<compile_context>
chip_gen: v6e
topology: v6e:2x2x1
jax: 0.10.0
libtpu: 0.0.40
codegen_flags: <defaults>
</compile_context>

<pallas_src>
import jax
import jax.numpy as jnp
from jax.experimental import pallas as pl
from jax.experimental.pallas import tpu as pltpu

ALPHA_RELU = 0.15
BN_EPS = 1e-5
LANE = 128


def _round_up(n, m):
    return (n + m - 1) // m * m


def _pad_axis(a, axis, target):
    if a.shape[axis] == target:
        return a
    pads = [(0, 0)] * a.ndim
    pads[axis] = (0, target - a.shape[axis])
    return jnp.pad(a, pads)


# ----------------------------- in-kernel helpers -----------------------------

def _bn_lrelu(y, gamma, beta):
    """Train-mode BatchNorm (per-channel batch mean / biased var) folded into a single
    scale/shift FMA, then LeakyReLU(0.15).  y: (M, C) f32, gamma/beta: (1, C) f32."""
    mean = jnp.mean(y, axis=0, keepdims=True)
    var = jnp.mean(jnp.square(y - mean), axis=0, keepdims=True)   # biased var (PyTorch fwd)
    scale = gamma * jax.lax.rsqrt(var + BN_EPS)
    shift = beta - mean * scale
    a = y * scale + shift
    return jnp.maximum(a, ALPHA_RELU * a)                          # LeakyReLU, alpha in (0,1)


# --------------------------------- kernels -----------------------------------

def _stage1_kernel(xc_ref, w_ref, g_ref, b_ref, o_ref):
    """Fused identity-projection + conv1 channel tile.

    xc_ref: (B, H, W, Kp) bf16 im2col'ed input (3x3 taps folded into the contraction
    dim, zero-padded to 128 lanes) -> one dense MXU matmul per tile, no window slicing."""
    B, H, W, tn = o_ref.shape
    Kp = xc_ref.shape[-1]
    x2d = xc_ref[...].reshape(B * H * W, Kp)
    y = jnp.dot(x2d, w_ref[...], preferred_element_type=jnp.float32)   # (B*H*W, tn) f32
    a = _bn_lrelu(y, g_ref[...], b_ref[...])
    o_ref[...] = a.reshape(B, H, W, tn).astype(o_ref.dtype)


def _stage2_kernel(h1p_ref, id_ref, w2_ref, g2_ref, b2_ref, out_ref):
    """conv2 over the (host-reflect-padded) conv1 output + residual add.

    h1p_ref: (B, H+2, Wp, Cmid) bf16 with Wp a sublane multiple.  The W-axis (sublane)
    shifts are hoisted out of the dy loop: 3 misaligned views, 9 cheap H slices."""
    B, H, W, tn = out_ref.shape
    Cmid = h1p_ref.shape[-1]
    hp = h1p_ref[...]
    w2 = w2_ref[...]                                               # (3, 3, Cmid, tn) bf16
    acc = jnp.zeros((B * H * W, tn), jnp.float32)
    for dx in range(3):                                            # sublane shift: 3x only
        xdx = hp[:, :, dx:dx + W, :]                               # (B, H+2, W, Cmid)
        for dy in range(3):                                        # H slice: pure addressing
            win = xdx[:, dy:dy + H].reshape(B * H * W, Cmid)
            acc = acc + jnp.dot(win, w2[dy, dx], preferred_element_type=jnp.float32)
    a = _bn_lrelu(acc, g2_ref[...], b2_ref[...])
    out_ref[...] = (a.reshape(B, H, W, tn)
                    + id_ref[...].astype(jnp.float32)).astype(out_ref.dtype)


# --------------------------------- wrapper -----------------------------------

def conv_residual_block(x_nchw, params, *, tn=LANE, out_layout="NCHW"):
    """x_nchw: (B, Cin, H, W) f32.  params: HWIO conv weights + BN gamma/beta.

    tn: output-channel tile width.  128 is right for v5e; use 256 on v6e/v7x when
    Cout_p >= 256 (256-wide MXU).  out_layout="NHWC" skips the final NCHW transpose."""
    B, Cin, H, W = x_nchw.shape
    Cout = params["w1"].shape[-1]
    Cout_p = _round_up(Cout, LANE)
    tn = min(tn, Cout_p)
    assert Cout_p % tn == 0
    K1 = 9 * Cin
    K1p = _round_up(K1, LANE)

    # ---------------- host-side (XLA) layout prep, done ONCE ----------------
    # NCHW -> NHWC (channels on the lane axis); reflect pad; im2col the 3x3 taps into
    # the contraction dim; zero-pad channels to 128-lane multiples; bf16 MXU operands.
    x = jnp.transpose(x_nchw, (0, 2, 3, 1))
    xp = jnp.pad(x, ((0, 0), (1, 1), (1, 1), (0, 0)), mode="reflect")
    taps = [xp[:, dy:dy + H, dx:dx + W, :] for dy in range(3) for dx in range(3)]
    xc = jnp.concatenate(taps, axis=-1)                            # (B, H, W, 9*Cin)
    xc = _pad_axis(xc, 3, K1p).astype(jnp.bfloat16)

    def flat_w(w):                                                 # (3,3,Cin,Co)->(K1p,Cout_p)
        return _pad_axis(_pad_axis(w.reshape(K1, Cout), 0, K1p), 1, Cout_p)

    # identity-projection and conv1 weights / BN rows pre-concatenated on the host
    w_s1 = jnp.concatenate([flat_w(params["wi"]), flat_w(params["w1"])],
                           axis=-1).astype(jnp.bfloat16)           # (K1p, 2*Cout_p)
    w2 = _pad_axis(_pad_axis(params["w2"], 2, Cout_p), 3, Cout_p).astype(jnp.bfloat16)

    def bn_row(v):
        return _pad_axis(v.reshape(1, -1), 1, Cout_p).astype(jnp.float32)

    g_s1 = jnp.concatenate([bn_row(params["gi"]), bn_row(params["g1"])], axis=-1)
    b_s1 = jnp.concatenate([bn_row(params["bi"]), bn_row(params["b1"])], axis=-1)
    g2, b2 = bn_row(params["g2"]), bn_row(params["b2"])

    cparams = pltpu.CompilerParams(
        dimension_semantics=("parallel",),        # channel tiles independent (BN per-channel)
        vmem_limit_bytes=64 * 1024 * 1024,        # explicit; raise toward 96 MiB on v6e
    )

    # ---- stage 1: identity projection + conv1, one matmul per channel tile ----
    # Grid spans the concatenated (identity | conv1) channel axis => >= 2 steps even when
    # Cout_p == tn, so the 'parallel' axis can shard across both v7x TensorCores.
    n1 = (2 * Cout_p) // tn
    h_all = pl.pallas_call(
        _stage1_kernel,
        grid=(n1,),
        in_specs=[
            pl.BlockSpec((B, H, W, K1p), lambda j: (0, 0, 0, 0)),   # grid-invariant
            pl.BlockSpec((K1p, tn), lambda j: (0, j)),
            pl.BlockSpec((1, tn), lambda j: (0, j)),
            pl.BlockSpec((1, tn), lambda j: (0, j)),
        ],
        out_specs=pl.BlockSpec((B, H, W, tn), lambda j: (0, 0, 0, j)),
        out_shape=jax.ShapeDtypeStruct((B, H, W, 2 * Cout_p), jnp.bfloat16),
        compiler_params=cparams,
    )(xc, w_s1, g_s1, b_s1)

    id_b = h_all[..., :Cout_p]                                     # identity branch (bf16)
    h1 = h_all[..., Cout_p:]                                       # conv1 activations (bf16)
    # host-side reflect pad of h1; W axis rounded up to a sublane (8) multiple.
    h1p = jnp.pad(h1, ((0, 0), (1, 1), (1, 1), (0, 0)), mode="reflect")
    Wp2 = _round_up(W + 2, 8)
    h1p = _pad_axis(h1p, 2, Wp2)

    # ---- stage 2: conv2 (full conv1 output as contraction dim) + residual add ----
    n2 = Cout_p // tn
    out = pl.pallas_call(
        _stage2_kernel,
        grid=(n2,),
        in_specs=[
            pl.BlockSpec((B, H + 2, Wp2, Cout_p), lambda j: (0, 0, 0, 0)),  # grid-invariant
            pl.BlockSpec((B, H, W, tn), lambda j: (0, 0, 0, j)),
            pl.BlockSpec((3, 3, Cout_p, tn), lambda j: (0, 0, 0, j)),
            pl.BlockSpec((1, tn), lambda j: (0, j)),
            pl.BlockSpec((1, tn), lambda j: (0, j)),
        ],
        out_specs=pl.BlockSpec((B, H, W, tn), lambda j: (0, 0, 0, j)),
        out_shape=jax.ShapeDtypeStruct((B, H, W, Cout_p), jnp.float32),
        compiler_params=cparams,
    )(h1p, id_b, w2, g2, b2)

    out = out[..., :Cout]
    if out_layout == "NHWC":                       # TPU-native layout: no transpose needed
        return out
    return jnp.transpose(out, (0, 3, 1, 2))


# ------------------------------ test harness ---------------------------------

def _make_params(key, cin, cout):
    ks = jax.random.split(key, 9)

    def w(k, ci, co):
        return jax.random.normal(k, (3, 3, ci, co), jnp.float32) * 0.2

    return dict(
        wi=w(ks[0], cin, cout),
        w1=w(ks[1], cin, cout),
        w2=w(ks[2], cout, cout),
        gi=1.0 + 0.1 * jax.random.normal(ks[3], (cout,), jnp.float32),
        bi=0.1 * jax.random.normal(ks[4], (cout,), jnp.float32),
        g1=1.0 + 0.1 * jax.random.normal(ks[5], (cout,), jnp.float32),
        b1=0.1 * jax.random.normal(ks[6], (cout,), jnp.float32),
        g2=1.0 + 0.1 * jax.random.normal(ks[7], (cout,), jnp.float32),
        b2=0.1 * jax.random.normal(ks[8], (cout,), jnp.float32),
    )


def _reference(x_nchw, p):
    """Pure-JAX (XLA conv) reference mirroring the kernel's mixed precision
    (bf16 MXU operands / bf16 inter-stage storage, f32 accumulation & BN)."""
    x = jnp.transpose(x_nchw, (0, 2, 3, 1))

    def conv_bn_lrelu(h, w, g, b):
        hp = jnp.pad(h, ((0, 0), (1, 1), (1, 1), (0, 0)), mode="reflect")
        y = jax.lax.conv_general_dilated(
            hp.astype(jnp.bfloat16), w.astype(jnp.bfloat16),
            window_strides=(1, 1), padding="VALID",
            dimension_numbers=("NHWC", "HWIO", "NHWC"),
            preferred_element_type=jnp.float32)
        mean = jnp.mean(y, axis=(0, 1, 2), keepdims=True)
        var = jnp.mean(jnp.square(y - mean), axis=(0, 1, 2), keepdims=True)
        a = (y - mean) * jax.lax.rsqrt(var + BN_EPS) * g + b
        return jnp.maximum(a, ALPHA_RELU * a)

    identity = conv_bn_lrelu(x, p["wi"], p["gi"], p["bi"]).astype(jnp.bfloat16)
    h1 = conv_bn_lrelu(x, p["w1"], p["g1"], p["b1"]).astype(jnp.bfloat16)
    h2 = conv_bn_lrelu(h1, p["w2"], p["g2"], p["b2"])
    return jnp.transpose(h2 + identity.astype(jnp.float32), (0, 3, 1, 2))


if __name__ == "__main__":
    key = jax.random.PRNGKey(0)
    kx, kp = jax.random.split(key)

    batch, in_ch, out_ch, hw = 2, 4, 8, 16
    x = jax.random.normal(kx, (batch, in_ch, hw, hw), jnp.float32)
    params = _make_params(kp, in_ch, out_ch)

    fwd = jax.jit(conv_residual_block)
    out = jax.block_until_ready(fwd(x, params))

    ref = _reference(x, params)
    assert out.shape == (batch, out_ch, hw, hw)
    max_diff = jnp.max(jnp.abs(out - ref))
    # Tolerance sized for the bf16-stored residual branch (1 bf16 ulp ~= 0.8% relative)
    # plus MXU-vs-XLA f32 accumulation-order differences.
    assert jnp.allclose(out, ref, atol=2e-2, rtol=1e-2), \
        f"mismatch vs reference, max|diff|={max_diff}"

    print("KERNEL_OK")
</pallas_src>

<mosaic_0001>
module attributes {stable_mosaic.version = 11 : i64} {
  func.func @_stage1_kernel(%arg0: i32, %arg1: memref<2x16x16x128xbf16, #tpu.memory_space<vmem>>, %arg2: memref<128x128xbf16, #tpu.memory_space<vmem>>, %arg3: memref<1x128xf32, #tpu.memory_space<vmem>>, %arg4: memref<1x128xf32, #tpu.memory_space<vmem>>, %arg5: memref<2x16x16x128xbf16, #tpu.memory_space<vmem>>) attributes {dimension_semantics = [#tpu.dimension_semantics<parallel>], iteration_bounds = array<i64: 2>, scalar_prefetch = 0 : i64, scratch_operands = 0 : i64, tpu.core_type = #tpu.core_type<tc>, window_params = [{pipeline_mode = #tpu.pipeline_mode<synchronous>, transform_indices = @transform_0, window_bounds = array<i64: 2, 16, 16, 128>}, {transform_indices = @transform_1, window_bounds = array<i64: 128, 128>}, {transform_indices = @transform_2, window_bounds = array<i64: 1, 128>}, {transform_indices = @transform_3, window_bounds = array<i64: 1, 128>}, {transform_indices = @transform_4, window_bounds = array<i64: 2, 16, 16, 128>}]} {
    %c0 = arith.constant 0 : index
    %c0_0 = arith.constant 0 : index
    %c0_1 = arith.constant 0 : index
    %c0_2 = arith.constant 0 : index
    %0 = vector.load %arg1[%c0, %c0_0, %c0_1, %c0_2] : memref<2x16x16x128xbf16, #tpu.memory_space<vmem>>, vector<2x16x16x128xbf16>
    %1 = vector.shape_cast %0 : vector<2x16x16x128xbf16> to vector<512x128xbf16>
    %c0_3 = arith.constant 0 : index
    %c0_4 = arith.constant 0 : index
    %2 = vector.load %arg2[%c0_3, %c0_4] : memref<128x128xbf16, #tpu.memory_space<vmem>>, vector<128x128xbf16>
    %cst = arith.constant dense<0.000000e+00> : vector<512x128xf32>
    %3 = tpu.matmul %1, %2, %cst {dimension_numbers = #tpu.dot_dimension_numbers<[1], [0], [0], [1], [0, 0, 1, 1], [], []>} : vector<512x128xbf16>, vector<128x128xbf16>, vector<512x128xf32> -> vector<512x128xf32>
    %c0_5 = arith.constant 0 : index
    %c0_6 = arith.constant 0 : index
    %4 = vector.load %arg3[%c0_5, %c0_6] : memref<1x128xf32, #tpu.memory_space<vmem>>, vector<1x128xf32>
    %c0_7 = arith.constant 0 : index
    %c0_8 = arith.constant 0 : index
    %5 = vector.load %arg4[%c0_7, %c0_8] : memref<1x128xf32, #tpu.memory_space<vmem>>, vector<1x128xf32>
    %cst_9 = arith.constant dense<0.000000e+00> : vector<128xf32>
    %6 = vector.multi_reduction <add>, %3, %cst_9 [0] : vector<512x128xf32> to vector<128xf32>
    %7 = vector.shape_cast %6 : vector<128xf32> to vector<1x128xf32>
    %cst_10 = arith.constant 5.120000e+02 : f32
    %8 = vector.broadcast %cst_10 : f32 to vector<1x128xf32>
    %9 = arith.divf %7, %8 : vector<1x128xf32>
    %10 = vector.broadcast %9 : vector<1x128xf32> to vector<512x128xf32>
    %11 = arith.subf %3, %10 : vector<512x128xf32>
    %12 = arith.mulf %11, %11 : vector<512x128xf32>
    %cst_11 = arith.constant dense<0.000000e+00> : vector<128xf32>
    %13 = vector.multi_reduction <add>, %12, %cst_11 [0] : vector<512x128xf32> to vector<128xf32>
    %14 = vector.shape_cast %13 : vector<128xf32> to vector<1x128xf32>
    %cst_12 = arith.constant 5.120000e+02 : f32
    %15 = vector.broadcast %cst_12 : f32 to vector<1x128xf32>
    %16 = arith.divf %14, %15 : vector<1x128xf32>
    %cst_13 = arith.constant 9.99999974E-6 : f32
    %17 = vector.broadcast %cst_13 : f32 to vector<1x128xf32>
    %18 = arith.addf %16, %17 : vector<1x128xf32>
    %19 = math.rsqrt %18 : vector<1x128xf32>
    %20 = arith.mulf %4, %19 : vector<1x128xf32>
    %21 = arith.mulf %9, %20 : vector<1x128xf32>
    %22 = arith.subf %5, %21 : vector<1x128xf32>
    %23 = vector.broadcast %20 : vector<1x128xf32> to vector<512x128xf32>
    %24 = arith.mulf %3, %23 : vector<512x128xf32>
    %25 = vector.broadcast %22 : vector<1x128xf32> to vector<512x128xf32>
    %26 = arith.addf %24, %25 : vector<512x128xf32>
    %cst_14 = arith.constant 1.500000e-01 : f32
    %27 = vector.broadcast %cst_14 : f32 to vector<512x128xf32>
    %28 = arith.mulf %27, %26 : vector<512x128xf32>
    %29 = arith.maximumf %26, %28 : vector<512x128xf32>
    %30 = vector.shape_cast %29 : vector<512x128xf32> to vector<2x16x16x128xf32>
    %31 = arith.truncf %30 : vector<2x16x16x128xf32> to vector<2x16x16x128xbf16>
    %c0_15 = arith.constant 0 : index
    %c0_16 = arith.constant 0 : index
    %c0_17 = arith.constant 0 : index
    %c0_18 = arith.constant 0 : index
    %32 = vector.load %arg5[%c0_15, %c0_16, %c0_17, %c0_18] : memref<2x16x16x128xbf16, #tpu.memory_space<vmem>>, vector<2x16x16x128xbf16>
    tpu.vector_store %arg5[%c0_15, %c0_16, %c0_17, %c0_18], %31 {strides = array<i32>} : memref<2x16x16x128xbf16, #tpu.memory_space<vmem>>, vector<2x16x16x128xbf16>,
    return
  }
  func.func @transform_0(%arg0: i32) -> (i32, i32, i32, i32) {
    %c0_i32 = arith.constant 0 : i32
    %c0_i32_0 = arith.constant 0 : i32
    %c0_i32_1 = arith.constant 0 : i32
    %c0_i32_2 = arith.constant 0 : i32
    %c0_i32_3 = arith.constant 0 : i32
    return %c0_i32, %c0_i32_0, %c0_i32_1, %c0_i32_2 : i32, i32, i32, i32
  }
  func.func @transform_1(%arg0: i32) -> (i32, i32) {
    %c0_i32 = arith.constant 0 : i32
    %c0_i32_0 = arith.constant 0 : i32
    return %c0_i32, %arg0 : i32, i32
  }
  func.func @transform_2(%arg0: i32) -> (i32, i32) {
    %c0_i32 = arith.constant 0 : i32
    %c0_i32_0 = arith.constant 0 : i32
    return %c0_i32, %arg0 : i32, i32
  }
  func.func @transform_3(%arg0: i32) -> (i32, i32) {
    %c0_i32 = arith.constant 0 : i32
    %c0_i32_0 = arith.constant 0 : i32
    return %c0_i32, %arg0 : i32, i32
  }
  func.func @transform_4(%arg0: i32) -> (i32, i32, i32, i32) {
    %c0_i32 = arith.constant 0 : i32
    %c0_i32_0 = arith.constant 0 : i32
    %c0_i32_1 = arith.constant 0 : i32
    %c0_i32_2 = arith.constant 0 : i32
    return %c0_i32, %c0_i32_0, %c0_i32_1, %arg0 : i32, i32, i32, i32
  }
}

module attributes {stable_mosaic.version = 11 : i64} {
  func.func @_stage2_kernel(%arg0: i32, %arg1: memref<2x18x24x128xbf16, #tpu.memory_space<vmem>>, %arg2: memref<2x16x16x128xbf16, #tpu.memory_space<vmem>>, %arg3: memref<3x3x128x128xbf16, #tpu.memory_space<vmem>>, %arg4: memref<1x128xf32, #tpu.memory_space<vmem>>, %arg5: memref<1x128xf32, #tpu.memory_space<vmem>>, %arg6: memref<2x16x16x128xf32, #tpu.memory_space<vmem>>) attributes {dimension_semantics = [#tpu.dimension_semantics<parallel>], iteration_bounds = array<i64: 1>, scalar_prefetch = 0 : i64, scratch_operands = 0 : i64, tpu.core_type = #tpu.core_type<tc>, window_params = [{pipeline_mode = #tpu.pipeline_mode<synchronous>, transform_indices = @transform_0, window_bounds = array<i64: 2, 18, 24, 128>}, {transform_indices = @transform_1, window_bounds = array<i64: 2, 16, 16, 128>}, {transform_indices = @transform_2, window_bounds = array<i64: 3, 3, 128, 128>}, {transform_indices = @transform_3, window_bounds = array<i64: 1, 128>}, {transform_indices = @transform_4, window_bounds = array<i64: 1, 128>}, {transform_indices = @transform_5, window_bounds = array<i64: 2, 16, 16, 128>}]} {
    %c0 = arith.constant 0 : index
    %c0_0 = arith.constant 0 : index
    %c0_1 = arith.constant 0 : index
    %c0_2 = arith.constant 0 : index
    %0 = vector.load %arg1[%c0, %c0_0, %c0_1, %c0_2] : memref<2x18x24x128xbf16, #tpu.memory_space<vmem>>, vector<2x18x24x128xbf16>
    %c0_3 = arith.constant 0 : index
    %c0_4 = arith.constant 0 : index
    %c0_5 = arith.constant 0 : index
    %c0_6 = arith.constant 0 : index
    %1 = vector.load %arg3[%c0_3, %c0_4, %c0_5, %c0_6] : memref<3x3x128x128xbf16, #tpu.memory_space<vmem>>, vector<3x3x128x128xbf16>
    %cst = arith.constant 0.000000e+00 : f32
    %2 = vector.broadcast %cst : f32 to vector<512x128xf32>
    %3 = vector.extract_strided_slice %0 {offsets = [0, 0, 0, 0], sizes = [2, 18, 16, 128], strides = [1, 1, 1, 1]} : vector<2x18x24x128xbf16> to vector<2x18x16x128xbf16>
    %4 = vector.extract_strided_slice %3 {offsets = [0, 0, 0, 0], sizes = [2, 16, 16, 128], strides = [1, 1, 1, 1]} : vector<2x18x16x128xbf16> to vector<2x16x16x128xbf16>
    %5 = vector.shape_cast %4 : vector<2x16x16x128xbf16> to vector<512x128xbf16>
    %6 = vector.extract_strided_slice %1 {offsets = [0, 0, 0, 0], sizes = [1, 1, 128, 128], strides = [1, 1, 1, 1]} : vector<3x3x128x128xbf16> to vector<1x1x128x128xbf16>
    %7 = vector.shape_cast %6 : vector<1x1x128x128xbf16> to vector<128x128xbf16>
    %cst_7 = arith.constant dense<0.000000e+00> : vector<512x128xf32>
    %8 = tpu.matmul %5, %7, %cst_7 {dimension_numbers = #tpu.dot_dimension_numbers<[1], [0], [0], [1], [0, 0, 1, 1], [], []>} : vector<512x128xbf16>, vector<128x128xbf16>, vector<512x128xf32> -> vector<512x128xf32>
    %9 = arith.addf %2, %8 : vector<512x128xf32>
    %10 = vector.extract_strided_slice %3 {offsets = [0, 1, 0, 0], sizes = [2, 16, 16, 128], strides = [1, 1, 1, 1]} : vector<2x18x16x128xbf16> to vector<2x16x16x128xbf16>
    %11 = vector.shape_cast %10 : vector<2x16x16x128xbf16> to vector<512x128xbf16>
    %12 = vector.extract_strided_slice %1 {offsets = [1, 0, 0, 0], sizes = [1, 1, 128, 128], strides = [1, 1, 1, 1]} : vector<3x3x128x128xbf16> to vector<1x1x128x128xbf16>
    %13 = vector.shape_cast %12 : vector<1x1x128x128xbf16> to vector<128x128xbf16>
    %cst_8 = arith.constant dense<0.000000e+00> : vector<512x128xf32>
    %14 = tpu.matmul %11, %13, %cst_8 {dimension_numbers = #tpu.dot_dimension_numbers<[1], [0], [0], [1], [0, 0, 1, 1], [], []>} : vector<512x128xbf16>, vector<128x128xbf16>, vector<512x128xf32> -> vector<512x128xf32>
    %15 = arith.addf %9, %14 : vector<512x128xf32>
    %16 = vector.extract_strided_slice %3 {offsets = [0, 2, 0, 0], sizes = [2, 16, 16, 128], strides = [1, 1, 1, 1]} : vector<2x18x16x128xbf16> to vector<2x16x16x128xbf16>
    %17 = vector.shape_cast %16 : vector<2x16x16x128xbf16> to vector<512x128xbf16>
    %18 = vector.extract_strided_slice %1 {offsets = [2, 0, 0, 0], sizes = [1, 1, 128, 128], strides = [1, 1, 1, 1]} : vector<3x3x128x128xbf16> to vector<1x1x128x128xbf16>
    %19 = vector.shape_cast %18 : vector<1x1x128x128xbf16> to vector<128x128xbf16>
    %cst_9 = arith.constant dense<0.000000e+00> : vector<512x128xf32>
    %20 = tpu.matmul %17, %19, %cst_9 {dimension_numbers = #tpu.dot_dimension_numbers<[1], [0], [0], [1], [0, 0, 1, 1], [], []>} : vector<512x128xbf16>, vector<128x128xbf16>, vector<512x128xf32> -> vector<512x128xf32>
    %21 = arith.addf %15, %20 : vector<512x128xf32>
    %22 = vector.extract_strided_slice %0 {offsets = [0, 0, 1, 0], sizes = [2, 18, 16, 128], strides = [1, 1, 1, 1]} : vector<2x18x24x128xbf16> to vector<2x18x16x128xbf16>
    %23 = vector.extract_strided_slice %22 {offsets = [0, 0, 0, 0], sizes = [2, 16, 16, 128], strides = [1, 1, 1, 1]} : vector<2x18x16x128xbf16> to vector<2x16x16x128xbf16>
    %24 = vector.shape_cast %23 : vector<2x16x16x128xbf16> to vector<512x128xbf16>
    %25 = vector.extract_strided_slice %1 {offsets = [0, 1, 0, 0], sizes = [1, 1, 128, 128], strides = [1, 1, 1, 1]} : vector<3x3x128x128xbf16> to vector<1x1x128x128xbf16>
    %26 = vector.shape_cast %25 : vector<1x1x128x128xbf16> to vector<128x128xbf16>
    %cst_10 = arith.constant dense<0.000000e+00> : vector<512x128xf32>
    %27 = tpu.matmul %24, %26, %cst_10 {dimension_numbers = #tpu.dot_dimension_numbers<[1], [0], [0], [1], [0, 0, 1, 1], [], []>} : vector<512x128xbf16>, vector<128x128xbf16>, vector<512x128xf32> -> vector<512x128xf32>
    %28 = arith.addf %21, %27 : vector<512x128xf32>
    %29 = vector.extract_strided_slice %22 {offsets = [0, 1, 0, 0], sizes = [2, 16, 16, 128], strides = [1, 1, 1, 1]} : vector<2x18x16x128xbf16> to vector<2x16x16x128xbf16>
    %30 = vector.shape_cast %29 : vector<2x16x16x128xbf16> to vector<512x128xbf16>
    %31 = vector.extract_strided_slice %1 {offsets = [1, 1, 0, 0], sizes = [1, 1, 128, 128], strides = [1, 1, 1, 1]} : vector<3x3x128x128xbf16> to vector<1x1x128x128xbf16>
    %32 = vector.shape_cast %31 : vector<1x1x128x128xbf16> to vector<128x128xbf16>
    %cst_11 = arith.constant dense<0.000000e+00> : vector<512x128xf32>
    %33 = tpu.matmul %30, %32, %cst_11 {dimension_numbers = #tpu.dot_dimension_numbers<[1], [0], [0], [1], [0, 0, 1, 1], [], []>} : vector<512x128xbf16>, vector<128x128xbf16>, vector<512x128xf32> -> vector<512x128xf32>
    %34 = arith.addf %28, %33 : vector<512x128xf32>
    %35 = vector.extract_strided_slice %22 {offsets = [0, 2, 0, 0], sizes = [2, 16, 16, 128], strides = [1, 1, 1, 1]} : vector<2x18x16x128xbf16> to vector<2x16x16x128xbf16>
    %36 = vector.shape_cast %35 : vector<2x16x16x128xbf16> to vector<512x128xbf16>
    %37 = vector.extract_strided_slice %1 {offsets = [2, 1, 0, 0], sizes = [1, 1, 128, 128], strides = [1, 1, 1, 1]} : vector<3x3x128x128xbf16> to vector<1x1x128x128xbf16>
    %38 = vector.shape_cast %37 : vector<1x1x128x128xbf16> to vector<128x128xbf16>
    %cst_12 = arith.constant dense<0.000000e+00> : vector<512x128xf32>
    %39 = tpu.matmul %36, %38, %cst_12 {dimension_numbers = #tpu.dot_dimension_numbers<[1], [0], [0], [1], [0, 0, 1, 1], [], []>} : vector<512x128xbf16>, vector<128x128xbf16>, vector<512x128xf32> -> vector<512x128xf32>
    %40 = arith.addf %34, %39 : vector<512x128xf32>
    %41 = vector.extract_strided_slice %0 {offsets = [0, 0, 2, 0], sizes = [2, 18, 16, 128], strides = [1, 1, 1, 1]} : vector<2x18x24x128xbf16> to vector<2x18x16x128xbf16>
    %42 = vector.extract_strided_slice %41 {offsets = [0, 0, 0, 0], sizes = [2, 16, 16, 128], strides = [1, 1, 1, 1]} : vector<2x18x16x128xbf16> to vector<2x16x16x128xbf16>
    %43 = vector.shape_cast %42 : vector<2x16x16x128xbf16> to vector<512x128xbf16>
    %44 = vector.extract_strided_slice %1 {offsets = [0, 2, 0, 0], sizes = [1, 1, 128, 128], strides = [1, 1, 1, 1]} : vector<3x3x128x128xbf16> to vector<1x1x128x128xbf16>
    %45 = vector.shape_cast %44 : vector<1x1x128x128xbf16> to vector<128x128xbf16>
    %cst_13 = arith.constant dense<0.000000e+00> : vector<512x128xf32>
    %46 = tpu.matmul %43, %45, %cst_13 {dimension_numbers = #tpu.dot_dimension_numbers<[1], [0], [0], [1], [0, 0, 1, 1], [], []>} : vector<512x128xbf16>, vector<128x128xbf16>, vector<512x128xf32> -> vector<512x128xf32>
    %47 = arith.addf %40, %46 : vector<512x128xf32>
    %48 = vector.extract_strided_slice %41 {offsets = [0, 1, 0, 0], sizes = [2, 16, 16, 128], strides = [1, 1, 1, 1]} : vector<2x18x16x128xbf16> to vector<2x16x16x128xbf16>
    %49 = vector.shape_cast %48 : vector<2x16x16x128xbf16> to vector<512x128xbf16>
    %50 = vector.extract_strided_slice %1 {offsets = [1, 2, 0, 0], sizes = [1, 1, 128, 128], strides = [1, 1, 1, 1]} : vector<3x3x128x128xbf16> to vector<1x1x128x128xbf16>
    %51 = vector.shape_cast %50 : vector<1x1x128x128xbf16> to vector<128x128xbf16>
    %cst_14 = arith.constant dense<0.000000e+00> : vector<512x128xf32>
    %52 = tpu.matmul %49, %51, %cst_14 {dimension_numbers = #tpu.dot_dimension_numbers<[1], [0], [0], [1], [0, 0, 1, 1], [], []>} : vector<512x128xbf16>, vector<128x128xbf16>, vector<512x128xf32> -> vector<512x128xf32>
    %53 = arith.addf %47, %52 : vector<512x128xf32>
    %54 = vector.extract_strided_slice %41 {offsets = [0, 2, 0, 0], sizes = [2, 16, 16, 128], strides = [1, 1, 1, 1]} : vector<2x18x16x128xbf16> to vector<2x16x16x128xbf16>
    %55 = vector.shape_cast %54 : vector<2x16x16x128xbf16> to vector<512x128xbf16>
    %56 = vector.extract_strided_slice %1 {offsets = [2, 2, 0, 0], sizes = [1, 1, 128, 128], strides = [1, 1, 1, 1]} : vector<3x3x128x128xbf16> to vector<1x1x128x128xbf16>
    %57 = vector.shape_cast %56 : vector<1x1x128x128xbf16> to vector<128x128xbf16>
    %cst_15 = arith.constant dense<0.000000e+00> : vector<512x128xf32>
    %58 = tpu.matmul %55, %57, %cst_15 {dimension_numbers = #tpu.dot_dimension_numbers<[1], [0], [0], [1], [0, 0, 1, 1], [], []>} : vector<512x128xbf16>, vector<128x128xbf16>, vector<512x128xf32> -> vector<512x128xf32>
    %59 = arith.addf %53, %58 : vector<512x128xf32>
    %c0_16 = arith.constant 0 : index
    %c0_17 = arith.constant 0 : index
    %60 = vector.load %arg4[%c0_16, %c0_17] : memref<1x128xf32, #tpu.memory_space<vmem>>, vector<1x128xf32>
    %c0_18 = arith.constant 0 : index
    %c0_19 = arith.constant 0 : index
    %61 = vector.load %arg5[%c0_18, %c0_19] : memref<1x128xf32, #tpu.memory_space<vmem>>, vector<1x128xf32>
    %cst_20 = arith.constant dense<0.000000e+00> : vector<128xf32>
    %62 = vector.multi_reduction <add>, %59, %cst_20 [0] : vector<512x128xf32> to vector<128xf32>
    %63 = vector.shape_cast %62 : vector<128xf32> to vector<1x128xf32>
    %cst_21 = arith.constant 5.120000e+02 : f32
    %64 = vector.broadcast %cst_21 : f32 to vector<1x128xf32>
    %65 = arith.divf %63, %64 : vector<1x128xf32>
    %66 = vector.broadcast %65 : vector<1x128xf32> to vector<512x128xf32>
    %67 = arith.subf %59, %66 : vector<512x128xf32>
    %68 = arith.mulf %67, %67 : vector<512x128xf32>
    %cst_22 = arith.constant dense<0.000000e+00> : vector<128xf32>
    %69 = vector.multi_reduction <add>, %68, %cst_22 [0] : vector<512x128xf32> to vector<128xf32>
    %70 = vector.shape_cast %69 : vector<128xf32> to vector<1x128xf32>
    %cst_23 = arith.constant 5.120000e+02 : f32
    %71 = vector.broadcast %cst_23 : f32 to vector<1x128xf32>
    %72 = arith.divf %70, %71 : vector<1x128xf32>
    %cst_24 = arith.constant 9.99999974E-6 : f32
    %73 = vector.broadcast %cst_24 : f32 to vector<1x128xf32>
    %74 = arith.addf %72, %73 : vector<1x128xf32>
    %75 = math.rsqrt %74 : vector<1x128xf32>
    %76 = arith.mulf %60, %75 : vector<1x128xf32>
    %77 = arith.mulf %65, %76 : vector<1x128xf32>
    %78 = arith.subf %61, %77 : vector<1x128xf32>
    %79 = vector.broadcast %76 : vector<1x128xf32> to vector<512x128xf32>
    %80 = arith.mulf %59, %79 : vector<512x128xf32>
    %81 = vector.broadcast %78 : vector<1x128xf32> to vector<512x128xf32>
    %82 = arith.addf %80, %81 : vector<512x128xf32>
    %cst_25 = arith.constant 1.500000e-01 : f32
    %83 = vector.broadcast %cst_25 : f32 to vector<512x128xf32>
    %84 = arith.mulf %83, %82 : vector<512x128xf32>
    %85 = arith.maximumf %82, %84 : vector<512x128xf32>
    %86 = vector.shape_cast %85 : vector<512x128xf32> to vector<2x16x16x128xf32>
    %c0_26 = arith.constant 0 : index
    %c0_27 = arith.constant 0 : index
    %c0_28 = arith.constant 0 : index
    %c0_29 = arith.constant 0 : index
    %87 = vector.load %arg2[%c0_26, %c0_27, %c0_28, %c0_29] : memref<2x16x16x128xbf16, #tpu.memory_space<vmem>>, vector<2x16x16x128xbf16>
    %88 = arith.extf %87 : vector<2x16x16x128xbf16> to vector<2x16x16x128xf32>
    %89 = arith.addf %86, %88 : vector<2x16x16x128xf32>
    %c0_30 = arith.constant 0 : index
    %c0_31 = arith.constant 0 : index
    %c0_32 = arith.constant 0 : index
    %c0_33 = arith.constant 0 : index
    %90 = vector.load %arg6[%c0_30, %c0_31, %c0_32, %c0_33] : memref<2x16x16x128xf32, #tpu.memory_space<vmem>>, vector<2x16x16x128xf32>
    tpu.vector_store %arg6[%c0_30, %c0_31, %c0_32, %c0_33], %89 {strides = array<i32>} : memref<2x16x16x128xf32, #tpu.memory_space<vmem>>, vector<2x16x16x128xf32>,
    return
  }
  func.func @transform_0(%arg0: i32) -> (i32, i32, i32, i32) {
    %c0_i32 = arith.constant 0 : i32
    %c0_i32_0 = arith.constant 0 : i32
    %c0_i32_1 = arith.constant 0 : i32
    %c0_i32_2 = arith.constant 0 : i32
    %c0_i32_3 = arith.constant 0 : i32
    return %c0_i32, %c0_i32_0, %c0_i32_1, %c0_i32_2 : i32, i32, i32, i32
  }
  func.func @transform_1(%arg0: i32) -> (i32, i32, i32, i32) {
    %c0_i32 = arith.constant 0 : i32
    %c0_i32_0 = arith.constant 0 : i32
    %c0_i32_1 = arith.constant 0 : i32
    %c0_i32_2 = arith.constant 0 : i32
    return %c0_i32, %c0_i32_0, %c0_i32_1, %arg0 : i32, i32, i32, i32
  }
  func.func @transform_2(%arg0: i32) -> (i32, i32, i32, i32) {
    %c0_i32 = arith.constant 0 : i32
    %c0_i32_0 = arith.constant 0 : i32
    %c0_i32_1 = arith.constant 0 : i32
    %c0_i32_2 = arith.constant 0 : i32
    return %c0_i32, %c0_i32_0, %c0_i32_1, %arg0 : i32, i32, i32, i32
  }
  func.func @transform_3(%arg0: i32) -> (i32, i32) {
    %c0_i32 = arith.constant 0 : i32
    %c0_i32_0 = arith.constant 0 : i32
    return %c0_i32, %arg0 : i32, i32
  }
  func.func @transform_4(%arg0: i32) -> (i32, i32) {
    %c0_i32 = arith.constant 0 : i32
    %c0_i32_0 = arith.constant 0 : i32
    return %c0_i32, %arg0 : i32, i32
  }
  func.func @transform_5(%arg0: i32) -> (i32, i32, i32, i32) {
    %c0_i32 = arith.constant 0 : i32
    %c0_i32_0 = arith.constant 0 : i32
    %c0_i32_1 = arith.constant 0 : i32
    %c0_i32_2 = arith.constant 0 : i32
    return %c0_i32, %c0_i32_0, %c0_i32_1, %arg0 : i32, i32, i32, i32
  }
}

</mosaic_0001>

<llo_original>
// kernel: conv_residual_block.2
$region0: #{conv_residual_block.2}
  #allocation0 [shape = 'u32[]', space=smem, size = 0x4, offset = 0x4, fixed_abs, tag = 'smem constant byte address 0x4 - core index']
  #allocation1 [shape = 'u32[144,128]{1,0:T(1,128)}', space=vmem, size = 0x12000, scoped, tag = 'internal scratch']
  %s0 = inlined_call_operand.vmem [shape: bf16[2,16,16,128], index: 0, kind: input, shape index: {}]
  %s1 = inlined_call_operand.vmem [shape: bf16[128,256], index: 1, kind: input, shape index: {}]
  %s2 = inlined_call_operand.vmem [shape: f32[1,256], index: 2, kind: input, shape index: {}]
  %s3 = inlined_call_operand.vmem [shape: f32[1,256], index: 3, kind: input, shape index: {}]
  %s4 = inlined_call_operand.vmem [shape: bf16[2,16,16,256], index: 4, kind: output, shape index: {}]
  %s5 = sld [smem:[#allocation0]]
  $region127: #{conv_residual_block.2} parent=0
    _
  %s7 = ssub.s32 1, %s5
  %s8 = scalar_select 0, %s7, %s5
  $region1: #{conv_residual_block.2} parent=0
    #allocation2 [shape = 'u8[65536]{0}', space=vmem, size = 0x10000, scoped, tag = 'input window, operand 1']
    #allocation3 [shape = 'u8[262144]{0}', space=vmem, size = 0x40000, scoped, tag = 'output window, operand 0']
    loop: start=0, step=1, limit=4
    $region2: #{conv_residual_block.2} parent=1 // loop_pre_header
      _
    $region3: #{conv_residual_block.2} parent=1 // loop_header
      %s10 = sphi 0, %s14
      %p11 = scmp.ge.s32.totalorder %s10, 4
      %s18 = sphi 0, %s18
      %s20 = sphi 0, %s18
      %s21 = sphi 0, %s20
      %s35 = sphi 0, %s21
      %s41 = sphi 0, %s43
      %s44 = sphi 0, %s41
      %s45 = sphi 0, %s44
      %s61 = sphi 0, %s45
      %s67 = sphi 0, %s69
      %s70 = sphi 0, %s67
      %s71 = sphi 0, %s70
      %s87 = sphi 0, %s71
      %s93 = sphi 0, %s95
      %s96 = sphi 0, %s93
      %s97 = sphi 0, %s96
      %s113 = sphi 0, %s97
      %s119 = sphi 0, %s121
      %s122 = sphi 0, %s119
      %s123 = sphi 0, %s122
      %s139 = sphi 0, %s123
    $region4: #{conv_residual_block.2} parent=1 // loop_header_branch
      %13 = sbr.rel (%p11) target = $region8
    $region5: #{conv_residual_block.2} parent=1 // loop_body
      %s15 = ssub.s32 %s10, 1
      %s16 = ssub.s32 %s10, 2
      %s17 = sadd.s32 %s10, 1
      %s19 = sadd.s32 %s18, 1
      %p22 = scmp.eq.s32.totalorder %s10, 1
      %p23 = scmp.ne.s32.totalorder %s18, %s20
      %p24 = scmp.eq.s32.totalorder %s10, 0
      %p25 = por %p23, %p24
      %p26 = scmp.ne.s32.totalorder %s18, %s20
      %p27 = scmp.eq.s32.totalorder %s15, 1
      %p28 = por %p26, %p27
      %p29 = scmp.ne.s32.totalorder %s20, %s21
      %p30 = scmp.eq.s32.totalorder %s15, 0
      %p31 = por %p29, %p30
      %p32 = scmp.ne.s32.totalorder %s20, %s21
      %p33 = scmp.eq.s32.totalorder %s16, 1
      %p34 = por %p32, %p33
      %p36 = scmp.ne.s32.totalorder %s21, %s35
      %p37 = scmp.eq.s32.totalorder %s16, 0
      %p38 = por %p36, %p37
      %s39 = ssub.s32 %s10, %s17
      %p40 = scmp.eq.s32.totalorder %s39, 0
      %s42 = sadd.s32 %s41, 1
      %s43 = scalar_select %p40, %s41, %s42
      %p46 = pneg %p40
      %p47 = scmp.eq.s32.totalorder %s10, 1
      %p48 = por %p46, %p47
      %p49 = scmp.ne.s32.totalorder %s41, %s44
      %p50 = scmp.eq.s32.totalorder %s10, 0
      %p51 = por %p49, %p50
      %p52 = scmp.ne.s32.totalorder %s41, %s44
      %p53 = scmp.eq.s32.totalorder %s15, 1
      %p54 = por %p52, %p53
      %p55 = scmp.ne.s32.totalorder %s44, %s45
      %p56 = scmp.eq.s32.totalorder %s15, 0
      %p57 = por %p55, %p56
      %p58 = scmp.ne.s32.totalorder %s44, %s45
      %p59 = scmp.eq.s32.totalorder %s16, 1
      %p60 = por %p58, %p59
      %p62 = scmp.ne.s32.totalorder %s45, %s61
      %p63 = scmp.eq.s32.totalorder %s16, 0
      %p64 = por %p62, %p63
      %s65 = ssub.s32 %s10, %s17
      %p66 = scmp.eq.s32.totalorder %s65, 0
      %s68 = sadd.s32 %s67, 1
      %s69 = scalar_select %p66, %s67, %s68
      %p72 = pneg %p66
      %p73 = scmp.eq.s32.totalorder %s10, 1
      %p74 = por %p72, %p73
      %p75 = scmp.ne.s32.totalorder %s67, %s70
      %p76 = scmp.eq.s32.totalorder %s10, 0
      %p77 = por %p75, %p76
      %p78 = scmp.ne.s32.totalorder %s67, %s70
      %p79 = scmp.eq.s32.totalorder %s15, 1
      %p80 = por %p78, %p79
      %p81 = scmp.ne.s32.totalorder %s70, %s71
      %p82 = scmp.eq.s32.totalorder %s15, 0
      %p83 = por %p81, %p82
      %p84 = scmp.ne.s32.totalorder %s70, %s71
      %p85 = scmp.eq.s32.totalorder %s16, 1
      %p86 = por %p84, %p85
      %p88 = scmp.ne.s32.totalorder %s71, %s87
      %p89 = scmp.eq.s32.totalorder %s16, 0
      %p90 = por %p88, %p89
      %s91 = ssub.s32 %s10, %s17
      %p92 = scmp.eq.s32.totalorder %s91, 0
      %s94 = sadd.s32 %s93, 1
      %s95 = scalar_select %p92, %s93, %s94
      %p98 = pneg %p92
      %p99 = scmp.eq.s32.totalorder %s10, 1
      %p100 = por %p98, %p99
      %p101 = scmp.ne.s32.totalorder %s93, %s96
      %p102 = scmp.eq.s32.totalorder %s10, 0
      %p103 = por %p101, %p102
      %p104 = scmp.ne.s32.totalorder %s93, %s96
      %p105 = scmp.eq.s32.totalorder %s15, 1
      %p106 = por %p104, %p105
      %p107 = scmp.ne.s32.totalorder %s96, %s97
      %p108 = scmp.eq.s32.totalorder %s15, 0
      %p109 = por %p107, %p108
      %p110 = scmp.ne.s32.totalorder %s96, %s97
      %p111 = scmp.eq.s32.totalorder %s16, 1
      %p112 = por %p110, %p111
      %p114 = scmp.ne.s32.totalorder %s97, %s113
      %p115 = scmp.eq.s32.totalorder %s16, 0
      %p116 = por %p114, %p115
      %s117 = ssub.s32 %s10, %s17
      %p118 = scmp.eq.s32.totalorder %s117, 0
      %s120 = sadd.s32 %s119, 1
      %s121 = scalar_select %p118, %s119, %s120
      %p124 = pneg %p118
      %p125 = scmp.eq.s32.totalorder %s10, 1
      %p126 = por %p124, %p125
      %p127 = scmp.ne.s32.totalorder %s119, %s122
      %p128 = scmp.eq.s32.totalorder %s10, 0
      %p129 = por %p127, %p128
      %p130 = scmp.ne.s32.totalorder %s119, %s122
      %p131 = scmp.eq.s32.totalorder %s15, 1
      %p132 = por %p130, %p131
      %p133 = scmp.ne.s32.totalorder %s122, %s123
      %p134 = scmp.eq.s32.totalorder %s15, 0
      %p135 = por %p133, %p134
      %p136 = scmp.ne.s32.totalorder %s122, %s123
      %p137 = scmp.eq.s32.totalorder %s16, 1
      %p138 = por %p136, %p137
      %p140 = scmp.ne.s32.totalorder %s123, %s139
      %p141 = scmp.eq.s32.totalorder %s16, 0
      %p142 = por %p140, %p141
      %p143 = scmp.le.s32.totalorder 1, %s10
      %p144 = scmp.lt.s32.totalorder %s10, 3
      %p145 = pnand %p143, %p144
      %p146 = pneg %p145
      // Predicated region
      $region9: #{conv_residual_block.2} parent=5 // pred_check
        _
      $region10: #{conv_residual_block.2} parent=5 // pred_check_branch
        %148 = sbr.rel (%p145) target = $region12
      $region11: #{conv_residual_block.2} parent=5 // pred_region
        %s149 = ssub.s32 %s10, 1
        // Predicated region
        $region13: #{conv_residual_block.2} parent=11 // pred_check
          %p150 = pneg %p31
        $region14: #{conv_residual_block.2} parent=11 // pred_check_branch
          %152 = sbr.rel (%p150) target = $region16
        $region15: #{conv_residual_block.2} parent=11 // pred_region
          _
        $region16: #{conv_residual_block.2} parent=11 // pred_fallthru
          _
      $region12: #{conv_residual_block.2} parent=5 // pred_fallthru
        _
      %p153 = scmp.lt.s32.totalorder %s10, 2
      // Predicated region
      $region17: #{conv_residual_block.2} parent=5 // pred_check
        %p154 = pneg %p153
      $region18: #{conv_residual_block.2} parent=5 // pred_check_branch
        %156 = sbr.rel (%p154) target = $region20
      $region19: #{conv_residual_block.2} parent=5 // pred_region
        // Predicated region
        $region21: #{conv_residual_block.2} parent=19 // pred_check
          %p157 = pneg %p51
        $region22: #{conv_residual_block.2} parent=19 // pred_check_branch
          %159 = sbr.rel (%p157) target = $region24
        $region23: #{conv_residual_block.2} parent=19 // pred_region
          %s160 = sand.u32 %s41, 1
          %s161 = sand.u32 %s41, 1
          %s162 = smul.addr %s161, 64
          %s163 = scalar_lea.vmem [#allocation2], %s162
          %s164 = smul.addr %s10, 4
          %s165 = scalar_lea.vmem %s1, %s164
          // Predicated region
          $region25: #{conv_residual_block.2} parent=23 // pred_check
            _
          $region26: #{conv_residual_block.2} parent=23 // pred_check_branch
            %167 = sbr.rel (0) target = $region28
          $region27: #{conv_residual_block.2} parent=23 // pred_region
            // Predicated region
            $region29: #{conv_residual_block.2} parent=27 // pred_check
              _
            $region30: #{conv_residual_block.2} parent=27 // pred_check_branch
              %169 = sbr.rel target = $region32
            $region31: #{conv_residual_block.2} parent=27 // pred_region
              // Predicated region
              $region44: #{conv_residual_block.2} parent=31 // pred_check
                _
              $region45: #{conv_residual_block.2} parent=31 // pred_check_branch
                %215 = sbr.rel (0) target = $region47
              $region46: #{conv_residual_block.2} parent=31 // pred_region
                loop: start=0, step=1, limit=1
                $region48: #{conv_residual_block.2} parent=46 // loop_pre_header
                  _
                $region49: #{conv_residual_block.2} parent=46 // loop_header
                  %s217 = sphi 0, %s221
                  %p218 = scmp.ge.s32.totalorder %s217, 1
                  %s222 = sphi %s165, %s165
                  %s223 = sphi %s163, %s163
                $region50: #{conv_residual_block.2} parent=46 // loop_header_branch
                  %220 = sbr.rel (%p218) target = $region54
                $region51: #{conv_residual_block.2} parent=46 // loop_body
                  _
                $region52: #{conv_residual_block.2} parent=46 // loop_footer
                  %s221 = sadd.s32 1, %s217
                $region53: #{conv_residual_block.2} parent=46 // loop_footer_branch
                  %216 = sbr.rel target = $region49
                $region54: #{conv_residual_block.2} parent=46 // loop_exit
                  _
                %s225 = ssub.s32 16, 1
                loop: start=0, step=1, limit=1
                $region55: #{conv_residual_block.2} parent=46 // loop_pre_header
                  _
                $region56: #{conv_residual_block.2} parent=46 // loop_header
                  %s227 = sphi 0, %s231
                  %p228 = scmp.ge.s32.totalorder %s227, 1
                  %s232 = sphi %s165, %s165
                  %s233 = sphi %s163, %s163
                $region57: #{conv_residual_block.2} parent=46 // loop_header_branch
                  %230 = sbr.rel (%p228) target = $region61
                $region58: #{conv_residual_block.2} parent=46 // loop_body
                  %v234 = vld [vmem:[%s232] sm:%s225]
                  %235 = vst [vmem:[%s233] sm:%s225] %v234
                  %v236 = vld [vmem:[%s232 + $0x8] sm:%s225]
                  %237 = vst [vmem:[%s233 + $0x4] sm:%s225] %v236
                  %v238 = vld [vmem:[%s232 + $0x10] sm:%s225]
                  %239 = vst [vmem:[%s233 + $0x8] sm:%s225] %v238
                  %v240 = vld [vmem:[%s232 + $0x18] sm:%s225]
                  %241 = vst [vmem:[%s233 + $0xc] sm:%s225] %v240
                  %v242 = vld [vmem:[%s232 + $0x20] sm:%s225]
                  %243 = vst [vmem:[%s233 + $0x10] sm:%s225] %v242
                  %v244 = vld [vmem:[%s232 + $0x28] sm:%s225]
                  %245 = vst [vmem:[%s233 + $0x14] sm:%s225] %v244
                  %v246 = vld [vmem:[%s232 + $0x30] sm:%s225]
                  %247 = vst [vmem:[%s233 + $0x18] sm:%s225] %v246
                  %v248 = vld [vmem:[%s232 + $0x38] sm:%s225]
                  %249 = vst [vmem:[%s233 + $0x1c] sm:%s225] %v248
                  %v250 = vld [vmem:[%s232 + $0x40] sm:%s225]
                  %251 = vst [vmem:[%s233 + $0x20] sm:%s225] %v250
                  %v252 = vld [vmem:[%s232 + $0x48] sm:%s225]
                  %253 = vst [vmem:[%s233 + $0x24] sm:%s225] %v252
                  %v254 = vld [vmem:[%s232 + $0x50] sm:%s225]
                  %255 = vst [vmem:[%s233 + $0x28] sm:%s225] %v254
                  %v256 = vld [vmem:[%s232 + $0x58] sm:%s225]
                  %257 = vst [vmem:[%s233 + $0x2c] sm:%s225] %v256
                  %v258 = vld [vmem:[%s232 + $0x60] sm:%s225]
                  %259 = vst [vmem:[%s233 + $0x30] sm:%s225] %v258
                  %v260 = vld [vmem:[%s232 + $0x68] sm:%s225]
                  %261 = vst [vmem:[%s233 + $0x34] sm:%s225] %v260
                  %v262 = vld [vmem:[%s232 + $0x70] sm:%s225]
                  %263 = vst [vmem:[%s233 + $0x38] sm:%s225] %v262
                  %v264 = vld [vmem:[%s232 + $0x78] sm:%s225]
                  %265 = vst [vmem:[%s233 + $0x3c] sm:%s225] %v264
                $region59: #{conv_residual_block.2} parent=46 // loop_footer
                  %s231 = sadd.s32 1, %s227
                $region60: #{conv_residual_block.2} parent=46 // loop_footer_branch
                  %226 = sbr.rel target = $region56
                $region61: #{conv_residual_block.2} parent=46 // loop_exit
                  _
              $region47: #{conv_residual_block.2} parent=31 // pred_fallthru
                _
            $region32: #{conv_residual_block.2} parent=27 // pred_fallthru
              _
            // Predicated region
            $region33: #{conv_residual_block.2} parent=27 // pred_check
              _
            $region34: #{conv_residual_block.2} parent=27 // pred_check_branch
              %171 = sbr.rel (0) target = $region36
            $region35: #{conv_residual_block.2} parent=27 // pred_region
              %s173 = ssub.s32 16, 1
              loop: start=0, step=1, limit=1
              $region37: #{conv_residual_block.2} parent=35 // loop_pre_header
                _
              $region38: #{conv_residual_block.2} parent=35 // loop_header
                %s175 = sphi 0, %s179
                %p176 = scmp.ge.s32.totalorder %s175, 1
                %s180 = sphi %s165, %s165
                %s181 = sphi %s163, %s163
              $region39: #{conv_residual_block.2} parent=35 // loop_header_branch
                %178 = sbr.rel (%p176) target = $region43
              $region40: #{conv_residual_block.2} parent=35 // loop_body
                %v182 = vld [vmem:[%s180] sm:%s173]
                %183 = vst [vmem:[%s181] sm:%s173] %v182
                %v184 = vld [vmem:[%s180 + $0x8] sm:%s173]
                %185 = vst [vmem:[%s181 + $0x4] sm:%s173] %v184
                %v186 = vld [vmem:[%s180 + $0x10] sm:%s173]
                %187 = vst [vmem:[%s181 + $0x8] sm:%s173] %v186
                %v188 = vld [vmem:[%s180 + $0x18] sm:%s173]
                %189 = vst [vmem:[%s181 + $0xc] sm:%s173] %v188
                %v190 = vld [vmem:[%s180 + $0x20] sm:%s173]
                %191 = vst [vmem:[%s181 + $0x10] sm:%s173] %v190
                %v192 = vld [vmem:[%s180 + $0x28] sm:%s173]
                %193 = vst [vmem:[%s181 + $0x14] sm:%s173] %v192
                %v194 = vld [vmem:[%s180 + $0x30] sm:%s173]
                %195 = vst [vmem:[%s181 + $0x18] sm:%s173] %v194
                %v196 = vld [vmem:[%s180 + $0x38] sm:%s173]
                %197 = vst [vmem:[%s181 + $0x1c] sm:%s173] %v196
                %v198 = vld [vmem:[%s180 + $0x40] sm:%s173]
                %199 = vst [vmem:[%s181 + $0x20] sm:%s173] %v198
                %v200 = vld [vmem:[%s180 + $0x48] sm:%s173]
                %201 = vst [vmem:[%s181 + $0x24] sm:%s173] %v200
                %v202 = vld [vmem:[%s180 + $0x50] sm:%s173]
                %203 = vst [vmem:[%s181 + $0x28] sm:%s173] %v202
                %v204 = vld [vmem:[%s180 + $0x58] sm:%s173]
                %205 = vst [vmem:[%s181 + $0x2c] sm:%s173] %v204
                %v206 = vld [vmem:[%s180 + $0x60] sm:%s173]
                %207 = vst [vmem:[%s181 + $0x30] sm:%s173] %v206
                %v208 = vld [vmem:[%s180 + $0x68] sm:%s173]
                %209 = vst [vmem:[%s181 + $0x34] sm:%s173] %v208
                %v210 = vld [vmem:[%s180 + $0x70] sm:%s173]
                %211 = vst [vmem:[%s181 + $0x38] sm:%s173] %v210
                %v212 = vld [vmem:[%s180 + $0x78] sm:%s173]
                %213 = vst [vmem:[%s181 + $0x3c] sm:%s173] %v212
              $region41: #{conv_residual_block.2} parent=35 // loop_footer
                %s179 = sadd.s32 1, %s175
              $region42: #{conv_residual_block.2} parent=35 // loop_footer_branch
                %174 = sbr.rel target = $region38
              $region43: #{conv_residual_block.2} parent=35 // loop_exit
                _
            $region36: #{conv_residual_block.2} parent=27 // pred_fallthru
              _
          $region28: #{conv_residual_block.2} parent=23 // pred_fallthru
            _
          %266 = vnop
        $region24: #{conv_residual_block.2} parent=19 // pred_fallthru
          _
        // Predicated region
        $region62: #{conv_residual_block.2} parent=19 // pred_check
          %p267 = pneg %p77
        $region63: #{conv_residual_block.2} parent=19 // pred_check_branch
          %269 = sbr.rel (%p267) target = $region65
        $region64: #{conv_residual_block.2} parent=19 // pred_region
          %p270 = scmp.lt.s32.totalorder %s10, 1
          %s271 = scalar_select %p270, %s10, 1
          %s272 = scalar_lea.vmem %s2, %s271
        $region65: #{conv_residual_block.2} parent=19 // pred_fallthru
          _
        // Predicated region
        $region66: #{conv_residual_block.2} parent=19 // pred_check
          %p273 = pneg %p103
        $region67: #{conv_residual_block.2} parent=19 // pred_check_branch
          %275 = sbr.rel (%p273) target = $region69
        $region68: #{conv_residual_block.2} parent=19 // pred_region
          %p276 = scmp.lt.s32.totalorder %s10, 1
          %s277 = scalar_select %p276, %s10, 1
          %s278 = scalar_lea.vmem %s3, %s277
        $region69: #{conv_residual_block.2} parent=19 // pred_fallthru
          _
      $region20: #{conv_residual_block.2} parent=5 // pred_fallthru
        _
      %p279 = scmp.le.s32.totalorder 1, %s10
      %p280 = scmp.lt.s32.totalorder %s10, 3
      %p281 = pnand %p279, %p280
      %p282 = pneg %p281
      // Predicated region
      $region70: #{conv_residual_block.2} parent=5 // pred_check
        _
      $region71: #{conv_residual_block.2} parent=5 // pred_check_branch
        %284 = sbr.rel (%p281) target = $region73
      $region72: #{conv_residual_block.2} parent=5 // pred_region
        %s285 = ssub.s32 %s10, 1
        %s286 = sand.u32 %s44, 1
        %s287 = sand.u32 %s44, 1
        %s288 = smul.addr %s287, 64
        %s289 = scalar_lea.vmem [#allocation2], %s288
        // Predicated region
        $region74: #{conv_residual_block.2} parent=72 // pred_check
          %p290 = pneg %p57
        $region75: #{conv_residual_block.2} parent=72 // pred_check_branch
          %292 = sbr.rel (%p290) target = $region77
        $region76: #{conv_residual_block.2} parent=72 // pred_region
          _
        $region77: #{conv_residual_block.2} parent=72 // pred_fallthru
          _
        %p293 = pneg %p31
        %p294 = pneg %p28
        %s295 = sand.u32 %s44, 1
        %s296 = sand.u32 %s44, 1
        %s297 = smul.addr %s296, 64
        %s298 = scalar_lea.vmem [#allocation2], %s297
        %p299 = pneg %p57
        %p300 = pneg %p54
        %p301 = scmp.lt.s32.totalorder %s15, 1
        %s302 = scalar_select %p301, %s15, 1
        %s303 = scalar_lea.vmem %s2, %s302
        %p304 = pneg %p83
        %p305 = pneg %p80
        %p306 = scmp.lt.s32.totalorder %s15, 1
        %s307 = scalar_select %p306, %s15, 1
        %s308 = scalar_lea.vmem %s3, %s307
        %p309 = pneg %p109
        %p310 = pneg %p106
        %p311 = pneg %p135
        %p312 = pneg %p132
        %s313 = sand.u32 %s122, 1
        %s314 = sand.u32 %s122, 1
        %s315 = smul.addr %s314, 256
        %s316 = scalar_lea.vmem [#allocation3], %s315
        %p317 = scmp.lt.s32.totalorder %s15, 1
        %s318 = scalar_select %p317, %s15, 1
        %s319 = scalar_lea.vmem %s2, %s318
        %p320 = scmp.lt.s32.totalorder %s15, 1
        %s321 = scalar_select %p320, %s15, 1
        %s322 = scalar_lea.vmem %s3, %s321
        %v324 = vld [vmem:[%s0] sm:$0xf]
        %v325 = vld [vmem:[%s0 + $0x4] sm:$0xf]
        %v326 = vld [vmem:[%s0 + $0x8] sm:$0xf]
        %v327 = vld [vmem:[%s0 + $0xc] sm:$0xf]
        %v328 = vld [vmem:[%s0 + $0x10] sm:$0xf]
        %v329 = vld [vmem:[%s0 + $0x14] sm:$0xf]
        %v330 = vld [vmem:[%s0 + $0x18] sm:$0xf]
        %v331 = vld [vmem:[%s0 + $0x1c] sm:$0xf]
        %v332 = vld [vmem:[%s0 + $0x20] sm:$0xf]
        %v333 = vld [vmem:[%s0 + $0x24] sm:$0xf]
        %v334 = vld [vmem:[%s0 + $0x28] sm:$0xf]
        %v335 = vld [vmem:[%s0 + $0x2c] sm:$0xf]
        %v336 = vld [vmem:[%s0 + $0x30] sm:$0xf]
        %v337 = vld [vmem:[%s0 + $0x34] sm:$0xf]
        %v338 = vld [vmem:[%s0 + $0x38] sm:$0xf]
        %v339 = vld [vmem:[%s0 + $0x3c] sm:$0xf]
        %v340 = vld [vmem:[%s0 + $0x40] sm:$0xf]
        %v341 = vld [vmem:[%s0 + $0x44] sm:$0xf]
        %v342 = vld [vmem:[%s0 + $0x48] sm:$0xf]
        %v343 = vld [vmem:[%s0 + $0x4c] sm:$0xf]
        %v344 = vld [vmem:[%s0 + $0x50] sm:$0xf]
        %v345 = vld [vmem:[%s0 + $0x54] sm:$0xf]
        %v346 = vld [vmem:[%s0 + $0x58] sm:$0xf]
        %v347 = vld [vmem:[%s0 + $0x5c] sm:$0xf]
        %v348 = vld [vmem:[%s0 + $0x60] sm:$0xf]
        %v349 = vld [vmem:[%s0 + $0x64] sm:$0xf]
        %v350 = vld [vmem:[%s0 + $0x68] sm:$0xf]
        %v351 = vld [vmem:[%s0 + $0x6c] sm:$0xf]
        %v352 = vld [vmem:[%s0 + $0x70] sm:$0xf]
        %v353 = vld [vmem:[%s0 + $0x74] sm:$0xf]
        %v354 = vld [vmem:[%s0 + $0x78] sm:$0xf]
        %v355 = vld [vmem:[%s0 + $0x7c] sm:$0xf]
        %v356 = vld [vmem:[%s0 + $0x80] sm:$0xf]
        %v357 = vld [vmem:[%s0 + $0x84] sm:$0xf]
        %v358 = vld [vmem:[%s0 + $0x88] sm:$0xf]
        %v359 = vld [vmem:[%s0 + $0x8c] sm:$0xf]
        %v360 = vld [vmem:[%s0 + $0x90] sm:$0xf]
        %v361 = vld [vmem:[%s0 + $0x94] sm:$0xf]
        %v362 = vld [vmem:[%s0 + $0x98] sm:$0xf]
        %v363 = vld [vmem:[%s0 + $0x9c] sm:$0xf]
        %v364 = vld [vmem:[%s0 + $0xa0] sm:$0xf]
        %v365 = vld [vmem:[%s0 + $0xa4] sm:$0xf]
        %v366 = vld [vmem:[%s0 + $0xa8] sm:$0xf]
        %v367 = vld [vmem:[%s0 + $0xac] sm:$0xf]
        %v368 = vld [vmem:[%s0 + $0xb0] sm:$0xf]
        %v369 = vld [vmem:[%s0 + $0xb4] sm:$0xf]
        %v370 = vld [vmem:[%s0 + $0xb8] sm:$0xf]
        %v371 = vld [vmem:[%s0 + $0xbc] sm:$0xf]
        %v372 = vld [vmem:[%s0 + $0xc0] sm:$0xf]
        %v373 = vld [vmem:[%s0 + $0xc4] sm:$0xf]
        %v374 = vld [vmem:[%s0 + $0xc8] sm:$0xf]
        %v375 = vld [vmem:[%s0 + $0xcc] sm:$0xf]
        %v376 = vld [vmem:[%s0 + $0xd0] sm:$0xf]
        %v377 = vld [vmem:[%s0 + $0xd4] sm:$0xf]
        %v378 = vld [vmem:[%s0 + $0xd8] sm:$0xf]
        %v379 = vld [vmem:[%s0 + $0xdc] sm:$0xf]
        %v380 = vld [vmem:[%s0 + $0xe0] sm:$0xf]
        %v381 = vld [vmem:[%s0 + $0xe4] sm:$0xf]
        %v382 = vld [vmem:[%s0 + $0xe8] sm:$0xf]
        %v383 = vld [vmem:[%s0 + $0xec] sm:$0xf]
        %v384 = vld [vmem:[%s0 + $0xf0] sm:$0xf]
        %v385 = vld [vmem:[%s0 + $0xf4] sm:$0xf]
        %v386 = vld [vmem:[%s0 + $0xf8] sm:$0xf]
        %v387 = vld [vmem:[%s0 + $0xfc] sm:$0xf]
        %v388 = vld [vmem:[%s289] sm:$0xf]
        %v389 = vld [vmem:[%s289 + $0x4] sm:$0xf]
        %v390 = vld [vmem:[%s289 + $0x8] sm:$0xf]
        %v391 = vld [vmem:[%s289 + $0xc] sm:$0xf]
        %v392 = vld [vmem:[%s289 + $0x10] sm:$0xf]
        %v393 = vld [vmem:[%s289 + $0x14] sm:$0xf]
        %v394 = vld [vmem:[%s289 + $0x18] sm:$0xf]
        %v395 = vld [vmem:[%s289 + $0x1c] sm:$0xf]
        %v396 = vld [vmem:[%s289 + $0x20] sm:$0xf]
        %v397 = vld [vmem:[%s289 + $0x24] sm:$0xf]
        %v398 = vld [vmem:[%s289 + $0x28] sm:$0xf]
        %v399 = vld [vmem:[%s289 + $0x2c] sm:$0xf]
        %v400 = vld [vmem:[%s289 + $0x30] sm:$0xf]
        %v401 = vld [vmem:[%s289 + $0x34] sm:$0xf]
        %v402 = vld [vmem:[%s289 + $0x38] sm:$0xf]
        %v403 = vld [vmem:[%s289 + $0x3c] sm:$0xf]
        %v468 = vunpack.c.l.b16 %v324
        %v469 = vunpack.c.l.b16 %v325
        %v470 = vunpack.c.l.b16 %v326
        %v471 = vunpack.c.l.b16 %v327
        %v472 = vunpack.c.l.b16 %v328
        %v473 = vunpack.c.l.b16 %v329
        %v474 = vunpack.c.l.b16 %v330
        %v475 = vunpack.c.l.b16 %v331
        %v476 = vunpack.c.l.b16 %v332
        %v477 = vunpack.c.l.b16 %v333
        %v478 = vunpack.c.l.b16 %v334
        %v479 = vunpack.c.l.b16 %v335
        %v480 = vunpack.c.l.b16 %v336
        %v481 = vunpack.c.l.b16 %v337
        %v482 = vunpack.c.l.b16 %v338
        %v483 = vunpack.c.l.b16 %v339
        %v484 = vunpack.c.l.b16 %v340
        %v485 = vunpack.c.l.b16 %v341
        %v486 = vunpack.c.l.b16 %v342
        %v487 = vunpack.c.l.b16 %v343
        %v488 = vunpack.c.l.b16 %v344
        %v489 = vunpack.c.l.b16 %v345
        %v490 = vunpack.c.l.b16 %v346
        %v491 = vunpack.c.l.b16 %v347
        %v492 = vunpack.c.l.b16 %v348
        %v493 = vunpack.c.l.b16 %v349
        %v494 = vunpack.c.l.b16 %v350
        %v495 = vunpack.c.l.b16 %v351
        %v496 = vunpack.c.l.b16 %v352
        %v497 = vunpack.c.l.b16 %v353
        %v498 = vunpack.c.l.b16 %v354
        %v499 = vunpack.c.l.b16 %v355
        %v500 = vunpack.c.l.b16 %v356
        %v501 = vunpack.c.l.b16 %v357
        %v502 = vunpack.c.l.b16 %v358
        %v503 = vunpack.c.l.b16 %v359
        %v504 = vunpack.c.l.b16 %v360
        %v505 = vunpack.c.l.b16 %v361
        %v506 = vunpack.c.l.b16 %v362
        %v507 = vunpack.c.l.b16 %v363
        %v508 = vunpack.c.l.b16 %v364
        %v509 = vunpack.c.l.b16 %v365
        %v510 = vunpack.c.l.b16 %v366
        %v511 = vunpack.c.l.b16 %v367
        %v512 = vunpack.c.l.b16 %v368
        %v513 = vunpack.c.l.b16 %v369
        %v514 = vunpack.c.l.b16 %v370
        %v515 = vunpack.c.l.b16 %v371
        %v516 = vunpack.c.l.b16 %v372
        %v517 = vunpack.c.l.b16 %v373
        %v518 = vunpack.c.l.b16 %v374
        %v519 = vunpack.c.l.b16 %v375
        %v520 = vunpack.c.l.b16 %v376
        %v521 = vunpack.c.l.b16 %v377
        %v522 = vunpack.c.l.b16 %v378
        %v523 = vunpack.c.l.b16 %v379
        %v524 = vunpack.c.l.b16 %v380
        %v525 = vunpack.c.l.b16 %v381
        %v526 = vunpack.c.l.b16 %v382
        %v527 = vunpack.c.l.b16 %v383
        %v528 = vunpack.c.l.b16 %v384
        %v529 = vunpack.c.l.b16 %v385
        %v530 = vunpack.c.l.b16 %v386
        %v531 = vunpack.c.l.b16 %v387
        %v532 = vpack.c.b16 %v469, %v468
        %v533 = vpack.c.b16 %v471, %v470
        %v534 = vpack.c.b16 %v473, %v472
        %v535 = vpack.c.b16 %v475, %v474
        %v536 = vpack.c.b16 %v477, %v476
        %v537 = vpack.c.b16 %v479, %v478
        %v538 = vpack.c.b16 %v481, %v480
        %v539 = vpack.c.b16 %v483, %v482
        %v540 = vpack.c.b16 %v485, %v484
        %v541 = vpack.c.b16 %v487, %v486
        %v542 = vpack.c.b16 %v489, %v488
        %v543 = vpack.c.b16 %v491, %v490
        %v544 = vpack.c.b16 %v493, %v492
        %v545 = vpack.c.b16 %v495, %v494
        %v546 = vpack.c.b16 %v497, %v496
        %v547 = vpack.c.b16 %v499, %v498
        %v548 = vpack.c.b16 %v501, %v500
        %v549 = vpack.c.b16 %v503, %v502
        %v550 = vpack.c.b16 %v505, %v504
        %v551 = vpack.c.b16 %v507, %v506
        %v552 = vpack.c.b16 %v509, %v508
        %v553 = vpack.c.b16 %v511, %v510
        %v554 = vpack.c.b16 %v513, %v512
        %v555 = vpack.c.b16 %v515, %v514
        %v556 = vpack.c.b16 %v517, %v516
        %v557 = vpack.c.b16 %v519, %v518
        %v558 = vpack.c.b16 %v521, %v520
        %v559 = vpack.c.b16 %v523, %v522
        %v560 = vpack.c.b16 %v525, %v524
        %v561 = vpack.c.b16 %v527, %v526
        %v562 = vpack.c.b16 %v529, %v528
        %v563 = vpack.c.b16 %v531, %v530
        %v612 = vunpack.c.l.b16 %v388
        %v613 = vunpack.c.l.b16 %v389
        %v614 = vunpack.c.l.b16 %v390
        %v615 = vunpack.c.l.b16 %v391
        %v616 = vunpack.c.l.b16 %v392
        %v617 = vunpack.c.l.b16 %v393
        %v618 = vunpack.c.l.b16 %v394
        %v619 = vunpack.c.l.b16 %v395
        %v620 = vunpack.c.l.b16 %v396
        %v621 = vunpack.c.l.b16 %v397
        %v622 = vunpack.c.l.b16 %v398
        %v623 = vunpack.c.l.b16 %v399
        %v624 = vunpack.c.l.b16 %v400
        %v625 = vunpack.c.l.b16 %v401
        %v626 = vunpack.c.l.b16 %v402
        %v627 = vunpack.c.l.b16 %v403
        %v628 = vpack.c.b16 %v613, %v612
        %v629 = vpack.c.b16 %v615, %v614
        %v630 = vpack.c.b16 %v617, %v616
        %v631 = vpack.c.b16 %v619, %v618
        %v632 = vpack.c.b16 %v621, %v620
        %v633 = vpack.c.b16 %v623, %v622
        %v634 = vpack.c.b16 %v625, %v624
        %v635 = vpack.c.b16 %v627, %v626
        %644 = vmatprep.subr.bf16.mxu0 0
        %645 = vmatpush1.bf16.msra.mxu0 %v635
        %646 = vmatprep.subr.bf16.mxu0 0
        %647 = vmatpush1.bf16.msra.mxu0 %v634
        %648 = vmatprep.subr.bf16.mxu0 0
        %649 = vmatpush1.bf16.msra.mxu0 %v633
        %650 = vmatprep.subr.bf16.mxu0 0
        %651 = vmatpush1.bf16.msra.mxu0 %v632
        %652 = vmatprep.subr.bf16.mxu0 0
        %653 = vmatpush1.bf16.msra.mxu0 %v631
        %654 = vmatprep.subr.bf16.mxu0 0
        %655 = vmatpush1.bf16.msra.mxu0 %v630
        %656 = vmatprep.subr.bf16.mxu0 0
        %657 = vmatpush1.bf16.msra.mxu0 %v629
        %658 = vmatprep.subr.bf16.mxu0 0
        %659 = vmatpush1.bf16.msra.mxu0 %v628
        %660 = vmatprep.subr.bf16.mxu0 0
        %661 = vmatpush2.bf16.msra.mxu0 0
        %662 = vmatprep.subr.bf16.mxu0 0
        %663 = vmatpush2.bf16.msra.mxu0 0
        %664 = vmatprep.subr.bf16.mxu0 0
        %665 = vmatpush2.bf16.msra.mxu0 0
        %666 = vmatprep.subr.bf16.mxu0 0
        %667 = vmatpush2.bf16.msra.mxu0 0
        %668 = vmatprep.subr.bf16.mxu0 0
        %669 = vmatpush2.bf16.msra.mxu0 0
        %670 = vmatprep.subr.bf16.mxu0 0
        %671 = vmatpush2.bf16.msra.mxu0 0
        %672 = vmatprep.subr.bf16.mxu0 0
        %673 = vmatpush2.bf16.msra.mxu0 0
        %674 = vmatprep.subr.bf16.mxu0 0
        %675 = vmatpush2.bf16.msra.mxu0 0
        %676 = vmatprep.mubr.bf16.mxu0 0
        %677 = vmatmul.mubr.bf16.gmra.mxu0 %v532
        %v678 = vpop.f32.mrf.mxu0
        %v679 = vadd.f32 0.0, %v678
        %v680 = vpop.f32.mrf.mxu0
        %v681 = vpop.f32.mrf.mxu0
        %v682 = vadd.f32 0.0, %v681
        %v683 = vpop.f32.mrf.mxu0
        %684 = vmatprep.mubr.bf16.mxu0 0
        %685 = vmatmul.mubr.bf16.gmra.mxu0 %v533
        %v686 = vpop.f32.mrf.mxu0
        %v687 = vadd.f32 0.0, %v686
        %v688 = vpop.f32.mrf.mxu0
        %v689 = vpop.f32.mrf.mxu0
        %v690 = vadd.f32 0.0, %v689
        %v691 = vpop.f32.mrf.mxu0
        %692 = vmatprep.mubr.bf16.mxu0 0
        %693 = vmatmul.mubr.bf16.gmra.mxu0 %v534
        %v694 = vpop.f32.mrf.mxu0
        %v695 = vadd.f32 0.0, %v694
        %v696 = vpop.f32.mrf.mxu0
        %v697 = vpop.f32.mrf.mxu0
        %v698 = vadd.f32 0.0, %v697
        %v699 = vpop.f32.mrf.mxu0
        %700 = vmatprep.mubr.bf16.mxu0 0
        %701 = vmatmul.mubr.bf16.gmra.mxu0 %v535
        %v702 = vpop.f32.mrf.mxu0
        %v703 = vadd.f32 0.0, %v702
        %v704 = vpop.f32.mrf.mxu0
        %v705 = vpop.f32.mrf.mxu0
        %v706 = vadd.f32 0.0, %v705
        %v707 = vpop.f32.mrf.mxu0
        %708 = vmatprep.mubr.bf16.mxu0 0
        %709 = vmatmul.mubr.bf16.gmra.mxu0 %v536
        %v710 = vpop.f32.mrf.mxu0
        %v711 = vadd.f32 0.0, %v710
        %v712 = vpop.f32.mrf.mxu0
        %v713 = vpop.f32.mrf.mxu0
        %v714 = vadd.f32 0.0, %v713
        %v715 = vpop.f32.mrf.mxu0
        %716 = vmatprep.mubr.bf16.mxu0 0
        %717 = vmatmul.mubr.bf16.gmra.mxu0 %v537
        %v718 = vpop.f32.mrf.mxu0
        %v719 = vadd.f32 0.0, %v718
        %v720 = vpop.f32.mrf.mxu0
        %v721 = vpop.f32.mrf.mxu0
        %v722 = vadd.f32 0.0, %v721
        %v723 = vpop.f32.mrf.mxu0
        %724 = vmatprep.mubr.bf16.mxu0 0
        %725 = vmatmul.mubr.bf16.gmra.mxu0 %v538
        %v726 = vpop.f32.mrf.mxu0
        %v727 = vadd.f32 0.0, %v726
        %v728 = vpop.f32.mrf.mxu0
        %v729 = vpop.f32.mrf.mxu0
        %v730 = vadd.f32 0.0, %v729
        %v731 = vpop.f32.mrf.mxu0
        %732 = vmatprep.mubr.bf16.mxu0 0
        %733 = vmatmul.mubr.bf16.gmra.mxu0 %v539
        %v734 = vpop.f32.mrf.mxu0
        %v735 = vadd.f32 0.0, %v734
        %v736 = vpop.f32.mrf.mxu0
        %v737 = vpop.f32.mrf.mxu0
        %v738 = vadd.f32 0.0, %v737
        %v739 = vpop.f32.mrf.mxu0
        %740 = vmatprep.mubr.bf16.mxu0 0
        %741 = vmatmul.mubr.bf16.gmra.mxu0 %v540
        %v742 = vpop.f32.mrf.mxu0
        %v743 = vadd.f32 0.0, %v742
        %v744 = vpop.f32.mrf.mxu0
        %v745 = vpop.f32.mrf.mxu0
        %v746 = vadd.f32 0.0, %v745
        %v747 = vpop.f32.mrf.mxu0
        %748 = vmatprep.mubr.bf16.mxu0 0
        %749 = vmatmul.mubr.bf16.gmra.mxu0 %v541
        %v750 = vpop.f32.mrf.mxu0
        %v751 = vadd.f32 0.0, %v750
        %v752 = vpop.f32.mrf.mxu0
        %v753 = vpop.f32.mrf.mxu0
        %v754 = vadd.f32 0.0, %v753
        %v755 = vpop.f32.mrf.mxu0
        %756 = vmatprep.mubr.bf16.mxu0 0
        %757 = vmatmul.mubr.bf16.gmra.mxu0 %v542
        %v758 = vpop.f32.mrf.mxu0
        %v759 = vadd.f32 0.0, %v758
        %v760 = vpop.f32.mrf.mxu0
        %v761 = vpop.f32.mrf.mxu0
        %v762 = vadd.f32 0.0, %v761
        %v763 = vpop.f32.mrf.mxu0
        %764 = vmatprep.mubr.bf16.mxu0 0
        %765 = vmatmul.mubr.bf16.gmra.mxu0 %v543
        %v766 = vpop.f32.mrf.mxu0
        %v767 = vadd.f32 0.0, %v766
        %v768 = vpop.f32.mrf.mxu0
        %v769 = vpop.f32.mrf.mxu0
        %v770 = vadd.f32 0.0, %v769
        %v771 = vpop.f32.mrf.mxu0
        %772 = vmatprep.mubr.bf16.mxu0 0
        %773 = vmatmul.mubr.bf16.gmra.mxu0 %v544
        %v774 = vpop.f32.mrf.mxu0
        %v775 = vadd.f32 0.0, %v774
        %v776 = vpop.f32.mrf.mxu0
        %v777 = vpop.f32.mrf.mxu0
        %v778 = vadd.f32 0.0, %v777
        %v779 = vpop.f32.mrf.mxu0
        %780 = vmatprep.mubr.bf16.mxu0 0
        %781 = vmatmul.mubr.bf16.gmra.mxu0 %v545
        %v782 = vpop.f32.mrf.mxu0
        %v783 = vadd.f32 0.0, %v782
        %v784 = vpop.f32.mrf.mxu0
        %v785 = vpop.f32.mrf.mxu0
        %v786 = vadd.f32 0.0, %v785
        %v787 = vpop.f32.mrf.mxu0
        %788 = vmatprep.mubr.bf16.mxu0 0
        %789 = vmatmul.mubr.bf16.gmra.mxu0 %v546
        %v790 = vpop.f32.mrf.mxu0
        %v791 = vadd.f32 0.0, %v790
        %v792 = vpop.f32.mrf.mxu0
        %v793 = vpop.f32.mrf.mxu0
        %v794 = vadd.f32 0.0, %v793
        %v795 = vpop.f32.mrf.mxu0
        %796 = vmatprep.mubr.bf16.mxu0 0
        %797 = vmatmul.mubr.bf16.gmra.mxu0 %v547
        %v798 = vpop.f32.mrf.mxu0
        %v799 = vadd.f32 0.0, %v798
        %v800 = vpop.f32.mrf.mxu0
        %v801 = vpop.f32.mrf.mxu0
        %v802 = vadd.f32 0.0, %v801
        %v803 = vpop.f32.mrf.mxu0
        %804 = vmatprep.mubr.bf16.mxu0 0
        %805 = vmatmul.mubr.bf16.gmra.mxu0 %v548
        %v806 = vpop.f32.mrf.mxu0
        %v807 = vadd.f32 0.0, %v806
        %v808 = vpop.f32.mrf.mxu0
        %v809 = vpop.f32.mrf.mxu0
        %v810 = vadd.f32 0.0, %v809
        %v811 = vpop.f32.mrf.mxu0
        %812 = vmatprep.mubr.bf16.mxu0 0
        %813 = vmatmul.mubr.bf16.gmra.mxu0 %v549
        %v814 = vpop.f32.mrf.mxu0
        %v815 = vadd.f32 0.0, %v814
        %v816 = vpop.f32.mrf.mxu0
        %v817 = vpop.f32.mrf.mxu0
        %v818 = vadd.f32 0.0, %v817
        %v819 = vpop.f32.mrf.mxu0
        %820 = vmatprep.mubr.bf16.mxu0 0
        %821 = vmatmul.mubr.bf16.gmra.mxu0 %v550
        %v822 = vpop.f32.mrf.mxu0
        %v823 = vadd.f32 0.0, %v822
        %v824 = vpop.f32.mrf.mxu0
        %v825 = vpop.f32.mrf.mxu0
        %v826 = vadd.f32 0.0, %v825
        %v827 = vpop.f32.mrf.mxu0
        %828 = vmatprep.mubr.bf16.mxu0 0
        %829 = vmatmul.mubr.bf16.gmra.mxu0 %v551
        %v830 = vpop.f32.mrf.mxu0
        %v831 = vadd.f32 0.0, %v830
        %v832 = vpop.f32.mrf.mxu0
        %v833 = vpop.f32.mrf.mxu0
        %v834 = vadd.f32 0.0, %v833
        %v835 = vpop.f32.mrf.mxu0
        %836 = vmatprep.mubr.bf16.mxu0 0
        %837 = vmatmul.mubr.bf16.gmra.mxu0 %v552
        %v838 = vpop.f32.mrf.mxu0
        %v839 = vadd.f32 0.0, %v838
        %v840 = vpop.f32.mrf.mxu0
        %v841 = vpop.f32.mrf.mxu0
        %v842 = vadd.f32 0.0, %v841
        %v843 = vpop.f32.mrf.mxu0
        %844 = vmatprep.mubr.bf16.mxu0 0
        %845 = vmatmul.mubr.bf16.gmra.mxu0 %v553
        %v846 = vpop.f32.mrf.mxu0
        %v847 = vadd.f32 0.0, %v846
        %v848 = vpop.f32.mrf.mxu0
        %v849 = vpop.f32.mrf.mxu0
        %v850 = vadd.f32 0.0, %v849
        %v851 = vpop.f32.mrf.mxu0
        %852 = vmatprep.mubr.bf16.mxu0 0
        %853 = vmatmul.mubr.bf16.gmra.mxu0 %v554
        %v854 = vpop.f32.mrf.mxu0
        %v855 = vadd.f32 0.0, %v854
        %v856 = vpop.f32.mrf.mxu0
        %v857 = vpop.f32.mrf.mxu0
        %v858 = vadd.f32 0.0, %v857
        %v859 = vpop.f32.mrf.mxu0
        %860 = vmatprep.mubr.bf16.mxu0 0
        %861 = vmatmul.mubr.bf16.gmra.mxu0 %v555
        %v862 = vpop.f32.mrf.mxu0
        %v863 = vadd.f32 0.0, %v862
        %v864 = vpop.f32.mrf.mxu0
        %v865 = vpop.f32.mrf.mxu0
        %v866 = vadd.f32 0.0, %v865
        %v867 = vpop.f32.mrf.mxu0
        %868 = vmatprep.mubr.bf16.mxu0 0
        %869 = vmatmul.mubr.bf16.gmra.mxu0 %v556
        %v870 = vpop.f32.mrf.mxu0
        %v871 = vadd.f32 0.0, %v870
        %v872 = vpop.f32.mrf.mxu0
        %v873 = vpop.f32.mrf.mxu0
        %v874 = vadd.f32 0.0, %v873
        %v875 = vpop.f32.mrf.mxu0
        %876 = vmatprep.mubr.bf16.mxu0 0
        %877 = vmatmul.mubr.bf16.gmra.mxu0 %v557
        %v878 = vpop.f32.mrf.mxu0
        %v879 = vadd.f32 0.0, %v878
        %v880 = vpop.f32.mrf.mxu0
        %v881 = vpop.f32.mrf.mxu0
        %v882 = vadd.f32 0.0, %v881
        %v883 = vpop.f32.mrf.mxu0
        %884 = vmatprep.mubr.bf16.mxu0 0
        %885 = vmatmul.mubr.bf16.gmra.mxu0 %v558
        %v886 = vpop.f32.mrf.mxu0
        %v887 = vadd.f32 0.0, %v886
        %v888 = vpop.f32.mrf.mxu0
        %v889 = vpop.f32.mrf.mxu0
        %v890 = vadd.f32 0.0, %v889
        %v891 = vpop.f32.mrf.mxu0
        %892 = vmatprep.mubr.bf16.mxu0 0
        %893 = vmatmul.mubr.bf16.gmra.mxu0 %v559
        %v894 = vpop.f32.mrf.mxu0
        %v895 = vadd.f32 0.0, %v894
        %v896 = vpop.f32.mrf.mxu0
        %v897 = vpop.f32.mrf.mxu0
        %v898 = vadd.f32 0.0, %v897
        %v899 = vpop.f32.mrf.mxu0
        %900 = vmatprep.mubr.bf16.mxu0 0
        %901 = vmatmul.mubr.bf16.gmra.mxu0 %v560
        %v902 = vpop.f32.mrf.mxu0
        %v903 = vadd.f32 0.0, %v902
        %v904 = vpop.f32.mrf.mxu0
        %v905 = vpop.f32.mrf.mxu0
        %v906 = vadd.f32 0.0, %v905
        %v907 = vpop.f32.mrf.mxu0
        %908 = vmatprep.mubr.bf16.mxu0 0
        %909 = vmatmul.mubr.bf16.gmra.mxu0 %v561
        %v910 = vpop.f32.mrf.mxu0
        %v911 = vadd.f32 0.0, %v910
        %v912 = vpop.f32.mrf.mxu0
        %v913 = vpop.f32.mrf.mxu0
        %v914 = vadd.f32 0.0, %v913
        %v915 = vpop.f32.mrf.mxu0
        %916 = vmatprep.mubr.bf16.mxu0 0
        %917 = vmatmul.mubr.bf16.gmra.mxu0 %v562
        %v918 = vpop.f32.mrf.mxu0
        %v919 = vadd.f32 0.0, %v918
        %v920 = vpop.f32.mrf.mxu0
        %v921 = vpop.f32.mrf.mxu0
        %v922 = vadd.f32 0.0, %v921
        %v923 = vpop.f32.mrf.mxu0
        %924 = vmatprep.mubr.bf16.mxu0 0
        %925 = vmatmul.mubr.bf16.gmra.mxu0 %v563
        %v926 = vpop.f32.mrf.mxu0
        %v927 = vadd.f32 0.0, %v926
        %v928 = vpop.f32.mrf.mxu0
        %v929 = vpop.f32.mrf.mxu0
        %v930 = vadd.f32 0.0, %v929
        %v931 = vpop.f32.mrf.mxu0
        %932 = vdwg.mxu0
        %v933 = vld [vmem:[%s319] sm:$0x1]
        %v934 = vld [vmem:[%s322] sm:$0x1]
        %v935 = vadd.f32 %v679, %v682
        %v936 = vadd.f32 %v935, %v687
        %v937 = vadd.f32 %v936, %v690
        %v938 = vadd.f32 %v937, %v695
        %v939 = vadd.f32 %v938, %v698
        %v940 = vadd.f32 %v939, %v703
        %v941 = vadd.f32 %v940, %v706
        %v942 = vadd.f32 %v941, %v711
        %v943 = vadd.f32 %v942, %v714
        %v944 = vadd.f32 %v943, %v719
        %v945 = vadd.f32 %v944, %v722
        %v946 = vadd.f32 %v945, %v727
        %v947 = vadd.f32 %v946, %v730
        %v948 = vadd.f32 %v947, %v735
        %v949 = vadd.f32 %v948, %v738
        %v950 = vadd.f32 %v949, %v743
        %v951 = vadd.f32 %v950, %v746
        %v952 = vadd.f32 %v951, %v751
        %v953 = vadd.f32 %v952, %v754
        %v954 = vadd.f32 %v953, %v759
        %v955 = vadd.f32 %v954, %v762
        %v956 = vadd.f32 %v955, %v767
        %v957 = vadd.f32 %v956, %v770
        %v958 = vadd.f32 %v957, %v775
        %v959 = vadd.f32 %v958, %v778
        %v960 = vadd.f32 %v959, %v783
        %v961 = vadd.f32 %v960, %v786
        %v962 = vadd.f32 %v961, %v791
        %v963 = vadd.f32 %v962, %v794
        %v964 = vadd.f32 %v963, %v799
        %v965 = vadd.f32 %v964, %v802
        %v966 = vadd.f32 %v965, %v807
        %v967 = vadd.f32 %v966, %v810
        %v968 = vadd.f32 %v967, %v815
        %v969 = vadd.f32 %v968, %v818
        %v970 = vadd.f32 %v969, %v823
        %v971 = vadd.f32 %v970, %v826
        %v972 = vadd.f32 %v971, %v831
        %v973 = vadd.f32 %v972, %v834
        %v974 = vadd.f32 %v973, %v839
        %v975 = vadd.f32 %v974, %v842
        %v976 = vadd.f32 %v975, %v847
        %v977 = vadd.f32 %v976, %v850
        %v978 = vadd.f32 %v977, %v855
        %v979 = vadd.f32 %v978, %v858
        %v980 = vadd.f32 %v979, %v863
        %v981 = vadd.f32 %v980, %v866
        %v982 = vadd.f32 %v981, %v871
        %v983 = vadd.f32 %v982, %v874
        %v984 = vadd.f32 %v983, %v879
        %v985 = vadd.f32 %v984, %v882
        %v986 = vadd.f32 %v985, %v887
        %v987 = vadd.f32 %v986, %v890
        %v988 = vadd.f32 %v987, %v895
        %v989 = vadd.f32 %v988, %v898
        %v990 = vadd.f32 %v989, %v903
        %v991 = vadd.f32 %v990, %v906
        %v992 = vadd.f32 %v991, %v911
        %v993 = vadd.f32 %v992, %v914
        %v994 = vadd.f32 %v993, %v919
        %v995 = vadd.f32 %v994, %v922
        %v996 = vadd.f32 %v995, %v927
        %v997 = vadd.f32 %v996, %v930
        %v998 = vrot.slane %v997, 4
        %v999 = vadd.f32 %v997, %v998
        %v1000 = vrot.slane %v999, 2
        %v1001 = vadd.f32 %v999, %v1000
        %v1002 = vrot.slane %v1001, 1
        %v1003 = vadd.f32 %v1001, %v1002
        %v1004 = vrcp.pop 512.0
        %v1005 = vmul.f32 %v1003, %v1004
        %v1006 = vsub.f32 %v679, %v1005
        %v1007 = vsub.f32 %v682, %v1005
        %v1008 = vsub.f32 %v687, %v1005
        %v1009 = vsub.f32 %v690, %v1005
        %v1010 = vsub.f32 %v695, %v1005
        %v1011 = vsub.f32 %v698, %v1005
        %v1012 = vsub.f32 %v703, %v1005
        %v1013 = vsub.f32 %v706, %v1005
        %v1014 = vsub.f32 %v711, %v1005
        %v1015 = vsub.f32 %v714, %v1005
        %v1016 = vsub.f32 %v719, %v1005
        %v1017 = vsub.f32 %v722, %v1005
        %v1018 = vsub.f32 %v727, %v1005
        %v1019 = vsub.f32 %v730, %v1005
        %v1020 = vsub.f32 %v735, %v1005
        %v1021 = vsub.f32 %v738, %v1005
        %v1022 = vsub.f32 %v743, %v1005
        %v1023 = vsub.f32 %v746, %v1005
        %v1024 = vsub.f32 %v751, %v1005
        %v1025 = vsub.f32 %v754, %v1005
        %v1026 = vsub.f32 %v759, %v1005
        %v1027 = vsub.f32 %v762, %v1005
        %v1028 = vsub.f32 %v767, %v1005
        %v1029 = vsub.f32 %v770, %v1005
        %v1030 = vsub.f32 %v775, %v1005
        %v1031 = vsub.f32 %v778, %v1005
        %v1032 = vsub.f32 %v783, %v1005
        %v1033 = vsub.f32 %v786, %v1005
        %v1034 = vsub.f32 %v791, %v1005
        %v1035 = vsub.f32 %v794, %v1005
        %v1036 = vsub.f32 %v799, %v1005
        %v1037 = vsub.f32 %v802, %v1005
        %v1038 = vsub.f32 %v807, %v1005
        %v1039 = vsub.f32 %v810, %v1005
        %v1040 = vsub.f32 %v815, %v1005
        %v1041 = vsub.f32 %v818, %v1005
        %v1042 = vsub.f32 %v823, %v1005
        %v1043 = vsub.f32 %v826, %v1005
        %v1044 = vsub.f32 %v831, %v1005
        %v1045 = vsub.f32 %v834, %v1005
        %v1046 = vsub.f32 %v839, %v1005
        %v1047 = vsub.f32 %v842, %v1005
        %v1048 = vsub.f32 %v847, %v1005
        %v1049 = vsub.f32 %v850, %v1005
        %v1050 = vsub.f32 %v855, %v1005
        %v1051 = vsub.f32 %v858, %v1005
        %v1052 = vsub.f32 %v863, %v1005
        %v1053 = vsub.f32 %v866, %v1005
        %v1054 = vsub.f32 %v871, %v1005
        %v1055 = vsub.f32 %v874, %v1005
        %v1056 = vsub.f32 %v879, %v1005
        %v1057 = vsub.f32 %v882, %v1005
        %v1058 = vsub.f32 %v887, %v1005
        %v1059 = vsub.f32 %v890, %v1005
        %v1060 = vsub.f32 %v895, %v1005
        %v1061 = vsub.f32 %v898, %v1005
        %v1062 = vsub.f32 %v903, %v1005
        %v1063 = vsub.f32 %v906, %v1005
        %v1064 = vsub.f32 %v911, %v1005
        %v1065 = vsub.f32 %v914, %v1005
        %v1066 = vsub.f32 %v919, %v1005
        %v1067 = vsub.f32 %v922, %v1005
        %v1068 = vsub.f32 %v927, %v1005
        %v1069 = vsub.f32 %v930, %v1005
        %v1070 = vmul.f32 %v1006, %v1006
        %v1071 = vmul.f32 %v1007, %v1007
        %v1072 = vmul.f32 %v1008, %v1008
        %v1073 = vmul.f32 %v1009, %v1009
        %v1074 = vmul.f32 %v1010, %v1010
        %v1075 = vmul.f32 %v1011, %v1011
        %v1076 = vmul.f32 %v1012, %v1012
        %v1077 = vmul.f32 %v1013, %v1013
        %v1078 = vmul.f32 %v1014, %v1014
        %v1079 = vmul.f32 %v1015, %v1015
        %v1080 = vmul.f32 %v1016, %v1016
        %v1081 = vmul.f32 %v1017, %v1017
        %v1082 = vmul.f32 %v1018, %v1018
        %v1083 = vmul.f32 %v1019, %v1019
        %v1084 = vmul.f32 %v1020, %v1020
        %v1085 = vmul.f32 %v1021, %v1021
        %v1086 = vmul.f32 %v1022, %v1022
        %v1087 = vmul.f32 %v1023, %v1023
        %v1088 = vmul.f32 %v1024, %v1024
        %v1089 = vmul.f32 %v1025, %v1025
        %v1090 = vmul.f32 %v1026, %v1026
        %v1091 = vmul.f32 %v1027, %v1027
        %v1092 = vmul.f32 %v1028, %v1028
        %v1093 = vmul.f32 %v1029, %v1029
        %v1094 = vmul.f32 %v1030, %v1030
        %v1095 = vmul.f32 %v1031, %v1031
        %v1096 = vmul.f32 %v1032, %v1032
        %v1097 = vmul.f32 %v1033, %v1033
        %v1098 = vmul.f32 %v1034, %v1034
        %v1099 = vmul.f32 %v1035, %v1035
        %v1100 = vmul.f32 %v1036, %v1036
        %v1101 = vmul.f32 %v1037, %v1037
        %v1102 = vmul.f32 %v1038, %v1038
        %v1103 = vmul.f32 %v1039, %v1039
        %v1104 = vmul.f32 %v1040, %v1040
        %v1105 = vmul.f32 %v1041, %v1041
        %v1106 = vmul.f32 %v1042, %v1042
        %v1107 = vmul.f32 %v1043, %v1043
        %v1108 = vmul.f32 %v1044, %v1044
        %v1109 = vmul.f32 %v1045, %v1045
        %v1110 = vmul.f32 %v1046, %v1046
        %v1111 = vmul.f32 %v1047, %v1047
        %v1112 = vmul.f32 %v1048, %v1048
        %v1113 = vmul.f32 %v1049, %v1049
        %v1114 = vmul.f32 %v1050, %v1050
        %v1115 = vmul.f32 %v1051, %v1051
        %v1116 = vmul.f32 %v1052, %v1052
        %v1117 = vmul.f32 %v1053, %v1053
        %v1118 = vmul.f32 %v1054, %v1054
        %v1119 = vmul.f32 %v1055, %v1055
        %v1120 = vmul.f32 %v1056, %v1056
        %v1121 = vmul.f32 %v1057, %v1057
        %v1122 = vmul.f32 %v1058, %v1058
        %v1123 = vmul.f32 %v1059, %v1059
        %v1124 = vmul.f32 %v1060, %v1060
        %v1125 = vmul.f32 %v1061, %v1061
        %v1126 = vmul.f32 %v1062, %v1062
        %v1127 = vmul.f32 %v1063, %v1063
        %v1128 = vmul.f32 %v1064, %v1064
        %v1129 = vmul.f32 %v1065, %v1065
        %v1130 = vmul.f32 %v1066, %v1066
        %v1131 = vmul.f32 %v1067, %v1067
        %v1132 = vmul.f32 %v1068, %v1068
        %v1133 = vmul.f32 %v1069, %v1069
        %v1134 = vadd.f32 %v1070, %v1071
        %v1135 = vadd.f32 %v1134, %v1072
        %v1136 = vadd.f32 %v1135, %v1073
        %v1137 = vadd.f32 %v1136, %v1074
        %v1138 = vadd.f32 %v1137, %v1075
        %v1139 = vadd.f32 %v1138, %v1076
        %v1140 = vadd.f32 %v1139, %v1077
        %v1141 = vadd.f32 %v1140, %v1078
        %v1142 = vadd.f32 %v1141, %v1079
        %v1143 = vadd.f32 %v1142, %v1080
        %v1144 = vadd.f32 %v1143, %v1081
        %v1145 = vadd.f32 %v1144, %v1082
        %v1146 = vadd.f32 %v1145, %v1083
        %v1147 = vadd.f32 %v1146, %v1084
        %v1148 = vadd.f32 %v1147, %v1085
        %v1149 = vadd.f32 %v1148, %v1086
        %v1150 = vadd.f32 %v1149, %v1087
        %v1151 = vadd.f32 %v1150, %v1088
        %v1152 = vadd.f32 %v1151, %v1089
        %v1153 = vadd.f32 %v1152, %v1090
        %v1154 = vadd.f32 %v1153, %v1091
        %v1155 = vadd.f32 %v1154, %v1092
        %v1156 = vadd.f32 %v1155, %v1093
        %v1157 = vadd.f32 %v1156, %v1094
        %v1158 = vadd.f32 %v1157, %v1095
        %v1159 = vadd.f32 %v1158, %v1096
        %v1160 = vadd.f32 %v1159, %v1097
        %v1161 = vadd.f32 %v1160, %v1098
        %v1162 = vadd.f32 %v1161, %v1099
        %v1163 = vadd.f32 %v1162, %v1100
        %v1164 = vadd.f32 %v1163, %v1101
        %v1165 = vadd.f32 %v1164, %v1102
        %v1166 = vadd.f32 %v1165, %v1103
        %v1167 = vadd.f32 %v1166, %v1104
        %v1168 = vadd.f32 %v1167, %v1105
        %v1169 = vadd.f32 %v1168, %v1106
        %v1170 = vadd.f32 %v1169, %v1107
        %v1171 = vadd.f32 %v1170, %v1108
        %v1172 = vadd.f32 %v1171, %v1109
        %v1173 = vadd.f32 %v1172, %v1110
        %v1174 = vadd.f32 %v1173, %v1111
        %v1175 = vadd.f32 %v1174, %v1112
        %v1176 = vadd.f32 %v1175, %v1113
        %v1177 = vadd.f32 %v1176, %v1114
        %v1178 = vadd.f32 %v1177, %v1115
        %v1179 = vadd.f32 %v1178, %v1116
        %v1180 = vadd.f32 %v1179, %v1117
        %v1181 = vadd.f32 %v1180, %v1118
        %v1182 = vadd.f32 %v1181, %v1119
        %v1183 = vadd.f32 %v1182, %v1120
        %v1184 = vadd.f32 %v1183, %v1121
        %v1185 = vadd.f32 %v1184, %v1122
        %v1186 = vadd.f32 %v1185, %v1123
        %v1187 = vadd.f32 %v1186, %v1124
        %v1188 = vadd.f32 %v1187, %v1125
        %v1189 = vadd.f32 %v1188, %v1126
        %v1190 = vadd.f32 %v1189, %v1127
        %v1191 = vadd.f32 %v1190, %v1128
        %v1192 = vadd.f32 %v1191, %v1129
        %v1193 = vadd.f32 %v1192, %v1130
        %v1194 = vadd.f32 %v1193, %v1131
        %v1195 = vadd.f32 %v1194, %v1132
        %v1196 = vadd.f32 %v1195, %v1133
        %v1197 = vrot.slane %v1196, 4
        %v1198 = vadd.f32 %v1196, %v1197
        %v1199 = vrot.slane %v1198, 2
        %v1200 = vadd.f32 %v1198, %v1199
        %v1201 = vrot.slane %v1200, 1
        %v1202 = vadd.f32 %v1200, %v1201
        %v1203 = vmul.f32 %v1202, %v1004
        %v1204 = vadd.f32 %v1203, 1e-05
        %v1205 = vrsqrt.pop %v1204
        %v1206 = vmul.f32 %v933, %v1205
        %v1207 = vmul.f32 %v1005, %v1206
        %v1208 = vsub.f32 %v934, %v1207
        %v1210 = vlaneseq
        %v1211 = vshrl.u32 %v1210, 7
        %v1212 = vsub.s32 0, %v1211
        %v1213 = vrot.slane %v1206, %v1212
        %v1215 = vmul.f32 %v679, %v1213
        %v1216 = vmul.f32 %v682, %v1213
        %v1217 = vmul.f32 %v687, %v1213
        %v1218 = vmul.f32 %v690, %v1213
        %v1219 = vmul.f32 %v695, %v1213
        %v1220 = vmul.f32 %v698, %v1213
        %v1221 = vmul.f32 %v703, %v1213
        %v1222 = vmul.f32 %v706, %v1213
        %v1223 = vmul.f32 %v711, %v1213
        %v1224 = vmul.f32 %v714, %v1213
        %v1225 = vmul.f32 %v719, %v1213
        %v1226 = vmul.f32 %v722, %v1213
        %v1227 = vmul.f32 %v727, %v1213
        %v1228 = vmul.f32 %v730, %v1213
        %v1229 = vmul.f32 %v735, %v1213
        %v1230 = vmul.f32 %v738, %v1213
        %v1231 = vmul.f32 %v743, %v1213
        %v1232 = vmul.f32 %v746, %v1213
        %v1233 = vmul.f32 %v751, %v1213
        %v1234 = vmul.f32 %v754, %v1213
        %v1235 = vmul.f32 %v759, %v1213
        %v1236 = vmul.f32 %v762, %v1213
        %v1237 = vmul.f32 %v767, %v1213
        %v1238 = vmul.f32 %v770, %v1213
        %v1239 = vmul.f32 %v775, %v1213
        %v1240 = vmul.f32 %v778, %v1213
        %v1241 = vmul.f32 %v783, %v1213
        %v1242 = vmul.f32 %v786, %v1213
        %v1243 = vmul.f32 %v791, %v1213
        %v1244 = vmul.f32 %v794, %v1213
        %v1245 = vmul.f32 %v799, %v1213
        %v1246 = vmul.f32 %v802, %v1213
        %v1247 = vmul.f32 %v807, %v1213
        %v1248 = vmul.f32 %v810, %v1213
        %v1249 = vmul.f32 %v815, %v1213
        %v1250 = vmul.f32 %v818, %v1213
        %v1251 = vmul.f32 %v823, %v1213
        %v1252 = vmul.f32 %v826, %v1213
        %v1253 = vmul.f32 %v831, %v1213
        %v1254 = vmul.f32 %v834, %v1213
        %v1255 = vmul.f32 %v839, %v1213
        %v1256 = vmul.f32 %v842, %v1213
        %v1257 = vmul.f32 %v847, %v1213
        %v1258 = vmul.f32 %v850, %v1213
        %v1259 = vmul.f32 %v855, %v1213
        %v1260 = vmul.f32 %v858, %v1213
        %v1261 = vmul.f32 %v863, %v1213
        %v1262 = vmul.f32 %v866, %v1213
        %v1263 = vmul.f32 %v871, %v1213
        %v1264 = vmul.f32 %v874, %v1213
        %v1265 = vmul.f32 %v879, %v1213
        %v1266 = vmul.f32 %v882, %v1213
        %v1267 = vmul.f32 %v887, %v1213
        %v1268 = vmul.f32 %v890, %v1213
        %v1269 = vmul.f32 %v895, %v1213
        %v1270 = vmul.f32 %v898, %v1213
        %v1271 = vmul.f32 %v903, %v1213
        %v1272 = vmul.f32 %v906, %v1213
        %v1273 = vmul.f32 %v911, %v1213
        %v1274 = vmul.f32 %v914, %v1213
        %v1275 = vmul.f32 %v919, %v1213
        %v1276 = vmul.f32 %v922, %v1213
        %v1277 = vmul.f32 %v927, %v1213
        %v1278 = vmul.f32 %v930, %v1213
        %v1280 = vlaneseq
        %v1281 = vshrl.u32 %v1280, 7
        %v1282 = vsub.s32 0, %v1281
        %v1283 = vrot.slane %v1208, %v1282
        %v1285 = vadd.f32 %v1215, %v1283
        %v1286 = vadd.f32 %v1216, %v1283
        %v1287 = vadd.f32 %v1217, %v1283
        %v1288 = vadd.f32 %v1218, %v1283
        %v1289 = vadd.f32 %v1219, %v1283
        %v1290 = vadd.f32 %v1220, %v1283
        %v1291 = vadd.f32 %v1221, %v1283
        %v1292 = vadd.f32 %v1222, %v1283
        %v1293 = vadd.f32 %v1223, %v1283
        %v1294 = vadd.f32 %v1224, %v1283
        %v1295 = vadd.f32 %v1225, %v1283
        %v1296 = vadd.f32 %v1226, %v1283
        %v1297 = vadd.f32 %v1227, %v1283
        %v1298 = vadd.f32 %v1228, %v1283
        %v1299 = vadd.f32 %v1229, %v1283
        %v1300 = vadd.f32 %v1230, %v1283
        %v1301 = vadd.f32 %v1231, %v1283
        %v1302 = vadd.f32 %v1232, %v1283
        %v1303 = vadd.f32 %v1233, %v1283
        %v1304 = vadd.f32 %v1234, %v1283
        %v1305 = vadd.f32 %v1235, %v1283
        %v1306 = vadd.f32 %v1236, %v1283
        %v1307 = vadd.f32 %v1237, %v1283
        %v1308 = vadd.f32 %v1238, %v1283
        %v1309 = vadd.f32 %v1239, %v1283
        %v1310 = vadd.f32 %v1240, %v1283
        %v1311 = vadd.f32 %v1241, %v1283
        %v1312 = vadd.f32 %v1242, %v1283
        %v1313 = vadd.f32 %v1243, %v1283
        %v1314 = vadd.f32 %v1244, %v1283
        %v1315 = vadd.f32 %v1245, %v1283
        %v1316 = vadd.f32 %v1246, %v1283
        %v1317 = vadd.f32 %v1247, %v1283
        %v1318 = vadd.f32 %v1248, %v1283
        %v1319 = vadd.f32 %v1249, %v1283
        %v1320 = vadd.f32 %v1250, %v1283
        %v1321 = vadd.f32 %v1251, %v1283
        %v1322 = vadd.f32 %v1252, %v1283
        %v1323 = vadd.f32 %v1253, %v1283
        %v1324 = vadd.f32 %v1254, %v1283
        %v1325 = vadd.f32 %v1255, %v1283
        %v1326 = vadd.f32 %v1256, %v1283
        %v1327 = vadd.f32 %v1257, %v1283
        %v1328 = vadd.f32 %v1258, %v1283
        %v1329 = vadd.f32 %v1259, %v1283
        %v1330 = vadd.f32 %v1260, %v1283
        %v1331 = vadd.f32 %v1261, %v1283
        %v1332 = vadd.f32 %v1262, %v1283
        %v1333 = vadd.f32 %v1263, %v1283
        %v1334 = vadd.f32 %v1264, %v1283
        %v1335 = vadd.f32 %v1265, %v1283
        %v1336 = vadd.f32 %v1266, %v1283
        %v1337 = vadd.f32 %v1267, %v1283
        %v1338 = vadd.f32 %v1268, %v1283
        %v1339 = vadd.f32 %v1269, %v1283
        %v1340 = vadd.f32 %v1270, %v1283
        %v1341 = vadd.f32 %v1271, %v1283
        %v1342 = vadd.f32 %v1272, %v1283
        %v1343 = vadd.f32 %v1273, %v1283
        %v1344 = vadd.f32 %v1274, %v1283
        %v1345 = vadd.f32 %v1275, %v1283
        %v1346 = vadd.f32 %v1276, %v1283
        %v1347 = vadd.f32 %v1277, %v1283
        %v1348 = vadd.f32 %v1278, %v1283
        %v1349 = vmul.f32 %v1285, 0.15
        %v1350 = vmul.f32 %v1286, 0.15
        %v1351 = vmul.f32 %v1287, 0.15
        %v1352 = vmul.f32 %v1288, 0.15
        %v1353 = vmul.f32 %v1289, 0.15
        %v1354 = vmul.f32 %v1290, 0.15
        %v1355 = vmul.f32 %v1291, 0.15
        %v1356 = vmul.f32 %v1292, 0.15
        %v1357 = vmul.f32 %v1293, 0.15
        %v1358 = vmul.f32 %v1294, 0.15
        %v1359 = vmul.f32 %v1295, 0.15
        %v1360 = vmul.f32 %v1296, 0.15
        %v1361 = vmul.f32 %v1297, 0.15
        %v1362 = vmul.f32 %v1298, 0.15
        %v1363 = vmul.f32 %v1299, 0.15
        %v1364 = vmul.f32 %v1300, 0.15
        %v1365 = vmul.f32 %v1301, 0.15
        %v1366 = vmul.f32 %v1302, 0.15
        %v1367 = vmul.f32 %v1303, 0.15
        %v1368 = vmul.f32 %v1304, 0.15
        %v1369 = vmul.f32 %v1305, 0.15
        %v1370 = vmul.f32 %v1306, 0.15
        %v1371 = vmul.f32 %v1307, 0.15
        %v1372 = vmul.f32 %v1308, 0.15
        %v1373 = vmul.f32 %v1309, 0.15
        %v1374 = vmul.f32 %v1310, 0.15
        %v1375 = vmul.f32 %v1311, 0.15
        %v1376 = vmul.f32 %v1312, 0.15
        %v1377 = vmul.f32 %v1313, 0.15
        %v1378 = vmul.f32 %v1314, 0.15
        %v1379 = vmul.f32 %v1315, 0.15
        %v1380 = vmul.f32 %v1316, 0.15
        %v1381 = vmul.f32 %v1317, 0.15
        %v1382 = vmul.f32 %v1318, 0.15
        %v1383 = vmul.f32 %v1319, 0.15
        %v1384 = vmul.f32 %v1320, 0.15
        %v1385 = vmul.f32 %v1321, 0.15
        %v1386 = vmul.f32 %v1322, 0.15
        %v1387 = vmul.f32 %v1323, 0.15
        %v1388 = vmul.f32 %v1324, 0.15
        %v1389 = vmul.f32 %v1325, 0.15
        %v1390 = vmul.f32 %v1326, 0.15
        %v1391 = vmul.f32 %v1327, 0.15
        %v1392 = vmul.f32 %v1328, 0.15
        %v1393 = vmul.f32 %v1329, 0.15
        %v1394 = vmul.f32 %v1330, 0.15
        %v1395 = vmul.f32 %v1331, 0.15
        %v1396 = vmul.f32 %v1332, 0.15
        %v1397 = vmul.f32 %v1333, 0.15
        %v1398 = vmul.f32 %v1334, 0.15
        %v1399 = vmul.f32 %v1335, 0.15
        %v1400 = vmul.f32 %v1336, 0.15
        %v1401 = vmul.f32 %v1337, 0.15
        %v1402 = vmul.f32 %v1338, 0.15
        %v1403 = vmul.f32 %v1339, 0.15
        %v1404 = vmul.f32 %v1340, 0.15
        %v1405 = vmul.f32 %v1341, 0.15
        %v1406 = vmul.f32 %v1342, 0.15
        %v1407 = vmul.f32 %v1343, 0.15
        %v1408 = vmul.f32 %v1344, 0.15
        %v1409 = vmul.f32 %v1345, 0.15
        %v1410 = vmul.f32 %v1346, 0.15
        %v1411 = vmul.f32 %v1347, 0.15
        %v1412 = vmul.f32 %v1348, 0.15
        %v1413 = vmax.f32 %v1285, %v1349
        %v1414 = vmax.f32 %v1286, %v1350
        %v1415 = vmax.f32 %v1287, %v1351
        %v1416 = vmax.f32 %v1288, %v1352
        %v1417 = vmax.f32 %v1289, %v1353
        %v1418 = vmax.f32 %v1290, %v1354
        %v1419 = vmax.f32 %v1291, %v1355
        %v1420 = vmax.f32 %v1292, %v1356
        %v1421 = vmax.f32 %v1293, %v1357
        %v1422 = vmax.f32 %v1294, %v1358
        %v1423 = vmax.f32 %v1295, %v1359
        %v1424 = vmax.f32 %v1296, %v1360
        %v1425 = vmax.f32 %v1297, %v1361
        %v1426 = vmax.f32 %v1298, %v1362
        %v1427 = vmax.f32 %v1299, %v1363
        %v1428 = vmax.f32 %v1300, %v1364
        %v1429 = vmax.f32 %v1301, %v1365
        %v1430 = vmax.f32 %v1302, %v1366
        %v1431 = vmax.f32 %v1303, %v1367
        %v1432 = vmax.f32 %v1304, %v1368
        %v1433 = vmax.f32 %v1305, %v1369
        %v1434 = vmax.f32 %v1306, %v1370
        %v1435 = vmax.f32 %v1307, %v1371
        %v1436 = vmax.f32 %v1308, %v1372
        %v1437 = vmax.f32 %v1309, %v1373
        %v1438 = vmax.f32 %v1310, %v1374
        %v1439 = vmax.f32 %v1311, %v1375
        %v1440 = vmax.f32 %v1312, %v1376
        %v1441 = vmax.f32 %v1313, %v1377
        %v1442 = vmax.f32 %v1314, %v1378
        %v1443 = vmax.f32 %v1315, %v1379
        %v1444 = vmax.f32 %v1316, %v1380
        %v1445 = vmax.f32 %v1317, %v1381
        %v1446 = vmax.f32 %v1318, %v1382
        %v1447 = vmax.f32 %v1319, %v1383
        %v1448 = vmax.f32 %v1320, %v1384
        %v1449 = vmax.f32 %v1321, %v1385
        %v1450 = vmax.f32 %v1322, %v1386
        %v1451 = vmax.f32 %v1323, %v1387
        %v1452 = vmax.f32 %v1324, %v1388
        %v1453 = vmax.f32 %v1325, %v1389
        %v1454 = vmax.f32 %v1326, %v1390
        %v1455 = vmax.f32 %v1327, %v1391
        %v1456 = vmax.f32 %v1328, %v1392
        %v1457 = vmax.f32 %v1329, %v1393
        %v1458 = vmax.f32 %v1330, %v1394
        %v1459 = vmax.f32 %v1331, %v1395
        %v1460 = vmax.f32 %v1332, %v1396
        %v1461 = vmax.f32 %v1333, %v1397
        %v1462 = vmax.f32 %v1334, %v1398
        %v1463 = vmax.f32 %v1335, %v1399
        %v1464 = vmax.f32 %v1336, %v1400
        %v1465 = vmax.f32 %v1337, %v1401
        %v1466 = vmax.f32 %v1338, %v1402
        %v1467 = vmax.f32 %v1339, %v1403
        %v1468 = vmax.f32 %v1340, %v1404
        %v1469 = vmax.f32 %v1341, %v1405
        %v1470 = vmax.f32 %v1342, %v1406
        %v1471 = vmax.f32 %v1343, %v1407
        %v1472 = vmax.f32 %v1344, %v1408
        %v1473 = vmax.f32 %v1345, %v1409
        %v1474 = vmax.f32 %v1346, %v1410
        %v1475 = vmax.f32 %v1347, %v1411
        %v1476 = vmax.f32 %v1348, %v1412
        %v1477 = vpack.c.bf16 %v1414, %v1413
        %v1478 = vpack.c.bf16 %v1416, %v1415
        %v1479 = vpack.c.bf16 %v1418, %v1417
        %v1480 = vpack.c.bf16 %v1420, %v1419
        %v1481 = vpack.c.bf16 %v1422, %v1421
        %v1482 = vpack.c.bf16 %v1424, %v1423
        %v1483 = vpack.c.bf16 %v1426, %v1425
        %v1484 = vpack.c.bf16 %v1428, %v1427
        %v1485 = vpack.c.bf16 %v1430, %v1429
        %v1486 = vpack.c.bf16 %v1432, %v1431
        %v1487 = vpack.c.bf16 %v1434, %v1433
        %v1488 = vpack.c.bf16 %v1436, %v1435
        %v1489 = vpack.c.bf16 %v1438, %v1437
        %v1490 = vpack.c.bf16 %v1440, %v1439
        %v1491 = vpack.c.bf16 %v1442, %v1441
        %v1492 = vpack.c.bf16 %v1444, %v1443
        %v1493 = vpack.c.bf16 %v1446, %v1445
        %v1494 = vpack.c.bf16 %v1448, %v1447
        %v1495 = vpack.c.bf16 %v1450, %v1449
        %v1496 = vpack.c.bf16 %v1452, %v1451
        %v1497 = vpack.c.bf16 %v1454, %v1453
        %v1498 = vpack.c.bf16 %v1456, %v1455
        %v1499 = vpack.c.bf16 %v1458, %v1457
        %v1500 = vpack.c.bf16 %v1460, %v1459
        %v1501 = vpack.c.bf16 %v1462, %v1461
        %v1502 = vpack.c.bf16 %v1464, %v1463
        %v1503 = vpack.c.bf16 %v1466, %v1465
        %v1504 = vpack.c.bf16 %v1468, %v1467
        %v1505 = vpack.c.bf16 %v1470, %v1469
        %v1506 = vpack.c.bf16 %v1472, %v1471
        %v1507 = vpack.c.bf16 %v1474, %v1473
        %v1508 = vpack.c.bf16 %v1476, %v1475
        %v1541 = vunpack.c.l.b16 %v1477
        %v1542 = vunpack.c.h.b16 %v1477
        %v1543 = vunpack.c.l.b16 %v1478
        %v1544 = vunpack.c.h.b16 %v1478
        %v1545 = vunpack.c.l.b16 %v1479
        %v1546 = vunpack.c.h.b16 %v1479
        %v1547 = vunpack.c.l.b16 %v1480
        %v1548 = vunpack.c.h.b16 %v1480
        %v1549 = vunpack.c.l.b16 %v1481
        %v1550 = vunpack.c.h.b16 %v1481
        %v1551 = vunpack.c.l.b16 %v1482
        %v1552 = vunpack.c.h.b16 %v1482
        %v1553 = vunpack.c.l.b16 %v1483
        %v1554 = vunpack.c.h.b16 %v1483
        %v1555 = vunpack.c.l.b16 %v1484
        %v1556 = vunpack.c.h.b16 %v1484
        %v1557 = vunpack.c.l.b16 %v1485
        %v1558 = vunpack.c.h.b16 %v1485
        %v1559 = vunpack.c.l.b16 %v1486
        %v1560 = vunpack.c.h.b16 %v1486
        %v1561 = vunpack.c.l.b16 %v1487
        %v1562 = vunpack.c.h.b16 %v1487
        %v1563 = vunpack.c.l.b16 %v1488
        %v1564 = vunpack.c.h.b16 %v1488
        %v1565 = vunpack.c.l.b16 %v1489
        %v1566 = vunpack.c.h.b16 %v1489
        %v1567 = vunpack.c.l.b16 %v1490
        %v1568 = vunpack.c.h.b16 %v1490
        %v1569 = vunpack.c.l.b16 %v1491
        %v1570 = vunpack.c.h.b16 %v1491
        %v1571 = vunpack.c.l.b16 %v1492
        %v1572 = vunpack.c.h.b16 %v1492
        %v1573 = vunpack.c.l.b16 %v1493
        %v1574 = vunpack.c.h.b16 %v1493
        %v1575 = vunpack.c.l.b16 %v1494
        %v1576 = vunpack.c.h.b16 %v1494
        %v1577 = vunpack.c.l.b16 %v1495
        %v1578 = vunpack.c.h.b16 %v1495
        %v1579 = vunpack.c.l.b16 %v1496
        %v1580 = vunpack.c.h.b16 %v1496
        %v1581 = vunpack.c.l.b16 %v1497
        %v1582 = vunpack.c.h.b16 %v1497
        %v1583 = vunpack.c.l.b16 %v1498
        %v1584 = vunpack.c.h.b16 %v1498
        %v1585 = vunpack.c.l.b16 %v1499
        %v1586 = vunpack.c.h.b16 %v1499
        %v1587 = vunpack.c.l.b16 %v1500
        %v1588 = vunpack.c.h.b16 %v1500
        %v1589 = vunpack.c.l.b16 %v1501
        %v1590 = vunpack.c.h.b16 %v1501
        %v1591 = vunpack.c.l.b16 %v1502
        %v1592 = vunpack.c.h.b16 %v1502
        %v1593 = vunpack.c.l.b16 %v1503
        %v1594 = vunpack.c.h.b16 %v1503
        %v1595 = vunpack.c.l.b16 %v1504
        %v1596 = vunpack.c.h.b16 %v1504
        %v1597 = vunpack.c.l.b16 %v1505
        %v1598 = vunpack.c.h.b16 %v1505
        %v1599 = vunpack.c.l.b16 %v1506
        %v1600 = vunpack.c.h.b16 %v1506
        %v1601 = vunpack.c.l.b16 %v1507
        %v1602 = vunpack.c.h.b16 %v1507
        %v1603 = vunpack.c.l.b16 %v1508
        %v1604 = vunpack.c.h.b16 %v1508
        %v1605 = vpack.c.b16 %v1541, %v1541
        %v1606 = vpack.c.b16 %v1542, %v1542
        %v1607 = vpack.c.b16 %v1543, %v1543
        %v1608 = vpack.c.b16 %v1544, %v1544
        %v1609 = vpack.c.b16 %v1545, %v1545
        %v1610 = vpack.c.b16 %v1546, %v1546
        %v1611 = vpack.c.b16 %v1547, %v1547
        %v1612 = vpack.c.b16 %v1548, %v1548
        %v1613 = vpack.c.b16 %v1549, %v1549
        %v1614 = vpack.c.b16 %v1550, %v1550
        %v1615 = vpack.c.b16 %v1551, %v1551
        %v1616 = vpack.c.b16 %v1552, %v1552
        %v1617 = vpack.c.b16 %v1553, %v1553
        %v1618 = vpack.c.b16 %v1554, %v1554
        %v1619 = vpack.c.b16 %v1555, %v1555
        %v1620 = vpack.c.b16 %v1556, %v1556
        %v1621 = vpack.c.b16 %v1557, %v1557
        %v1622 = vpack.c.b16 %v1558, %v1558
        %v1623 = vpack.c.b16 %v1559, %v1559
        %v1624 = vpack.c.b16 %v1560, %v1560
        %v1625 = vpack.c.b16 %v1561, %v1561
        %v1626 = vpack.c.b16 %v1562, %v1562
        %v1627 = vpack.c.b16 %v1563, %v1563
        %v1628 = vpack.c.b16 %v1564, %v1564
        %v1629 = vpack.c.b16 %v1565, %v1565
        %v1630 = vpack.c.b16 %v1566, %v1566
        %v1631 = vpack.c.b16 %v1567, %v1567
        %v1632 = vpack.c.b16 %v1568, %v1568
        %v1633 = vpack.c.b16 %v1569, %v1569
        %v1634 = vpack.c.b16 %v1570, %v1570
        %v1635 = vpack.c.b16 %v1571, %v1571
        %v1636 = vpack.c.b16 %v1572, %v1572
        %v1637 = vpack.c.b16 %v1573, %v1573
        %v1638 = vpack.c.b16 %v1574, %v1574
        %v1639 = vpack.c.b16 %v1575, %v1575
        %v1640 = vpack.c.b16 %v1576, %v1576
        %v1641 = vpack.c.b16 %v1577, %v1577
        %v1642 = vpack.c.b16 %v1578, %v1578
        %v1643 = vpack.c.b16 %v1579, %v1579
        %v1644 = vpack.c.b16 %v1580, %v1580
        %v1645 = vpack.c.b16 %v1581, %v1581
        %v1646 = vpack.c.b16 %v1582, %v1582
        %v1647 = vpack.c.b16 %v1583, %v1583
        %v1648 = vpack.c.b16 %v1584, %v1584
        %v1649 = vpack.c.b16 %v1585, %v1585
        %v1650 = vpack.c.b16 %v1586, %v1586
        %v1651 = vpack.c.b16 %v1587, %v1587
        %v1652 = vpack.c.b16 %v1588, %v1588
        %v1653 = vpack.c.b16 %v1589, %v1589
        %v1654 = vpack.c.b16 %v1590, %v1590
        %v1655 = vpack.c.b16 %v1591, %v1591
        %v1656 = vpack.c.b16 %v1592, %v1592
        %v1657 = vpack.c.b16 %v1593, %v1593
        %v1658 = vpack.c.b16 %v1594, %v1594
        %v1659 = vpack.c.b16 %v1595, %v1595
        %v1660 = vpack.c.b16 %v1596, %v1596
        %v1661 = vpack.c.b16 %v1597, %v1597
        %v1662 = vpack.c.b16 %v1598, %v1598
        %v1663 = vpack.c.b16 %v1599, %v1599
        %v1664 = vpack.c.b16 %v1600, %v1600
        %v1665 = vpack.c.b16 %v1601, %v1601
        %v1666 = vpack.c.b16 %v1602, %v1602
        %v1667 = vpack.c.b16 %v1603, %v1603
        %v1668 = vpack.c.b16 %v1604, %v1604
        %1733 = vst [vmem:[%s316] sm:$0xf] %v1605
        %1734 = vst [vmem:[%s316 + $0x4] sm:$0xf] %v1606
        %1735 = vst [vmem:[%s316 + $0x8] sm:$0xf] %v1607
        %1736 = vst [vmem:[%s316 + $0xc] sm:$0xf] %v1608
        %1737 = vst [vmem:[%s316 + $0x10] sm:$0xf] %v1609
        %1738 = vst [vmem:[%s316 + $0x14] sm:$0xf] %v1610
        %1739 = vst [vmem:[%s316 + $0x18] sm:$0xf] %v1611
        %1740 = vst [vmem:[%s316 + $0x1c] sm:$0xf] %v1612
        %1741 = vst [vmem:[%s316 + $0x20] sm:$0xf] %v1613
        %1742 = vst [vmem:[%s316 + $0x24] sm:$0xf] %v1614
        %1743 = vst [vmem:[%s316 + $0x28] sm:$0xf] %v1615
        %1744 = vst [vmem:[%s316 + $0x2c] sm:$0xf] %v1616
        %1745 = vst [vmem:[%s316 + $0x30] sm:$0xf] %v1617
        %1746 = vst [vmem:[%s316 + $0x34] sm:$0xf] %v1618
        %1747 = vst [vmem:[%s316 + $0x38] sm:$0xf] %v1619
        %1748 = vst [vmem:[%s316 + $0x3c] sm:$0xf] %v1620
        %1749 = vst [vmem:[%s316 + $0x40] sm:$0xf] %v1621
        %1750 = vst [vmem:[%s316 + $0x44] sm:$0xf] %v1622
        %1751 = vst [vmem:[%s316 + $0x48] sm:$0xf] %v1623
        %1752 = vst [vmem:[%s316 + $0x4c] sm:$0xf] %v1624
        %1753 = vst [vmem:[%s316 + $0x50] sm:$0xf] %v1625
        %1754 = vst [vmem:[%s316 + $0x54] sm:$0xf] %v1626
        %1755 = vst [vmem:[%s316 + $0x58] sm:$0xf] %v1627
        %1756 = vst [vmem:[%s316 + $0x5c] sm:$0xf] %v1628
        %1757 = vst [vmem:[%s316 + $0x60] sm:$0xf] %v1629
        %1758 = vst [vmem:[%s316 + $0x64] sm:$0xf] %v1630
        %1759 = vst [vmem:[%s316 + $0x68] sm:$0xf] %v1631
        %1760 = vst [vmem:[%s316 + $0x6c] sm:$0xf] %v1632
        %1761 = vst [vmem:[%s316 + $0x70] sm:$0xf] %v1633
        %1762 = vst [vmem:[%s316 + $0x74] sm:$0xf] %v1634
        %1763 = vst [vmem:[%s316 + $0x78] sm:$0xf] %v1635
        %1764 = vst [vmem:[%s316 + $0x7c] sm:$0xf] %v1636
        %1765 = vst [vmem:[%s316 + $0x80] sm:$0xf] %v1637
        %1766 = vst [vmem:[%s316 + $0x84] sm:$0xf] %v1638
        %1767 = vst [vmem:[%s316 + $0x88] sm:$0xf] %v1639
        %1768 = vst [vmem:[%s316 + $0x8c] sm:$0xf] %v1640
        %1769 = vst [vmem:[%s316 + $0x90] sm:$0xf] %v1641
        %1770 = vst [vmem:[%s316 + $0x94] sm:$0xf] %v1642
        %1771 = vst [vmem:[%s316 + $0x98] sm:$0xf] %v1643
        %1772 = vst [vmem:[%s316 + $0x9c] sm:$0xf] %v1644
        %1773 = vst [vmem:[%s316 + $0xa0] sm:$0xf] %v1645
        %1774 = vst [vmem:[%s316 + $0xa4] sm:$0xf] %v1646
        %1775 = vst [vmem:[%s316 + $0xa8] sm:$0xf] %v1647
        %1776 = vst [vmem:[%s316 + $0xac] sm:$0xf] %v1648
        %1777 = vst [vmem:[%s316 + $0xb0] sm:$0xf] %v1649
        %1778 = vst [vmem:[%s316 + $0xb4] sm:$0xf] %v1650
        %1779 = vst [vmem:[%s316 + $0xb8] sm:$0xf] %v1651
        %1780 = vst [vmem:[%s316 + $0xbc] sm:$0xf] %v1652
        %1781 = vst [vmem:[%s316 + $0xc0] sm:$0xf] %v1653
        %1782 = vst [vmem:[%s316 + $0xc4] sm:$0xf] %v1654
        %1783 = vst [vmem:[%s316 + $0xc8] sm:$0xf] %v1655
        %1784 = vst [vmem:[%s316 + $0xcc] sm:$0xf] %v1656
        %1785 = vst [vmem:[%s316 + $0xd0] sm:$0xf] %v1657
        %1786 = vst [vmem:[%s316 + $0xd4] sm:$0xf] %v1658
        %1787 = vst [vmem:[%s316 + $0xd8] sm:$0xf] %v1659
        %1788 = vst [vmem:[%s316 + $0xdc] sm:$0xf] %v1660
        %1789 = vst [vmem:[%s316 + $0xe0] sm:$0xf] %v1661
        %1790 = vst [vmem:[%s316 + $0xe4] sm:$0xf] %v1662
        %1791 = vst [vmem:[%s316 + $0xe8] sm:$0xf] %v1663
        %1792 = vst [vmem:[%s316 + $0xec] sm:$0xf] %v1664
        %1793 = vst [vmem:[%s316 + $0xf0] sm:$0xf] %v1665
        %1794 = vst [vmem:[%s316 + $0xf4] sm:$0xf] %v1666
        %1795 = vst [vmem:[%s316 + $0xf8] sm:$0xf] %v1667
        %1796 = vst [vmem:[%s316 + $0xfc] sm:$0xf] %v1668
        %s1797 = sand.u32 %s122, 1
        %s1798 = sand.u32 %s122, 1
        %s1799 = smul.addr %s1798, 256
        %s1800 = scalar_lea.vmem [#allocation3], %s1799
        // Predicated region
        $region78: #{conv_residual_block.2} parent=72 // pred_check
          %p1801 = pneg %p132
        $region79: #{conv_residual_block.2} parent=72 // pred_check_branch
          %1803 = sbr.rel (%p1801) target = $region81
        $region80: #{conv_residual_block.2} parent=72 // pred_region
          %s1804 = smul.addr %s15, 4
          %s1805 = scalar_lea.vmem %s4, %s1804
          // Predicated region
          $region82: #{conv_residual_block.2} parent=80 // pred_check
            _
          $region83: #{conv_residual_block.2} parent=80 // pred_check_branch
            %1807 = sbr.rel (0) target = $region85
          $region84: #{conv_residual_block.2} parent=80 // pred_region
            // Predicated region
            $region86: #{conv_residual_block.2} parent=84 // pred_check
              _
            $region87: #{conv_residual_block.2} parent=84 // pred_check_branch
              %1809 = sbr.rel target = $region89
            $region88: #{conv_residual_block.2} parent=84 // pred_region
              // Predicated region
              $region101: #{conv_residual_block.2} parent=88 // pred_check
                _
              $region102: #{conv_residual_block.2} parent=88 // pred_check_branch
                %1951 = sbr.rel (0) target = $region104
              $region103: #{conv_residual_block.2} parent=88 // pred_region
                loop: start=0, step=1, limit=1
                $region105: #{conv_residual_block.2} parent=103 // loop_pre_header
                  _
                $region106: #{conv_residual_block.2} parent=103 // loop_header
                  %s1953 = sphi 0, %s1957
                  %p1954 = scmp.ge.s32.totalorder %s1953, 1
                  %s1958 = sphi %s1800, %s1800
                  %s1959 = sphi %s1805, %s1805
                $region107: #{conv_residual_block.2} parent=103 // loop_header_branch
                  %1956 = sbr.rel (%p1954) target = $region111
                $region108: #{conv_residual_block.2} parent=103 // loop_body
                  _
                $region109: #{conv_residual_block.2} parent=103 // loop_footer
                  %s1957 = sadd.s32 1, %s1953
                $region110: #{conv_residual_block.2} parent=103 // loop_footer_branch
                  %1952 = sbr.rel target = $region106
                $region111: #{conv_residual_block.2} parent=103 // loop_exit
                  _
                %s1961 = ssub.s32 16, 1
                loop: start=0, step=1, limit=1
                $region112: #{conv_residual_block.2} parent=103 // loop_pre_header
                  _
                $region113: #{conv_residual_block.2} parent=103 // loop_header
                  %s1963 = sphi 0, %s1967
                  %p1964 = scmp.ge.s32.totalorder %s1963, 1
                  %s1968 = sphi %s1800, %s1800
                  %s1969 = sphi %s1805, %s1805
                $region114: #{conv_residual_block.2} parent=103 // loop_header_branch
                  %1966 = sbr.rel (%p1964) target = $region118
                $region115: #{conv_residual_block.2} parent=103 // loop_body
                  %v1970 = vld [vmem:[%s1968] sm:%s1961]
                  %1971 = vst [vmem:[%s1969] sm:%s1961] %v1970
                  %v1972 = vld [vmem:[%s1968 + $0x4] sm:%s1961]
                  %1973 = vst [vmem:[%s1969 + $0x8] sm:%s1961] %v1972
                  %v1974 = vld [vmem:[%s1968 + $0x8] sm:%s1961]
                  %1975 = vst [vmem:[%s1969 + $0x10] sm:%s1961] %v1974
                  %v1976 = vld [vmem:[%s1968 + $0xc] sm:%s1961]
                  %1977 = vst [vmem:[%s1969 + $0x18] sm:%s1961] %v1976
                  %v1978 = vld [vmem:[%s1968 + $0x10] sm:%s1961]
                  %1979 = vst [vmem:[%s1969 + $0x20] sm:%s1961] %v1978
                  %v1980 = vld [vmem:[%s1968 + $0x14] sm:%s1961]
                  %1981 = vst [vmem:[%s1969 + $0x28] sm:%s1961] %v1980
                  %v1982 = vld [vmem:[%s1968 + $0x18] sm:%s1961]
                  %1983 = vst [vmem:[%s1969 + $0x30] sm:%s1961] %v1982
                  %v1984 = vld [vmem:[%s1968 + $0x1c] sm:%s1961]
                  %1985 = vst [vmem:[%s1969 + $0x38] sm:%s1961] %v1984
                  %v1986 = vld [vmem:[%s1968 + $0x20] sm:%s1961]
                  %1987 = vst [vmem:[%s1969 + $0x40] sm:%s1961] %v1986
                  %v1988 = vld [vmem:[%s1968 + $0x24] sm:%s1961]
                  %1989 = vst [vmem:[%s1969 + $0x48] sm:%s1961] %v1988
                  %v1990 = vld [vmem:[%s1968 + $0x28] sm:%s1961]
                  %1991 = vst [vmem:[%s1969 + $0x50] sm:%s1961] %v1990
                  %v1992 = vld [vmem:[%s1968 + $0x2c] sm:%s1961]
                  %1993 = vst [vmem:[%s1969 + $0x58] sm:%s1961] %v1992
                  %v1994 = vld [vmem:[%s1968 + $0x30] sm:%s1961]
                  %1995 = vst [vmem:[%s1969 + $0x60] sm:%s1961] %v1994
                  %v1996 = vld [vmem:[%s1968 + $0x34] sm:%s1961]
                  %1997 = vst [vmem:[%s1969 + $0x68] sm:%s1961] %v1996
                  %v1998 = vld [vmem:[%s1968 + $0x38] sm:%s1961]
                  %1999 = vst [vmem:[%s1969 + $0x70] sm:%s1961] %v1998
                  %v2000 = vld [vmem:[%s1968 + $0x3c] sm:%s1961]
                  %2001 = vst [vmem:[%s1969 + $0x78] sm:%s1961] %v2000
                  %v2002 = vld [vmem:[%s1968 + $0x40] sm:%s1961]
                  %2003 = vst [vmem:[%s1969 + $0x80] sm:%s1961] %v2002
                  %v2004 = vld [vmem:[%s1968 + $0x44] sm:%s1961]
                  %2005 = vst [vmem:[%s1969 + $0x88] sm:%s1961] %v2004
                  %v2006 = vld [vmem:[%s1968 + $0x48] sm:%s1961]
                  %2007 = vst [vmem:[%s1969 + $0x90] sm:%s1961] %v2006
                  %v2008 = vld [vmem:[%s1968 + $0x4c] sm:%s1961]
                  %2009 = vst [vmem:[%s1969 + $0x98] sm:%s1961] %v2008
                  %v2010 = vld [vmem:[%s1968 + $0x50] sm:%s1961]
                  %2011 = vst [vmem:[%s1969 + $0xa0] sm:%s1961] %v2010
                  %v2012 = vld [vmem:[%s1968 + $0x54] sm:%s1961]
                  %2013 = vst [vmem:[%s1969 + $0xa8] sm:%s1961] %v2012
                  %v2014 = vld [vmem:[%s1968 + $0x58] sm:%s1961]
                  %2015 = vst [vmem:[%s1969 + $0xb0] sm:%s1961] %v2014
                  %v2016 = vld [vmem:[%s1968 + $0x5c] sm:%s1961]
                  %2017 = vst [vmem:[%s1969 + $0xb8] sm:%s1961] %v2016
                  %v2018 = vld [vmem:[%s1968 + $0x60] sm:%s1961]
                  %2019 = vst [vmem:[%s1969 + $0xc0] sm:%s1961] %v2018
                  %v2020 = vld [vmem:[%s1968 + $0x64] sm:%s1961]
                  %2021 = vst [vmem:[%s1969 + $0xc8] sm:%s1961] %v2020
                  %v2022 = vld [vmem:[%s1968 + $0x68] sm:%s1961]
                  %2023 = vst [vmem:[%s1969 + $0xd0] sm:%s1961] %v2022
                  %v2024 = vld [vmem:[%s1968 + $0x6c] sm:%s1961]
                  %2025 = vst [vmem:[%s1969 + $0xd8] sm:%s1961] %v2024
                  %v2026 = vld [vmem:[%s1968 + $0x70] sm:%s1961]
                  %2027 = vst [vmem:[%s1969 + $0xe0] sm:%s1961] %v2026
                  %v2028 = vld [vmem:[%s1968 + $0x74] sm:%s1961]
                  %2029 = vst [vmem:[%s1969 + $0xe8] sm:%s1961] %v2028
                  %v2030 = vld [vmem:[%s1968 + $0x78] sm:%s1961]
                  %2031 = vst [vmem:[%s1969 + $0xf0] sm:%s1961] %v2030
                  %v2032 = vld [vmem:[%s1968 + $0x7c] sm:%s1961]
                  %2033 = vst [vmem:[%s1969 + $0xf8] sm:%s1961] %v2032
                  %v2034 = vld [vmem:[%s1968 + $0x80] sm:%s1961]
                  %2035 = vst [vmem:[%s1969 + $0x100] sm:%s1961] %v2034
                  %v2036 = vld [vmem:[%s1968 + $0x84] sm:%s1961]
                  %2037 = vst [vmem:[%s1969 + $0x108] sm:%s1961] %v2036
                  %v2038 = vld [vmem:[%s1968 + $0x88] sm:%s1961]
                  %2039 = vst [vmem:[%s1969 + $0x110] sm:%s1961] %v2038
                  %v2040 = vld [vmem:[%s1968 + $0x8c] sm:%s1961]
                  %2041 = vst [vmem:[%s1969 + $0x118] sm:%s1961] %v2040
                  %v2042 = vld [vmem:[%s1968 + $0x90] sm:%s1961]
                  %2043 = vst [vmem:[%s1969 + $0x120] sm:%s1961] %v2042
                  %v2044 = vld [vmem:[%s1968 + $0x94] sm:%s1961]
                  %2045 = vst [vmem:[%s1969 + $0x128] sm:%s1961] %v2044
                  %v2046 = vld [vmem:[%s1968 + $0x98] sm:%s1961]
                  %2047 = vst [vmem:[%s1969 + $0x130] sm:%s1961] %v2046
                  %v2048 = vld [vmem:[%s1968 + $0x9c] sm:%s1961]
                  %2049 = vst [vmem:[%s1969 + $0x138] sm:%s1961] %v2048
                  %v2050 = vld [vmem:[%s1968 + $0xa0] sm:%s1961]
                  %2051 = vst [vmem:[%s1969 + $0x140] sm:%s1961] %v2050
                  %v2052 = vld [vmem:[%s1968 + $0xa4] sm:%s1961]
                  %2053 = vst [vmem:[%s1969 + $0x148] sm:%s1961] %v2052
                  %v2054 = vld [vmem:[%s1968 + $0xa8] sm:%s1961]
                  %2055 = vst [vmem:[%s1969 + $0x150] sm:%s1961] %v2054
                  %v2056 = vld [vmem:[%s1968 + $0xac] sm:%s1961]
                  %2057 = vst [vmem:[%s1969 + $0x158] sm:%s1961] %v2056
                  %v2058 = vld [vmem:[%s1968 + $0xb0] sm:%s1961]
                  %2059 = vst [vmem:[%s1969 + $0x160] sm:%s1961] %v2058
                  %v2060 = vld [vmem:[%s1968 + $0xb4] sm:%s1961]
                  %2061 = vst [vmem:[%s1969 + $0x168] sm:%s1961] %v2060
                  %v2062 = vld [vmem:[%s1968 + $0xb8] sm:%s1961]
                  %2063 = vst [vmem:[%s1969 + $0x170] sm:%s1961] %v2062
                  %v2064 = vld [vmem:[%s1968 + $0xbc] sm:%s1961]
                  %2065 = vst [vmem:[%s1969 + $0x178] sm:%s1961] %v2064
                  %v2066 = vld [vmem:[%s1968 + $0xc0] sm:%s1961]
                  %2067 = vst [vmem:[%s1969 + $0x180] sm:%s1961] %v2066
                  %v2068 = vld [vmem:[%s1968 + $0xc4] sm:%s1961]
                  %2069 = vst [vmem:[%s1969 + $0x188] sm:%s1961] %v2068
                  %v2070 = vld [vmem:[%s1968 + $0xc8] sm:%s1961]
                  %2071 = vst [vmem:[%s1969 + $0x190] sm:%s1961] %v2070
                  %v2072 = vld [vmem:[%s1968 + $0xcc] sm:%s1961]
                  %2073 = vst [vmem:[%s1969 + $0x198] sm:%s1961] %v2072
                  %v2074 = vld [vmem:[%s1968 + $0xd0] sm:%s1961]
                  %2075 = vst [vmem:[%s1969 + $0x1a0] sm:%s1961] %v2074
                  %v2076 = vld [vmem:[%s1968 + $0xd4] sm:%s1961]
                  %2077 = vst [vmem:[%s1969 + $0x1a8] sm:%s1961] %v2076
                  %v2078 = vld [vmem:[%s1968 + $0xd8] sm:%s1961]
                  %2079 = vst [vmem:[%s1969 + $0x1b0] sm:%s1961] %v2078
                  %v2080 = vld [vmem:[%s1968 + $0xdc] sm:%s1961]
                  %2081 = vst [vmem:[%s1969 + $0x1b8] sm:%s1961] %v2080
                  %v2082 = vld [vmem:[%s1968 + $0xe0] sm:%s1961]
                  %2083 = vst [vmem:[%s1969 + $0x1c0] sm:%s1961] %v2082
                  %v2084 = vld [vmem:[%s1968 + $0xe4] sm:%s1961]
                  %2085 = vst [vmem:[%s1969 + $0x1c8] sm:%s1961] %v2084
                  %v2086 = vld [vmem:[%s1968 + $0xe8] sm:%s1961]
                  %2087 = vst [vmem:[%s1969 + $0x1d0] sm:%s1961] %v2086
                  %v2088 = vld [vmem:[%s1968 + $0xec] sm:%s1961]
                  %2089 = vst [vmem:[%s1969 + $0x1d8] sm:%s1961] %v2088
                  %v2090 = vld [vmem:[%s1968 + $0xf0] sm:%s1961]
                  %2091 = vst [vmem:[%s1969 + $0x1e0] sm:%s1961] %v2090
                  %v2092 = vld [vmem:[%s1968 + $0xf4] sm:%s1961]
                  %2093 = vst [vmem:[%s1969 + $0x1e8] sm:%s1961] %v2092
                  %v2094 = vld [vmem:[%s1968 + $0xf8] sm:%s1961]
                  %2095 = vst [vmem:[%s1969 + $0x1f0] sm:%s1961] %v2094
                  %v2096 = vld [vmem:[%s1968 + $0xfc] sm:%s1961]
                  %2097 = vst [vmem:[%s1969 + $0x1f8] sm:%s1961] %v2096
                $region116: #{conv_residual_block.2} parent=103 // loop_footer
                  %s1967 = sadd.s32 1, %s1963
                $region117: #{conv_residual_block.2} parent=103 // loop_footer_branch
                  %1962 = sbr.rel target = $region113
                $region118: #{conv_residual_block.2} parent=103 // loop_exit
                  _
              $region104: #{conv_residual_block.2} parent=88 // pred_fallthru
                _
            $region89: #{conv_residual_block.2} parent=84 // pred_fallthru
              _
            // Predicated region
            $region90: #{conv_residual_block.2} parent=84 // pred_check
              _
            $region91: #{conv_residual_block.2} parent=84 // pred_check_branch
              %1811 = sbr.rel (0) target = $region93
            $region92: #{conv_residual_block.2} parent=84 // pred_region
              %s1813 = ssub.s32 16, 1
              loop: start=0, step=1, limit=1
              $region94: #{conv_residual_block.2} parent=92 // loop_pre_header
                _
              $region95: #{conv_residual_block.2} parent=92 // loop_header
                %s1815 = sphi 0, %s1819
                %p1816 = scmp.ge.s32.totalorder %s1815, 1
                %s1820 = sphi %s1800, %s1800
                %s1821 = sphi %s1805, %s1805
              $region96: #{conv_residual_block.2} parent=92 // loop_header_branch
                %1818 = sbr.rel (%p1816) target = $region100
              $region97: #{conv_residual_block.2} parent=92 // loop_body
                %v1822 = vld [vmem:[%s1820] sm:%s1813]
                %1823 = vst [vmem:[%s1821] sm:%s1813] %v1822
                %v1824 = vld [vmem:[%s1820 + $0x4] sm:%s1813]
                %1825 = vst [vmem:[%s1821 + $0x8] sm:%s1813] %v1824
                %v1826 = vld [vmem:[%s1820 + $0x8] sm:%s1813]
                %1827 = vst [vmem:[%s1821 + $0x10] sm:%s1813] %v1826
                %v1828 = vld [vmem:[%s1820 + $0xc] sm:%s1813]
                %1829 = vst [vmem:[%s1821 + $0x18] sm:%s1813] %v1828
                %v1830 = vld [vmem:[%s1820 + $0x10] sm:%s1813]
                %1831 = vst [vmem:[%s1821 + $0x20] sm:%s1813] %v1830
                %v1832 = vld [vmem:[%s1820 + $0x14] sm:%s1813]
                %1833 = vst [vmem:[%s1821 + $0x28] sm:%s1813] %v1832
                %v1834 = vld [vmem:[%s1820 + $0x18] sm:%s1813]
                %1835 = vst [vmem:[%s1821 + $0x30] sm:%s1813] %v1834
                %v1836 = vld [vmem:[%s1820 + $0x1c] sm:%s1813]
                %1837 = vst [vmem:[%s1821 + $0x38] sm:%s1813] %v1836
                %v1838 = vld [vmem:[%s1820 + $0x20] sm:%s1813]
                %1839 = vst [vmem:[%s1821 + $0x40] sm:%s1813] %v1838
                %v1840 = vld [vmem:[%s1820 + $0x24] sm:%s1813]
                %1841 = vst [vmem:[%s1821 + $0x48] sm:%s1813] %v1840
                %v1842 = vld [vmem:[%s1820 + $0x28] sm:%s1813]
                %1843 = vst [vmem:[%s1821 + $0x50] sm:%s1813] %v1842
                %v1844 = vld [vmem:[%s1820 + $0x2c] sm:%s1813]
                %1845 = vst [vmem:[%s1821 + $0x58] sm:%s1813] %v1844
                %v1846 = vld [vmem:[%s1820 + $0x30] sm:%s1813]
                %1847 = vst [vmem:[%s1821 + $0x60] sm:%s1813] %v1846
                %v1848 = vld [vmem:[%s1820 + $0x34] sm:%s1813]
                %1849 = vst [vmem:[%s1821 + $0x68] sm:%s1813] %v1848
                %v1850 = vld [vmem:[%s1820 + $0x38] sm:%s1813]
                %1851 = vst [vmem:[%s1821 + $0x70] sm:%s1813] %v1850
                %v1852 = vld [vmem:[%s1820 + $0x3c] sm:%s1813]
                %1853 = vst [vmem:[%s1821 + $0x78] sm:%s1813] %v1852
                %v1854 = vld [vmem:[%s1820 + $0x40] sm:%s1813]
                %1855 = vst [vmem:[%s1821 + $0x80] sm:%s1813] %v1854
                %v1856 = vld [vmem:[%s1820 + $0x44] sm:%s1813]
                %1857 = vst [vmem:[%s1821 + $0x88] sm:%s1813] %v1856
                %v1858 = vld [vmem:[%s1820 + $0x48] sm:%s1813]
                %1859 = vst [vmem:[%s1821 + $0x90] sm:%s1813] %v1858
                %v1860 = vld [vmem:[%s1820 + $0x4c] sm:%s1813]
                %1861 = vst [vmem:[%s1821 + $0x98] sm:%s1813] %v1860
                %v1862 = vld [vmem:[%s1820 + $0x50] sm:%s1813]
                %1863 = vst [vmem:[%s1821 + $0xa0] sm:%s1813] %v1862
                %v1864 = vld [vmem:[%s1820 + $0x54] sm:%s1813]
                %1865 = vst [vmem:[%s1821 + $0xa8] sm:%s1813] %v1864
                %v1866 = vld [vmem:[%s1820 + $0x58] sm:%s1813]
                %1867 = vst [vmem:[%s1821 + $0xb0] sm:%s1813] %v1866
                %v1868 = vld [vmem:[%s1820 + $0x5c] sm:%s1813]
                %1869 = vst [vmem:[%s1821 + $0xb8] sm:%s1813] %v1868
                %v1870 = vld [vmem:[%s1820 + $0x60] sm:%s1813]
                %1871 = vst [vmem:[%s1821 + $0xc0] sm:%s1813] %v1870
                %v1872 = vld [vmem:[%s1820 + $0x64] sm:%s1813]
                %1873 = vst [vmem:[%s1821 + $0xc8] sm:%s1813] %v1872
                %v1874 = vld [vmem:[%s1820 + $0x68] sm:%s1813]
                %1875 = vst [vmem:[%s1821 + $0xd0] sm:%s1813] %v1874
                %v1876 = vld [vmem:[%s1820 + $0x6c] sm:%s1813]
                %1877 = vst [vmem:[%s1821 + $0xd8] sm:%s1813] %v1876
                %v1878 = vld [vmem:[%s1820 + $0x70] sm:%s1813]
                %1879 = vst [vmem:[%s1821 + $0xe0] sm:%s1813] %v1878
                %v1880 = vld [vmem:[%s1820 + $0x74] sm:%s1813]
                %1881 = vst [vmem:[%s1821 + $0xe8] sm:%s1813] %v1880
                %v1882 = vld [vmem:[%s1820 + $0x78] sm:%s1813]
                %1883 = vst [vmem:[%s1821 + $0xf0] sm:%s1813] %v1882
                %v1884 = vld [vmem:[%s1820 + $0x7c] sm:%s1813]
                %1885 = vst [vmem:[%s1821 + $0xf8] sm:%s1813] %v1884
                %v1886 = vld [vmem:[%s1820 + $0x80] sm:%s1813]
                %1887 = vst [vmem:[%s1821 + $0x100] sm:%s1813] %v1886
                %v1888 = vld [vmem:[%s1820 + $0x84] sm:%s1813]
                %1889 = vst [vmem:[%s1821 + $0x108] sm:%s1813] %v1888
                %v1890 = vld [vmem:[%s1820 + $0x88] sm:%s1813]
                %1891 = vst [vmem:[%s1821 + $0x110] sm:%s1813] %v1890
                %v1892 = vld [vmem:[%s1820 + $0x8c] sm:%s1813]
                %1893 = vst [vmem:[%s1821 + $0x118] sm:%s1813] %v1892
                %v1894 = vld [vmem:[%s1820 + $0x90] sm:%s1813]
                %1895 = vst [vmem:[%s1821 + $0x120] sm:%s1813] %v1894
                %v1896 = vld [vmem:[%s1820 + $0x94] sm:%s1813]
                %1897 = vst [vmem:[%s1821 + $0x128] sm:%s1813] %v1896
                %v1898 = vld [vmem:[%s1820 + $0x98] sm:%s1813]
                %1899 = vst [vmem:[%s1821 + $0x130] sm:%s1813] %v1898
                %v1900 = vld [vmem:[%s1820 + $0x9c] sm:%s1813]
                %1901 = vst [vmem:[%s1821 + $0x138] sm:%s1813] %v1900
                %v1902 = vld [vmem:[%s1820 + $0xa0] sm:%s1813]
                %1903 = vst [vmem:[%s1821 + $0x140] sm:%s1813] %v1902
                %v1904 = vld [vmem:[%s1820 + $0xa4] sm:%s1813]
                %1905 = vst [vmem:[%s1821 + $0x148] sm:%s1813] %v1904
                %v1906 = vld [vmem:[%s1820 + $0xa8] sm:%s1813]
                %1907 = vst [vmem:[%s1821 + $0x150] sm:%s1813] %v1906
                %v1908 = vld [vmem:[%s1820 + $0xac] sm:%s1813]
                %1909 = vst [vmem:[%s1821 + $0x158] sm:%s1813] %v1908
                %v1910 = vld [vmem:[%s1820 + $0xb0] sm:%s1813]
                %1911 = vst [vmem:[%s1821 + $0x160] sm:%s1813] %v1910
                %v1912 = vld [vmem:[%s1820 + $0xb4] sm:%s1813]
                %1913 = vst [vmem:[%s1821 + $0x168] sm:%s1813] %v1912
                %v1914 = vld [vmem:[%s1820 + $0xb8] sm:%s1813]
                %1915 = vst [vmem:[%s1821 + $0x170] sm:%s1813] %v1914
                %v1916 = vld [vmem:[%s1820 + $0xbc] sm:%s1813]
                %1917 = vst [vmem:[%s1821 + $0x178] sm:%s1813] %v1916
                %v1918 = vld [vmem:[%s1820 + $0xc0] sm:%s1813]
                %1919 = vst [vmem:[%s1821 + $0x180] sm:%s1813] %v1918
                %v1920 = vld [vmem:[%s1820 + $0xc4] sm:%s1813]
                %1921 = vst [vmem:[%s1821 + $0x188] sm:%s1813] %v1920
                %v1922 = vld [vmem:[%s1820 + $0xc8] sm:%s1813]
                %1923 = vst [vmem:[%s1821 + $0x190] sm:%s1813] %v1922
                %v1924 = vld [vmem:[%s1820 + $0xcc] sm:%s1813]
                %1925 = vst [vmem:[%s1821 + $0x198] sm:%s1813] %v1924
                %v1926 = vld [vmem:[%s1820 + $0xd0] sm:%s1813]
                %1927 = vst [vmem:[%s1821 + $0x1a0] sm:%s1813] %v1926
                %v1928 = vld [vmem:[%s1820 + $0xd4] sm:%s1813]
                %1929 = vst [vmem:[%s1821 + $0x1a8] sm:%s1813] %v1928
                %v1930 = vld [vmem:[%s1820 + $0xd8] sm:%s1813]
                %1931 = vst [vmem:[%s1821 + $0x1b0] sm:%s1813] %v1930
                %v1932 = vld [vmem:[%s1820 + $0xdc] sm:%s1813]
                %1933 = vst [vmem:[%s1821 + $0x1b8] sm:%s1813] %v1932
                %v1934 = vld [vmem:[%s1820 + $0xe0] sm:%s1813]
                %1935 = vst [vmem:[%s1821 + $0x1c0] sm:%s1813] %v1934
                %v1936 = vld [vmem:[%s1820 + $0xe4] sm:%s1813]
                %1937 = vst [vmem:[%s1821 + $0x1c8] sm:%s1813] %v1936
                %v1938 = vld [vmem:[%s1820 + $0xe8] sm:%s1813]
                %1939 = vst [vmem:[%s1821 + $0x1d0] sm:%s1813] %v1938
                %v1940 = vld [vmem:[%s1820 + $0xec] sm:%s1813]
                %1941 = vst [vmem:[%s1821 + $0x1d8] sm:%s1813] %v1940
                %v1942 = vld [vmem:[%s1820 + $0xf0] sm:%s1813]
                %1943 = vst [vmem:[%s1821 + $0x1e0] sm:%s1813] %v1942
                %v1944 = vld [vmem:[%s1820 + $0xf4] sm:%s1813]
                %1945 = vst [vmem:[%s1821 + $0x1e8] sm:%s1813] %v1944
                %v1946 = vld [vmem:[%s1820 + $0xf8] sm:%s1813]
                %1947 = vst [vmem:[%s1821 + $0x1f0] sm:%s1813] %v1946
                %v1948 = vld [vmem:[%s1820 + $0xfc] sm:%s1813]
                %1949 = vst [vmem:[%s1821 + $0x1f8] sm:%s1813] %v1948
              $region98: #{conv_residual_block.2} parent=92 // loop_footer
                %s1819 = sadd.s32 1, %s1815
              $region99: #{conv_residual_block.2} parent=92 // loop_footer_branch
                %1814 = sbr.rel target = $region95
              $region100: #{conv_residual_block.2} parent=92 // loop_exit
                _
            $region93: #{conv_residual_block.2} parent=84 // pred_fallthru
              _
          $region85: #{conv_residual_block.2} parent=80 // pred_fallthru
            _
          %2098 = vnop
        $region81: #{conv_residual_block.2} parent=72 // pred_fallthru
          _
      $region73: #{conv_residual_block.2} parent=5 // pred_fallthru
        _
      %p2099 = scmp.le.s32.totalorder 2, %s10
      // Predicated region
      $region119: #{conv_residual_block.2} parent=5 // pred_check
        %p2100 = pneg %p2099
      $region120: #{conv_residual_block.2} parent=5 // pred_check_branch
        %2102 = sbr.rel (%p2100) target = $region122
      $region121: #{conv_residual_block.2} parent=5 // pred_region
        %s2103 = ssub.s32 %s10, 2
        // Predicated region
        $region123: #{conv_residual_block.2} parent=121 // pred_check
          %p2104 = pneg %p138
        $region124: #{conv_residual_block.2} parent=121 // pred_check_branch
          %2106 = sbr.rel (%p2104) target = $region126
        $region125: #{conv_residual_block.2} parent=121 // pred_region
          %s2107 = sand.u32 %s123, 1
          %s2108 = sand.u32 %s123, 1
          %s2109 = smul.addr %s2108, 256
          %s2110 = scalar_lea.vmem [#allocation3], %s2109
        $region126: #{conv_residual_block.2} parent=121 // pred_fallthru
          _
      $region122: #{conv_residual_block.2} parent=5 // pred_fallthru
        _
    $region6: #{conv_residual_block.2} parent=1 // loop_footer
      %s14 = sadd.s32 1, %s10
    $region7: #{conv_residual_block.2} parent=1 // loop_footer_branch
      %9 = sbr.rel target = $region3
    $region8: #{conv_residual_block.2} parent=1 // loop_exit
      _

// kernel: conv_residual_block.3
$region0: #{conv_residual_block.3}
  #allocation0 [shape = 'u32[]', space=smem, size = 0x4, offset = 0x4, fixed_abs, tag = 'smem constant byte address 0x4 - core index']
  #allocation1 [shape = 'u32[144,128]{1,0:T(1,128)}', space=vmem, size = 0x12000, scoped, tag = 'internal scratch']
  %s0 = inlined_call_operand.vmem [shape: bf16[2,18,24,128], index: 0, kind: input, shape index: {}]
  %s1 = inlined_call_operand.vmem [shape: bf16[2,16,16,128], index: 1, kind: input, shape index: {}]
  %s2 = inlined_call_operand.vmem [shape: bf16[3,3,128,128], index: 2, kind: input, shape index: {}]
  %s3 = inlined_call_operand.vmem [shape: f32[1,128], index: 3, kind: input, shape index: {}]
  %s4 = inlined_call_operand.vmem [shape: f32[1,128], index: 4, kind: input, shape index: {}]
  %s5 = inlined_call_operand.vmem [shape: f32[2,16,16,128], index: 5, kind: output, shape index: {}]
  %s6 = sld [smem:[#allocation0]]
  $region30: #{conv_residual_block.3} parent=0
    _
  %s8 = ssub.s32 1, %s6
  %s9 = scalar_select 0, %s8, %s6
  // Predicated region
  $region2: #{conv_residual_block.3} parent=0 // pred_check
    _
  $region3: #{conv_residual_block.3} parent=0 // pred_check_branch
    %11 = sbr.rel (0) target = $region5
  $region4: #{conv_residual_block.3} parent=0 // pred_region
    _
  $region5: #{conv_residual_block.3} parent=0 // pred_fallthru
    _
  // Predicated region
  $region6: #{conv_residual_block.3} parent=0 // pred_check
    _
  $region7: #{conv_residual_block.3} parent=0 // pred_check_branch
    %13 = sbr.rel (0) target = $region9
  $region8: #{conv_residual_block.3} parent=0 // pred_region
    _
  $region9: #{conv_residual_block.3} parent=0 // pred_fallthru
    _
  // Predicated region
  $region10: #{conv_residual_block.3} parent=0 // pred_check
    _
  $region11: #{conv_residual_block.3} parent=0 // pred_check_branch
    %15 = sbr.rel (0) target = $region13
  $region12: #{conv_residual_block.3} parent=0 // pred_region
    _
  $region13: #{conv_residual_block.3} parent=0 // pred_fallthru
    _
  // Predicated region
  $region14: #{conv_residual_block.3} parent=0 // pred_check
    _
  $region15: #{conv_residual_block.3} parent=0 // pred_check_branch
    %17 = sbr.rel (0) target = $region17
  $region16: #{conv_residual_block.3} parent=0 // pred_region
    _
  $region17: #{conv_residual_block.3} parent=0 // pred_fallthru
    _
  // Predicated region
  $region18: #{conv_residual_block.3} parent=0 // pred_check
    _
  $region19: #{conv_residual_block.3} parent=0 // pred_check_branch
    %19 = sbr.rel (0) target = $region21
  $region20: #{conv_residual_block.3} parent=0 // pred_region
    _
  $region21: #{conv_residual_block.3} parent=0 // pred_fallthru
    _
  %v21 = vld [vmem:[%s0] sm:$0xf]
  %v22 = vld [vmem:[%s0 + $0x4] sm:$0xf]
  %v23 = vld [vmem:[%s0 + $0x8] sm:$0xf]
  %v24 = vld [vmem:[%s0 + $0xc] sm:$0xf]
  %v25 = vld [vmem:[%s0 + $0x10] sm:$0xf]
  %v26 = vld [vmem:[%s0 + $0x14] sm:$0xf]
  %v27 = vld [vmem:[%s0 + $0x18] sm:$0xf]
  %v28 = vld [vmem:[%s0 + $0x1c] sm:$0xf]
  %v29 = vld [vmem:[%s0 + $0x20] sm:$0xf]
  %v30 = vld [vmem:[%s0 + $0x24] sm:$0xf]
  %v31 = vld [vmem:[%s0 + $0x28] sm:$0xf]
  %v32 = vld [vmem:[%s0 + $0x2c] sm:$0xf]
  %v33 = vld [vmem:[%s0 + $0x30] sm:$0xf]
  %v34 = vld [vmem:[%s0 + $0x34] sm:$0xf]
  %v35 = vld [vmem:[%s0 + $0x38] sm:$0xf]
  %v36 = vld [vmem:[%s0 + $0x3c] sm:$0xf]
  %v37 = vld [vmem:[%s0 + $0x40] sm:$0xf]
  %v38 = vld [vmem:[%s0 + $0x44] sm:$0xf]
  %v39 = vld [vmem:[%s0 + $0x48] sm:$0xf]
  %v40 = vld [vmem:[%s0 + $0x4c] sm:$0xf]
  %v41 = vld [vmem:[%s0 + $0x50] sm:$0xf]
  %v42 = vld [vmem:[%s0 + $0x54] sm:$0xf]
  %v43 = vld [vmem:[%s0 + $0x58] sm:$0xf]
  %v44 = vld [vmem:[%s0 + $0x5c] sm:$0xf]
  %v45 = vld [vmem:[%s0 + $0x60] sm:$0xf]
  %v46 = vld [vmem:[%s0 + $0x64] sm:$0xf]
  %v47 = vld [vmem:[%s0 + $0x68] sm:$0xf]
  %v48 = vld [vmem:[%s0 + $0x6c] sm:$0xf]
  %v49 = vld [vmem:[%s0 + $0x70] sm:$0xf]
  %v50 = vld [vmem:[%s0 + $0x74] sm:$0xf]
  %v51 = vld [vmem:[%s0 + $0x78] sm:$0xf]
  %v52 = vld [vmem:[%s0 + $0x7c] sm:$0xf]
  %v53 = vld [vmem:[%s0 + $0x80] sm:$0xf]
  %v54 = vld [vmem:[%s0 + $0x84] sm:$0xf]
  %v55 = vld [vmem:[%s0 + $0x88] sm:$0xf]
  %v56 = vld [vmem:[%s0 + $0x8c] sm:$0xf]
  %v57 = vld [vmem:[%s0 + $0x90] sm:$0xf]
  %v58 = vld [vmem:[%s0 + $0x94] sm:$0xf]
  %v59 = vld [vmem:[%s0 + $0x98] sm:$0xf]
  %v60 = vld [vmem:[%s0 + $0x9c] sm:$0xf]
  %v61 = vld [vmem:[%s0 + $0xa0] sm:$0xf]
  %v62 = vld [vmem:[%s0 + $0xa4] sm:$0xf]
  %v63 = vld [vmem:[%s0 + $0xa8] sm:$0xf]
  %v64 = vld [vmem:[%s0 + $0xac] sm:$0xf]
  %v65 = vld [vmem:[%s0 + $0xb0] sm:$0xf]
  %v66 = vld [vmem:[%s0 + $0xb4] sm:$0xf]
  %v67 = vld [vmem:[%s0 + $0xb8] sm:$0xf]
  %v68 = vld [vmem:[%s0 + $0xbc] sm:$0xf]
  %v69 = vld [vmem:[%s0 + $0xc0] sm:$0xf]
  %v70 = vld [vmem:[%s0 + $0xc4] sm:$0xf]
  %v71 = vld [vmem:[%s0 + $0xc8] sm:$0xf]
  %v72 = vld [vmem:[%s0 + $0xcc] sm:$0xf]
  %v73 = vld [vmem:[%s0 + $0xd0] sm:$0xf]
  %v74 = vld [vmem:[%s0 + $0xd4] sm:$0xf]
  %v75 = vld [vmem:[%s0 + $0xd8] sm:$0xf]
  %v76 = vld [vmem:[%s0 + $0xdc] sm:$0xf]
  %v77 = vld [vmem:[%s0 + $0xe0] sm:$0xf]
  %v78 = vld [vmem:[%s0 + $0xe4] sm:$0xf]
  %v79 = vld [vmem:[%s0 + $0xe8] sm:$0xf]
  %v80 = vld [vmem:[%s0 + $0xec] sm:$0xf]
  %v81 = vld [vmem:[%s0 + $0xf0] sm:$0xf]
  %v82 = vld [vmem:[%s0 + $0xf4] sm:$0xf]
  %v83 = vld [vmem:[%s0 + $0xf8] sm:$0xf]
  %v84 = vld [vmem:[%s0 + $0xfc] sm:$0xf]
  %v85 = vld [vmem:[%s0 + $0x100] sm:$0xf]
  %v86 = vld [vmem:[%s0 + $0x104] sm:$0xf]
  %v87 = vld [vmem:[%s0 + $0x108] sm:$0xf]
  %v88 = vld [vmem:[%s0 + $0x10c] sm:$0xf]
  %v89 = vld [vmem:[%s0 + $0x110] sm:$0xf]
  %v90 = vld [vmem:[%s0 + $0x114] sm:$0xf]
  %v91 = vld [vmem:[%s0 + $0x118] sm:$0xf]
  %v92 = vld [vmem:[%s0 + $0x11c] sm:$0xf]
  %v93 = vld [vmem:[%s0 + $0x120] sm:$0xf]
  %v94 = vld [vmem:[%s0 + $0x124] sm:$0xf]
  %v95 = vld [vmem:[%s0 + $0x128] sm:$0xf]
  %v96 = vld [vmem:[%s0 + $0x12c] sm:$0xf]
  %v97 = vld [vmem:[%s0 + $0x130] sm:$0xf]
  %v98 = vld [vmem:[%s0 + $0x134] sm:$0xf]
  %v99 = vld [vmem:[%s0 + $0x138] sm:$0xf]
  %v100 = vld [vmem:[%s0 + $0x13c] sm:$0xf]
  %v101 = vld [vmem:[%s0 + $0x140] sm:$0xf]
  %v102 = vld [vmem:[%s0 + $0x144] sm:$0xf]
  %v103 = vld [vmem:[%s0 + $0x148] sm:$0xf]
  %v104 = vld [vmem:[%s0 + $0x14c] sm:$0xf]
  %v105 = vld [vmem:[%s0 + $0x150] sm:$0xf]
  %v106 = vld [vmem:[%s0 + $0x154] sm:$0xf]
  %v107 = vld [vmem:[%s0 + $0x158] sm:$0xf]
  %v108 = vld [vmem:[%s0 + $0x15c] sm:$0xf]
  %v109 = vld [vmem:[%s0 + $0x160] sm:$0xf]
  %v110 = vld [vmem:[%s0 + $0x164] sm:$0xf]
  %v111 = vld [vmem:[%s0 + $0x168] sm:$0xf]
  %v112 = vld [vmem:[%s0 + $0x16c] sm:$0xf]
  %v113 = vld [vmem:[%s0 + $0x170] sm:$0xf]
  %v114 = vld [vmem:[%s0 + $0x174] sm:$0xf]
  %v115 = vld [vmem:[%s0 + $0x178] sm:$0xf]
  %v116 = vld [vmem:[%s0 + $0x17c] sm:$0xf]
  %v117 = vld [vmem:[%s0 + $0x180] sm:$0xf]
  %v118 = vld [vmem:[%s0 + $0x184] sm:$0xf]
  %v119 = vld [vmem:[%s0 + $0x188] sm:$0xf]
  %v120 = vld [vmem:[%s0 + $0x18c] sm:$0xf]
  %v121 = vld [vmem:[%s0 + $0x190] sm:$0xf]
  %v122 = vld [vmem:[%s0 + $0x194] sm:$0xf]
  %v123 = vld [vmem:[%s0 + $0x198] sm:$0xf]
  %v124 = vld [vmem:[%s0 + $0x19c] sm:$0xf]
  %v125 = vld [vmem:[%s0 + $0x1a0] sm:$0xf]
  %v126 = vld [vmem:[%s0 + $0x1a4] sm:$0xf]
  %v127 = vld [vmem:[%s0 + $0x1a8] sm:$0xf]
  %v128 = vld [vmem:[%s0 + $0x1ac] sm:$0xf]
  %v129 = vld [vmem:[%s2] sm:$0xf]
  %v130 = vld [vmem:[%s2 + $0x4] sm:$0xf]
  %v131 = vld [vmem:[%s2 + $0x8] sm:$0xf]
  %v132 = vld [vmem:[%s2 + $0xc] sm:$0xf]
  %v133 = vld [vmem:[%s2 + $0x10] sm:$0xf]
  %v134 = vld [vmem:[%s2 + $0x14] sm:$0xf]
  %v135 = vld [vmem:[%s2 + $0x18] sm:$0xf]
  %v136 = vld [vmem:[%s2 + $0x1c] sm:$0xf]
  %v137 = vld [vmem:[%s2 + $0x20] sm:$0xf]
  %v138 = vld [vmem:[%s2 + $0x24] sm:$0xf]
  %v139 = vld [vmem:[%s2 + $0x28] sm:$0xf]
  %v140 = vld [vmem:[%s2 + $0x2c] sm:$0xf]
  %v141 = vld [vmem:[%s2 + $0x30] sm:$0xf]
  %v142 = vld [vmem:[%s2 + $0x34] sm:$0xf]
  %v143 = vld [vmem:[%s2 + $0x38] sm:$0xf]
  %v144 = vld [vmem:[%s2 + $0x3c] sm:$0xf]
  %v145 = vld [vmem:[%s2 + $0x40] sm:$0xf]
  %v146 = vld [vmem:[%s2 + $0x44] sm:$0xf]
  %v147 = vld [vmem:[%s2 + $0x48] sm:$0xf]
  %v148 = vld [vmem:[%s2 + $0x4c] sm:$0xf]
  %v149 = vld [vmem:[%s2 + $0x50] sm:$0xf]
  %v150 = vld [vmem:[%s2 + $0x54] sm:$0xf]
  %v151 = vld [vmem:[%s2 + $0x58] sm:$0xf]
  %v152 = vld [vmem:[%s2 + $0x5c] sm:$0xf]
  %v153 = vld [vmem:[%s2 + $0x60] sm:$0xf]
  %v154 = vld [vmem:[%s2 + $0x64] sm:$0xf]
  %v155 = vld [vmem:[%s2 + $0x68] sm:$0xf]
  %v156 = vld [vmem:[%s2 + $0x6c] sm:$0xf]
  %v157 = vld [vmem:[%s2 + $0x70] sm:$0xf]
  %v158 = vld [vmem:[%s2 + $0x74] sm:$0xf]
  %v159 = vld [vmem:[%s2 + $0x78] sm:$0xf]
  %v160 = vld [vmem:[%s2 + $0x7c] sm:$0xf]
  %v161 = vld [vmem:[%s2 + $0x80] sm:$0xf]
  %v162 = vld [vmem:[%s2 + $0x84] sm:$0xf]
  %v163 = vld [vmem:[%s2 + $0x88] sm:$0xf]
  %v164 = vld [vmem:[%s2 + $0x8c] sm:$0xf]
  %v165 = vld [vmem:[%s2 + $0x90] sm:$0xf]
  %v166 = vld [vmem:[%s2 + $0x94] sm:$0xf]
  %v167 = vld [vmem:[%s2 + $0x98] sm:$0xf]
  %v168 = vld [vmem:[%s2 + $0x9c] sm:$0xf]
  %v169 = vld [vmem:[%s2 + $0xa0] sm:$0xf]
  %v170 = vld [vmem:[%s2 + $0xa4] sm:$0xf]
  %v171 = vld [vmem:[%s2 + $0xa8] sm:$0xf]
  %v172 = vld [vmem:[%s2 + $0xac] sm:$0xf]
  %v173 = vld [vmem:[%s2 + $0xb0] sm:$0xf]
  %v174 = vld [vmem:[%s2 + $0xb4] sm:$0xf]
  %v175 = vld [vmem:[%s2 + $0xb8] sm:$0xf]
  %v176 = vld [vmem:[%s2 + $0xbc] sm:$0xf]
  %v177 = vld [vmem:[%s2 + $0xc0] sm:$0xf]
  %v178 = vld [vmem:[%s2 + $0xc4] sm:$0xf]
  %v179 = vld [vmem:[%s2 + $0xc8] sm:$0xf]
  %v180 = vld [vmem:[%s2 + $0xcc] sm:$0xf]
  %v181 = vld [vmem:[%s2 + $0xd0] sm:$0xf]
  %v182 = vld [vmem:[%s2 + $0xd4] sm:$0xf]
  %v183 = vld [vmem:[%s2 + $0xd8] sm:$0xf]
  %v184 = vld [vmem:[%s2 + $0xdc] sm:$0xf]
  %v185 = vld [vmem:[%s2 + $0xe0] sm:$0xf]
  %v186 = vld [vmem:[%s2 + $0xe4] sm:$0xf]
  %v187 = vld [vmem:[%s2 + $0xe8] sm:$0xf]
  %v188 = vld [vmem:[%s2 + $0xec] sm:$0xf]
  %v189 = vld [vmem:[%s2 + $0xf0] sm:$0xf]
  %v190 = vld [vmem:[%s2 + $0xf4] sm:$0xf]
  %v191 = vld [vmem:[%s2 + $0xf8] sm:$0xf]
  %v192 = vld [vmem:[%s2 + $0xfc] sm:$0xf]
  %v193 = vld [vmem:[%s2 + $0x100] sm:$0xf]
  %v194 = vld [vmem:[%s2 + $0x104] sm:$0xf]
  %v195 = vld [vmem:[%s2 + $0x108] sm:$0xf]
  %v196 = vld [vmem:[%s2 + $0x10c] sm:$0xf]
  %v197 = vld [vmem:[%s2 + $0x110] sm:$0xf]
  %v198 = vld [vmem:[%s2 + $0x114] sm:$0xf]
  %v199 = vld [vmem:[%s2 + $0x118] sm:$0xf]
  %v200 = vld [vmem:[%s2 + $0x11c] sm:$0xf]
  %v201 = vld [vmem:[%s2 + $0x120] sm:$0xf]
  %v202 = vld [vmem:[%s2 + $0x124] sm:$0xf]
  %v203 = vld [vmem:[%s2 + $0x128] sm:$0xf]
  %v204 = vld [vmem:[%s2 + $0x12c] sm:$0xf]
  %v205 = vld [vmem:[%s2 + $0x130] sm:$0xf]
  %v206 = vld [vmem:[%s2 + $0x134] sm:$0xf]
  %v207 = vld [vmem:[%s2 + $0x138] sm:$0xf]
  %v208 = vld [vmem:[%s2 + $0x13c] sm:$0xf]
  %v209 = vld [vmem:[%s2 + $0x140] sm:$0xf]
  %v210 = vld [vmem:[%s2 + $0x144] sm:$0xf]
  %v211 = vld [vmem:[%s2 + $0x148] sm:$0xf]
  %v212 = vld [vmem:[%s2 + $0x14c] sm:$0xf]
  %v213 = vld [vmem:[%s2 + $0x150] sm:$0xf]
  %v214 = vld [vmem:[%s2 + $0x154] sm:$0xf]
  %v215 = vld [vmem:[%s2 + $0x158] sm:$0xf]
  %v216 = vld [vmem:[%s2 + $0x15c] sm:$0xf]
  %v217 = vld [vmem:[%s2 + $0x160] sm:$0xf]
  %v218 = vld [vmem:[%s2 + $0x164] sm:$0xf]
  %v219 = vld [vmem:[%s2 + $0x168] sm:$0xf]
  %v220 = vld [vmem:[%s2 + $0x16c] sm:$0xf]
  %v221 = vld [vmem:[%s2 + $0x170] sm:$0xf]
  %v222 = vld [vmem:[%s2 + $0x174] sm:$0xf]
  %v223 = vld [vmem:[%s2 + $0x178] sm:$0xf]
  %v224 = vld [vmem:[%s2 + $0x17c] sm:$0xf]
  %v225 = vld [vmem:[%s2 + $0x180] sm:$0xf]
  %v226 = vld [vmem:[%s2 + $0x184] sm:$0xf]
  %v227 = vld [vmem:[%s2 + $0x188] sm:$0xf]
  %v228 = vld [vmem:[%s2 + $0x18c] sm:$0xf]
  %v229 = vld [vmem:[%s2 + $0x190] sm:$0xf]
  %v230 = vld [vmem:[%s2 + $0x194] sm:$0xf]
  %v231 = vld [vmem:[%s2 + $0x198] sm:$0xf]
  %v232 = vld [vmem:[%s2 + $0x19c] sm:$0xf]
  %v233 = vld [vmem:[%s2 + $0x1a0] sm:$0xf]
  %v234 = vld [vmem:[%s2 + $0x1a4] sm:$0xf]
  %v235 = vld [vmem:[%s2 + $0x1a8] sm:$0xf]
  %v236 = vld [vmem:[%s2 + $0x1ac] sm:$0xf]
  %v237 = vld [vmem:[%s2 + $0x1b0] sm:$0xf]
  %v238 = vld [vmem:[%s2 + $0x1b4] sm:$0xf]
  %v239 = vld [vmem:[%s2 + $0x1b8] sm:$0xf]
  %v240 = vld [vmem:[%s2 + $0x1bc] sm:$0xf]
  %v241 = vld [vmem:[%s2 + $0x1c0] sm:$0xf]
  %v242 = vld [vmem:[%s2 + $0x1c4] sm:$0xf]
  %v243 = vld [vmem:[%s2 + $0x1c8] sm:$0xf]
  %v244 = vld [vmem:[%s2 + $0x1cc] sm:$0xf]
  %v245 = vld [vmem:[%s2 + $0x1d0] sm:$0xf]
  %v246 = vld [vmem:[%s2 + $0x1d4] sm:$0xf]
  %v247 = vld [vmem:[%s2 + $0x1d8] sm:$0xf]
  %v248 = vld [vmem:[%s2 + $0x1dc] sm:$0xf]
  %v249 = vld [vmem:[%s2 + $0x1e0] sm:$0xf]
  %v250 = vld [vmem:[%s2 + $0x1e4] sm:$0xf]
  %v251 = vld [vmem:[%s2 + $0x1e8] sm:$0xf]
  %v252 = vld [vmem:[%s2 + $0x1ec] sm:$0xf]
  %v253 = vld [vmem:[%s2 + $0x1f0] sm:$0xf]
  %v254 = vld [vmem:[%s2 + $0x1f4] sm:$0xf]
  %v255 = vld [vmem:[%s2 + $0x1f8] sm:$0xf]
  %v256 = vld [vmem:[%s2 + $0x1fc] sm:$0xf]
  %v257 = vld [vmem:[%s2 + $0x200] sm:$0xf]
  %v258 = vld [vmem:[%s2 + $0x204] sm:$0xf]
  %v259 = vld [vmem:[%s2 + $0x208] sm:$0xf]
  %v260 = vld [vmem:[%s2 + $0x20c] sm:$0xf]
  %v261 = vld [vmem:[%s2 + $0x210] sm:$0xf]
  %v262 = vld [vmem:[%s2 + $0x214] sm:$0xf]
  %v263 = vld [vmem:[%s2 + $0x218] sm:$0xf]
  %v264 = vld [vmem:[%s2 + $0x21c] sm:$0xf]
  %v265 = vld [vmem:[%s2 + $0x220] sm:$0xf]
  %v266 = vld [vmem:[%s2 + $0x224] sm:$0xf]
  %v267 = vld [vmem:[%s2 + $0x228] sm:$0xf]
  %v268 = vld [vmem:[%s2 + $0x22c] sm:$0xf]
  %v269 = vld [vmem:[%s2 + $0x230] sm:$0xf]
  %v270 = vld [vmem:[%s2 + $0x234] sm:$0xf]
  %v271 = vld [vmem:[%s2 + $0x238] sm:$0xf]
  %v272 = vld [vmem:[%s2 + $0x23c] sm:$0xf]
  %v337 = vunpack.c.l.b16 %v24
  %v338 = vunpack.c.l.b16 %v25
  %v339 = vunpack.c.l.b16 %v27
  %v340 = vunpack.c.l.b16 %v28
  %v341 = vunpack.c.l.b16 %v30
  %v342 = vunpack.c.l.b16 %v31
  %v343 = vunpack.c.l.b16 %v33
  %v344 = vunpack.c.l.b16 %v34
  %v345 = vunpack.c.l.b16 %v36
  %v346 = vunpack.c.l.b16 %v37
  %v347 = vunpack.c.l.b16 %v39
  %v348 = vunpack.c.l.b16 %v40
  %v349 = vunpack.c.l.b16 %v42
  %v350 = vunpack.c.l.b16 %v43
  %v351 = vunpack.c.l.b16 %v45
  %v352 = vunpack.c.l.b16 %v46
  %v353 = vunpack.c.l.b16 %v48
  %v354 = vunpack.c.l.b16 %v49
  %v355 = vunpack.c.l.b16 %v51
  %v356 = vunpack.c.l.b16 %v52
  %v357 = vunpack.c.l.b16 %v54
  %v358 = vunpack.c.l.b16 %v55
  %v359 = vunpack.c.l.b16 %v57
  %v360 = vunpack.c.l.b16 %v58
  %v361 = vunpack.c.l.b16 %v60
  %v362 = vunpack.c.l.b16 %v61
  %v363 = vunpack.c.l.b16 %v63
  %v364 = vunpack.c.l.b16 %v64
  %v365 = vunpack.c.l.b16 %v66
  %v366 = vunpack.c.l.b16 %v67
  %v367 = vunpack.c.l.b16 %v69
  %v368 = vunpack.c.l.b16 %v70
  %v369 = vunpack.c.l.b16 %v78
  %v370 = vunpack.c.l.b16 %v79
  %v371 = vunpack.c.l.b16 %v81
  %v372 = vunpack.c.l.b16 %v82
  %v373 = vunpack.c.l.b16 %v84
  %v374 = vunpack.c.l.b16 %v85
  %v375 = vunpack.c.l.b16 %v87
  %v376 = vunpack.c.l.b16 %v88
  %v377 = vunpack.c.l.b16 %v90
  %v378 = vunpack.c.l.b16 %v91
  %v379 = vunpack.c.l.b16 %v93
  %v380 = vunpack.c.l.b16 %v94
  %v381 = vunpack.c.l.b16 %v96
  %v382 = vunpack.c.l.b16 %v97
  %v383 = vunpack.c.l.b16 %v99
  %v384 = vunpack.c.l.b16 %v100
  %v385 = vunpack.c.l.b16 %v102
  %v386 = vunpack.c.l.b16 %v103
  %v387 = vunpack.c.l.b16 %v105
  %v388 = vunpack.c.l.b16 %v106
  %v389 = vunpack.c.l.b16 %v108
  %v390 = vunpack.c.l.b16 %v109
  %v391 = vunpack.c.l.b16 %v111
  %v392 = vunpack.c.l.b16 %v112
  %v393 = vunpack.c.l.b16 %v114
  %v394 = vunpack.c.l.b16 %v115
  %v395 = vunpack.c.l.b16 %v117
  %v396 = vunpack.c.l.b16 %v118
  %v397 = vunpack.c.l.b16 %v120
  %v398 = vunpack.c.l.b16 %v121
  %v399 = vunpack.c.l.b16 %v123
  %v400 = vunpack.c.l.b16 %v124
  %v401 = vpack.c.b16 %v338, %v337
  %v402 = vpack.c.b16 %v340, %v339
  %v403 = vpack.c.b16 %v342, %v341
  %v404 = vpack.c.b16 %v344, %v343
  %v405 = vpack.c.b16 %v346, %v345
  %v406 = vpack.c.b16 %v348, %v347
  %v407 = vpack.c.b16 %v350, %v349
  %v408 = vpack.c.b16 %v352, %v351
  %v409 = vpack.c.b16 %v354, %v353
  %v410 = vpack.c.b16 %v356, %v355
  %v411 = vpack.c.b16 %v358, %v357
  %v412 = vpack.c.b16 %v360, %v359
  %v413 = vpack.c.b16 %v362, %v361
  %v414 = vpack.c.b16 %v364, %v363
  %v415 = vpack.c.b16 %v366, %v365
  %v416 = vpack.c.b16 %v368, %v367
  %v417 = vpack.c.b16 %v370, %v369
  %v418 = vpack.c.b16 %v372, %v371
  %v419 = vpack.c.b16 %v374, %v373
  %v420 = vpack.c.b16 %v376, %v375
  %v421 = vpack.c.b16 %v378, %v377
  %v422 = vpack.c.b16 %v380, %v379
  %v423 = vpack.c.b16 %v382, %v381
  %v424 = vpack.c.b16 %v384, %v383
  %v425 = vpack.c.b16 %v386, %v385
  %v426 = vpack.c.b16 %v388, %v387
  %v427 = vpack.c.b16 %v390, %v389
  %v428 = vpack.c.b16 %v392, %v391
  %v429 = vpack.c.b16 %v394, %v393
  %v430 = vpack.c.b16 %v396, %v395
  %v431 = vpack.c.b16 %v398, %v397
  %v432 = vpack.c.b16 %v400, %v399
  %v481 = vunpack.c.l.b16 %v177
  %v482 = vunpack.c.l.b16 %v178
  %v483 = vunpack.c.l.b16 %v179
  %v484 = vunpack.c.l.b16 %v180
  %v485 = vunpack.c.l.b16 %v181
  %v486 = vunpack.c.l.b16 %v182
  %v487 = vunpack.c.l.b16 %v183
  %v488 = vunpack.c.l.b16 %v184
  %v489 = vunpack.c.l.b16 %v185
  %v490 = vunpack.c.l.b16 %v186
  %v491 = vunpack.c.l.b16 %v187
  %v492 = vunpack.c.l.b16 %v188
  %v493 = vunpack.c.l.b16 %v189
  %v494 = vunpack.c.l.b16 %v190
  %v495 = vunpack.c.l.b16 %v191
  %v496 = vunpack.c.l.b16 %v192
  %v497 = vpack.c.b16 %v482, %v481
  %v498 = vpack.c.b16 %v484, %v483
  %v499 = vpack.c.b16 %v486, %v485
  %v500 = vpack.c.b16 %v488, %v487
  %v501 = vpack.c.b16 %v490, %v489
  %v502 = vpack.c.b16 %v492, %v491
  %v503 = vpack.c.b16 %v494, %v493
  %v504 = vpack.c.b16 %v496, %v495
  %513 = vmatprep.subr.bf16.mxu0 0
  %514 = vmatpush1.bf16.msra.mxu0 %v504
  %515 = vmatprep.subr.bf16.mxu0 0
  %516 = vmatpush1.bf16.msra.mxu0 %v503
  %517 = vmatprep.subr.bf16.mxu0 0
  %518 = vmatpush1.bf16.msra.mxu0 %v502
  %519 = vmatprep.subr.bf16.mxu0 0
  %520 = vmatpush1.bf16.msra.mxu0 %v501
  %521 = vmatprep.subr.bf16.mxu0 0
  %522 = vmatpush1.bf16.msra.mxu0 %v500
  %523 = vmatprep.subr.bf16.mxu0 0
  %524 = vmatpush1.bf16.msra.mxu0 %v499
  %525 = vmatprep.subr.bf16.mxu0 0
  %526 = vmatpush1.bf16.msra.mxu0 %v498
  %527 = vmatprep.subr.bf16.mxu0 0
  %528 = vmatpush1.bf16.msra.mxu0 %v497
  %529 = vmatprep.subr.bf16.mxu0 0
  %530 = vmatpush2.bf16.msra.mxu0 0
  %531 = vmatprep.subr.bf16.mxu0 0
  %532 = vmatpush2.bf16.msra.mxu0 0
  %533 = vmatprep.subr.bf16.mxu0 0
  %534 = vmatpush2.bf16.msra.mxu0 0
  %535 = vmatprep.subr.bf16.mxu0 0
  %536 = vmatpush2.bf16.msra.mxu0 0
  %537 = vmatprep.subr.bf16.mxu0 0
  %538 = vmatpush2.bf16.msra.mxu0 0
  %539 = vmatprep.subr.bf16.mxu0 0
  %540 = vmatpush2.bf16.msra.mxu0 0
  %541 = vmatprep.subr.bf16.mxu0 0
  %542 = vmatpush2.bf16.msra.mxu0 0
  %543 = vmatprep.subr.bf16.mxu0 0
  %544 = vmatpush2.bf16.msra.mxu0 0
  %545 = vmatprep.mubr.bf16.mxu0 0
  %546 = vmatmul.mubr.bf16.gmra.mxu0 %v401
  %v547 = vpop.f32.mrf.mxu0
  %v548 = vadd.f32 0.0, %v547
  %v549 = vpop.f32.mrf.mxu0
  %v550 = vpop.f32.mrf.mxu0
  %v551 = vadd.f32 0.0, %v550
  %v552 = vpop.f32.mrf.mxu0
  %553 = vmatprep.mubr.bf16.mxu0 0
  %554 = vmatmul.mubr.bf16.gmra.mxu0 %v402
  %v555 = vpop.f32.mrf.mxu0
  %v556 = vadd.f32 0.0, %v555
  %v557 = vpop.f32.mrf.mxu0
  %v558 = vpop.f32.mrf.mxu0
  %v559 = vadd.f32 0.0, %v558
  %v560 = vpop.f32.mrf.mxu0
  %561 = vmatprep.mubr.bf16.mxu0 0
  %562 = vmatmul.mubr.bf16.gmra.mxu0 %v403
  %v563 = vpop.f32.mrf.mxu0
  %v564 = vadd.f32 0.0, %v563
  %v565 = vpop.f32.mrf.mxu0
  %v566 = vpop.f32.mrf.mxu0
  %v567 = vadd.f32 0.0, %v566
  %v568 = vpop.f32.mrf.mxu0
  %569 = vmatprep.mubr.bf16.mxu0 0
  %570 = vmatmul.mubr.bf16.gmra.mxu0 %v404
  %v571 = vpop.f32.mrf.mxu0
  %v572 = vadd.f32 0.0, %v571
  %v573 = vpop.f32.mrf.mxu0
  %v574 = vpop.f32.mrf.mxu0
  %v575 = vadd.f32 0.0, %v574
  %v576 = vpop.f32.mrf.mxu0
  %577 = vmatprep.mubr.bf16.mxu0 0
  %578 = vmatmul.mubr.bf16.gmra.mxu0 %v405
  %v579 = vpop.f32.mrf.mxu0
  %v580 = vadd.f32 0.0, %v579
  %v581 = vpop.f32.mrf.mxu0
  %v582 = vpop.f32.mrf.mxu0
  %v583 = vadd.f32 0.0, %v582
  %v584 = vpop.f32.mrf.mxu0
  %585 = vmatprep.mubr.bf16.mxu0 0
  %586 = vmatmul.mubr.bf16.gmra.mxu0 %v406
  %v587 = vpop.f32.mrf.mxu0
  %v588 = vadd.f32 0.0, %v587
  %v589 = vpop.f32.mrf.mxu0
  %v590 = vpop.f32.mrf.mxu0
  %v591 = vadd.f32 0.0, %v590
  %v592 = vpop.f32.mrf.mxu0
  %593 = vmatprep.mubr.bf16.mxu0 0
  %594 = vmatmul.mubr.bf16.gmra.mxu0 %v407
  %v595 = vpop.f32.mrf.mxu0
  %v596 = vadd.f32 0.0, %v595
  %v597 = vpop.f32.mrf.mxu0
  %v598 = vpop.f32.mrf.mxu0
  %v599 = vadd.f32 0.0, %v598
  %v600 = vpop.f32.mrf.mxu0
  %601 = vmatprep.mubr.bf16.mxu0 0
  %602 = vmatmul.mubr.bf16.gmra.mxu0 %v408
  %v603 = vpop.f32.mrf.mxu0
  %v604 = vadd.f32 0.0, %v603
  %v605 = vpop.f32.mrf.mxu0
  %v606 = vpop.f32.mrf.mxu0
  %v607 = vadd.f32 0.0, %v606
  %v608 = vpop.f32.mrf.mxu0
  %609 = vmatprep.mubr.bf16.mxu0 0
  %610 = vmatmul.mubr.bf16.gmra.mxu0 %v409
  %v611 = vpop.f32.mrf.mxu0
  %v612 = vadd.f32 0.0, %v611
  %v613 = vpop.f32.mrf.mxu0
  %v614 = vpop.f32.mrf.mxu0
  %v615 = vadd.f32 0.0, %v614
  %v616 = vpop.f32.mrf.mxu0
  %617 = vmatprep.mubr.bf16.mxu0 0
  %618 = vmatmul.mubr.bf16.gmra.mxu0 %v410
  %v619 = vpop.f32.mrf.mxu0
  %v620 = vadd.f32 0.0, %v619
  %v621 = vpop.f32.mrf.mxu0
  %v622 = vpop.f32.mrf.mxu0
  %v623 = vadd.f32 0.0, %v622
  %v624 = vpop.f32.mrf.mxu0
  %625 = vmatprep.mubr.bf16.mxu0 0
  %626 = vmatmul.mubr.bf16.gmra.mxu0 %v411
  %v627 = vpop.f32.mrf.mxu0
  %v628 = vadd.f32 0.0, %v627
  %v629 = vpop.f32.mrf.mxu0
  %v630 = vpop.f32.mrf.mxu0
  %v631 = vadd.f32 0.0, %v630
  %v632 = vpop.f32.mrf.mxu0
  %633 = vmatprep.mubr.bf16.mxu0 0
  %634 = vmatmul.mubr.bf16.gmra.mxu0 %v412
  %v635 = vpop.f32.mrf.mxu0
  %v636 = vadd.f32 0.0, %v635
  %v637 = vpop.f32.mrf.mxu0
  %v638 = vpop.f32.mrf.mxu0
  %v639 = vadd.f32 0.0, %v638
  %v640 = vpop.f32.mrf.mxu0
  %641 = vmatprep.mubr.bf16.mxu0 0
  %642 = vmatmul.mubr.bf16.gmra.mxu0 %v413
  %v643 = vpop.f32.mrf.mxu0
  %v644 = vadd.f32 0.0, %v643
  %v645 = vpop.f32.mrf.mxu0
  %v646 = vpop.f32.mrf.mxu0
  %v647 = vadd.f32 0.0, %v646
  %v648 = vpop.f32.mrf.mxu0
  %649 = vmatprep.mubr.bf16.mxu0 0
  %650 = vmatmul.mubr.bf16.gmra.mxu0 %v414
  %v651 = vpop.f32.mrf.mxu0
  %v652 = vadd.f32 0.0, %v651
  %v653 = vpop.f32.mrf.mxu0
  %v654 = vpop.f32.mrf.mxu0
  %v655 = vadd.f32 0.0, %v654
  %v656 = vpop.f32.mrf.mxu0
  %657 = vmatprep.mubr.bf16.mxu0 0
  %658 = vmatmul.mubr.bf16.gmra.mxu0 %v415
  %v659 = vpop.f32.mrf.mxu0
  %v660 = vadd.f32 0.0, %v659
  %v661 = vpop.f32.mrf.mxu0
  %v662 = vpop.f32.mrf.mxu0
  %v663 = vadd.f32 0.0, %v662
  %v664 = vpop.f32.mrf.mxu0
  %665 = vmatprep.mubr.bf16.mxu0 0
  %666 = vmatmul.mubr.bf16.gmra.mxu0 %v416
  %v667 = vpop.f32.mrf.mxu0
  %v668 = vadd.f32 0.0, %v667
  %v669 = vpop.f32.mrf.mxu0
  %v670 = vpop.f32.mrf.mxu0
  %v671 = vadd.f32 0.0, %v670
  %v672 = vpop.f32.mrf.mxu0
  %673 = vmatprep.mubr.bf16.mxu0 0
  %674 = vmatmul.mubr.bf16.gmra.mxu0 %v417
  %v675 = vpop.f32.mrf.mxu0
  %v676 = vadd.f32 0.0, %v675
  %v677 = vpop.f32.mrf.mxu0
  %v678 = vpop.f32.mrf.mxu0
  %v679 = vadd.f32 0.0, %v678
  %v680 = vpop.f32.mrf.mxu0
  %681 = vmatprep.mubr.bf16.mxu0 0
  %682 = vmatmul.mubr.bf16.gmra.mxu0 %v418
  %v683 = vpop.f32.mrf.mxu0
  %v684 = vadd.f32 0.0, %v683
  %v685 = vpop.f32.mrf.mxu0
  %v686 = vpop.f32.mrf.mxu0
  %v687 = vadd.f32 0.0, %v686
  %v688 = vpop.f32.mrf.mxu0
  %689 = vmatprep.mubr.bf16.mxu0 0
  %690 = vmatmul.mubr.bf16.gmra.mxu0 %v419
  %v691 = vpop.f32.mrf.mxu0
  %v692 = vadd.f32 0.0, %v691
  %v693 = vpop.f32.mrf.mxu0
  %v694 = vpop.f32.mrf.mxu0
  %v695 = vadd.f32 0.0, %v694
  %v696 = vpop.f32.mrf.mxu0
  %697 = vmatprep.mubr.bf16.mxu0 0
  %698 = vmatmul.mubr.bf16.gmra.mxu0 %v420
  %v699 = vpop.f32.mrf.mxu0
  %v700 = vadd.f32 0.0, %v699
  %v701 = vpop.f32.mrf.mxu0
  %v702 = vpop.f32.mrf.mxu0
  %v703 = vadd.f32 0.0, %v702
  %v704 = vpop.f32.mrf.mxu0
  %705 = vmatprep.mubr.bf16.mxu0 0
  %706 = vmatmul.mubr.bf16.gmra.mxu0 %v421
  %v707 = vpop.f32.mrf.mxu0
  %v708 = vadd.f32 0.0, %v707
  %v709 = vpop.f32.mrf.mxu0
  %v710 = vpop.f32.mrf.mxu0
  %v711 = vadd.f32 0.0, %v710
  %v712 = vpop.f32.mrf.mxu0
  %713 = vmatprep.mubr.bf16.mxu0 0
  %714 = vmatmul.mubr.bf16.gmra.mxu0 %v422
  %v715 = vpop.f32.mrf.mxu0
  %v716 = vadd.f32 0.0, %v715
  %v717 = vpop.f32.mrf.mxu0
  %v718 = vpop.f32.mrf.mxu0
  %v719 = vadd.f32 0.0, %v718
  %v720 = vpop.f32.mrf.mxu0
  %721 = vmatprep.mubr.bf16.mxu0 0
  %722 = vmatmul.mubr.bf16.gmra.mxu0 %v423
  %v723 = vpop.f32.mrf.mxu0
  %v724 = vadd.f32 0.0, %v723
  %v725 = vpop.f32.mrf.mxu0
  %v726 = vpop.f32.mrf.mxu0
  %v727 = vadd.f32 0.0, %v726
  %v728 = vpop.f32.mrf.mxu0
  %729 = vmatprep.mubr.bf16.mxu0 0
  %730 = vmatmul.mubr.bf16.gmra.mxu0 %v424
  %v731 = vpop.f32.mrf.mxu0
  %v732 = vadd.f32 0.0, %v731
  %v733 = vpop.f32.mrf.mxu0
  %v734 = vpop.f32.mrf.mxu0
  %v735 = vadd.f32 0.0, %v734
  %v736 = vpop.f32.mrf.mxu0
  %737 = vmatprep.mubr.bf16.mxu0 0
  %738 = vmatmul.mubr.bf16.gmra.mxu0 %v425
  %v739 = vpop.f32.mrf.mxu0
  %v740 = vadd.f32 0.0, %v739
  %v741 = vpop.f32.mrf.mxu0
  %v742 = vpop.f32.mrf.mxu0
  %v743 = vadd.f32 0.0, %v742
  %v744 = vpop.f32.mrf.mxu0
  %745 = vmatprep.mubr.bf16.mxu0 0
  %746 = vmatmul.mubr.bf16.gmra.mxu0 %v426
  %v747 = vpop.f32.mrf.mxu0
  %v748 = vadd.f32 0.0, %v747
  %v749 = vpop.f32.mrf.mxu0
  %v750 = vpop.f32.mrf.mxu0
  %v751 = vadd.f32 0.0, %v750
  %v752 = vpop.f32.mrf.mxu0
  %753 = vmatprep.mubr.bf16.mxu0 0
  %754 = vmatmul.mubr.bf16.gmra.mxu0 %v427
  %v755 = vpop.f32.mrf.mxu0
  %v756 = vadd.f32 0.0, %v755
  %v757 = vpop.f32.mrf.mxu0
  %v758 = vpop.f32.mrf.mxu0
  %v759 = vadd.f32 0.0, %v758
  %v760 = vpop.f32.mrf.mxu0
  %761 = vmatprep.mubr.bf16.mxu0 0
  %762 = vmatmul.mubr.bf16.gmra.mxu0 %v428
  %v763 = vpop.f32.mrf.mxu0
  %v764 = vadd.f32 0.0, %v763
  %v765 = vpop.f32.mrf.mxu0
  %v766 = vpop.f32.mrf.mxu0
  %v767 = vadd.f32 0.0, %v766
  %v768 = vpop.f32.mrf.mxu0
  %769 = vmatprep.mubr.bf16.mxu0 0
  %770 = vmatmul.mubr.bf16.gmra.mxu0 %v429
  %v771 = vpop.f32.mrf.mxu0
  %v772 = vadd.f32 0.0, %v771
  %v773 = vpop.f32.mrf.mxu0
  %v774 = vpop.f32.mrf.mxu0
  %v775 = vadd.f32 0.0, %v774
  %v776 = vpop.f32.mrf.mxu0
  %777 = vmatprep.mubr.bf16.mxu0 0
  %778 = vmatmul.mubr.bf16.gmra.mxu0 %v430
  %v779 = vpop.f32.mrf.mxu0
  %v780 = vadd.f32 0.0, %v779
  %v781 = vpop.f32.mrf.mxu0
  %v782 = vpop.f32.mrf.mxu0
  %v783 = vadd.f32 0.0, %v782
  %v784 = vpop.f32.mrf.mxu0
  %785 = vmatprep.mubr.bf16.mxu0 0
  %786 = vmatmul.mubr.bf16.gmra.mxu0 %v431
  %v787 = vpop.f32.mrf.mxu0
  %v788 = vadd.f32 0.0, %v787
  %v789 = vpop.f32.mrf.mxu0
  %v790 = vpop.f32.mrf.mxu0
  %v791 = vadd.f32 0.0, %v790
  %v792 = vpop.f32.mrf.mxu0
  %793 = vmatprep.mubr.bf16.mxu0 0
  %794 = vmatmul.mubr.bf16.gmra.mxu0 %v432
  %v795 = vpop.f32.mrf.mxu0
  %v796 = vadd.f32 0.0, %v795
  %v797 = vpop.f32.mrf.mxu0
  %v798 = vpop.f32.mrf.mxu0
  %v799 = vadd.f32 0.0, %v798
  %v800 = vpop.f32.mrf.mxu0
  %801 = vdwg.mxu0
  %v806 = vunpack.c.l.b16 %v21
  %v807 = vunpack.c.l.b16 %v22
  %v808 = vunpack.c.l.b16 %v75
  %v809 = vunpack.c.l.b16 %v76
  %v810 = vpack.c.b16 %v807, %v806
  %v811 = vpack.c.b16 %v809, %v808
  %v830 = vunpack.c.l.b16 %v129
  %v831 = vunpack.c.l.b16 %v130
  %v832 = vunpack.c.l.b16 %v131
  %v833 = vunpack.c.l.b16 %v132
  %v834 = vunpack.c.l.b16 %v133
  %v835 = vunpack.c.l.b16 %v134
  %v836 = vunpack.c.l.b16 %v135
  %v837 = vunpack.c.l.b16 %v136
  %v838 = vunpack.c.l.b16 %v137
  %v839 = vunpack.c.l.b16 %v138
  %v840 = vunpack.c.l.b16 %v139
  %v841 = vunpack.c.l.b16 %v140
  %v842 = vunpack.c.l.b16 %v141
  %v843 = vunpack.c.l.b16 %v142
  %v844 = vunpack.c.l.b16 %v143
  %v845 = vunpack.c.l.b16 %v144
  %v846 = vpack.c.b16 %v831, %v830
  %v847 = vpack.c.b16 %v833, %v832
  %v848 = vpack.c.b16 %v835, %v834
  %v849 = vpack.c.b16 %v837, %v836
  %v850 = vpack.c.b16 %v839, %v838
  %v851 = vpack.c.b16 %v841, %v840
  %v852 = vpack.c.b16 %v843, %v842
  %v853 = vpack.c.b16 %v845, %v844
  %862 = vmatprep.subr.bf16.mxu0 0
  %863 = vmatpush1.bf16.msra.mxu0 %v853
  %864 = vmatprep.subr.bf16.mxu0 0
  %865 = vmatpush1.bf16.msra.mxu0 %v852
  %866 = vmatprep.subr.bf16.mxu0 0
  %867 = vmatpush1.bf16.msra.mxu0 %v851
  %868 = vmatprep.subr.bf16.mxu0 0
  %869 = vmatpush1.bf16.msra.mxu0 %v850
  %870 = vmatprep.subr.bf16.mxu0 0
  %871 = vmatpush1.bf16.msra.mxu0 %v849
  %872 = vmatprep.subr.bf16.mxu0 0
  %873 = vmatpush1.bf16.msra.mxu0 %v848
  %874 = vmatprep.subr.bf16.mxu0 0
  %875 = vmatpush1.bf16.msra.mxu0 %v847
  %876 = vmatprep.subr.bf16.mxu0 0
  %877 = vmatpush1.bf16.msra.mxu0 %v846
  %878 = vmatprep.subr.bf16.mxu0 0
  %879 = vmatpush2.bf16.msra.mxu0 0
  %880 = vmatprep.subr.bf16.mxu0 0
  %881 = vmatpush2.bf16.msra.mxu0 0
  %882 = vmatprep.subr.bf16.mxu0 0
  %883 = vmatpush2.bf16.msra.mxu0 0
  %884 = vmatprep.subr.bf16.mxu0 0
  %885 = vmatpush2.bf16.msra.mxu0 0
  %886 = vmatprep.subr.bf16.mxu0 0
  %887 = vmatpush2.bf16.msra.mxu0 0
  %888 = vmatprep.subr.bf16.mxu0 0
  %889 = vmatpush2.bf16.msra.mxu0 0
  %890 = vmatprep.subr.bf16.mxu0 0
  %891 = vmatpush2.bf16.msra.mxu0 0
  %892 = vmatprep.subr.bf16.mxu0 0
  %893 = vmatpush2.bf16.msra.mxu0 0
  %894 = vmatprep.mubr.bf16.mxu0 0
  %895 = vmatmul.mubr.bf16.gmra.mxu0 %v810
  %v896 = vpop.f32.mrf.mxu0
  %v897 = vadd.f32 %v548, %v896
  %v898 = vpop.f32.mrf.mxu0
  %v899 = vpop.f32.mrf.mxu0
  %v900 = vadd.f32 %v551, %v899
  %v901 = vpop.f32.mrf.mxu0
  %902 = vmatprep.mubr.bf16.mxu0 0
  %903 = vmatmul.mubr.bf16.gmra.mxu0 %v401
  %v904 = vpop.f32.mrf.mxu0
  %v905 = vadd.f32 %v556, %v904
  %v906 = vpop.f32.mrf.mxu0
  %v907 = vpop.f32.mrf.mxu0
  %v908 = vadd.f32 %v559, %v907
  %v909 = vpop.f32.mrf.mxu0
  %910 = vmatprep.mubr.bf16.mxu0 0
  %911 = vmatmul.mubr.bf16.gmra.mxu0 %v402
  %v912 = vpop.f32.mrf.mxu0
  %v913 = vadd.f32 %v564, %v912
  %v914 = vpop.f32.mrf.mxu0
  %v915 = vpop.f32.mrf.mxu0
  %v916 = vadd.f32 %v567, %v915
  %v917 = vpop.f32.mrf.mxu0
  %918 = vmatprep.mubr.bf16.mxu0 0
  %919 = vmatmul.mubr.bf16.gmra.mxu0 %v403
  %v920 = vpop.f32.mrf.mxu0
  %v921 = vadd.f32 %v572, %v920
  %v922 = vpop.f32.mrf.mxu0
  %v923 = vpop.f32.mrf.mxu0
  %v924 = vadd.f32 %v575, %v923
  %v925 = vpop.f32.mrf.mxu0
  %926 = vmatprep.mubr.bf16.mxu0 0
  %927 = vmatmul.mubr.bf16.gmra.mxu0 %v404
  %v928 = vpop.f32.mrf.mxu0
  %v929 = vadd.f32 %v580, %v928
  %v930 = vpop.f32.mrf.mxu0
  %v931 = vpop.f32.mrf.mxu0
  %v932 = vadd.f32 %v583, %v931
  %v933 = vpop.f32.mrf.mxu0
  %934 = vmatprep.mubr.bf16.mxu0 0
  %935 = vmatmul.mubr.bf16.gmra.mxu0 %v405
  %v936 = vpop.f32.mrf.mxu0
  %v937 = vadd.f32 %v588, %v936
  %v938 = vpop.f32.mrf.mxu0
  %v939 = vpop.f32.mrf.mxu0
  %v940 = vadd.f32 %v591, %v939
  %v941 = vpop.f32.mrf.mxu0
  %942 = vmatprep.mubr.bf16.mxu0 0
  %943 = vmatmul.mubr.bf16.gmra.mxu0 %v406
  %v944 = vpop.f32.mrf.mxu0
  %v945 = vadd.f32 %v596, %v944
  %v946 = vpop.f32.mrf.mxu0
  %v947 = vpop.f32.mrf.mxu0
  %v948 = vadd.f32 %v599, %v947
  %v949 = vpop.f32.mrf.mxu0
  %950 = vmatprep.mubr.bf16.mxu0 0
  %951 = vmatmul.mubr.bf16.gmra.mxu0 %v407
  %v952 = vpop.f32.mrf.mxu0
  %v953 = vadd.f32 %v604, %v952
  %v954 = vpop.f32.mrf.mxu0
  %v955 = vpop.f32.mrf.mxu0
  %v956 = vadd.f32 %v607, %v955
  %v957 = vpop.f32.mrf.mxu0
  %958 = vmatprep.mubr.bf16.mxu0 0
  %959 = vmatmul.mubr.bf16.gmra.mxu0 %v408
  %v960 = vpop.f32.mrf.mxu0
  %v961 = vadd.f32 %v612, %v960
  %v962 = vpop.f32.mrf.mxu0
  %v963 = vpop.f32.mrf.mxu0
  %v964 = vadd.f32 %v615, %v963
  %v965 = vpop.f32.mrf.mxu0
  %966 = vmatprep.mubr.bf16.mxu0 0
  %967 = vmatmul.mubr.bf16.gmra.mxu0 %v409
  %v968 = vpop.f32.mrf.mxu0
  %v969 = vadd.f32 %v620, %v968
  %v970 = vpop.f32.mrf.mxu0
  %v971 = vpop.f32.mrf.mxu0
  %v972 = vadd.f32 %v623, %v971
  %v973 = vpop.f32.mrf.mxu0
  %974 = vmatprep.mubr.bf16.mxu0 0
  %975 = vmatmul.mubr.bf16.gmra.mxu0 %v410
  %v976 = vpop.f32.mrf.mxu0
  %v977 = vadd.f32 %v628, %v976
  %v978 = vpop.f32.mrf.mxu0
  %v979 = vpop.f32.mrf.mxu0
  %v980 = vadd.f32 %v631, %v979
  %v981 = vpop.f32.mrf.mxu0
  %982 = vmatprep.mubr.bf16.mxu0 0
  %983 = vmatmul.mubr.bf16.gmra.mxu0 %v411
  %v984 = vpop.f32.mrf.mxu0
  %v985 = vadd.f32 %v636, %v984
  %v986 = vpop.f32.mrf.mxu0
  %v987 = vpop.f32.mrf.mxu0
  %v988 = vadd.f32 %v639, %v987
  %v989 = vpop.f32.mrf.mxu0
  %990 = vmatprep.mubr.bf16.mxu0 0
  %991 = vmatmul.mubr.bf16.gmra.mxu0 %v412
  %v992 = vpop.f32.mrf.mxu0
  %v993 = vadd.f32 %v644, %v992
  %v994 = vpop.f32.mrf.mxu0
  %v995 = vpop.f32.mrf.mxu0
  %v996 = vadd.f32 %v647, %v995
  %v997 = vpop.f32.mrf.mxu0
  %998 = vmatprep.mubr.bf16.mxu0 0
  %999 = vmatmul.mubr.bf16.gmra.mxu0 %v413
  %v1000 = vpop.f32.mrf.mxu0
  %v1001 = vadd.f32 %v652, %v1000
  %v1002 = vpop.f32.mrf.mxu0
  %v1003 = vpop.f32.mrf.mxu0
  %v1004 = vadd.f32 %v655, %v1003
  %v1005 = vpop.f32.mrf.mxu0
  %1006 = vmatprep.mubr.bf16.mxu0 0
  %1007 = vmatmul.mubr.bf16.gmra.mxu0 %v414
  %v1008 = vpop.f32.mrf.mxu0
  %v1009 = vadd.f32 %v660, %v1008
  %v1010 = vpop.f32.mrf.mxu0
  %v1011 = vpop.f32.mrf.mxu0
  %v1012 = vadd.f32 %v663, %v1011
  %v1013 = vpop.f32.mrf.mxu0
  %1014 = vmatprep.mubr.bf16.mxu0 0
  %1015 = vmatmul.mubr.bf16.gmra.mxu0 %v415
  %v1016 = vpop.f32.mrf.mxu0
  %v1017 = vadd.f32 %v668, %v1016
  %v1018 = vpop.f32.mrf.mxu0
  %v1019 = vpop.f32.mrf.mxu0
  %v1020 = vadd.f32 %v671, %v1019
  %v1021 = vpop.f32.mrf.mxu0
  %1022 = vmatprep.mubr.bf16.mxu0 0
  %1023 = vmatmul.mubr.bf16.gmra.mxu0 %v811
  %v1024 = vpop.f32.mrf.mxu0
  %v1025 = vadd.f32 %v676, %v1024
  %v1026 = vpop.f32.mrf.mxu0
  %v1027 = vpop.f32.mrf.mxu0
  %v1028 = vadd.f32 %v679, %v1027
  %v1029 = vpop.f32.mrf.mxu0
  %1030 = vmatprep.mubr.bf16.mxu0 0
  %1031 = vmatmul.mubr.bf16.gmra.mxu0 %v417
  %v1032 = vpop.f32.mrf.mxu0
  %v1033 = vadd.f32 %v684, %v1032
  %v1034 = vpop.f32.mrf.mxu0
  %v1035 = vpop.f32.mrf.mxu0
  %v1036 = vadd.f32 %v687, %v1035
  %v1037 = vpop.f32.mrf.mxu0
  %1038 = vmatprep.mubr.bf16.mxu0 0
  %1039 = vmatmul.mubr.bf16.gmra.mxu0 %v418
  %v1040 = vpop.f32.mrf.mxu0
  %v1041 = vadd.f32 %v692, %v1040
  %v1042 = vpop.f32.mrf.mxu0
  %v1043 = vpop.f32.mrf.mxu0
  %v1044 = vadd.f32 %v695, %v1043
  %v1045 = vpop.f32.mrf.mxu0
  %1046 = vmatprep.mubr.bf16.mxu0 0
  %1047 = vmatmul.mubr.bf16.gmra.mxu0 %v419
  %v1048 = vpop.f32.mrf.mxu0
  %v1049 = vadd.f32 %v700, %v1048
  %v1050 = vpop.f32.mrf.mxu0
  %v1051 = vpop.f32.mrf.mxu0
  %v1052 = vadd.f32 %v703, %v1051
  %v1053 = vpop.f32.mrf.mxu0
  %1054 = vmatprep.mubr.bf16.mxu0 0
  %1055 = vmatmul.mubr.bf16.gmra.mxu0 %v420
  %v1056 = vpop.f32.mrf.mxu0
  %v1057 = vadd.f32 %v708, %v1056
  %v1058 = vpop.f32.mrf.mxu0
  %v1059 = vpop.f32.mrf.mxu0
  %v1060 = vadd.f32 %v711, %v1059
  %v1061 = vpop.f32.mrf.mxu0
  %1062 = vmatprep.mubr.bf16.mxu0 0
  %1063 = vmatmul.mubr.bf16.gmra.mxu0 %v421
  %v1064 = vpop.f32.mrf.mxu0
  %v1065 = vadd.f32 %v716, %v1064
  %v1066 = vpop.f32.mrf.mxu0
  %v1067 = vpop.f32.mrf.mxu0
  %v1068 = vadd.f32 %v719, %v1067
  %v1069 = vpop.f32.mrf.mxu0
  %1070 = vmatprep.mubr.bf16.mxu0 0
  %1071 = vmatmul.mubr.bf16.gmra.mxu0 %v422
  %v1072 = vpop.f32.mrf.mxu0
  %v1073 = vadd.f32 %v724, %v1072
  %v1074 = vpop.f32.mrf.mxu0
  %v1075 = vpop.f32.mrf.mxu0
  %v1076 = vadd.f32 %v727, %v1075
  %v1077 = vpop.f32.mrf.mxu0
  %1078 = vmatprep.mubr.bf16.mxu0 0
  %1079 = vmatmul.mubr.bf16.gmra.mxu0 %v423
  %v1080 = vpop.f32.mrf.mxu0
  %v1081 = vadd.f32 %v732, %v1080
  %v1082 = vpop.f32.mrf.mxu0
  %v1083 = vpop.f32.mrf.mxu0
  %v1084 = vadd.f32 %v735, %v1083
  %v1085 = vpop.f32.mrf.mxu0
  %1086 = vmatprep.mubr.bf16.mxu0 0
  %1087 = vmatmul.mubr.bf16.gmra.mxu0 %v424
  %v1088 = vpop.f32.mrf.mxu0
  %v1089 = vadd.f32 %v740, %v1088
  %v1090 = vpop.f32.mrf.mxu0
  %v1091 = vpop.f32.mrf.mxu0
  %v1092 = vadd.f32 %v743, %v1091
  %v1093 = vpop.f32.mrf.mxu0
  %1094 = vmatprep.mubr.bf16.mxu0 0
  %1095 = vmatmul.mubr.bf16.gmra.mxu0 %v425
  %v1096 = vpop.f32.mrf.mxu0
  %v1097 = vadd.f32 %v748, %v1096
  %v1098 = vpop.f32.mrf.mxu0
  %v1099 = vpop.f32.mrf.mxu0
  %v1100 = vadd.f32 %v751, %v1099
  %v1101 = vpop.f32.mrf.mxu0
  %1102 = vmatprep.mubr.bf16.mxu0 0
  %1103 = vmatmul.mubr.bf16.gmra.mxu0 %v426
  %v1104 = vpop.f32.mrf.mxu0
  %v1105 = vadd.f32 %v756, %v1104
  %v1106 = vpop.f32.mrf.mxu0
  %v1107 = vpop.f32.mrf.mxu0
  %v1108 = vadd.f32 %v759, %v1107
  %v1109 = vpop.f32.mrf.mxu0
  %1110 = vmatprep.mubr.bf16.mxu0 0
  %1111 = vmatmul.mubr.bf16.gmra.mxu0 %v427
  %v1112 = vpop.f32.mrf.mxu0
  %v1113 = vadd.f32 %v764, %v1112
  %v1114 = vpop.f32.mrf.mxu0
  %v1115 = vpop.f32.mrf.mxu0
  %v1116 = vadd.f32 %v767, %v1115
  %v1117 = vpop.f32.mrf.mxu0
  %1118 = vmatprep.mubr.bf16.mxu0 0
  %1119 = vmatmul.mubr.bf16.gmra.mxu0 %v428
  %v1120 = vpop.f32.mrf.mxu0
  %v1121 = vadd.f32 %v772, %v1120
  %v1122 = vpop.f32.mrf.mxu0
  %v1123 = vpop.f32.mrf.mxu0
  %v1124 = vadd.f32 %v775, %v1123
  %v1125 = vpop.f32.mrf.mxu0
  %1126 = vmatprep.mubr.bf16.mxu0 0
  %1127 = vmatmul.mubr.bf16.gmra.mxu0 %v429
  %v1128 = vpop.f32.mrf.mxu0
  %v1129 = vadd.f32 %v780, %v1128
  %v1130 = vpop.f32.mrf.mxu0
  %v1131 = vpop.f32.mrf.mxu0
  %v1132 = vadd.f32 %v783, %v1131
  %v1133 = vpop.f32.mrf.mxu0
  %1134 = vmatprep.mubr.bf16.mxu0 0
  %1135 = vmatmul.mubr.bf16.gmra.mxu0 %v430
  %v1136 = vpop.f32.mrf.mxu0
  %v1137 = vadd.f32 %v788, %v1136
  %v1138 = vpop.f32.mrf.mxu0
  %v1139 = vpop.f32.mrf.mxu0
  %v1140 = vadd.f32 %v791, %v1139
  %v1141 = vpop.f32.mrf.mxu0
  %1142 = vmatprep.mubr.bf16.mxu0 0
  %1143 = vmatmul.mubr.bf16.gmra.mxu0 %v431
  %v1144 = vpop.f32.mrf.mxu0
  %v1145 = vadd.f32 %v796, %v1144
  %v1146 = vpop.f32.mrf.mxu0
  %v1147 = vpop.f32.mrf.mxu0
  %v1148 = vadd.f32 %v799, %v1147
  %v1149 = vpop.f32.mrf.mxu0
  %1150 = vdwg.mxu0
  %v1155 = vunpack.c.l.b16 %v72
  %v1156 = vunpack.c.l.b16 %v73
  %v1157 = vunpack.c.l.b16 %v126
  %v1158 = vunpack.c.l.b16 %v127
  %v1159 = vpack.c.b16 %v1156, %v1155
  %v1160 = vpack.c.b16 %v1158, %v1157
  %v1179 = vunpack.c.l.b16 %v225
  %v1180 = vunpack.c.l.b16 %v226
  %v1181 = vunpack.c.l.b16 %v227
  %v1182 = vunpack.c.l.b16 %v228
  %v1183 = vunpack.c.l.b16 %v229
  %v1184 = vunpack.c.l.b16 %v230
  %v1185 = vunpack.c.l.b16 %v231
  %v1186 = vunpack.c.l.b16 %v232
  %v1187 = vunpack.c.l.b16 %v233
  %v1188 = vunpack.c.l.b16 %v234
  %v1189 = vunpack.c.l.b16 %v235
  %v1190 = vunpack.c.l.b16 %v236
  %v1191 = vunpack.c.l.b16 %v237
  %v1192 = vunpack.c.l.b16 %v238
  %v1193 = vunpack.c.l.b16 %v239
  %v1194 = vunpack.c.l.b16 %v240
  %v1195 = vpack.c.b16 %v1180, %v1179
  %v1196 = vpack.c.b16 %v1182, %v1181
  %v1197 = vpack.c.b16 %v1184, %v1183
  %v1198 = vpack.c.b16 %v1186, %v1185
  %v1199 = vpack.c.b16 %v1188, %v1187
  %v1200 = vpack.c.b16 %v1190, %v1189
  %v1201 = vpack.c.b16 %v1192, %v1191
  %v1202 = vpack.c.b16 %v1194, %v1193
  %1211 = vmatprep.subr.bf16.mxu0 0
  %1212 = vmatpush1.bf16.msra.mxu0 %v1202
  %1213 = vmatprep.subr.bf16.mxu0 0
  %1214 = vmatpush1.bf16.msra.mxu0 %v1201
  %1215 = vmatprep.subr.bf16.mxu0 0
  %1216 = vmatpush1.bf16.msra.mxu0 %v1200
  %1217 = vmatprep.subr.bf16.mxu0 0
  %1218 = vmatpush1.bf16.msra.mxu0 %v1199
  %1219 = vmatprep.subr.bf16.mxu0 0
  %1220 = vmatpush1.bf16.msra.mxu0 %v1198
  %1221 = vmatprep.subr.bf16.mxu0 0
  %1222 = vmatpush1.bf16.msra.mxu0 %v1197
  %1223 = vmatprep.subr.bf16.mxu0 0
  %1224 = vmatpush1.bf16.msra.mxu0 %v1196
  %1225 = vmatprep.subr.bf16.mxu0 0
  %1226 = vmatpush1.bf16.msra.mxu0 %v1195
  %1227 = vmatprep.subr.bf16.mxu0 0
  %1228 = vmatpush2.bf16.msra.mxu0 0
  %1229 = vmatprep.subr.bf16.mxu0 0
  %1230 = vmatpush2.bf16.msra.mxu0 0
  %1231 = vmatprep.subr.bf16.mxu0 0
  %1232 = vmatpush2.bf16.msra.mxu0 0
  %1233 = vmatprep.subr.bf16.mxu0 0
  %1234 = vmatpush2.bf16.msra.mxu0 0
  %1235 = vmatprep.subr.bf16.mxu0 0
  %1236 = vmatpush2.bf16.msra.mxu0 0
  %1237 = vmatprep.subr.bf16.mxu0 0
  %1238 = vmatpush2.bf16.msra.mxu0 0
  %1239 = vmatprep.subr.bf16.mxu0 0
  %1240 = vmatpush2.bf16.msra.mxu0 0
  %1241 = vmatprep.subr.bf16.mxu0 0
  %1242 = vmatpush2.bf16.msra.mxu0 0
  %1243 = vmatprep.mubr.bf16.mxu0 0
  %1244 = vmatmul.mubr.bf16.gmra.mxu0 %v402
  %v1245 = vpop.f32.mrf.mxu0
  %v1246 = vadd.f32 0.0, %v1245
  %v1247 = vpop.f32.mrf.mxu0
  %v1248 = vpop.f32.mrf.mxu0
  %v1249 = vadd.f32 0.0, %v1248
  %v1250 = vpop.f32.mrf.mxu0
  %1251 = vmatprep.mubr.bf16.mxu0 0
  %1252 = vmatmul.mubr.bf16.gmra.mxu0 %v403
  %v1253 = vpop.f32.mrf.mxu0
  %v1254 = vadd.f32 0.0, %v1253
  %v1255 = vpop.f32.mrf.mxu0
  %v1256 = vpop.f32.mrf.mxu0
  %v1257 = vadd.f32 0.0, %v1256
  %v1258 = vpop.f32.mrf.mxu0
  %1259 = vmatprep.mubr.bf16.mxu0 0
  %1260 = vmatmul.mubr.bf16.gmra.mxu0 %v404
  %v1261 = vpop.f32.mrf.mxu0
  %v1262 = vadd.f32 0.0, %v1261
  %v1263 = vpop.f32.mrf.mxu0
  %v1264 = vpop.f32.mrf.mxu0
  %v1265 = vadd.f32 0.0, %v1264
  %v1266 = vpop.f32.mrf.mxu0
  %1267 = vmatprep.mubr.bf16.mxu0 0
  %1268 = vmatmul.mubr.bf16.gmra.mxu0 %v405
  %v1269 = vpop.f32.mrf.mxu0
  %v1270 = vadd.f32 0.0, %v1269
  %v1271 = vpop.f32.mrf.mxu0
  %v1272 = vpop.f32.mrf.mxu0
  %v1273 = vadd.f32 0.0, %v1272
  %v1274 = vpop.f32.mrf.mxu0
  %1275 = vmatprep.mubr.bf16.mxu0 0
  %1276 = vmatmul.mubr.bf16.gmra.mxu0 %v406
  %v1277 = vpop.f32.mrf.mxu0
  %v1278 = vadd.f32 0.0, %v1277
  %v1279 = vpop.f32.mrf.mxu0
  %v1280 = vpop.f32.mrf.mxu0
  %v1281 = vadd.f32 0.0, %v1280
  %v1282 = vpop.f32.mrf.mxu0
  %1283 = vmatprep.mubr.bf16.mxu0 0
  %1284 = vmatmul.mubr.bf16.gmra.mxu0 %v407
  %v1285 = vpop.f32.mrf.mxu0
  %v1286 = vadd.f32 0.0, %v1285
  %v1287 = vpop.f32.mrf.mxu0
  %v1288 = vpop.f32.mrf.mxu0
  %v1289 = vadd.f32 0.0, %v1288
  %v1290 = vpop.f32.mrf.mxu0
  %1291 = vmatprep.mubr.bf16.mxu0 0
  %1292 = vmatmul.mubr.bf16.gmra.mxu0 %v408
  %v1293 = vpop.f32.mrf.mxu0
  %v1294 = vadd.f32 0.0, %v1293
  %v1295 = vpop.f32.mrf.mxu0
  %v1296 = vpop.f32.mrf.mxu0
  %v1297 = vadd.f32 0.0, %v1296
  %v1298 = vpop.f32.mrf.mxu0
  %1299 = vmatprep.mubr.bf16.mxu0 0
  %1300 = vmatmul.mubr.bf16.gmra.mxu0 %v409
  %v1301 = vpop.f32.mrf.mxu0
  %v1302 = vadd.f32 0.0, %v1301
  %v1303 = vpop.f32.mrf.mxu0
  %v1304 = vpop.f32.mrf.mxu0
  %v1305 = vadd.f32 0.0, %v1304
  %v1306 = vpop.f32.mrf.mxu0
  %1307 = vmatprep.mubr.bf16.mxu0 0
  %1308 = vmatmul.mubr.bf16.gmra.mxu0 %v410
  %v1309 = vpop.f32.mrf.mxu0
  %v1310 = vadd.f32 0.0, %v1309
  %v1311 = vpop.f32.mrf.mxu0
  %v1312 = vpop.f32.mrf.mxu0
  %v1313 = vadd.f32 0.0, %v1312
  %v1314 = vpop.f32.mrf.mxu0
  %1315 = vmatprep.mubr.bf16.mxu0 0
  %1316 = vmatmul.mubr.bf16.gmra.mxu0 %v411
  %v1317 = vpop.f32.mrf.mxu0
  %v1318 = vadd.f32 0.0, %v1317
  %v1319 = vpop.f32.mrf.mxu0
  %v1320 = vpop.f32.mrf.mxu0
  %v1321 = vadd.f32 0.0, %v1320
  %v1322 = vpop.f32.mrf.mxu0
  %1323 = vmatprep.mubr.bf16.mxu0 0
  %1324 = vmatmul.mubr.bf16.gmra.mxu0 %v412
  %v1325 = vpop.f32.mrf.mxu0
  %v1326 = vadd.f32 0.0, %v1325
  %v1327 = vpop.f32.mrf.mxu0
  %v1328 = vpop.f32.mrf.mxu0
  %v1329 = vadd.f32 0.0, %v1328
  %v1330 = vpop.f32.mrf.mxu0
  %1331 = vmatprep.mubr.bf16.mxu0 0
  %1332 = vmatmul.mubr.bf16.gmra.mxu0 %v413
  %v1333 = vpop.f32.mrf.mxu0
  %v1334 = vadd.f32 0.0, %v1333
  %v1335 = vpop.f32.mrf.mxu0
  %v1336 = vpop.f32.mrf.mxu0
  %v1337 = vadd.f32 0.0, %v1336
  %v1338 = vpop.f32.mrf.mxu0
  %1339 = vmatprep.mubr.bf16.mxu0 0
  %1340 = vmatmul.mubr.bf16.gmra.mxu0 %v414
  %v1341 = vpop.f32.mrf.mxu0
  %v1342 = vadd.f32 0.0, %v1341
  %v1343 = vpop.f32.mrf.mxu0
  %v1344 = vpop.f32.mrf.mxu0
  %v1345 = vadd.f32 0.0, %v1344
  %v1346 = vpop.f32.mrf.mxu0
  %1347 = vmatprep.mubr.bf16.mxu0 0
  %1348 = vmatmul.mubr.bf16.gmra.mxu0 %v415
  %v1349 = vpop.f32.mrf.mxu0
  %v1350 = vadd.f32 0.0, %v1349
  %v1351 = vpop.f32.mrf.mxu0
  %v1352 = vpop.f32.mrf.mxu0
  %v1353 = vadd.f32 0.0, %v1352
  %v1354 = vpop.f32.mrf.mxu0
  %1355 = vmatprep.mubr.bf16.mxu0 0
  %1356 = vmatmul.mubr.bf16.gmra.mxu0 %v416
  %v1357 = vpop.f32.mrf.mxu0
  %v1358 = vadd.f32 0.0, %v1357
  %v1359 = vpop.f32.mrf.mxu0
  %v1360 = vpop.f32.mrf.mxu0
  %v1361 = vadd.f32 0.0, %v1360
  %v1362 = vpop.f32.mrf.mxu0
  %1363 = vmatprep.mubr.bf16.mxu0 0
  %1364 = vmatmul.mubr.bf16.gmra.mxu0 %v1159
  %v1365 = vpop.f32.mrf.mxu0
  %v1366 = vadd.f32 0.0, %v1365
  %v1367 = vpop.f32.mrf.mxu0
  %v1368 = vpop.f32.mrf.mxu0
  %v1369 = vadd.f32 0.0, %v1368
  %v1370 = vpop.f32.mrf.mxu0
  %1371 = vmatprep.mubr.bf16.mxu0 0
  %1372 = vmatmul.mubr.bf16.gmra.mxu0 %v418
  %v1373 = vpop.f32.mrf.mxu0
  %v1374 = vadd.f32 0.0, %v1373
  %v1375 = vpop.f32.mrf.mxu0
  %v1376 = vpop.f32.mrf.mxu0
  %v1377 = vadd.f32 0.0, %v1376
  %v1378 = vpop.f32.mrf.mxu0
  %1379 = vmatprep.mubr.bf16.mxu0 0
  %1380 = vmatmul.mubr.bf16.gmra.mxu0 %v419
  %v1381 = vpop.f32.mrf.mxu0
  %v1382 = vadd.f32 0.0, %v1381
  %v1383 = vpop.f32.mrf.mxu0
  %v1384 = vpop.f32.mrf.mxu0
  %v1385 = vadd.f32 0.0, %v1384
  %v1386 = vpop.f32.mrf.mxu0
  %1387 = vmatprep.mubr.bf16.mxu0 0
  %1388 = vmatmul.mubr.bf16.gmra.mxu0 %v420
  %v1389 = vpop.f32.mrf.mxu0
  %v1390 = vadd.f32 0.0, %v1389
  %v1391 = vpop.f32.mrf.mxu0
  %v1392 = vpop.f32.mrf.mxu0
  %v1393 = vadd.f32 0.0, %v1392
  %v1394 = vpop.f32.mrf.mxu0
  %1395 = vmatprep.mubr.bf16.mxu0 0
  %1396 = vmatmul.mubr.bf16.gmra.mxu0 %v421
  %v1397 = vpop.f32.mrf.mxu0
  %v1398 = vadd.f32 0.0, %v1397
  %v1399 = vpop.f32.mrf.mxu0
  %v1400 = vpop.f32.mrf.mxu0
  %v1401 = vadd.f32 0.0, %v1400
  %v1402 = vpop.f32.mrf.mxu0
  %1403 = vmatprep.mubr.bf16.mxu0 0
  %1404 = vmatmul.mubr.bf16.gmra.mxu0 %v422
  %v1405 = vpop.f32.mrf.mxu0
  %v1406 = vadd.f32 0.0, %v1405
  %v1407 = vpop.f32.mrf.mxu0
  %v1408 = vpop.f32.mrf.mxu0
  %v1409 = vadd.f32 0.0, %v1408
  %v1410 = vpop.f32.mrf.mxu0
  %1411 = vmatprep.mubr.bf16.mxu0 0
  %1412 = vmatmul.mubr.bf16.gmra.mxu0 %v423
  %v1413 = vpop.f32.mrf.mxu0
  %v1414 = vadd.f32 0.0, %v1413
  %v1415 = vpop.f32.mrf.mxu0
  %v1416 = vpop.f32.mrf.mxu0
  %v1417 = vadd.f32 0.0, %v1416
  %v1418 = vpop.f32.mrf.mxu0
  %1419 = vmatprep.mubr.bf16.mxu0 0
  %1420 = vmatmul.mubr.bf16.gmra.mxu0 %v424
  %v1421 = vpop.f32.mrf.mxu0
  %v1422 = vadd.f32 0.0, %v1421
  %v1423 = vpop.f32.mrf.mxu0
  %v1424 = vpop.f32.mrf.mxu0
  %v1425 = vadd.f32 0.0, %v1424
  %v1426 = vpop.f32.mrf.mxu0
  %1427 = vmatprep.mubr.bf16.mxu0 0
  %1428 = vmatmul.mubr.bf16.gmra.mxu0 %v425
  %v1429 = vpop.f32.mrf.mxu0
  %v1430 = vadd.f32 0.0, %v1429
  %v1431 = vpop.f32.mrf.mxu0
  %v1432 = vpop.f32.mrf.mxu0
  %v1433 = vadd.f32 0.0, %v1432
  %v1434 = vpop.f32.mrf.mxu0
  %1435 = vmatprep.mubr.bf16.mxu0 0
  %1436 = vmatmul.mubr.bf16.gmra.mxu0 %v426
  %v1437 = vpop.f32.mrf.mxu0
  %v1438 = vadd.f32 0.0, %v1437
  %v1439 = vpop.f32.mrf.mxu0
  %v1440 = vpop.f32.mrf.mxu0
  %v1441 = vadd.f32 0.0, %v1440
  %v1442 = vpop.f32.mrf.mxu0
  %1443 = vmatprep.mubr.bf16.mxu0 0
  %1444 = vmatmul.mubr.bf16.gmra.mxu0 %v427
  %v1445 = vpop.f32.mrf.mxu0
  %v1446 = vadd.f32 0.0, %v1445
  %v1447 = vpop.f32.mrf.mxu0
  %v1448 = vpop.f32.mrf.mxu0
  %v1449 = vadd.f32 0.0, %v1448
  %v1450 = vpop.f32.mrf.mxu0
  %1451 = vmatprep.mubr.bf16.mxu0 0
  %1452 = vmatmul.mubr.bf16.gmra.mxu0 %v428
  %v1453 = vpop.f32.mrf.mxu0
  %v1454 = vadd.f32 0.0, %v1453
  %v1455 = vpop.f32.mrf.mxu0
  %v1456 = vpop.f32.mrf.mxu0
  %v1457 = vadd.f32 0.0, %v1456
  %v1458 = vpop.f32.mrf.mxu0
  %1459 = vmatprep.mubr.bf16.mxu0 0
  %1460 = vmatmul.mubr.bf16.gmra.mxu0 %v429
  %v1461 = vpop.f32.mrf.mxu0
  %v1462 = vadd.f32 0.0, %v1461
  %v1463 = vpop.f32.mrf.mxu0
  %v1464 = vpop.f32.mrf.mxu0
  %v1465 = vadd.f32 0.0, %v1464
  %v1466 = vpop.f32.mrf.mxu0
  %1467 = vmatprep.mubr.bf16.mxu0 0
  %1468 = vmatmul.mubr.bf16.gmra.mxu0 %v430
  %v1469 = vpop.f32.mrf.mxu0
  %v1470 = vadd.f32 0.0, %v1469
  %v1471 = vpop.f32.mrf.mxu0
  %v1472 = vpop.f32.mrf.mxu0
  %v1473 = vadd.f32 0.0, %v1472
  %v1474 = vpop.f32.mrf.mxu0
  %1475 = vmatprep.mubr.bf16.mxu0 0
  %1476 = vmatmul.mubr.bf16.gmra.mxu0 %v431
  %v1477 = vpop.f32.mrf.mxu0
  %v1478 = vadd.f32 0.0, %v1477
  %v1479 = vpop.f32.mrf.mxu0
  %v1480 = vpop.f32.mrf.mxu0
  %v1481 = vadd.f32 0.0, %v1480
  %v1482 = vpop.f32.mrf.mxu0
  %1483 = vmatprep.mubr.bf16.mxu0 0
  %1484 = vmatmul.mubr.bf16.gmra.mxu0 %v432
  %v1485 = vpop.f32.mrf.mxu0
  %v1486 = vadd.f32 0.0, %v1485
  %v1487 = vpop.f32.mrf.mxu0
  %v1488 = vpop.f32.mrf.mxu0
  %v1489 = vadd.f32 0.0, %v1488
  %v1490 = vpop.f32.mrf.mxu0
  %1491 = vmatprep.mubr.bf16.mxu0 0
  %1492 = vmatmul.mubr.bf16.gmra.mxu0 %v1160
  %v1493 = vpop.f32.mrf.mxu0
  %v1494 = vadd.f32 0.0, %v1493
  %v1495 = vpop.f32.mrf.mxu0
  %v1496 = vpop.f32.mrf.mxu0
  %v1497 = vadd.f32 0.0, %v1496
  %v1498 = vpop.f32.mrf.mxu0
  %1499 = vdwg.mxu0
  %v1500 = vadd.f32 %v897, %v1246
  %v1501 = vadd.f32 %v900, %v1249
  %v1502 = vadd.f32 %v905, %v1254
  %v1503 = vadd.f32 %v908, %v1257
  %v1504 = vadd.f32 %v913, %v1262
  %v1505 = vadd.f32 %v916, %v1265
  %v1506 = vadd.f32 %v921, %v1270
  %v1507 = vadd.f32 %v924, %v1273
  %v1508 = vadd.f32 %v929, %v1278
  %v1509 = vadd.f32 %v932, %v1281
  %v1510 = vadd.f32 %v937, %v1286
  %v1511 = vadd.f32 %v940, %v1289
  %v1512 = vadd.f32 %v945, %v1294
  %v1513 = vadd.f32 %v948, %v1297
  %v1514 = vadd.f32 %v953, %v1302
  %v1515 = vadd.f32 %v956, %v1305
  %v1516 = vadd.f32 %v961, %v1310
  %v1517 = vadd.f32 %v964, %v1313
  %v1518 = vadd.f32 %v969, %v1318
  %v1519 = vadd.f32 %v972, %v1321
  %v1520 = vadd.f32 %v977, %v1326
  %v1521 = vadd.f32 %v980, %v1329
  %v1522 = vadd.f32 %v985, %v1334
  %v1523 = vadd.f32 %v988, %v1337
  %v1524 = vadd.f32 %v993, %v1342
  %v1525 = vadd.f32 %v996, %v1345
  %v1526 = vadd.f32 %v1001, %v1350
  %v1527 = vadd.f32 %v1004, %v1353
  %v1528 = vadd.f32 %v1009, %v1358
  %v1529 = vadd.f32 %v1012, %v1361
  %v1530 = vadd.f32 %v1017, %v1366
  %v1531 = vadd.f32 %v1020, %v1369
  %v1532 = vadd.f32 %v1025, %v1374
  %v1533 = vadd.f32 %v1028, %v1377
  %v1534 = vadd.f32 %v1033, %v1382
  %v1535 = vadd.f32 %v1036, %v1385
  %v1536 = vadd.f32 %v1041, %v1390
  %v1537 = vadd.f32 %v1044, %v1393
  %v1538 = vadd.f32 %v1049, %v1398
  %v1539 = vadd.f32 %v1052, %v1401
  %v1540 = vadd.f32 %v1057, %v1406
  %v1541 = vadd.f32 %v1060, %v1409
  %v1542 = vadd.f32 %v1065, %v1414
  %v1543 = vadd.f32 %v1068, %v1417
  %v1544 = vadd.f32 %v1073, %v1422
  %v1545 = vadd.f32 %v1076, %v1425
  %v1546 = vadd.f32 %v1081, %v1430
  %v1547 = vadd.f32 %v1084, %v1433
  %v1548 = vadd.f32 %v1089, %v1438
  %v1549 = vadd.f32 %v1092, %v1441
  %v1550 = vadd.f32 %v1097, %v1446
  %v1551 = vadd.f32 %v1100, %v1449
  %v1552 = vadd.f32 %v1105, %v1454
  %v1553 = vadd.f32 %v1108, %v1457
  %v1554 = vadd.f32 %v1113, %v1462
  %v1555 = vadd.f32 %v1116, %v1465
  %v1556 = vadd.f32 %v1121, %v1470
  %v1557 = vadd.f32 %v1124, %v1473
  %v1558 = vadd.f32 %v1129, %v1478
  %v1559 = vadd.f32 %v1132, %v1481
  %v1560 = vadd.f32 %v1137, %v1486
  %v1561 = vadd.f32 %v1140, %v1489
  %v1562 = vadd.f32 %v1145, %v1494
  %v1563 = vadd.f32 %v1148, %v1497
  %vm1564 = vsmask.f32 3328
  %vm1565 = vsmask.f32 7440
  %vm1566 = vmor %vm1564, %vm1565
  %v1568 = vshrl.u32 %v21, 16
  %v1570 = vrot.slane %v1568, 4
  %v1571 = vshll.u32 %v21, 16
  %v1573 = vrot.slane %v1571, 5
  %v1574 = vor.u32 %v1570, %v1573
  %v1575 = vrot.slane %v1574, 4
  %v1577 = vshll.u32 %v22, 16
  %v1579 = vrot.slane %v1577, 5
  %v1580 = vsel %vm1566, %v1575, %v1579
  %v1581 = vshrl.u32 %v22, 16
  %v1583 = vrot.slane %v1581, 4
  %v1584 = vor.u32 %v1583, %v1579
  %v1585 = vrot.slane %v1584, 4
  %v1587 = vshll.u32 %v23, 16
  %v1589 = vrot.slane %v1587, 5
  %v1590 = vsel %vm1566, %v1585, %v1589
  %v1592 = vshrl.u32 %v24, 16
  %v1594 = vrot.slane %v1592, 4
  %v1595 = vshll.u32 %v24, 16
  %v1597 = vrot.slane %v1595, 5
  %v1598 = vor.u32 %v1594, %v1597
  %v1599 = vrot.slane %v1598, 4
  %v1601 = vshll.u32 %v25, 16
  %v1603 = vrot.slane %v1601, 5
  %v1604 = vsel %vm1566, %v1599, %v1603
  %v1605 = vshrl.u32 %v25, 16
  %v1607 = vrot.slane %v1605, 4
  %v1608 = vor.u32 %v1607, %v1603
  %v1609 = vrot.slane %v1608, 4
  %v1611 = vshll.u32 %v26, 16
  %v1613 = vrot.slane %v1611, 5
  %v1614 = vsel %vm1566, %v1609, %v1613
  %v1616 = vshrl.u32 %v27, 16
  %v1618 = vrot.slane %v1616, 4
  %v1619 = vshll.u32 %v27, 16
  %v1621 = vrot.slane %v1619, 5
  %v1622 = vor.u32 %v1618, %v1621
  %v1623 = vrot.slane %v1622, 4
  %v1625 = vshll.u32 %v28, 16
  %v1627 = vrot.slane %v1625, 5
  %v1628 = vsel %vm1566, %v1623, %v1627
  %v1629 = vshrl.u32 %v28, 16
  %v1631 = vrot.slane %v1629, 4
  %v1632 = vor.u32 %v1631, %v1627
  %v1633 = vrot.slane %v1632, 4
  %v1635 = vshll.u32 %v29, 16
  %v1637 = vrot.slane %v1635, 5
  %v1638 = vsel %vm1566, %v1633, %v1637
  %v1640 = vshrl.u32 %v30, 16
  %v1642 = vrot.slane %v1640, 4
  %v1643 = vshll.u32 %v30, 16
  %v1645 = vrot.slane %v1643, 5
  %v1646 = vor.u32 %v1642, %v1645
  %v1647 = vrot.slane %v1646, 4
  %v1649 = vshll.u32 %v31, 16
  %v1651 = vrot.slane %v1649, 5
  %v1652 = vsel %vm1566, %v1647, %v1651
  %v1653 = vshrl.u32 %v31, 16
  %v1655 = vrot.slane %v1653, 4
  %v1656 = vor.u32 %v1655, %v1651
  %v1657 = vrot.slane %v1656, 4
  %v1659 = vshll.u32 %v32, 16
  %v1661 = vrot.slane %v1659, 5
  %v1662 = vsel %vm1566, %v1657, %v1661
  %v1664 = vshrl.u32 %v33, 16
  %v1666 = vrot.slane %v1664, 4
  %v1667 = vshll.u32 %v33, 16
  %v1669 = vrot.slane %v1667, 5
  %v1670 = vor.u32 %v1666, %v1669
  %v1671 = vrot.slane %v1670, 4
  %v1673 = vshll.u32 %v34, 16
  %v1675 = vrot.slane %v1673, 5
  %v1676 = vsel %vm1566, %v1671, %v1675
  %v1677 = vshrl.u32 %v34, 16
  %v1679 = vrot.slane %v1677, 4
  %v1680 = vor.u32 %v1679, %v1675
  %v1681 = vrot.slane %v1680, 4
  %v1683 = vshll.u32 %v35, 16
  %v1685 = vrot.slane %v1683, 5
  %v1686 = vsel %vm1566, %v1681, %v1685
  %v1688 = vshrl.u32 %v36, 16
  %v1690 = vrot.slane %v1688, 4
  %v1691 = vshll.u32 %v36, 16
  %v1693 = vrot.slane %v1691, 5
  %v1694 = vor.u32 %v1690, %v1693
  %v1695 = vrot.slane %v1694, 4
  %v1697 = vshll.u32 %v37, 16
  %v1699 = vrot.slane %v1697, 5
  %v1700 = vsel %vm1566, %v1695, %v1699
  %v1701 = vshrl.u32 %v37, 16
  %v1703 = vrot.slane %v1701, 4
  %v1704 = vor.u32 %v1703, %v1699
  %v1705 = vrot.slane %v1704, 4
  %v1707 = vshll.u32 %v38, 16
  %v1709 = vrot.slane %v1707, 5
  %v1710 = vsel %vm1566, %v1705, %v1709
  %v1712 = vshrl.u32 %v39, 16
  %v1714 = vrot.slane %v1712, 4
  %v1715 = vshll.u32 %v39, 16
  %v1717 = vrot.slane %v1715, 5
  %v1718 = vor.u32 %v1714, %v1717
  %v1719 = vrot.slane %v1718, 4
  %v1721 = vshll.u32 %v40, 16
  %v1723 = vrot.slane %v1721, 5
  %v1724 = vsel %vm1566, %v1719, %v1723
  %v1725 = vshrl.u32 %v40, 16
  %v1727 = vrot.slane %v1725, 4
  %v1728 = vor.u32 %v1727, %v1723
  %v1729 = vrot.slane %v1728, 4
  %v1731 = vshll.u32 %v41, 16
  %v1733 = vrot.slane %v1731, 5
  %v1734 = vsel %vm1566, %v1729, %v1733
  %v1736 = vshrl.u32 %v42, 16
  %v1738 = vrot.slane %v1736, 4
  %v1739 = vshll.u32 %v42, 16
  %v1741 = vrot.slane %v1739, 5
  %v1742 = vor.u32 %v1738, %v1741
  %v1743 = vrot.slane %v1742, 4
  %v1745 = vshll.u32 %v43, 16
  %v1747 = vrot.slane %v1745, 5
  %v1748 = vsel %vm1566, %v1743, %v1747
  %v1749 = vshrl.u32 %v43, 16
  %v1751 = vrot.slane %v1749, 4
  %v1752 = vor.u32 %v1751, %v1747
  %v1753 = vrot.slane %v1752, 4
  %v1755 = vshll.u32 %v44, 16
  %v1757 = vrot.slane %v1755, 5
  %v1758 = vsel %vm1566, %v1753, %v1757
  %v1760 = vshrl.u32 %v45, 16
  %v1762 = vrot.slane %v1760, 4
  %v1763 = vshll.u32 %v45, 16
  %v1765 = vrot.slane %v1763, 5
  %v1766 = vor.u32 %v1762, %v1765
  %v1767 = vrot.slane %v1766, 4
  %v1769 = vshll.u32 %v46, 16
  %v1771 = vrot.slane %v1769, 5
  %v1772 = vsel %vm1566, %v1767, %v1771
  %v1773 = vshrl.u32 %v46, 16
  %v1775 = vrot.slane %v1773, 4
  %v1776 = vor.u32 %v1775, %v1771
  %v1777 = vrot.slane %v1776, 4
  %v1779 = vshll.u32 %v47, 16
  %v1781 = vrot.slane %v1779, 5
  %v1782 = vsel %vm1566, %v1777, %v1781
  %v1784 = vshrl.u32 %v48, 16
  %v1786 = vrot.slane %v1784, 4
  %v1787 = vshll.u32 %v48, 16
  %v1789 = vrot.slane %v1787, 5
  %v1790 = vor.u32 %v1786, %v1789
  %v1791 = vrot.slane %v1790, 4
  %v1793 = vshll.u32 %v49, 16
  %v1795 = vrot.slane %v1793, 5
  %v1796 = vsel %vm1566, %v1791, %v1795
  %v1797 = vshrl.u32 %v49, 16
  %v1799 = vrot.slane %v1797, 4
  %v1800 = vor.u32 %v1799, %v1795
  %v1801 = vrot.slane %v1800, 4
  %v1803 = vshll.u32 %v50, 16
  %v1805 = vrot.slane %v1803, 5
  %v1806 = vsel %vm1566, %v1801, %v1805
  %v1808 = vshrl.u32 %v51, 16
  %v1810 = vrot.slane %v1808, 4
  %v1811 = vshll.u32 %v51, 16
  %v1813 = vrot.slane %v1811, 5
  %v1814 = vor.u32 %v1810, %v1813
  %v1815 = vrot.slane %v1814, 4
  %v1817 = vshll.u32 %v52, 16
  %v1819 = vrot.slane %v1817, 5
  %v1820 = vsel %vm1566, %v1815, %v1819
  %v1821 = vshrl.u32 %v52, 16
  %v1823 = vrot.slane %v1821, 4
  %v1824 = vor.u32 %v1823, %v1819
  %v1825 = vrot.slane %v1824, 4
  %v1827 = vshll.u32 %v53, 16
  %v1829 = vrot.slane %v1827, 5
  %v1830 = vsel %vm1566, %v1825, %v1829
  %v1832 = vshrl.u32 %v54, 16
  %v1834 = vrot.slane %v1832, 4
  %v1835 = vshll.u32 %v54, 16
  %v1837 = vrot.slane %v1835, 5
  %v1838 = vor.u32 %v1834, %v1837
  %v1839 = vrot.slane %v1838, 4
  %v1841 = vshll.u32 %v55, 16
  %v1843 = vrot.slane %v1841, 5
  %v1844 = vsel %vm1566, %v1839, %v1843
  %v1845 = vshrl.u32 %v55, 16
  %v1847 = vrot.slane %v1845, 4
  %v1848 = vor.u32 %v1847, %v1843
  %v1849 = vrot.slane %v1848, 4
  %v1851 = vshll.u32 %v56, 16
  %v1853 = vrot.slane %v1851, 5
  %v1854 = vsel %vm1566, %v1849, %v1853
  %v1856 = vshrl.u32 %v57, 16
  %v1858 = vrot.slane %v1856, 4
  %v1859 = vshll.u32 %v57, 16
  %v1861 = vrot.slane %v1859, 5
  %v1862 = vor.u32 %v1858, %v1861
  %v1863 = vrot.slane %v1862, 4
  %v1865 = vshll.u32 %v58, 16
  %v1867 = vrot.slane %v1865, 5
  %v1868 = vsel %vm1566, %v1863, %v1867
  %v1869 = vshrl.u32 %v58, 16
  %v1871 = vrot.slane %v1869, 4
  %v1872 = vor.u32 %v1871, %v1867
  %v1873 = vrot.slane %v1872, 4
  %v1875 = vshll.u32 %v59, 16
  %v1877 = vrot.slane %v1875, 5
  %v1878 = vsel %vm1566, %v1873, %v1877
  %v1880 = vshrl.u32 %v60, 16
  %v1882 = vrot.slane %v1880, 4
  %v1883 = vshll.u32 %v60, 16
  %v1885 = vrot.slane %v1883, 5
  %v1886 = vor.u32 %v1882, %v1885
  %v1887 = vrot.slane %v1886, 4
  %v1889 = vshll.u32 %v61, 16
  %v1891 = vrot.slane %v1889, 5
  %v1892 = vsel %vm1566, %v1887, %v1891
  %v1893 = vshrl.u32 %v61, 16
  %v1895 = vrot.slane %v1893, 4
  %v1896 = vor.u32 %v1895, %v1891
  %v1897 = vrot.slane %v1896, 4
  %v1899 = vshll.u32 %v62, 16
  %v1901 = vrot.slane %v1899, 5
  %v1902 = vsel %vm1566, %v1897, %v1901
  %v1904 = vshrl.u32 %v63, 16
  %v1906 = vrot.slane %v1904, 4
  %v1907 = vshll.u32 %v63, 16
  %v1909 = vrot.slane %v1907, 5
  %v1910 = vor.u32 %v1906, %v1909
  %v1911 = vrot.slane %v1910, 4
  %v1913 = vshll.u32 %v64, 16
  %v1915 = vrot.slane %v1913, 5
  %v1916 = vsel %vm1566, %v1911, %v1915
  %v1917 = vshrl.u32 %v64, 16
  %v1919 = vrot.slane %v1917, 4
  %v1920 = vor.u32 %v1919, %v1915
  %v1921 = vrot.slane %v1920, 4
  %v1923 = vshll.u32 %v65, 16
  %v1925 = vrot.slane %v1923, 5
  %v1926 = vsel %vm1566, %v1921, %v1925
  %v1928 = vshrl.u32 %v66, 16
  %v1930 = vrot.slane %v1928, 4
  %v1931 = vshll.u32 %v66, 16
  %v1933 = vrot.slane %v1931, 5
  %v1934 = vor.u32 %v1930, %v1933
  %v1935 = vrot.slane %v1934, 4
  %v1937 = vshll.u32 %v67, 16
  %v1939 = vrot.slane %v1937, 5
  %v1940 = vsel %vm1566, %v1935, %v1939
  %v1941 = vshrl.u32 %v67, 16
  %v1943 = vrot.slane %v1941, 4
  %v1944 = vor.u32 %v1943, %v1939
  %v1945 = vrot.slane %v1944, 4
  %v1947 = vshll.u32 %v68, 16
  %v1949 = vrot.slane %v1947, 5
  %v1950 = vsel %vm1566, %v1945, %v1949
  %v1952 = vshrl.u32 %v75, 16
  %v1954 = vrot.slane %v1952, 4
  %v1955 = vshll.u32 %v75, 16
  %v1957 = vrot.slane %v1955, 5
  %v1958 = vor.u32 %v1954, %v1957
  %v1959 = vrot.slane %v1958, 4
  %v1961 = vshll.u32 %v76, 16
  %v1963 = vrot.slane %v1961, 5
  %v1964 = vsel %vm1566, %v1959, %v1963
  %v1965 = vshrl.u32 %v76, 16
  %v1967 = vrot.slane %v1965, 4
  %v1968 = vor.u32 %v1967, %v1963
  %v1969 = vrot.slane %v1968, 4
  %v1971 = vshll.u32 %v77, 16
  %v1973 = vrot.slane %v1971, 5
  %v1974 = vsel %vm1566, %v1969, %v1973
  %v1976 = vshrl.u32 %v78, 16
  %v1978 = vrot.slane %v1976, 4
  %v1979 = vshll.u32 %v78, 16
  %v1981 = vrot.slane %v1979, 5
  %v1982 = vor.u32 %v1978, %v1981
  %v1983 = vrot.slane %v1982, 4
  %v1985 = vshll.u32 %v79, 16
  %v1987 = vrot.slane %v1985, 5
  %v1988 = vsel %vm1566, %v1983, %v1987
  %v1989 = vshrl.u32 %v79, 16
  %v1991 = vrot.slane %v1989, 4
  %v1992 = vor.u32 %v1991, %v1987
  %v1993 = vrot.slane %v1992, 4
  %v1995 = vshll.u32 %v80, 16
  %v1997 = vrot.slane %v1995, 5
  %v1998 = vsel %vm1566, %v1993, %v1997
  %v2000 = vshrl.u32 %v81, 16
  %v2002 = vrot.slane %v2000, 4
  %v2003 = vshll.u32 %v81, 16
  %v2005 = vrot.slane %v2003, 5
  %v2006 = vor.u32 %v2002, %v2005
  %v2007 = vrot.slane %v2006, 4
  %v2009 = vshll.u32 %v82, 16
  %v2011 = vrot.slane %v2009, 5
  %v2012 = vsel %vm1566, %v2007, %v2011
  %v2013 = vshrl.u32 %v82, 16
  %v2015 = vrot.slane %v2013, 4
  %v2016 = vor.u32 %v2015, %v2011
  %v2017 = vrot.slane %v2016, 4
  %v2019 = vshll.u32 %v83, 16
  %v2021 = vrot.slane %v2019, 5
  %v2022 = vsel %vm1566, %v2017, %v2021
  %v2024 = vshrl.u32 %v84, 16
  %v2026 = vrot.slane %v2024, 4
  %v2027 = vshll.u32 %v84, 16
  %v2029 = vrot.slane %v2027, 5
  %v2030 = vor.u32 %v2026, %v2029
  %v2031 = vrot.slane %v2030, 4
  %v2033 = vshll.u32 %v85, 16
  %v2035 = vrot.slane %v2033, 5
  %v2036 = vsel %vm1566, %v2031, %v2035
  %v2037 = vshrl.u32 %v85, 16
  %v2039 = vrot.slane %v2037, 4
  %v2040 = vor.u32 %v2039, %v2035
  %v2041 = vrot.slane %v2040, 4
  %v2043 = vshll.u32 %v86, 16
  %v2045 = vrot.slane %v2043, 5
  %v2046 = vsel %vm1566, %v2041, %v2045
  %v2048 = vshrl.u32 %v87, 16
  %v2050 = vrot.slane %v2048, 4
  %v2051 = vshll.u32 %v87, 16
  %v2053 = vrot.slane %v2051, 5
  %v2054 = vor.u32 %v2050, %v2053
  %v2055 = vrot.slane %v2054, 4
  %v2057 = vshll.u32 %v88, 16
  %v2059 = vrot.slane %v2057, 5
  %v2060 = vsel %vm1566, %v2055, %v2059
  %v2061 = vshrl.u32 %v88, 16
  %v2063 = vrot.slane %v2061, 4
  %v2064 = vor.u32 %v2063, %v2059
  %v2065 = vrot.slane %v2064, 4
  %v2067 = vshll.u32 %v89, 16
  %v2069 = vrot.slane %v2067, 5
  %v2070 = vsel %vm1566, %v2065, %v2069
  %v2072 = vshrl.u32 %v90, 16
  %v2074 = vrot.slane %v2072, 4
  %v2075 = vshll.u32 %v90, 16
  %v2077 = vrot.slane %v2075, 5
  %v2078 = vor.u32 %v2074, %v2077
  %v2079 = vrot.slane %v2078, 4
  %v2081 = vshll.u32 %v91, 16
  %v2083 = vrot.slane %v2081, 5
  %v2084 = vsel %vm1566, %v2079, %v2083
  %v2085 = vshrl.u32 %v91, 16
  %v2087 = vrot.slane %v2085, 4
  %v2088 = vor.u32 %v2087, %v2083
  %v2089 = vrot.slane %v2088, 4
  %v2091 = vshll.u32 %v92, 16
  %v2093 = vrot.slane %v2091, 5
  %v2094 = vsel %vm1566, %v2089, %v2093
  %v2096 = vshrl.u32 %v93, 16
  %v2098 = vrot.slane %v2096, 4
  %v2099 = vshll.u32 %v93, 16
  %v2101 = vrot.slane %v2099, 5
  %v2102 = vor.u32 %v2098, %v2101
  %v2103 = vrot.slane %v2102, 4
  %v2105 = vshll.u32 %v94, 16
  %v2107 = vrot.slane %v2105, 5
  %v2108 = vsel %vm1566, %v2103, %v2107
  %v2109 = vshrl.u32 %v94, 16
  %v2111 = vrot.slane %v2109, 4
  %v2112 = vor.u32 %v2111, %v2107
  %v2113 = vrot.slane %v2112, 4
  %v2115 = vshll.u32 %v95, 16
  %v2117 = vrot.slane %v2115, 5
  %v2118 = vsel %vm1566, %v2113, %v2117
  %v2120 = vshrl.u32 %v96, 16
  %v2122 = vrot.slane %v2120, 4
  %v2123 = vshll.u32 %v96, 16
  %v2125 = vrot.slane %v2123, 5
  %v2126 = vor.u32 %v2122, %v2125
  %v2127 = vrot.slane %v2126, 4
  %v2129 = vshll.u32 %v97, 16
  %v2131 = vrot.slane %v2129, 5
  %v2132 = vsel %vm1566, %v2127, %v2131
  %v2133 = vshrl.u32 %v97, 16
  %v2135 = vrot.slane %v2133, 4
  %v2136 = vor.u32 %v2135, %v2131
  %v2137 = vrot.slane %v2136, 4
  %v2139 = vshll.u32 %v98, 16
  %v2141 = vrot.slane %v2139, 5
  %v2142 = vsel %vm1566, %v2137, %v2141
  %v2144 = vshrl.u32 %v99, 16
  %v2146 = vrot.slane %v2144, 4
  %v2147 = vshll.u32 %v99, 16
  %v2149 = vrot.slane %v2147, 5
  %v2150 = vor.u32 %v2146, %v2149
  %v2151 = vrot.slane %v2150, 4
  %v2153 = vshll.u32 %v100, 16
  %v2155 = vrot.slane %v2153, 5
  %v2156 = vsel %vm1566, %v2151, %v2155
  %v2157 = vshrl.u32 %v100, 16
  %v2159 = vrot.slane %v2157, 4
  %v2160 = vor.u32 %v2159, %v2155
  %v2161 = vrot.slane %v2160, 4
  %v2163 = vshll.u32 %v101, 16
  %v2165 = vrot.slane %v2163, 5
  %v2166 = vsel %vm1566, %v2161, %v2165
  %v2168 = vshrl.u32 %v102, 16
  %v2170 = vrot.slane %v2168, 4
  %v2171 = vshll.u32 %v102, 16
  %v2173 = vrot.slane %v2171, 5
  %v2174 = vor.u32 %v2170, %v2173
  %v2175 = vrot.slane %v2174, 4
  %v2177 = vshll.u32 %v103, 16
  %v2179 = vrot.slane %v2177, 5
  %v2180 = vsel %vm1566, %v2175, %v2179
  %v2181 = vshrl.u32 %v103, 16
  %v2183 = vrot.slane %v2181, 4
  %v2184 = vor.u32 %v2183, %v2179
  %v2185 = vrot.slane %v2184, 4
  %v2187 = vshll.u32 %v104, 16
  %v2189 = vrot.slane %v2187, 5
  %v2190 = vsel %vm1566, %v2185, %v2189
  %v2192 = vshrl.u32 %v105, 16
  %v2194 = vrot.slane %v2192, 4
  %v2195 = vshll.u32 %v105, 16
  %v2197 = vrot.slane %v2195, 5
  %v2198 = vor.u32 %v2194, %v2197
  %v2199 = vrot.slane %v2198, 4
  %v2201 = vshll.u32 %v106, 16
  %v2203 = vrot.slane %v2201, 5
  %v2204 = vsel %vm1566, %v2199, %v2203
  %v2205 = vshrl.u32 %v106, 16
  %v2207 = vrot.slane %v2205, 4
  %v2208 = vor.u32 %v2207, %v2203
  %v2209 = vrot.slane %v2208, 4
  %v2211 = vshll.u32 %v107, 16
  %v2213 = vrot.slane %v2211, 5
  %v2214 = vsel %vm1566, %v2209, %v2213
  %v2216 = vshrl.u32 %v108, 16
  %v2218 = vrot.slane %v2216, 4
  %v2219 = vshll.u32 %v108, 16
  %v2221 = vrot.slane %v2219, 5
  %v2222 = vor.u32 %v2218, %v2221
  %v2223 = vrot.slane %v2222, 4
  %v2225 = vshll.u32 %v109, 16
  %v2227 = vrot.slane %v2225, 5
  %v2228 = vsel %vm1566, %v2223, %v2227
  %v2229 = vshrl.u32 %v109, 16
  %v2231 = vrot.slane %v2229, 4
  %v2232 = vor.u32 %v2231, %v2227
  %v2233 = vrot.slane %v2232, 4
  %v2235 = vshll.u32 %v110, 16
  %v2237 = vrot.slane %v2235, 5
  %v2238 = vsel %vm1566, %v2233, %v2237
  %v2240 = vshrl.u32 %v111, 16
  %v2242 = vrot.slane %v2240, 4
  %v2243 = vshll.u32 %v111, 16
  %v2245 = vrot.slane %v2243, 5
  %v2246 = vor.u32 %v2242, %v2245
  %v2247 = vrot.slane %v2246, 4
  %v2249 = vshll.u32 %v112, 16
  %v2251 = vrot.slane %v2249, 5
  %v2252 = vsel %vm1566, %v2247, %v2251
  %v2253 = vshrl.u32 %v112, 16
  %v2255 = vrot.slane %v2253, 4
  %v2256 = vor.u32 %v2255, %v2251
  %v2257 = vrot.slane %v2256, 4
  %v2259 = vshll.u32 %v113, 16
  %v2261 = vrot.slane %v2259, 5
  %v2262 = vsel %vm1566, %v2257, %v2261
  %v2264 = vshrl.u32 %v114, 16
  %v2266 = vrot.slane %v2264, 4
  %v2267 = vshll.u32 %v114, 16
  %v2269 = vrot.slane %v2267, 5
  %v2270 = vor.u32 %v2266, %v2269
  %v2271 = vrot.slane %v2270, 4
  %v2273 = vshll.u32 %v115, 16
  %v2275 = vrot.slane %v2273, 5
  %v2276 = vsel %vm1566, %v2271, %v2275
  %v2277 = vshrl.u32 %v115, 16
  %v2279 = vrot.slane %v2277, 4
  %v2280 = vor.u32 %v2279, %v2275
  %v2281 = vrot.slane %v2280, 4
  %v2283 = vshll.u32 %v116, 16
  %v2285 = vrot.slane %v2283, 5
  %v2286 = vsel %vm1566, %v2281, %v2285
  %v2288 = vshrl.u32 %v117, 16
  %v2290 = vrot.slane %v2288, 4
  %v2291 = vshll.u32 %v117, 16
  %v2293 = vrot.slane %v2291, 5
  %v2294 = vor.u32 %v2290, %v2293
  %v2295 = vrot.slane %v2294, 4
  %v2297 = vshll.u32 %v118, 16
  %v2299 = vrot.slane %v2297, 5
  %v2300 = vsel %vm1566, %v2295, %v2299
  %v2301 = vshrl.u32 %v118, 16
  %v2303 = vrot.slane %v2301, 4
  %v2304 = vor.u32 %v2303, %v2299
  %v2305 = vrot.slane %v2304, 4
  %v2307 = vshll.u32 %v119, 16
  %v2309 = vrot.slane %v2307, 5
  %v2310 = vsel %vm1566, %v2305, %v2309
  %v2312 = vshrl.u32 %v120, 16
  %v2314 = vrot.slane %v2312, 4
  %v2315 = vshll.u32 %v120, 16
  %v2317 = vrot.slane %v2315, 5
  %v2318 = vor.u32 %v2314, %v2317
  %v2319 = vrot.slane %v2318, 4
  %v2321 = vshll.u32 %v121, 16
  %v2323 = vrot.slane %v2321, 5
  %v2324 = vsel %vm1566, %v2319, %v2323
  %v2325 = vshrl.u32 %v121, 16
  %v2327 = vrot.slane %v2325, 4
  %v2328 = vor.u32 %v2327, %v2323
  %v2329 = vrot.slane %v2328, 4
  %v2331 = vshll.u32 %v122, 16
  %v2333 = vrot.slane %v2331, 5
  %v2334 = vsel %vm1566, %v2329, %v2333
  %v2335 = vunpack.c.l.b16 %v1580
  %v2336 = vunpack.c.l.b16 %v1590
  %v2337 = vunpack.c.l.b16 %v1604
  %v2338 = vunpack.c.l.b16 %v1614
  %v2339 = vunpack.c.l.b16 %v1628
  %v2340 = vunpack.c.l.b16 %v1638
  %v2341 = vunpack.c.l.b16 %v1652
  %v2342 = vunpack.c.l.b16 %v1662
  %v2343 = vunpack.c.l.b16 %v1676
  %v2344 = vunpack.c.l.b16 %v1686
  %v2345 = vunpack.c.l.b16 %v1700
  %v2346 = vunpack.c.l.b16 %v1710
  %v2347 = vunpack.c.l.b16 %v1724
  %v2348 = vunpack.c.l.b16 %v1734
  %v2349 = vunpack.c.l.b16 %v1748
  %v2350 = vunpack.c.l.b16 %v1758
  %v2351 = vunpack.c.l.b16 %v1772
  %v2352 = vunpack.c.l.b16 %v1782
  %v2353 = vunpack.c.l.b16 %v1796
  %v2354 = vunpack.c.l.b16 %v1806
  %v2355 = vunpack.c.l.b16 %v1820
  %v2356 = vunpack.c.l.b16 %v1830
  %v2357 = vunpack.c.l.b16 %v1844
  %v2358 = vunpack.c.l.b16 %v1854
  %v2359 = vunpack.c.l.b16 %v1868
  %v2360 = vunpack.c.l.b16 %v1878
  %v2361 = vunpack.c.l.b16 %v1892
  %v2362 = vunpack.c.l.b16 %v1902
  %v2363 = vunpack.c.l.b16 %v1916
  %v2364 = vunpack.c.l.b16 %v1926
  %v2365 = vunpack.c.l.b16 %v1940
  %v2366 = vunpack.c.l.b16 %v1950
  %v2367 = vunpack.c.l.b16 %v1964
  %v2368 = vunpack.c.l.b16 %v1974
  %v2369 = vunpack.c.l.b16 %v1988
  %v2370 = vunpack.c.l.b16 %v1998
  %v2371 = vunpack.c.l.b16 %v2012
  %v2372 = vunpack.c.l.b16 %v2022
  %v2373 = vunpack.c.l.b16 %v2036
  %v2374 = vunpack.c.l.b16 %v2046
  %v2375 = vunpack.c.l.b16 %v2060
  %v2376 = vunpack.c.l.b16 %v2070
  %v2377 = vunpack.c.l.b16 %v2084
  %v2378 = vunpack.c.l.b16 %v2094
  %v2379 = vunpack.c.l.b16 %v2108
  %v2380 = vunpack.c.l.b16 %v2118
  %v2381 = vunpack.c.l.b16 %v2132
  %v2382 = vunpack.c.l.b16 %v2142
  %v2383 = vunpack.c.l.b16 %v2156
  %v2384 = vunpack.c.l.b16 %v2166
  %v2385 = vunpack.c.l.b16 %v2180
  %v2386 = vunpack.c.l.b16 %v2190
  %v2387 = vunpack.c.l.b16 %v2204
  %v2388 = vunpack.c.l.b16 %v2214
  %v2389 = vunpack.c.l.b16 %v2228
  %v2390 = vunpack.c.l.b16 %v2238
  %v2391 = vunpack.c.l.b16 %v2252
  %v2392 = vunpack.c.l.b16 %v2262
  %v2393 = vunpack.c.l.b16 %v2276
  %v2394 = vunpack.c.l.b16 %v2286
  %v2395 = vunpack.c.l.b16 %v2300
  %v2396 = vunpack.c.l.b16 %v2310
  %v2397 = vunpack.c.l.b16 %v2324
  %v2398 = vunpack.c.l.b16 %v2334
  %v2399 = vpack.c.b16 %v2336, %v2335
  %v2400 = vpack.c.b16 %v2338, %v2337
  %v2401 = vpack.c.b16 %v2340, %v2339
  %v2402 = vpack.c.b16 %v2342, %v2341
  %v2403 = vpack.c.b16 %v2344, %v2343
  %v2404 = vpack.c.b16 %v2346, %v2345
  %v2405 = vpack.c.b16 %v2348, %v2347
  %v2406 = vpack.c.b16 %v2350, %v2349
  %v2407 = vpack.c.b16 %v2352, %v2351
  %v2408 = vpack.c.b16 %v2354, %v2353
  %v2409 = vpack.c.b16 %v2356, %v2355
  %v2410 = vpack.c.b16 %v2358, %v2357
  %v2411 = vpack.c.b16 %v2360, %v2359
  %v2412 = vpack.c.b16 %v2362, %v2361
  %v2413 = vpack.c.b16 %v2364, %v2363
  %v2414 = vpack.c.b16 %v2366, %v2365
  %v2415 = vpack.c.b16 %v2368, %v2367
  %v2416 = vpack.c.b16 %v2370, %v2369
  %v2417 = vpack.c.b16 %v2372, %v2371
  %v2418 = vpack.c.b16 %v2374, %v2373
  %v2419 = vpack.c.b16 %v2376, %v2375
  %v2420 = vpack.c.b16 %v2378, %v2377
  %v2421 = vpack.c.b16 %v2380, %v2379
  %v2422 = vpack.c.b16 %v2382, %v2381
  %v2423 = vpack.c.b16 %v2384, %v2383
  %v2424 = vpack.c.b16 %v2386, %v2385
  %v2425 = vpack.c.b16 %v2388, %v2387
  %v2426 = vpack.c.b16 %v2390, %v2389
  %v2427 = vpack.c.b16 %v2392, %v2391
  %v2428 = vpack.c.b16 %v2394, %v2393
  %v2429 = vpack.c.b16 %v2396, %v2395
  %v2430 = vpack.c.b16 %v2398, %v2397
  %v2479 = vunpack.c.l.b16 %v145
  %v2480 = vunpack.c.l.b16 %v146
  %v2481 = vunpack.c.l.b16 %v147
  %v2482 = vunpack.c.l.b16 %v148
  %v2483 = vunpack.c.l.b16 %v149
  %v2484 = vunpack.c.l.b16 %v150
  %v2485 = vunpack.c.l.b16 %v151
  %v2486 = vunpack.c.l.b16 %v152
  %v2487 = vunpack.c.l.b16 %v153
  %v2488 = vunpack.c.l.b16 %v154
  %v2489 = vunpack.c.l.b16 %v155
  %v2490 = vunpack.c.l.b16 %v156
  %v2491 = vunpack.c.l.b16 %v157
  %v2492 = vunpack.c.l.b16 %v158
  %v2493 = vunpack.c.l.b16 %v159
  %v2494 = vunpack.c.l.b16 %v160
  %v2495 = vpack.c.b16 %v2480, %v2479
  %v2496 = vpack.c.b16 %v2482, %v2481
  %v2497 = vpack.c.b16 %v2484, %v2483
  %v2498 = vpack.c.b16 %v2486, %v2485
  %v2499 = vpack.c.b16 %v2488, %v2487
  %v2500 = vpack.c.b16 %v2490, %v2489
  %v2501 = vpack.c.b16 %v2492, %v2491
  %v2502 = vpack.c.b16 %v2494, %v2493
  %2511 = vmatprep.subr.bf16.mxu0 0
  %2512 = vmatpush1.bf16.msra.mxu0 %v2502
  %2513 = vmatprep.subr.bf16.mxu0 0
  %2514 = vmatpush1.bf16.msra.mxu0 %v2501
  %2515 = vmatprep.subr.bf16.mxu0 0
  %2516 = vmatpush1.bf16.msra.mxu0 %v2500
  %2517 = vmatprep.subr.bf16.mxu0 0
  %2518 = vmatpush1.bf16.msra.mxu0 %v2499
  %2519 = vmatprep.subr.bf16.mxu0 0
  %2520 = vmatpush1.bf16.msra.mxu0 %v2498
  %2521 = vmatprep.subr.bf16.mxu0 0
  %2522 = vmatpush1.bf16.msra.mxu0 %v2497
  %2523 = vmatprep.subr.bf16.mxu0 0
  %2524 = vmatpush1.bf16.msra.mxu0 %v2496
  %2525 = vmatprep.subr.bf16.mxu0 0
  %2526 = vmatpush1.bf16.msra.mxu0 %v2495
  %2527 = vmatprep.subr.bf16.mxu0 0
  %2528 = vmatpush2.bf16.msra.mxu0 0
  %2529 = vmatprep.subr.bf16.mxu0 0
  %2530 = vmatpush2.bf16.msra.mxu0 0
  %2531 = vmatprep.subr.bf16.mxu0 0
  %2532 = vmatpush2.bf16.msra.mxu0 0
  %2533 = vmatprep.subr.bf16.mxu0 0
  %2534 = vmatpush2.bf16.msra.mxu0 0
  %2535 = vmatprep.subr.bf16.mxu0 0
  %2536 = vmatpush2.bf16.msra.mxu0 0
  %2537 = vmatprep.subr.bf16.mxu0 0
  %2538 = vmatpush2.bf16.msra.mxu0 0
  %2539 = vmatprep.subr.bf16.mxu0 0
  %2540 = vmatpush2.bf16.msra.mxu0 0
  %2541 = vmatprep.subr.bf16.mxu0 0
  %2542 = vmatpush2.bf16.msra.mxu0 0
  %2543 = vmatprep.mubr.bf16.mxu0 0
  %2544 = vmatmul.mubr.bf16.gmra.mxu0 %v2399
  %v2545 = vpop.f32.mrf.mxu0
  %v2546 = vadd.f32 0.0, %v2545
  %v2547 = vpop.f32.mrf.mxu0
  %v2548 = vpop.f32.mrf.mxu0
  %v2549 = vadd.f32 0.0, %v2548
  %v2550 = vpop.f32.mrf.mxu0
  %2551 = vmatprep.mubr.bf16.mxu0 0
  %2552 = vmatmul.mubr.bf16.gmra.mxu0 %v2400
  %v2553 = vpop.f32.mrf.mxu0
  %v2554 = vadd.f32 0.0, %v2553
  %v2555 = vpop.f32.mrf.mxu0
  %v2556 = vpop.f32.mrf.mxu0
  %v2557 = vadd.f32 0.0, %v2556
  %v2558 = vpop.f32.mrf.mxu0
  %2559 = vmatprep.mubr.bf16.mxu0 0
  %2560 = vmatmul.mubr.bf16.gmra.mxu0 %v2401
  %v2561 = vpop.f32.mrf.mxu0
  %v2562 = vadd.f32 0.0, %v2561
  %v2563 = vpop.f32.mrf.mxu0
  %v2564 = vpop.f32.mrf.mxu0
  %v2565 = vadd.f32 0.0, %v2564
  %v2566 = vpop.f32.mrf.mxu0
  %2567 = vmatprep.mubr.bf16.mxu0 0
  %2568 = vmatmul.mubr.bf16.gmra.mxu0 %v2402
  %v2569 = vpop.f32.mrf.mxu0
  %v2570 = vadd.f32 0.0, %v2569
  %v2571 = vpop.f32.mrf.mxu0
  %v2572 = vpop.f32.mrf.mxu0
  %v2573 = vadd.f32 0.0, %v2572
  %v2574 = vpop.f32.mrf.mxu0
  %2575 = vmatprep.mubr.bf16.mxu0 0
  %2576 = vmatmul.mubr.bf16.gmra.mxu0 %v2403
  %v2577 = vpop.f32.mrf.mxu0
  %v2578 = vadd.f32 0.0, %v2577
  %v2579 = vpop.f32.mrf.mxu0
  %v2580 = vpop.f32.mrf.mxu0
  %v2581 = vadd.f32 0.0, %v2580
  %v2582 = vpop.f32.mrf.mxu0
  %2583 = vmatprep.mubr.bf16.mxu0 0
  %2584 = vmatmul.mubr.bf16.gmra.mxu0 %v2404
  %v2585 = vpop.f32.mrf.mxu0
  %v2586 = vadd.f32 0.0, %v2585
  %v2587 = vpop.f32.mrf.mxu0
  %v2588 = vpop.f32.mrf.mxu0
  %v2589 = vadd.f32 0.0, %v2588
  %v2590 = vpop.f32.mrf.mxu0
  %2591 = vmatprep.mubr.bf16.mxu0 0
  %2592 = vmatmul.mubr.bf16.gmra.mxu0 %v2405
  %v2593 = vpop.f32.mrf.mxu0
  %v2594 = vadd.f32 0.0, %v2593
  %v2595 = vpop.f32.mrf.mxu0
  %v2596 = vpop.f32.mrf.mxu0
  %v2597 = vadd.f32 0.0, %v2596
  %v2598 = vpop.f32.mrf.mxu0
  %2599 = vmatprep.mubr.bf16.mxu0 0
  %2600 = vmatmul.mubr.bf16.gmra.mxu0 %v2406
  %v2601 = vpop.f32.mrf.mxu0
  %v2602 = vadd.f32 0.0, %v2601
  %v2603 = vpop.f32.mrf.mxu0
  %v2604 = vpop.f32.mrf.mxu0
  %v2605 = vadd.f32 0.0, %v2604
  %v2606 = vpop.f32.mrf.mxu0
  %2607 = vmatprep.mubr.bf16.mxu0 0
  %2608 = vmatmul.mubr.bf16.gmra.mxu0 %v2407
  %v2609 = vpop.f32.mrf.mxu0
  %v2610 = vadd.f32 0.0, %v2609
  %v2611 = vpop.f32.mrf.mxu0
  %v2612 = vpop.f32.mrf.mxu0
  %v2613 = vadd.f32 0.0, %v2612
  %v2614 = vpop.f32.mrf.mxu0
  %2615 = vmatprep.mubr.bf16.mxu0 0
  %2616 = vmatmul.mubr.bf16.gmra.mxu0 %v2408
  %v2617 = vpop.f32.mrf.mxu0
  %v2618 = vadd.f32 0.0, %v2617
  %v2619 = vpop.f32.mrf.mxu0
  %v2620 = vpop.f32.mrf.mxu0
  %v2621 = vadd.f32 0.0, %v2620
  %v2622 = vpop.f32.mrf.mxu0
  %2623 = vmatprep.mubr.bf16.mxu0 0
  %2624 = vmatmul.mubr.bf16.gmra.mxu0 %v2409
  %v2625 = vpop.f32.mrf.mxu0
  %v2626 = vadd.f32 0.0, %v2625
  %v2627 = vpop.f32.mrf.mxu0
  %v2628 = vpop.f32.mrf.mxu0
  %v2629 = vadd.f32 0.0, %v2628
  %v2630 = vpop.f32.mrf.mxu0
  %2631 = vmatprep.mubr.bf16.mxu0 0
  %2632 = vmatmul.mubr.bf16.gmra.mxu0 %v2410
  %v2633 = vpop.f32.mrf.mxu0
  %v2634 = vadd.f32 0.0, %v2633
  %v2635 = vpop.f32.mrf.mxu0
  %v2636 = vpop.f32.mrf.mxu0
  %v2637 = vadd.f32 0.0, %v2636
  %v2638 = vpop.f32.mrf.mxu0
  %2639 = vmatprep.mubr.bf16.mxu0 0
  %2640 = vmatmul.mubr.bf16.gmra.mxu0 %v2411
  %v2641 = vpop.f32.mrf.mxu0
  %v2642 = vadd.f32 0.0, %v2641
  %v2643 = vpop.f32.mrf.mxu0
  %v2644 = vpop.f32.mrf.mxu0
  %v2645 = vadd.f32 0.0, %v2644
  %v2646 = vpop.f32.mrf.mxu0
  %2647 = vmatprep.mubr.bf16.mxu0 0
  %2648 = vmatmul.mubr.bf16.gmra.mxu0 %v2412
  %v2649 = vpop.f32.mrf.mxu0
  %v2650 = vadd.f32 0.0, %v2649
  %v2651 = vpop.f32.mrf.mxu0
  %v2652 = vpop.f32.mrf.mxu0
  %v2653 = vadd.f32 0.0, %v2652
  %v2654 = vpop.f32.mrf.mxu0
  %2655 = vmatprep.mubr.bf16.mxu0 0
  %2656 = vmatmul.mubr.bf16.gmra.mxu0 %v2413
  %v2657 = vpop.f32.mrf.mxu0
  %v2658 = vadd.f32 0.0, %v2657
  %v2659 = vpop.f32.mrf.mxu0
  %v2660 = vpop.f32.mrf.mxu0
  %v2661 = vadd.f32 0.0, %v2660
  %v2662 = vpop.f32.mrf.mxu0
  %2663 = vmatprep.mubr.bf16.mxu0 0
  %2664 = vmatmul.mubr.bf16.gmra.mxu0 %v2414
  %v2665 = vpop.f32.mrf.mxu0
  %v2666 = vadd.f32 0.0, %v2665
  %v2667 = vpop.f32.mrf.mxu0
  %v2668 = vpop.f32.mrf.mxu0
  %v2669 = vadd.f32 0.0, %v2668
  %v2670 = vpop.f32.mrf.mxu0
  %2671 = vmatprep.mubr.bf16.mxu0 0
  %2672 = vmatmul.mubr.bf16.gmra.mxu0 %v2415
  %v2673 = vpop.f32.mrf.mxu0
  %v2674 = vadd.f32 0.0, %v2673
  %v2675 = vpop.f32.mrf.mxu0
  %v2676 = vpop.f32.mrf.mxu0
  %v2677 = vadd.f32 0.0, %v2676
  %v2678 = vpop.f32.mrf.mxu0
  %2679 = vmatprep.mubr.bf16.mxu0 0
  %2680 = vmatmul.mubr.bf16.gmra.mxu0 %v2416
  %v2681 = vpop.f32.mrf.mxu0
  %v2682 = vadd.f32 0.0, %v2681
  %v2683 = vpop.f32.mrf.mxu0
  %v2684 = vpop.f32.mrf.mxu0
  %v2685 = vadd.f32 0.0, %v2684
  %v2686 = vpop.f32.mrf.mxu0
  %2687 = vmatprep.mubr.bf16.mxu0 0
  %2688 = vmatmul.mubr.bf16.gmra.mxu0 %v2417
  %v2689 = vpop.f32.mrf.mxu0
  %v2690 = vadd.f32 0.0, %v2689
  %v2691 = vpop.f32.mrf.mxu0
  %v2692 = vpop.f32.mrf.mxu0
  %v2693 = vadd.f32 0.0, %v2692
  %v2694 = vpop.f32.mrf.mxu0
  %2695 = vmatprep.mubr.bf16.mxu0 0
  %2696 = vmatmul.mubr.bf16.gmra.mxu0 %v2418
  %v2697 = vpop.f32.mrf.mxu0
  %v2698 = vadd.f32 0.0, %v2697
  %v2699 = vpop.f32.mrf.mxu0
  %v2700 = vpop.f32.mrf.mxu0
  %v2701 = vadd.f32 0.0, %v2700
  %v2702 = vpop.f32.mrf.mxu0
  %2703 = vmatprep.mubr.bf16.mxu0 0
  %2704 = vmatmul.mubr.bf16.gmra.mxu0 %v2419
  %v2705 = vpop.f32.mrf.mxu0
  %v2706 = vadd.f32 0.0, %v2705
  %v2707 = vpop.f32.mrf.mxu0
  %v2708 = vpop.f32.mrf.mxu0
  %v2709 = vadd.f32 0.0, %v2708
  %v2710 = vpop.f32.mrf.mxu0
  %2711 = vmatprep.mubr.bf16.mxu0 0
  %2712 = vmatmul.mubr.bf16.gmra.mxu0 %v2420
  %v2713 = vpop.f32.mrf.mxu0
  %v2714 = vadd.f32 0.0, %v2713
  %v2715 = vpop.f32.mrf.mxu0
  %v2716 = vpop.f32.mrf.mxu0
  %v2717 = vadd.f32 0.0, %v2716
  %v2718 = vpop.f32.mrf.mxu0
  %2719 = vmatprep.mubr.bf16.mxu0 0
  %2720 = vmatmul.mubr.bf16.gmra.mxu0 %v2421
  %v2721 = vpop.f32.mrf.mxu0
  %v2722 = vadd.f32 0.0, %v2721
  %v2723 = vpop.f32.mrf.mxu0
  %v2724 = vpop.f32.mrf.mxu0
  %v2725 = vadd.f32 0.0, %v2724
  %v2726 = vpop.f32.mrf.mxu0
  %2727 = vmatprep.mubr.bf16.mxu0 0
  %2728 = vmatmul.mubr.bf16.gmra.mxu0 %v2422
  %v2729 = vpop.f32.mrf.mxu0
  %v2730 = vadd.f32 0.0, %v2729
  %v2731 = vpop.f32.mrf.mxu0
  %v2732 = vpop.f32.mrf.mxu0
  %v2733 = vadd.f32 0.0, %v2732
  %v2734 = vpop.f32.mrf.mxu0
  %2735 = vmatprep.mubr.bf16.mxu0 0
  %2736 = vmatmul.mubr.bf16.gmra.mxu0 %v2423
  %v2737 = vpop.f32.mrf.mxu0
  %v2738 = vadd.f32 0.0, %v2737
  %v2739 = vpop.f32.mrf.mxu0
  %v2740 = vpop.f32.mrf.mxu0
  %v2741 = vadd.f32 0.0, %v2740
  %v2742 = vpop.f32.mrf.mxu0
  %2743 = vmatprep.mubr.bf16.mxu0 0
  %2744 = vmatmul.mubr.bf16.gmra.mxu0 %v2424
  %v2745 = vpop.f32.mrf.mxu0
  %v2746 = vadd.f32 0.0, %v2745
  %v2747 = vpop.f32.mrf.mxu0
  %v2748 = vpop.f32.mrf.mxu0
  %v2749 = vadd.f32 0.0, %v2748
  %v2750 = vpop.f32.mrf.mxu0
  %2751 = vmatprep.mubr.bf16.mxu0 0
  %2752 = vmatmul.mubr.bf16.gmra.mxu0 %v2425
  %v2753 = vpop.f32.mrf.mxu0
  %v2754 = vadd.f32 0.0, %v2753
  %v2755 = vpop.f32.mrf.mxu0
  %v2756 = vpop.f32.mrf.mxu0
  %v2757 = vadd.f32 0.0, %v2756
  %v2758 = vpop.f32.mrf.mxu0
  %2759 = vmatprep.mubr.bf16.mxu0 0
  %2760 = vmatmul.mubr.bf16.gmra.mxu0 %v2426
  %v2761 = vpop.f32.mrf.mxu0
  %v2762 = vadd.f32 0.0, %v2761
  %v2763 = vpop.f32.mrf.mxu0
  %v2764 = vpop.f32.mrf.mxu0
  %v2765 = vadd.f32 0.0, %v2764
  %v2766 = vpop.f32.mrf.mxu0
  %2767 = vmatprep.mubr.bf16.mxu0 0
  %2768 = vmatmul.mubr.bf16.gmra.mxu0 %v2427
  %v2769 = vpop.f32.mrf.mxu0
  %v2770 = vadd.f32 0.0, %v2769
  %v2771 = vpop.f32.mrf.mxu0
  %v2772 = vpop.f32.mrf.mxu0
  %v2773 = vadd.f32 0.0, %v2772
  %v2774 = vpop.f32.mrf.mxu0
  %2775 = vmatprep.mubr.bf16.mxu0 0
  %2776 = vmatmul.mubr.bf16.gmra.mxu0 %v2428
  %v2777 = vpop.f32.mrf.mxu0
  %v2778 = vadd.f32 0.0, %v2777
  %v2779 = vpop.f32.mrf.mxu0
  %v2780 = vpop.f32.mrf.mxu0
  %v2781 = vadd.f32 0.0, %v2780
  %v2782 = vpop.f32.mrf.mxu0
  %2783 = vmatprep.mubr.bf16.mxu0 0
  %2784 = vmatmul.mubr.bf16.gmra.mxu0 %v2429
  %v2785 = vpop.f32.mrf.mxu0
  %v2786 = vadd.f32 0.0, %v2785
  %v2787 = vpop.f32.mrf.mxu0
  %v2788 = vpop.f32.mrf.mxu0
  %v2789 = vadd.f32 0.0, %v2788
  %v2790 = vpop.f32.mrf.mxu0
  %2791 = vmatprep.mubr.bf16.mxu0 0
  %2792 = vmatmul.mubr.bf16.gmra.mxu0 %v2430
  %v2793 = vpop.f32.mrf.mxu0
  %v2794 = vadd.f32 0.0, %v2793
  %v2795 = vpop.f32.mrf.mxu0
  %v2796 = vpop.f32.mrf.mxu0
  %v2797 = vadd.f32 0.0, %v2796
  %v2798 = vpop.f32.mrf.mxu0
  %2799 = vdwg.mxu0
  %v2800 = vadd.f32 %v1500, %v2546
  %v2801 = vadd.f32 %v1501, %v2549
  %v2802 = vadd.f32 %v1502, %v2554
  %v2803 = vadd.f32 %v1503, %v2557
  %v2804 = vadd.f32 %v1504, %v2562
  %v2805 = vadd.f32 %v1505, %v2565
  %v2806 = vadd.f32 %v1506, %v2570
  %v2807 = vadd.f32 %v1507, %v2573
  %v2808 = vadd.f32 %v1508, %v2578
  %v2809 = vadd.f32 %v1509, %v2581
  %v2810 = vadd.f32 %v1510, %v2586
  %v2811 = vadd.f32 %v1511, %v2589
  %v2812 = vadd.f32 %v1512, %v2594
  %v2813 = vadd.f32 %v1513, %v2597
  %v2814 = vadd.f32 %v1514, %v2602
  %v2815 = vadd.f32 %v1515, %v2605
  %v2816 = vadd.f32 %v1516, %v2610
  %v2817 = vadd.f32 %v1517, %v2613
  %v2818 = vadd.f32 %v1518, %v2618
  %v2819 = vadd.f32 %v1519, %v2621
  %v2820 = vadd.f32 %v1520, %v2626
  %v2821 = vadd.f32 %v1521, %v2629
  %v2822 = vadd.f32 %v1522, %v2634
  %v2823 = vadd.f32 %v1523, %v2637
  %v2824 = vadd.f32 %v1524, %v2642
  %v2825 = vadd.f32 %v1525, %v2645
  %v2826 = vadd.f32 %v1526, %v2650
  %v2827 = vadd.f32 %v1527, %v2653
  %v2828 = vadd.f32 %v1528, %v2658
  %v2829 = vadd.f32 %v1529, %v2661
  %v2830 = vadd.f32 %v1530, %v2666
  %v2831 = vadd.f32 %v1531, %v2669
  %v2832 = vadd.f32 %v1532, %v2674
  %v2833 = vadd.f32 %v1533, %v2677
  %v2834 = vadd.f32 %v1534, %v2682
  %v2835 = vadd.f32 %v1535, %v2685
  %v2836 = vadd.f32 %v1536, %v2690
  %v2837 = vadd.f32 %v1537, %v2693
  %v2838 = vadd.f32 %v1538, %v2698
  %v2839 = vadd.f32 %v1539, %v2701
  %v2840 = vadd.f32 %v1540, %v2706
  %v2841 = vadd.f32 %v1541, %v2709
  %v2842 = vadd.f32 %v1542, %v2714
  %v2843 = vadd.f32 %v1543, %v2717
  %v2844 = vadd.f32 %v1544, %v2722
  %v2845 = vadd.f32 %v1545, %v2725
  %v2846 = vadd.f32 %v1546, %v2730
  %v2847 = vadd.f32 %v1547, %v2733
  %v2848 = vadd.f32 %v1548, %v2738
  %v2849 = vadd.f32 %v1549, %v2741
  %v2850 = vadd.f32 %v1550, %v2746
  %v2851 = vadd.f32 %v1551, %v2749
  %v2852 = vadd.f32 %v1552, %v2754
  %v2853 = vadd.f32 %v1553, %v2757
  %v2854 = vadd.f32 %v1554, %v2762
  %v2855 = vadd.f32 %v1555, %v2765
  %v2856 = vadd.f32 %v1556, %v2770
  %v2857 = vadd.f32 %v1557, %v2773
  %v2858 = vadd.f32 %v1558, %v2778
  %v2859 = vadd.f32 %v1559, %v2781
  %v2860 = vadd.f32 %v1560, %v2786
  %v2861 = vadd.f32 %v1561, %v2789
  %v2862 = vadd.f32 %v1562, %v2794
  %v2863 = vadd.f32 %v1563, %v2797
  %v2865 = vshrl.u32 %v69, 16
  %v2867 = vrot.slane %v2865, 4
  %v2868 = vshll.u32 %v69, 16
  %v2870 = vrot.slane %v2868, 5
  %v2871 = vor.u32 %v2867, %v2870
  %v2872 = vrot.slane %v2871, 4
  %v2874 = vshll.u32 %v70, 16
  %v2876 = vrot.slane %v2874, 5
  %v2877 = vsel %vm1566, %v2872, %v2876
  %v2878 = vshrl.u32 %v70, 16
  %v2880 = vrot.slane %v2878, 4
  %v2881 = vor.u32 %v2880, %v2876
  %v2882 = vrot.slane %v2881, 4
  %v2884 = vshll.u32 %v71, 16
  %v2886 = vrot.slane %v2884, 5
  %v2887 = vsel %vm1566, %v2882, %v2886
  %v2889 = vshrl.u32 %v123, 16
  %v2891 = vrot.slane %v2889, 4
  %v2892 = vshll.u32 %v123, 16
  %v2894 = vrot.slane %v2892, 5
  %v2895 = vor.u32 %v2891, %v2894
  %v2896 = vrot.slane %v2895, 4
  %v2898 = vshll.u32 %v124, 16
  %v2900 = vrot.slane %v2898, 5
  %v2901 = vsel %vm1566, %v2896, %v2900
  %v2902 = vshrl.u32 %v124, 16
  %v2904 = vrot.slane %v2902, 4
  %v2905 = vor.u32 %v2904, %v2900
  %v2906 = vrot.slane %v2905, 4
  %v2908 = vshll.u32 %v125, 16
  %v2910 = vrot.slane %v2908, 5
  %v2911 = vsel %vm1566, %v2906, %v2910
  %v2912 = vunpack.c.l.b16 %v2877
  %v2913 = vunpack.c.l.b16 %v2887
  %v2914 = vunpack.c.l.b16 %v2901
  %v2915 = vunpack.c.l.b16 %v2911
  %v2916 = vpack.c.b16 %v2913, %v2912
  %v2917 = vpack.c.b16 %v2915, %v2914
  %v2936 = vunpack.c.l.b16 %v193
  %v2937 = vunpack.c.l.b16 %v194
  %v2938 = vunpack.c.l.b16 %v195
  %v2939 = vunpack.c.l.b16 %v196
  %v2940 = vunpack.c.l.b16 %v197
  %v2941 = vunpack.c.l.b16 %v198
  %v2942 = vunpack.c.l.b16 %v199
  %v2943 = vunpack.c.l.b16 %v200
  %v2944 = vunpack.c.l.b16 %v201
  %v2945 = vunpack.c.l.b16 %v202
  %v2946 = vunpack.c.l.b16 %v203
  %v2947 = vunpack.c.l.b16 %v204
  %v2948 = vunpack.c.l.b16 %v205
  %v2949 = vunpack.c.l.b16 %v206
  %v2950 = vunpack.c.l.b16 %v207
  %v2951 = vunpack.c.l.b16 %v208
  %v2952 = vpack.c.b16 %v2937, %v2936
  %v2953 = vpack.c.b16 %v2939, %v2938
  %v2954 = vpack.c.b16 %v2941, %v2940
  %v2955 = vpack.c.b16 %v2943, %v2942
  %v2956 = vpack.c.b16 %v2945, %v2944
  %v2957 = vpack.c.b16 %v2947, %v2946
  %v2958 = vpack.c.b16 %v2949, %v2948
  %v2959 = vpack.c.b16 %v2951, %v2950
  %2968 = vmatprep.subr.bf16.mxu0 0
  %2969 = vmatpush1.bf16.msra.mxu0 %v2959
  %2970 = vmatprep.subr.bf16.mxu0 0
  %2971 = vmatpush1.bf16.msra.mxu0 %v2958
  %2972 = vmatprep.subr.bf16.mxu0 0
  %2973 = vmatpush1.bf16.msra.mxu0 %v2957
  %2974 = vmatprep.subr.bf16.mxu0 0
  %2975 = vmatpush1.bf16.msra.mxu0 %v2956
  %2976 = vmatprep.subr.bf16.mxu0 0
  %2977 = vmatpush1.bf16.msra.mxu0 %v2955
  %2978 = vmatprep.subr.bf16.mxu0 0
  %2979 = vmatpush1.bf16.msra.mxu0 %v2954
  %2980 = vmatprep.subr.bf16.mxu0 0
  %2981 = vmatpush1.bf16.msra.mxu0 %v2953
  %2982 = vmatprep.subr.bf16.mxu0 0
  %2983 = vmatpush1.bf16.msra.mxu0 %v2952
  %2984 = vmatprep.subr.bf16.mxu0 0
  %2985 = vmatpush2.bf16.msra.mxu0 0
  %2986 = vmatprep.subr.bf16.mxu0 0
  %2987 = vmatpush2.bf16.msra.mxu0 0
  %2988 = vmatprep.subr.bf16.mxu0 0
  %2989 = vmatpush2.bf16.msra.mxu0 0
  %2990 = vmatprep.subr.bf16.mxu0 0
  %2991 = vmatpush2.bf16.msra.mxu0 0
  %2992 = vmatprep.subr.bf16.mxu0 0
  %2993 = vmatpush2.bf16.msra.mxu0 0
  %2994 = vmatprep.subr.bf16.mxu0 0
  %2995 = vmatpush2.bf16.msra.mxu0 0
  %2996 = vmatprep.subr.bf16.mxu0 0
  %2997 = vmatpush2.bf16.msra.mxu0 0
  %2998 = vmatprep.subr.bf16.mxu0 0
  %2999 = vmatpush2.bf16.msra.mxu0 0
  %3000 = vmatprep.mubr.bf16.mxu0 0
  %3001 = vmatmul.mubr.bf16.gmra.mxu0 %v2400
  %v3002 = vpop.f32.mrf.mxu0
  %v3003 = vadd.f32 0.0, %v3002
  %v3004 = vpop.f32.mrf.mxu0
  %v3005 = vpop.f32.mrf.mxu0
  %v3006 = vadd.f32 0.0, %v3005
  %v3007 = vpop.f32.mrf.mxu0
  %3008 = vmatprep.mubr.bf16.mxu0 0
  %3009 = vmatmul.mubr.bf16.gmra.mxu0 %v2401
  %v3010 = vpop.f32.mrf.mxu0
  %v3011 = vadd.f32 0.0, %v3010
  %v3012 = vpop.f32.mrf.mxu0
  %v3013 = vpop.f32.mrf.mxu0
  %v3014 = vadd.f32 0.0, %v3013
  %v3015 = vpop.f32.mrf.mxu0
  %3016 = vmatprep.mubr.bf16.mxu0 0
  %3017 = vmatmul.mubr.bf16.gmra.mxu0 %v2402
  %v3018 = vpop.f32.mrf.mxu0
  %v3019 = vadd.f32 0.0, %v3018
  %v3020 = vpop.f32.mrf.mxu0
  %v3021 = vpop.f32.mrf.mxu0
  %v3022 = vadd.f32 0.0, %v3021
  %v3023 = vpop.f32.mrf.mxu0
  %3024 = vmatprep.mubr.bf16.mxu0 0
  %3025 = vmatmul.mubr.bf16.gmra.mxu0 %v2403
  %v3026 = vpop.f32.mrf.mxu0
  %v3027 = vadd.f32 0.0, %v3026
  %v3028 = vpop.f32.mrf.mxu0
  %v3029 = vpop.f32.mrf.mxu0
  %v3030 = vadd.f32 0.0, %v3029
  %v3031 = vpop.f32.mrf.mxu0
  %3032 = vmatprep.mubr.bf16.mxu0 0
  %3033 = vmatmul.mubr.bf16.gmra.mxu0 %v2404
  %v3034 = vpop.f32.mrf.mxu0
  %v3035 = vadd.f32 0.0, %v3034
  %v3036 = vpop.f32.mrf.mxu0
  %v3037 = vpop.f32.mrf.mxu0
  %v3038 = vadd.f32 0.0, %v3037
  %v3039 = vpop.f32.mrf.mxu0
  %3040 = vmatprep.mubr.bf16.mxu0 0
  %3041 = vmatmul.mubr.bf16.gmra.mxu0 %v2405
  %v3042 = vpop.f32.mrf.mxu0
  %v3043 = vadd.f32 0.0, %v3042
  %v3044 = vpop.f32.mrf.mxu0
  %v3045 = vpop.f32.mrf.mxu0
  %v3046 = vadd.f32 0.0, %v3045
  %v3047 = vpop.f32.mrf.mxu0
  %3048 = vmatprep.mubr.bf16.mxu0 0
  %3049 = vmatmul.mubr.bf16.gmra.mxu0 %v2406
  %v3050 = vpop.f32.mrf.mxu0
  %v3051 = vadd.f32 0.0, %v3050
  %v3052 = vpop.f32.mrf.mxu0
  %v3053 = vpop.f32.mrf.mxu0
  %v3054 = vadd.f32 0.0, %v3053
  %v3055 = vpop.f32.mrf.mxu0
  %3056 = vmatprep.mubr.bf16.mxu0 0
  %3057 = vmatmul.mubr.bf16.gmra.mxu0 %v2407
  %v3058 = vpop.f32.mrf.mxu0
  %v3059 = vadd.f32 0.0, %v3058
  %v3060 = vpop.f32.mrf.mxu0
  %v3061 = vpop.f32.mrf.mxu0
  %v3062 = vadd.f32 0.0, %v3061
  %v3063 = vpop.f32.mrf.mxu0
  %3064 = vmatprep.mubr.bf16.mxu0 0
  %3065 = vmatmul.mubr.bf16.gmra.mxu0 %v2408
  %v3066 = vpop.f32.mrf.mxu0
  %v3067 = vadd.f32 0.0, %v3066
  %v3068 = vpop.f32.mrf.mxu0
  %v3069 = vpop.f32.mrf.mxu0
  %v3070 = vadd.f32 0.0, %v3069
  %v3071 = vpop.f32.mrf.mxu0
  %3072 = vmatprep.mubr.bf16.mxu0 0
  %3073 = vmatmul.mubr.bf16.gmra.mxu0 %v2409
  %v3074 = vpop.f32.mrf.mxu0
  %v3075 = vadd.f32 0.0, %v3074
  %v3076 = vpop.f32.mrf.mxu0
  %v3077 = vpop.f32.mrf.mxu0
  %v3078 = vadd.f32 0.0, %v3077
  %v3079 = vpop.f32.mrf.mxu0
  %3080 = vmatprep.mubr.bf16.mxu0 0
  %3081 = vmatmul.mubr.bf16.gmra.mxu0 %v2410
  %v3082 = vpop.f32.mrf.mxu0
  %v3083 = vadd.f32 0.0, %v3082
  %v3084 = vpop.f32.mrf.mxu0
  %v3085 = vpop.f32.mrf.mxu0
  %v3086 = vadd.f32 0.0, %v3085
  %v3087 = vpop.f32.mrf.mxu0
  %3088 = vmatprep.mubr.bf16.mxu0 0
  %3089 = vmatmul.mubr.bf16.gmra.mxu0 %v2411
  %v3090 = vpop.f32.mrf.mxu0
  %v3091 = vadd.f32 0.0, %v3090
  %v3092 = vpop.f32.mrf.mxu0
  %v3093 = vpop.f32.mrf.mxu0
  %v3094 = vadd.f32 0.0, %v3093
  %v3095 = vpop.f32.mrf.mxu0
  %3096 = vmatprep.mubr.bf16.mxu0 0
  %3097 = vmatmul.mubr.bf16.gmra.mxu0 %v2412
  %v3098 = vpop.f32.mrf.mxu0
  %v3099 = vadd.f32 0.0, %v3098
  %v3100 = vpop.f32.mrf.mxu0
  %v3101 = vpop.f32.mrf.mxu0
  %v3102 = vadd.f32 0.0, %v3101
  %v3103 = vpop.f32.mrf.mxu0
  %3104 = vmatprep.mubr.bf16.mxu0 0
  %3105 = vmatmul.mubr.bf16.gmra.mxu0 %v2413
  %v3106 = vpop.f32.mrf.mxu0
  %v3107 = vadd.f32 0.0, %v3106
  %v3108 = vpop.f32.mrf.mxu0
  %v3109 = vpop.f32.mrf.mxu0
  %v3110 = vadd.f32 0.0, %v3109
  %v3111 = vpop.f32.mrf.mxu0
  %3112 = vmatprep.mubr.bf16.mxu0 0
  %3113 = vmatmul.mubr.bf16.gmra.mxu0 %v2414
  %v3114 = vpop.f32.mrf.mxu0
  %v3115 = vadd.f32 0.0, %v3114
  %v3116 = vpop.f32.mrf.mxu0
  %v3117 = vpop.f32.mrf.mxu0
  %v3118 = vadd.f32 0.0, %v3117
  %v3119 = vpop.f32.mrf.mxu0
  %3120 = vmatprep.mubr.bf16.mxu0 0
  %3121 = vmatmul.mubr.bf16.gmra.mxu0 %v2916
  %v3122 = vpop.f32.mrf.mxu0
  %v3123 = vadd.f32 0.0, %v3122
  %v3124 = vpop.f32.mrf.mxu0
  %v3125 = vpop.f32.mrf.mxu0
  %v3126 = vadd.f32 0.0, %v3125
  %v3127 = vpop.f32.mrf.mxu0
  %3128 = vmatprep.mubr.bf16.mxu0 0
  %3129 = vmatmul.mubr.bf16.gmra.mxu0 %v2416
  %v3130 = vpop.f32.mrf.mxu0
  %v3131 = vadd.f32 0.0, %v3130
  %v3132 = vpop.f32.mrf.mxu0
  %v3133 = vpop.f32.mrf.mxu0
  %v3134 = vadd.f32 0.0, %v3133
  %v3135 = vpop.f32.mrf.mxu0
  %3136 = vmatprep.mubr.bf16.mxu0 0
  %3137 = vmatmul.mubr.bf16.gmra.mxu0 %v2417
  %v3138 = vpop.f32.mrf.mxu0
  %v3139 = vadd.f32 0.0, %v3138
  %v3140 = vpop.f32.mrf.mxu0
  %v3141 = vpop.f32.mrf.mxu0
  %v3142 = vadd.f32 0.0, %v3141
  %v3143 = vpop.f32.mrf.mxu0
  %3144 = vmatprep.mubr.bf16.mxu0 0
  %3145 = vmatmul.mubr.bf16.gmra.mxu0 %v2418
  %v3146 = vpop.f32.mrf.mxu0
  %v3147 = vadd.f32 0.0, %v3146
  %v3148 = vpop.f32.mrf.mxu0
  %v3149 = vpop.f32.mrf.mxu0
  %v3150 = vadd.f32 0.0, %v3149
  %v3151 = vpop.f32.mrf.mxu0
  %3152 = vmatprep.mubr.bf16.mxu0 0
  %3153 = vmatmul.mubr.bf16.gmra.mxu0 %v2419
  %v3154 = vpop.f32.mrf.mxu0
  %v3155 = vadd.f32 0.0, %v3154
  %v3156 = vpop.f32.mrf.mxu0
  %v3157 = vpop.f32.mrf.mxu0
  %v3158 = vadd.f32 0.0, %v3157
  %v3159 = vpop.f32.mrf.mxu0
  %3160 = vmatprep.mubr.bf16.mxu0 0
  %3161 = vmatmul.mubr.bf16.gmra.mxu0 %v2420
  %v3162 = vpop.f32.mrf.mxu0
  %v3163 = vadd.f32 0.0, %v3162
  %v3164 = vpop.f32.mrf.mxu0
  %v3165 = vpop.f32.mrf.mxu0
  %v3166 = vadd.f32 0.0, %v3165
  %v3167 = vpop.f32.mrf.mxu0
  %3168 = vmatprep.mubr.bf16.mxu0 0
  %3169 = vmatmul.mubr.bf16.gmra.mxu0 %v2421
  %v3170 = vpop.f32.mrf.mxu0
  %v3171 = vadd.f32 0.0, %v3170
  %v3172 = vpop.f32.mrf.mxu0
  %v3173 = vpop.f32.mrf.mxu0
  %v3174 = vadd.f32 0.0, %v3173
  %v3175 = vpop.f32.mrf.mxu0
  %3176 = vmatprep.mubr.bf16.mxu0 0
  %3177 = vmatmul.mubr.bf16.gmra.mxu0 %v2422
  %v3178 = vpop.f32.mrf.mxu0
  %v3179 = vadd.f32 0.0, %v3178
  %v3180 = vpop.f32.mrf.mxu0
  %v3181 = vpop.f32.mrf.mxu0
  %v3182 = vadd.f32 0.0, %v3181
  %v3183 = vpop.f32.mrf.mxu0
  %3184 = vmatprep.mubr.bf16.mxu0 0
  %3185 = vmatmul.mubr.bf16.gmra.mxu0 %v2423
  %v3186 = vpop.f32.mrf.mxu0
  %v3187 = vadd.f32 0.0, %v3186
  %v3188 = vpop.f32.mrf.mxu0
  %v3189 = vpop.f32.mrf.mxu0
  %v3190 = vadd.f32 0.0, %v3189
  %v3191 = vpop.f32.mrf.mxu0
  %3192 = vmatprep.mubr.bf16.mxu0 0
  %3193 = vmatmul.mubr.bf16.gmra.mxu0 %v2424
  %v3194 = vpop.f32.mrf.mxu0
  %v3195 = vadd.f32 0.0, %v3194
  %v3196 = vpop.f32.mrf.mxu0
  %v3197 = vpop.f32.mrf.mxu0
  %v3198 = vadd.f32 0.0, %v3197
  %v3199 = vpop.f32.mrf.mxu0
  %3200 = vmatprep.mubr.bf16.mxu0 0
  %3201 = vmatmul.mubr.bf16.gmra.mxu0 %v2425
  %v3202 = vpop.f32.mrf.mxu0
  %v3203 = vadd.f32 0.0, %v3202
  %v3204 = vpop.f32.mrf.mxu0
  %v3205 = vpop.f32.mrf.mxu0
  %v3206 = vadd.f32 0.0, %v3205
  %v3207 = vpop.f32.mrf.mxu0
  %3208 = vmatprep.mubr.bf16.mxu0 0
  %3209 = vmatmul.mubr.bf16.gmra.mxu0 %v2426
  %v3210 = vpop.f32.mrf.mxu0
  %v3211 = vadd.f32 0.0, %v3210
  %v3212 = vpop.f32.mrf.mxu0
  %v3213 = vpop.f32.mrf.mxu0
  %v3214 = vadd.f32 0.0, %v3213
  %v3215 = vpop.f32.mrf.mxu0
  %3216 = vmatprep.mubr.bf16.mxu0 0
  %3217 = vmatmul.mubr.bf16.gmra.mxu0 %v2427
  %v3218 = vpop.f32.mrf.mxu0
  %v3219 = vadd.f32 0.0, %v3218
  %v3220 = vpop.f32.mrf.mxu0
  %v3221 = vpop.f32.mrf.mxu0
  %v3222 = vadd.f32 0.0, %v3221
  %v3223 = vpop.f32.mrf.mxu0
  %3224 = vmatprep.mubr.bf16.mxu0 0
  %3225 = vmatmul.mubr.bf16.gmra.mxu0 %v2428
  %v3226 = vpop.f32.mrf.mxu0
  %v3227 = vadd.f32 0.0, %v3226
  %v3228 = vpop.f32.mrf.mxu0
  %v3229 = vpop.f32.mrf.mxu0
  %v3230 = vadd.f32 0.0, %v3229
  %v3231 = vpop.f32.mrf.mxu0
  %3232 = vmatprep.mubr.bf16.mxu0 0
  %3233 = vmatmul.mubr.bf16.gmra.mxu0 %v2429
  %v3234 = vpop.f32.mrf.mxu0
  %v3235 = vadd.f32 0.0, %v3234
  %v3236 = vpop.f32.mrf.mxu0
  %v3237 = vpop.f32.mrf.mxu0
  %v3238 = vadd.f32 0.0, %v3237
  %v3239 = vpop.f32.mrf.mxu0
  %3240 = vmatprep.mubr.bf16.mxu0 0
  %3241 = vmatmul.mubr.bf16.gmra.mxu0 %v2430
  %v3242 = vpop.f32.mrf.mxu0
  %v3243 = vadd.f32 0.0, %v3242
  %v3244 = vpop.f32.mrf.mxu0
  %v3245 = vpop.f32.mrf.mxu0
  %v3246 = vadd.f32 0.0, %v3245
  %v3247 = vpop.f32.mrf.mxu0
  %3248 = vmatprep.mubr.bf16.mxu0 0
  %3249 = vmatmul.mubr.bf16.gmra.mxu0 %v2917
  %v3250 = vpop.f32.mrf.mxu0
  %v3251 = vadd.f32 0.0, %v3250
  %v3252 = vpop.f32.mrf.mxu0
  %v3253 = vpop.f32.mrf.mxu0
  %v3254 = vadd.f32 0.0, %v3253
  %v3255 = vpop.f32.mrf.mxu0
  %3256 = vdwg.mxu0
  %v3257 = vadd.f32 %v2800, %v3003
  %v3258 = vadd.f32 %v2801, %v3006
  %v3259 = vadd.f32 %v2802, %v3011
  %v3260 = vadd.f32 %v2803, %v3014
  %v3261 = vadd.f32 %v2804, %v3019
  %v3262 = vadd.f32 %v2805, %v3022
  %v3263 = vadd.f32 %v2806, %v3027
  %v3264 = vadd.f32 %v2807, %v3030
  %v3265 = vadd.f32 %v2808, %v3035
  %v3266 = vadd.f32 %v2809, %v3038
  %v3267 = vadd.f32 %v2810, %v3043
  %v3268 = vadd.f32 %v2811, %v3046
  %v3269 = vadd.f32 %v2812, %v3051
  %v3270 = vadd.f32 %v2813, %v3054
  %v3271 = vadd.f32 %v2814, %v3059
  %v3272 = vadd.f32 %v2815, %v3062
  %v3273 = vadd.f32 %v2816, %v3067
  %v3274 = vadd.f32 %v2817, %v3070
  %v3275 = vadd.f32 %v2818, %v3075
  %v3276 = vadd.f32 %v2819, %v3078
  %v3277 = vadd.f32 %v2820, %v3083
  %v3278 = vadd.f32 %v2821, %v3086
  %v3279 = vadd.f32 %v2822, %v3091
  %v3280 = vadd.f32 %v2823, %v3094
  %v3281 = vadd.f32 %v2824, %v3099
  %v3282 = vadd.f32 %v2825, %v3102
  %v3283 = vadd.f32 %v2826, %v3107
  %v3284 = vadd.f32 %v2827, %v3110
  %v3285 = vadd.f32 %v2828, %v3115
  %v3286 = vadd.f32 %v2829, %v3118
  %v3287 = vadd.f32 %v2830, %v3123
  %v3288 = vadd.f32 %v2831, %v3126
  %v3289 = vadd.f32 %v2832, %v3131
  %v3290 = vadd.f32 %v2833, %v3134
  %v3291 = vadd.f32 %v2834, %v3139
  %v3292 = vadd.f32 %v2835, %v3142
  %v3293 = vadd.f32 %v2836, %v3147
  %v3294 = vadd.f32 %v2837, %v3150
  %v3295 = vadd.f32 %v2838, %v3155
  %v3296 = vadd.f32 %v2839, %v3158
  %v3297 = vadd.f32 %v2840, %v3163
  %v3298 = vadd.f32 %v2841, %v3166
  %v3299 = vadd.f32 %v2842, %v3171
  %v3300 = vadd.f32 %v2843, %v3174
  %v3301 = vadd.f32 %v2844, %v3179
  %v3302 = vadd.f32 %v2845, %v3182
  %v3303 = vadd.f32 %v2846, %v3187
  %v3304 = vadd.f32 %v2847, %v3190
  %v3305 = vadd.f32 %v2848, %v3195
  %v3306 = vadd.f32 %v2849, %v3198
  %v3307 = vadd.f32 %v2850, %v3203
  %v3308 = vadd.f32 %v2851, %v3206
  %v3309 = vadd.f32 %v2852, %v3211
  %v3310 = vadd.f32 %v2853, %v3214
  %v3311 = vadd.f32 %v2854, %v3219
  %v3312 = vadd.f32 %v2855, %v3222
  %v3313 = vadd.f32 %v2856, %v3227
  %v3314 = vadd.f32 %v2857, %v3230
  %v3315 = vadd.f32 %v2858, %v3235
  %v3316 = vadd.f32 %v2859, %v3238
  %v3317 = vadd.f32 %v2860, %v3243
  %v3318 = vadd.f32 %v2861, %v3246
  %v3319 = vadd.f32 %v2862, %v3251
  %v3320 = vadd.f32 %v2863, %v3254
  %v3322 = vshrl.u32 %v72, 16
  %v3324 = vrot.slane %v3322, 4
  %v3325 = vshll.u32 %v72, 16
  %v3327 = vrot.slane %v3325, 5
  %v3328 = vor.u32 %v3324, %v3327
  %v3329 = vrot.slane %v3328, 4
  %v3331 = vshll.u32 %v73, 16
  %v3333 = vrot.slane %v3331, 5
  %v3334 = vsel %vm1566, %v3329, %v3333
  %v3335 = vshrl.u32 %v73, 16
  %v3337 = vrot.slane %v3335, 4
  %v3338 = vor.u32 %v3337, %v3333
  %v3339 = vrot.slane %v3338, 4
  %v3341 = vshll.u32 %v74, 16
  %v3343 = vrot.slane %v3341, 5
  %v3344 = vsel %vm1566, %v3339, %v3343
  %v3346 = vshrl.u32 %v126, 16
  %v3348 = vrot.slane %v3346, 4
  %v3349 = vshll.u32 %v126, 16
  %v3351 = vrot.slane %v3349, 5
  %v3352 = vor.u32 %v3348, %v3351
  %v3353 = vrot.slane %v3352, 4
  %v3355 = vshll.u32 %v127, 16
  %v3357 = vrot.slane %v3355, 5
  %v3358 = vsel %vm1566, %v3353, %v3357
  %v3359 = vshrl.u32 %v127, 16
  %v3361 = vrot.slane %v3359, 4
  %v3362 = vor.u32 %v3361, %v3357
  %v3363 = vrot.slane %v3362, 4
  %v3365 = vshll.u32 %v128, 16
  %v3367 = vrot.slane %v3365, 5
  %v3368 = vsel %vm1566, %v3363, %v3367
  %v3369 = vunpack.c.l.b16 %v3334
  %v3370 = vunpack.c.l.b16 %v3344
  %v3371 = vunpack.c.l.b16 %v3358
  %v3372 = vunpack.c.l.b16 %v3368
  %v3373 = vpack.c.b16 %v3370, %v3369
  %v3374 = vpack.c.b16 %v3372, %v3371
  %v3393 = vunpack.c.l.b16 %v241
  %v3394 = vunpack.c.l.b16 %v242
  %v3395 = vunpack.c.l.b16 %v243
  %v3396 = vunpack.c.l.b16 %v244
  %v3397 = vunpack.c.l.b16 %v245
  %v3398 = vunpack.c.l.b16 %v246
  %v3399 = vunpack.c.l.b16 %v247
  %v3400 = vunpack.c.l.b16 %v248
  %v3401 = vunpack.c.l.b16 %v249
  %v3402 = vunpack.c.l.b16 %v250
  %v3403 = vunpack.c.l.b16 %v251
  %v3404 = vunpack.c.l.b16 %v252
  %v3405 = vunpack.c.l.b16 %v253
  %v3406 = vunpack.c.l.b16 %v254
  %v3407 = vunpack.c.l.b16 %v255
  %v3408 = vunpack.c.l.b16 %v256
  %v3409 = vpack.c.b16 %v3394, %v3393
  %v3410 = vpack.c.b16 %v3396, %v3395
  %v3411 = vpack.c.b16 %v3398, %v3397
  %v3412 = vpack.c.b16 %v3400, %v3399
  %v3413 = vpack.c.b16 %v3402, %v3401
  %v3414 = vpack.c.b16 %v3404, %v3403
  %v3415 = vpack.c.b16 %v3406, %v3405
  %v3416 = vpack.c.b16 %v3408, %v3407
  %3425 = vmatprep.subr.bf16.mxu0 0
  %3426 = vmatpush1.bf16.msra.mxu0 %v3416
  %3427 = vmatprep.subr.bf16.mxu0 0
  %3428 = vmatpush1.bf16.msra.mxu0 %v3415
  %3429 = vmatprep.subr.bf16.mxu0 0
  %3430 = vmatpush1.bf16.msra.mxu0 %v3414
  %3431 = vmatprep.subr.bf16.mxu0 0
  %3432 = vmatpush1.bf16.msra.mxu0 %v3413
  %3433 = vmatprep.subr.bf16.mxu0 0
  %3434 = vmatpush1.bf16.msra.mxu0 %v3412
  %3435 = vmatprep.subr.bf16.mxu0 0
  %3436 = vmatpush1.bf16.msra.mxu0 %v3411
  %3437 = vmatprep.subr.bf16.mxu0 0
  %3438 = vmatpush1.bf16.msra.mxu0 %v3410
  %3439 = vmatprep.subr.bf16.mxu0 0
  %3440 = vmatpush1.bf16.msra.mxu0 %v3409
  %3441 = vmatprep.subr.bf16.mxu0 0
  %3442 = vmatpush2.bf16.msra.mxu0 0
  %3443 = vmatprep.subr.bf16.mxu0 0
  %3444 = vmatpush2.bf16.msra.mxu0 0
  %3445 = vmatprep.subr.bf16.mxu0 0
  %3446 = vmatpush2.bf16.msra.mxu0 0
  %3447 = vmatprep.subr.bf16.mxu0 0
  %3448 = vmatpush2.bf16.msra.mxu0 0
  %3449 = vmatprep.subr.bf16.mxu0 0
  %3450 = vmatpush2.bf16.msra.mxu0 0
  %3451 = vmatprep.subr.bf16.mxu0 0
  %3452 = vmatpush2.bf16.msra.mxu0 0
  %3453 = vmatprep.subr.bf16.mxu0 0
  %3454 = vmatpush2.bf16.msra.mxu0 0
  %3455 = vmatprep.subr.bf16.mxu0 0
  %3456 = vmatpush2.bf16.msra.mxu0 0
  %3457 = vmatprep.mubr.bf16.mxu0 0
  %3458 = vmatmul.mubr.bf16.gmra.mxu0 %v2401
  %v3459 = vpop.f32.mrf.mxu0
  %v3460 = vadd.f32 0.0, %v3459
  %v3461 = vpop.f32.mrf.mxu0
  %v3462 = vpop.f32.mrf.mxu0
  %v3463 = vadd.f32 0.0, %v3462
  %v3464 = vpop.f32.mrf.mxu0
  %3465 = vmatprep.mubr.bf16.mxu0 0
  %3466 = vmatmul.mubr.bf16.gmra.mxu0 %v2402
  %v3467 = vpop.f32.mrf.mxu0
  %v3468 = vadd.f32 0.0, %v3467
  %v3469 = vpop.f32.mrf.mxu0
  %v3470 = vpop.f32.mrf.mxu0
  %v3471 = vadd.f32 0.0, %v3470
  %v3472 = vpop.f32.mrf.mxu0
  %3473 = vmatprep.mubr.bf16.mxu0 0
  %3474 = vmatmul.mubr.bf16.gmra.mxu0 %v2403
  %v3475 = vpop.f32.mrf.mxu0
  %v3476 = vadd.f32 0.0, %v3475
  %v3477 = vpop.f32.mrf.mxu0
  %v3478 = vpop.f32.mrf.mxu0
  %v3479 = vadd.f32 0.0, %v3478
  %v3480 = vpop.f32.mrf.mxu0
  %3481 = vmatprep.mubr.bf16.mxu0 0
  %3482 = vmatmul.mubr.bf16.gmra.mxu0 %v2404
  %v3483 = vpop.f32.mrf.mxu0
  %v3484 = vadd.f32 0.0, %v3483
  %v3485 = vpop.f32.mrf.mxu0
  %v3486 = vpop.f32.mrf.mxu0
  %v3487 = vadd.f32 0.0, %v3486
  %v3488 = vpop.f32.mrf.mxu0
  %3489 = vmatprep.mubr.bf16.mxu0 0
  %3490 = vmatmul.mubr.bf16.gmra.mxu0 %v2405
  %v3491 = vpop.f32.mrf.mxu0
  %v3492 = vadd.f32 0.0, %v3491
  %v3493 = vpop.f32.mrf.mxu0
  %v3494 = vpop.f32.mrf.mxu0
  %v3495 = vadd.f32 0.0, %v3494
  %v3496 = vpop.f32.mrf.mxu0
  %3497 = vmatprep.mubr.bf16.mxu0 0
  %3498 = vmatmul.mubr.bf16.gmra.mxu0 %v2406
  %v3499 = vpop.f32.mrf.mxu0
  %v3500 = vadd.f32 0.0, %v3499
  %v3501 = vpop.f32.mrf.mxu0
  %v3502 = vpop.f32.mrf.mxu0
  %v3503 = vadd.f32 0.0, %v3502
  %v3504 = vpop.f32.mrf.mxu0
  %3505 = vmatprep.mubr.bf16.mxu0 0
  %3506 = vmatmul.mubr.bf16.gmra.mxu0 %v2407
  %v3507 = vpop.f32.mrf.mxu0
  %v3508 = vadd.f32 0.0, %v3507
  %v3509 = vpop.f32.mrf.mxu0
  %v3510 = vpop.f32.mrf.mxu0
  %v3511 = vadd.f32 0.0, %v3510
  %v3512 = vpop.f32.mrf.mxu0
  %3513 = vmatprep.mubr.bf16.mxu0 0
  %3514 = vmatmul.mubr.bf16.gmra.mxu0 %v2408
  %v3515 = vpop.f32.mrf.mxu0
  %v3516 = vadd.f32 0.0, %v3515
  %v3517 = vpop.f32.mrf.mxu0
  %v3518 = vpop.f32.mrf.mxu0
  %v3519 = vadd.f32 0.0, %v3518
  %v3520 = vpop.f32.mrf.mxu0
  %3521 = vmatprep.mubr.bf16.mxu0 0
  %3522 = vmatmul.mubr.bf16.gmra.mxu0 %v2409
  %v3523 = vpop.f32.mrf.mxu0
  %v3524 = vadd.f32 0.0, %v3523
  %v3525 = vpop.f32.mrf.mxu0
  %v3526 = vpop.f32.mrf.mxu0
  %v3527 = vadd.f32 0.0, %v3526
  %v3528 = vpop.f32.mrf.mxu0
  %3529 = vmatprep.mubr.bf16.mxu0 0
  %3530 = vmatmul.mubr.bf16.gmra.mxu0 %v2410
  %v3531 = vpop.f32.mrf.mxu0
  %v3532 = vadd.f32 0.0, %v3531
  %v3533 = vpop.f32.mrf.mxu0
  %v3534 = vpop.f32.mrf.mxu0
  %v3535 = vadd.f32 0.0, %v3534
  %v3536 = vpop.f32.mrf.mxu0
  %3537 = vmatprep.mubr.bf16.mxu0 0
  %3538 = vmatmul.mubr.bf16.gmra.mxu0 %v2411
  %v3539 = vpop.f32.mrf.mxu0
  %v3540 = vadd.f32 0.0, %v3539
  %v3541 = vpop.f32.mrf.mxu0
  %v3542 = vpop.f32.mrf.mxu0
  %v3543 = vadd.f32 0.0, %v3542
  %v3544 = vpop.f32.mrf.mxu0
  %3545 = vmatprep.mubr.bf16.mxu0 0
  %3546 = vmatmul.mubr.bf16.gmra.mxu0 %v2412
  %v3547 = vpop.f32.mrf.mxu0
  %v3548 = vadd.f32 0.0, %v3547
  %v3549 = vpop.f32.mrf.mxu0
  %v3550 = vpop.f32.mrf.mxu0
  %v3551 = vadd.f32 0.0, %v3550
  %v3552 = vpop.f32.mrf.mxu0
  %3553 = vmatprep.mubr.bf16.mxu0 0
  %3554 = vmatmul.mubr.bf16.gmra.mxu0 %v2413
  %v3555 = vpop.f32.mrf.mxu0
  %v3556 = vadd.f32 0.0, %v3555
  %v3557 = vpop.f32.mrf.mxu0
  %v3558 = vpop.f32.mrf.mxu0
  %v3559 = vadd.f32 0.0, %v3558
  %v3560 = vpop.f32.mrf.mxu0
  %3561 = vmatprep.mubr.bf16.mxu0 0
  %3562 = vmatmul.mubr.bf16.gmra.mxu0 %v2414
  %v3563 = vpop.f32.mrf.mxu0
  %v3564 = vadd.f32 0.0, %v3563
  %v3565 = vpop.f32.mrf.mxu0
  %v3566 = vpop.f32.mrf.mxu0
  %v3567 = vadd.f32 0.0, %v3566
  %v3568 = vpop.f32.mrf.mxu0
  %3569 = vmatprep.mubr.bf16.mxu0 0
  %3570 = vmatmul.mubr.bf16.gmra.mxu0 %v2916
  %v3571 = vpop.f32.mrf.mxu0
  %v3572 = vadd.f32 0.0, %v3571
  %v3573 = vpop.f32.mrf.mxu0
  %v3574 = vpop.f32.mrf.mxu0
  %v3575 = vadd.f32 0.0, %v3574
  %v3576 = vpop.f32.mrf.mxu0
  %3577 = vmatprep.mubr.bf16.mxu0 0
  %3578 = vmatmul.mubr.bf16.gmra.mxu0 %v3373
  %v3579 = vpop.f32.mrf.mxu0
  %v3580 = vadd.f32 0.0, %v3579
  %v3581 = vpop.f32.mrf.mxu0
  %v3582 = vpop.f32.mrf.mxu0
  %v3583 = vadd.f32 0.0, %v3582
  %v3584 = vpop.f32.mrf.mxu0
  %3585 = vmatprep.mubr.bf16.mxu0 0
  %3586 = vmatmul.mubr.bf16.gmra.mxu0 %v2417
  %v3587 = vpop.f32.mrf.mxu0
  %v3588 = vadd.f32 0.0, %v3587
  %v3589 = vpop.f32.mrf.mxu0
  %v3590 = vpop.f32.mrf.mxu0
  %v3591 = vadd.f32 0.0, %v3590
  %v3592 = vpop.f32.mrf.mxu0
  %3593 = vmatprep.mubr.bf16.mxu0 0
  %3594 = vmatmul.mubr.bf16.gmra.mxu0 %v2418
  %v3595 = vpop.f32.mrf.mxu0
  %v3596 = vadd.f32 0.0, %v3595
  %v3597 = vpop.f32.mrf.mxu0
  %v3598 = vpop.f32.mrf.mxu0
  %v3599 = vadd.f32 0.0, %v3598
  %v3600 = vpop.f32.mrf.mxu0
  %3601 = vmatprep.mubr.bf16.mxu0 0
  %3602 = vmatmul.mubr.bf16.gmra.mxu0 %v2419
  %v3603 = vpop.f32.mrf.mxu0
  %v3604 = vadd.f32 0.0, %v3603
  %v3605 = vpop.f32.mrf.mxu0
  %v3606 = vpop.f32.mrf.mxu0
  %v3607 = vadd.f32 0.0, %v3606
  %v3608 = vpop.f32.mrf.mxu0
  %3609 = vmatprep.mubr.bf16.mxu0 0
  %3610 = vmatmul.mubr.bf16.gmra.mxu0 %v2420
  %v3611 = vpop.f32.mrf.mxu0
  %v3612 = vadd.f32 0.0, %v3611
  %v3613 = vpop.f32.mrf.mxu0
  %v3614 = vpop.f32.mrf.mxu0
  %v3615 = vadd.f32 0.0, %v3614
  %v3616 = vpop.f32.mrf.mxu0
  %3617 = vmatprep.mubr.bf16.mxu0 0
  %3618 = vmatmul.mubr.bf16.gmra.mxu0 %v2421
  %v3619 = vpop.f32.mrf.mxu0
  %v3620 = vadd.f32 0.0, %v3619
  %v3621 = vpop.f32.mrf.mxu0
  %v3622 = vpop.f32.mrf.mxu0
  %v3623 = vadd.f32 0.0, %v3622
  %v3624 = vpop.f32.mrf.mxu0
  %3625 = vmatprep.mubr.bf16.mxu0 0
  %3626 = vmatmul.mubr.bf16.gmra.mxu0 %v2422
  %v3627 = vpop.f32.mrf.mxu0
  %v3628 = vadd.f32 0.0, %v3627
  %v3629 = vpop.f32.mrf.mxu0
  %v3630 = vpop.f32.mrf.mxu0
  %v3631 = vadd.f32 0.0, %v3630
  %v3632 = vpop.f32.mrf.mxu0
  %3633 = vmatprep.mubr.bf16.mxu0 0
  %3634 = vmatmul.mubr.bf16.gmra.mxu0 %v2423
  %v3635 = vpop.f32.mrf.mxu0
  %v3636 = vadd.f32 0.0, %v3635
  %v3637 = vpop.f32.mrf.mxu0
  %v3638 = vpop.f32.mrf.mxu0
  %v3639 = vadd.f32 0.0, %v3638
  %v3640 = vpop.f32.mrf.mxu0
  %3641 = vmatprep.mubr.bf16.mxu0 0
  %3642 = vmatmul.mubr.bf16.gmra.mxu0 %v2424
  %v3643 = vpop.f32.mrf.mxu0
  %v3644 = vadd.f32 0.0, %v3643
  %v3645 = vpop.f32.mrf.mxu0
  %v3646 = vpop.f32.mrf.mxu0
  %v3647 = vadd.f32 0.0, %v3646
  %v3648 = vpop.f32.mrf.mxu0
  %3649 = vmatprep.mubr.bf16.mxu0 0
  %3650 = vmatmul.mubr.bf16.gmra.mxu0 %v2425
  %v3651 = vpop.f32.mrf.mxu0
  %v3652 = vadd.f32 0.0, %v3651
  %v3653 = vpop.f32.mrf.mxu0
  %v3654 = vpop.f32.mrf.mxu0
  %v3655 = vadd.f32 0.0, %v3654
  %v3656 = vpop.f32.mrf.mxu0
  %3657 = vmatprep.mubr.bf16.mxu0 0
  %3658 = vmatmul.mubr.bf16.gmra.mxu0 %v2426
  %v3659 = vpop.f32.mrf.mxu0
  %v3660 = vadd.f32 0.0, %v3659
  %v3661 = vpop.f32.mrf.mxu0
  %v3662 = vpop.f32.mrf.mxu0
  %v3663 = vadd.f32 0.0, %v3662
  %v3664 = vpop.f32.mrf.mxu0
  %3665 = vmatprep.mubr.bf16.mxu0 0
  %3666 = vmatmul.mubr.bf16.gmra.mxu0 %v2427
  %v3667 = vpop.f32.mrf.mxu0
  %v3668 = vadd.f32 0.0, %v3667
  %v3669 = vpop.f32.mrf.mxu0
  %v3670 = vpop.f32.mrf.mxu0
  %v3671 = vadd.f32 0.0, %v3670
  %v3672 = vpop.f32.mrf.mxu0
  %3673 = vmatprep.mubr.bf16.mxu0 0
  %3674 = vmatmul.mubr.bf16.gmra.mxu0 %v2428
  %v3675 = vpop.f32.mrf.mxu0
  %v3676 = vadd.f32 0.0, %v3675
  %v3677 = vpop.f32.mrf.mxu0
  %v3678 = vpop.f32.mrf.mxu0
  %v3679 = vadd.f32 0.0, %v3678
  %v3680 = vpop.f32.mrf.mxu0
  %3681 = vmatprep.mubr.bf16.mxu0 0
  %3682 = vmatmul.mubr.bf16.gmra.mxu0 %v2429
  %v3683 = vpop.f32.mrf.mxu0
  %v3684 = vadd.f32 0.0, %v3683
  %v3685 = vpop.f32.mrf.mxu0
  %v3686 = vpop.f32.mrf.mxu0
  %v3687 = vadd.f32 0.0, %v3686
  %v3688 = vpop.f32.mrf.mxu0
  %3689 = vmatprep.mubr.bf16.mxu0 0
  %3690 = vmatmul.mubr.bf16.gmra.mxu0 %v2430
  %v3691 = vpop.f32.mrf.mxu0
  %v3692 = vadd.f32 0.0, %v3691
  %v3693 = vpop.f32.mrf.mxu0
  %v3694 = vpop.f32.mrf.mxu0
  %v3695 = vadd.f32 0.0, %v3694
  %v3696 = vpop.f32.mrf.mxu0
  %3697 = vmatprep.mubr.bf16.mxu0 0
  %3698 = vmatmul.mubr.bf16.gmra.mxu0 %v2917
  %v3699 = vpop.f32.mrf.mxu0
  %v3700 = vadd.f32 0.0, %v3699
  %v3701 = vpop.f32.mrf.mxu0
  %v3702 = vpop.f32.mrf.mxu0
  %v3703 = vadd.f32 0.0, %v3702
  %v3704 = vpop.f32.mrf.mxu0
  %3705 = vmatprep.mubr.bf16.mxu0 0
  %3706 = vmatmul.mubr.bf16.gmra.mxu0 %v3374
  %v3707 = vpop.f32.mrf.mxu0
  %v3708 = vadd.f32 0.0, %v3707
  %v3709 = vpop.f32.mrf.mxu0
  %v3710 = vpop.f32.mrf.mxu0
  %v3711 = vadd.f32 0.0, %v3710
  %v3712 = vpop.f32.mrf.mxu0
  %3713 = vdwg.mxu0
  %v3714 = vadd.f32 %v3257, %v3460
  %v3715 = vadd.f32 %v3258, %v3463
  %v3716 = vadd.f32 %v3259, %v3468
  %v3717 = vadd.f32 %v3260, %v3471
  %v3718 = vadd.f32 %v3261, %v3476
  %v3719 = vadd.f32 %v3262, %v3479
  %v3720 = vadd.f32 %v3263, %v3484
  %v3721 = vadd.f32 %v3264, %v3487
  %v3722 = vadd.f32 %v3265, %v3492
  %v3723 = vadd.f32 %v3266, %v3495
  %v3724 = vadd.f32 %v3267, %v3500
  %v3725 = vadd.f32 %v3268, %v3503
  %v3726 = vadd.f32 %v3269, %v3508
  %v3727 = vadd.f32 %v3270, %v3511
  %v3728 = vadd.f32 %v3271, %v3516
  %v3729 = vadd.f32 %v3272, %v3519
  %v3730 = vadd.f32 %v3273, %v3524
  %v3731 = vadd.f32 %v3274, %v3527
  %v3732 = vadd.f32 %v3275, %v3532
  %v3733 = vadd.f32 %v3276, %v3535
  %v3734 = vadd.f32 %v3277, %v3540
  %v3735 = vadd.f32 %v3278, %v3543
  %v3736 = vadd.f32 %v3279, %v3548
  %v3737 = vadd.f32 %v3280, %v3551
  %v3738 = vadd.f32 %v3281, %v3556
  %v3739 = vadd.f32 %v3282, %v3559
  %v3740 = vadd.f32 %v3283, %v3564
  %v3741 = vadd.f32 %v3284, %v3567
  %v3742 = vadd.f32 %v3285, %v3572
  %v3743 = vadd.f32 %v3286, %v3575
  %v3744 = vadd.f32 %v3287, %v3580
  %v3745 = vadd.f32 %v3288, %v3583
  %v3746 = vadd.f32 %v3289, %v3588
  %v3747 = vadd.f32 %v3290, %v3591
  %v3748 = vadd.f32 %v3291, %v3596
  %v3749 = vadd.f32 %v3292, %v3599
  %v3750 = vadd.f32 %v3293, %v3604
  %v3751 = vadd.f32 %v3294, %v3607
  %v3752 = vadd.f32 %v3295, %v3612
  %v3753 = vadd.f32 %v3296, %v3615
  %v3754 = vadd.f32 %v3297, %v3620
  %v3755 = vadd.f32 %v3298, %v3623
  %v3756 = vadd.f32 %v3299, %v3628
  %v3757 = vadd.f32 %v3300, %v3631
  %v3758 = vadd.f32 %v3301, %v3636
  %v3759 = vadd.f32 %v3302, %v3639
  %v3760 = vadd.f32 %v3303, %v3644
  %v3761 = vadd.f32 %v3304, %v3647
  %v3762 = vadd.f32 %v3305, %v3652
  %v3763 = vadd.f32 %v3306, %v3655
  %v3764 = vadd.f32 %v3307, %v3660
  %v3765 = vadd.f32 %v3308, %v3663
  %v3766 = vadd.f32 %v3309, %v3668
  %v3767 = vadd.f32 %v3310, %v3671
  %v3768 = vadd.f32 %v3311, %v3676
  %v3769 = vadd.f32 %v3312, %v3679
  %v3770 = vadd.f32 %v3313, %v3684
  %v3771 = vadd.f32 %v3314, %v3687
  %v3772 = vadd.f32 %v3315, %v3692
  %v3773 = vadd.f32 %v3316, %v3695
  %v3774 = vadd.f32 %v3317, %v3700
  %v3775 = vadd.f32 %v3318, %v3703
  %v3776 = vadd.f32 %v3319, %v3708
  %v3777 = vadd.f32 %v3320, %v3711
  %vm3810 = vcmask 1042432
  %vm3811 = vcmask 1046532
  %vm3812 = vmor %vm3810, %vm3811
  %v3813 = vrot.slane %v21, 5
  %v3814 = vrot.slane %v3813, 4
  %v3815 = vrot.slane %v22, 5
  %v3816 = vsel %vm3812, %v3814, %v3815
  %v3817 = vrot.slane %v3815, 4
  %v3818 = vrot.slane %v23, 5
  %v3819 = vsel %vm3812, %v3817, %v3818
  %v3820 = vrot.slane %v24, 5
  %v3821 = vrot.slane %v3820, 4
  %v3822 = vrot.slane %v25, 5
  %v3823 = vsel %vm3812, %v3821, %v3822
  %v3824 = vrot.slane %v3822, 4
  %v3825 = vrot.slane %v26, 5
  %v3826 = vsel %vm3812, %v3824, %v3825
  %v3827 = vrot.slane %v27, 5
  %v3828 = vrot.slane %v3827, 4
  %v3829 = vrot.slane %v28, 5
  %v3830 = vsel %vm3812, %v3828, %v3829
  %v3831 = vrot.slane %v3829, 4
  %v3832 = vrot.slane %v29, 5
  %v3833 = vsel %vm3812, %v3831, %v3832
  %v3834 = vrot.slane %v30, 5
  %v3835 = vrot.slane %v3834, 4
  %v3836 = vrot.slane %v31, 5
  %v3837 = vsel %vm3812, %v3835, %v3836
  %v3838 = vrot.slane %v3836, 4
  %v3839 = vrot.slane %v32, 5
  %v3840 = vsel %vm3812, %v3838, %v3839
  %v3841 = vrot.slane %v33, 5
  %v3842 = vrot.slane %v3841, 4
  %v3843 = vrot.slane %v34, 5
  %v3844 = vsel %vm3812, %v3842, %v3843
  %v3845 = vrot.slane %v3843, 4
  %v3846 = vrot.slane %v35, 5
  %v3847 = vsel %vm3812, %v3845, %v3846
  %v3848 = vrot.slane %v36, 5
  %v3849 = vrot.slane %v3848, 4
  %v3850 = vrot.slane %v37, 5
  %v3851 = vsel %vm3812, %v3849, %v3850
  %v3852 = vrot.slane %v3850, 4
  %v3853 = vrot.slane %v38, 5
  %v3854 = vsel %vm3812, %v3852, %v3853
  %v3855 = vrot.slane %v39, 5
  %v3856 = vrot.slane %v3855, 4
  %v3857 = vrot.slane %v40, 5
  %v3858 = vsel %vm3812, %v3856, %v3857
  %v3859 = vrot.slane %v3857, 4
  %v3860 = vrot.slane %v41, 5
  %v3861 = vsel %vm3812, %v3859, %v3860
  %v3862 = vrot.slane %v42, 5
  %v3863 = vrot.slane %v3862, 4
  %v3864 = vrot.slane %v43, 5
  %v3865 = vsel %vm3812, %v3863, %v3864
  %v3866 = vrot.slane %v3864, 4
  %v3867 = vrot.slane %v44, 5
  %v3868 = vsel %vm3812, %v3866, %v3867
  %v3869 = vrot.slane %v45, 5
  %v3870 = vrot.slane %v3869, 4
  %v3871 = vrot.slane %v46, 5
  %v3872 = vsel %vm3812, %v3870, %v3871
  %v3873 = vrot.slane %v3871, 4
  %v3874 = vrot.slane %v47, 5
  %v3875 = vsel %vm3812, %v3873, %v3874
  %v3876 = vrot.slane %v48, 5
  %v3877 = vrot.slane %v3876, 4
  %v3878 = vrot.slane %v49, 5
  %v3879 = vsel %vm3812, %v3877, %v3878
  %v3880 = vrot.slane %v3878, 4
  %v3881 = vrot.slane %v50, 5
  %v3882 = vsel %vm3812, %v3880, %v3881
  %v3883 = vrot.slane %v51, 5
  %v3884 = vrot.slane %v3883, 4
  %v3885 = vrot.slane %v52, 5
  %v3886 = vsel %vm3812, %v3884, %v3885
  %v3887 = vrot.slane %v3885, 4
  %v3888 = vrot.slane %v53, 5
  %v3889 = vsel %vm3812, %v3887, %v3888
  %v3890 = vrot.slane %v54, 5
  %v3891 = vrot.slane %v3890, 4
  %v3892 = vrot.slane %v55, 5
  %v3893 = vsel %vm3812, %v3891, %v3892
  %v3894 = vrot.slane %v3892, 4
  %v3895 = vrot.slane %v56, 5
  %v3896 = vsel %vm3812, %v3894, %v3895
  %v3897 = vrot.slane %v57, 5
  %v3898 = vrot.slane %v3897, 4
  %v3899 = vrot.slane %v58, 5
  %v3900 = vsel %vm3812, %v3898, %v3899
  %v3901 = vrot.slane %v3899, 4
  %v3902 = vrot.slane %v59, 5
  %v3903 = vsel %vm3812, %v3901, %v3902
  %v3904 = vrot.slane %v60, 5
  %v3905 = vrot.slane %v3904, 4
  %v3906 = vrot.slane %v61, 5
  %v3907 = vsel %vm3812, %v3905, %v3906
  %v3908 = vrot.slane %v3906, 4
  %v3909 = vrot.slane %v62, 5
  %v3910 = vsel %vm3812, %v3908, %v3909
  %v3911 = vrot.slane %v63, 5
  %v3912 = vrot.slane %v3911, 4
  %v3913 = vrot.slane %v64, 5
  %v3914 = vsel %vm3812, %v3912, %v3913
  %v3915 = vrot.slane %v3913, 4
  %v3916 = vrot.slane %v65, 5
  %v3917 = vsel %vm3812, %v3915, %v3916
  %v3918 = vrot.slane %v66, 5
  %v3919 = vrot.slane %v3918, 4
  %v3920 = vrot.slane %v67, 5
  %v3921 = vsel %vm3812, %v3919, %v3920
  %v3922 = vrot.slane %v3920, 4
  %v3923 = vrot.slane %v68, 5
  %v3924 = vsel %vm3812, %v3922, %v3923
  %v3925 = vrot.slane %v75, 5
  %v3926 = vrot.slane %v3925, 4
  %v3927 = vrot.slane %v76, 5
  %v3928 = vsel %vm3812, %v3926, %v3927
  %v3929 = vrot.slane %v3927, 4
  %v3930 = vrot.slane %v77, 5
  %v3931 = vsel %vm3812, %v3929, %v3930
  %v3932 = vrot.slane %v78, 5
  %v3933 = vrot.slane %v3932, 4
  %v3934 = vrot.slane %v79, 5
  %v3935 = vsel %vm3812, %v3933, %v3934
  %v3936 = vrot.slane %v3934, 4
  %v3937 = vrot.slane %v80, 5
  %v3938 = vsel %vm3812, %v3936, %v3937
  %v3939 = vrot.slane %v81, 5
  %v3940 = vrot.slane %v3939, 4
  %v3941 = vrot.slane %v82, 5
  %v3942 = vsel %vm3812, %v3940, %v3941
  %v3943 = vrot.slane %v3941, 4
  %v3944 = vrot.slane %v83, 5
  %v3945 = vsel %vm3812, %v3943, %v3944
  %v3946 = vrot.slane %v84, 5
  %v3947 = vrot.slane %v3946, 4
  %v3948 = vrot.slane %v85, 5
  %v3949 = vsel %vm3812, %v3947, %v3948
  %v3950 = vrot.slane %v3948, 4
  %v3951 = vrot.slane %v86, 5
  %v3952 = vsel %vm3812, %v3950, %v3951
  %v3953 = vrot.slane %v87, 5
  %v3954 = vrot.slane %v3953, 4
  %v3955 = vrot.slane %v88, 5
  %v3956 = vsel %vm3812, %v3954, %v3955
  %v3957 = vrot.slane %v3955, 4
  %v3958 = vrot.slane %v89, 5
  %v3959 = vsel %vm3812, %v3957, %v3958
  %v3960 = vrot.slane %v90, 5
  %v3961 = vrot.slane %v3960, 4
  %v3962 = vrot.slane %v91, 5
  %v3963 = vsel %vm3812, %v3961, %v3962
  %v3964 = vrot.slane %v3962, 4
  %v3965 = vrot.slane %v92, 5
  %v3966 = vsel %vm3812, %v3964, %v3965
  %v3967 = vrot.slane %v93, 5
  %v3968 = vrot.slane %v3967, 4
  %v3969 = vrot.slane %v94, 5
  %v3970 = vsel %vm3812, %v3968, %v3969
  %v3971 = vrot.slane %v3969, 4
  %v3972 = vrot.slane %v95, 5
  %v3973 = vsel %vm3812, %v3971, %v3972
  %v3974 = vrot.slane %v96, 5
  %v3975 = vrot.slane %v3974, 4
  %v3976 = vrot.slane %v97, 5
  %v3977 = vsel %vm3812, %v3975, %v3976
  %v3978 = vrot.slane %v3976, 4
  %v3979 = vrot.slane %v98, 5
  %v3980 = vsel %vm3812, %v3978, %v3979
  %v3981 = vrot.slane %v99, 5
  %v3982 = vrot.slane %v3981, 4
  %v3983 = vrot.slane %v100, 5
  %v3984 = vsel %vm3812, %v3982, %v3983
  %v3985 = vrot.slane %v3983, 4
  %v3986 = vrot.slane %v101, 5
  %v3987 = vsel %vm3812, %v3985, %v3986
  %v3988 = vrot.slane %v102, 5
  %v3989 = vrot.slane %v3988, 4
  %v3990 = vrot.slane %v103, 5
  %v3991 = vsel %vm3812, %v3989, %v3990
  %v3992 = vrot.slane %v3990, 4
  %v3993 = vrot.slane %v104, 5
  %v3994 = vsel %vm3812, %v3992, %v3993
  %v3995 = vrot.slane %v105, 5
  %v3996 = vrot.slane %v3995, 4
  %v3997 = vrot.slane %v106, 5
  %v3998 = vsel %vm3812, %v3996, %v3997
  %v3999 = vrot.slane %v3997, 4
  %v4000 = vrot.slane %v107, 5
  %v4001 = vsel %vm3812, %v3999, %v4000
  %v4002 = vrot.slane %v108, 5
  %v4003 = vrot.slane %v4002, 4
  %v4004 = vrot.slane %v109, 5
  %v4005 = vsel %vm3812, %v4003, %v4004
  %v4006 = vrot.slane %v4004, 4
  %v4007 = vrot.slane %v110, 5
  %v4008 = vsel %vm3812, %v4006, %v4007
  %v4009 = vrot.slane %v111, 5
  %v4010 = vrot.slane %v4009, 4
  %v4011 = vrot.slane %v112, 5
  %v4012 = vsel %vm3812, %v4010, %v4011
  %v4013 = vrot.slane %v4011, 4
  %v4014 = vrot.slane %v113, 5
  %v4015 = vsel %vm3812, %v4013, %v4014
  %v4016 = vrot.slane %v114, 5
  %v4017 = vrot.slane %v4016, 4
  %v4018 = vrot.slane %v115, 5
  %v4019 = vsel %vm3812, %v4017, %v4018
  %v4020 = vrot.slane %v4018, 4
  %v4021 = vrot.slane %v116, 5
  %v4022 = vsel %vm3812, %v4020, %v4021
  %v4023 = vrot.slane %v117, 5
  %v4024 = vrot.slane %v4023, 4
  %v4025 = vrot.slane %v118, 5
  %v4026 = vsel %vm3812, %v4024, %v4025
  %v4027 = vrot.slane %v4025, 4
  %v4028 = vrot.slane %v119, 5
  %v4029 = vsel %vm3812, %v4027, %v4028
  %v4030 = vrot.slane %v120, 5
  %v4031 = vrot.slane %v4030, 4
  %v4032 = vrot.slane %v121, 5
  %v4033 = vsel %vm3812, %v4031, %v4032
  %v4034 = vrot.slane %v4032, 4
  %v4035 = vrot.slane %v122, 5
  %v4036 = vsel %vm3812, %v4034, %v4035
  %v4037 = vunpack.c.l.b16 %v3816
  %v4038 = vunpack.c.l.b16 %v3819
  %v4039 = vunpack.c.l.b16 %v3823
  %v4040 = vunpack.c.l.b16 %v3826
  %v4041 = vunpack.c.l.b16 %v3830
  %v4042 = vunpack.c.l.b16 %v3833
  %v4043 = vunpack.c.l.b16 %v3837
  %v4044 = vunpack.c.l.b16 %v3840
  %v4045 = vunpack.c.l.b16 %v3844
  %v4046 = vunpack.c.l.b16 %v3847
  %v4047 = vunpack.c.l.b16 %v3851
  %v4048 = vunpack.c.l.b16 %v3854
  %v4049 = vunpack.c.l.b16 %v3858
  %v4050 = vunpack.c.l.b16 %v3861
  %v4051 = vunpack.c.l.b16 %v3865
  %v4052 = vunpack.c.l.b16 %v3868
  %v4053 = vunpack.c.l.b16 %v3872
  %v4054 = vunpack.c.l.b16 %v3875
  %v4055 = vunpack.c.l.b16 %v3879
  %v4056 = vunpack.c.l.b16 %v3882
  %v4057 = vunpack.c.l.b16 %v3886
  %v4058 = vunpack.c.l.b16 %v3889
  %v4059 = vunpack.c.l.b16 %v3893
  %v4060 = vunpack.c.l.b16 %v3896
  %v4061 = vunpack.c.l.b16 %v3900
  %v4062 = vunpack.c.l.b16 %v3903
  %v4063 = vunpack.c.l.b16 %v3907
  %v4064 = vunpack.c.l.b16 %v3910
  %v4065 = vunpack.c.l.b16 %v3914
  %v4066 = vunpack.c.l.b16 %v3917
  %v4067 = vunpack.c.l.b16 %v3921
  %v4068 = vunpack.c.l.b16 %v3924
  %v4069 = vunpack.c.l.b16 %v3928
  %v4070 = vunpack.c.l.b16 %v3931
  %v4071 = vunpack.c.l.b16 %v3935
  %v4072 = vunpack.c.l.b16 %v3938
  %v4073 = vunpack.c.l.b16 %v3942
  %v4074 = vunpack.c.l.b16 %v3945
  %v4075 = vunpack.c.l.b16 %v3949
  %v4076 = vunpack.c.l.b16 %v3952
  %v4077 = vunpack.c.l.b16 %v3956
  %v4078 = vunpack.c.l.b16 %v3959
  %v4079 = vunpack.c.l.b16 %v3963
  %v4080 = vunpack.c.l.b16 %v3966
  %v4081 = vunpack.c.l.b16 %v3970
  %v4082 = vunpack.c.l.b16 %v3973
  %v4083 = vunpack.c.l.b16 %v3977
  %v4084 = vunpack.c.l.b16 %v3980
  %v4085 = vunpack.c.l.b16 %v3984
  %v4086 = vunpack.c.l.b16 %v3987
  %v4087 = vunpack.c.l.b16 %v3991
  %v4088 = vunpack.c.l.b16 %v3994
  %v4089 = vunpack.c.l.b16 %v3998
  %v4090 = vunpack.c.l.b16 %v4001
  %v4091 = vunpack.c.l.b16 %v4005
  %v4092 = vunpack.c.l.b16 %v4008
  %v4093 = vunpack.c.l.b16 %v4012
  %v4094 = vunpack.c.l.b16 %v4015
  %v4095 = vunpack.c.l.b16 %v4019
  %v4096 = vunpack.c.l.b16 %v4022
  %v4097 = vunpack.c.l.b16 %v4026
  %v4098 = vunpack.c.l.b16 %v4029
  %v4099 = vunpack.c.l.b16 %v4033
  %v4100 = vunpack.c.l.b16 %v4036
  %v4101 = vpack.c.b16 %v4038, %v4037
  %v4102 = vpack.c.b16 %v4040, %v4039
  %v4103 = vpack.c.b16 %v4042, %v4041
  %v4104 = vpack.c.b16 %v4044, %v4043
  %v4105 = vpack.c.b16 %v4046, %v4045
  %v4106 = vpack.c.b16 %v4048, %v4047
  %v4107 = vpack.c.b16 %v4050, %v4049
  %v4108 = vpack.c.b16 %v4052, %v4051
  %v4109 = vpack.c.b16 %v4054, %v4053
  %v4110 = vpack.c.b16 %v4056, %v4055
  %v4111 = vpack.c.b16 %v4058, %v4057
  %v4112 = vpack.c.b16 %v4060, %v4059
  %v4113 = vpack.c.b16 %v4062, %v4061
  %v4114 = vpack.c.b16 %v4064, %v4063
  %v4115 = vpack.c.b16 %v4066, %v4065
  %v4116 = vpack.c.b16 %v4068, %v4067
  %v4117 = vpack.c.b16 %v4070, %v4069
  %v4118 = vpack.c.b16 %v4072, %v4071
  %v4119 = vpack.c.b16 %v4074, %v4073
  %v4120 = vpack.c.b16 %v4076, %v4075
  %v4121 = vpack.c.b16 %v4078, %v4077
  %v4122 = vpack.c.b16 %v4080, %v4079
  %v4123 = vpack.c.b16 %v4082, %v4081
  %v4124 = vpack.c.b16 %v4084, %v4083
  %v4125 = vpack.c.b16 %v4086, %v4085
  %v4126 = vpack.c.b16 %v4088, %v4087
  %v4127 = vpack.c.b16 %v4090, %v4089
  %v4128 = vpack.c.b16 %v4092, %v4091
  %v4129 = vpack.c.b16 %v4094, %v4093
  %v4130 = vpack.c.b16 %v4096, %v4095
  %v4131 = vpack.c.b16 %v4098, %v4097
  %v4132 = vpack.c.b16 %v4100, %v4099
  %v4181 = vunpack.c.l.b16 %v161
  %v4182 = vunpack.c.l.b16 %v162
  %v4183 = vunpack.c.l.b16 %v163
  %v4184 = vunpack.c.l.b16 %v164
  %v4185 = vunpack.c.l.b16 %v165
  %v4186 = vunpack.c.l.b16 %v166
  %v4187 = vunpack.c.l.b16 %v167
  %v4188 = vunpack.c.l.b16 %v168
  %v4189 = vunpack.c.l.b16 %v169
  %v4190 = vunpack.c.l.b16 %v170
  %v4191 = vunpack.c.l.b16 %v171
  %v4192 = vunpack.c.l.b16 %v172
  %v4193 = vunpack.c.l.b16 %v173
  %v4194 = vunpack.c.l.b16 %v174
  %v4195 = vunpack.c.l.b16 %v175
  %v4196 = vunpack.c.l.b16 %v176
  %v4197 = vpack.c.b16 %v4182, %v4181
  %v4198 = vpack.c.b16 %v4184, %v4183
  %v4199 = vpack.c.b16 %v4186, %v4185
  %v4200 = vpack.c.b16 %v4188, %v4187
  %v4201 = vpack.c.b16 %v4190, %v4189
  %v4202 = vpack.c.b16 %v4192, %v4191
  %v4203 = vpack.c.b16 %v4194, %v4193
  %v4204 = vpack.c.b16 %v4196, %v4195
  %4213 = vmatprep.subr.bf16.mxu0 0
  %4214 = vmatpush1.bf16.msra.mxu0 %v4204
  %4215 = vmatprep.subr.bf16.mxu0 0
  %4216 = vmatpush1.bf16.msra.mxu0 %v4203
  %4217 = vmatprep.subr.bf16.mxu0 0
  %4218 = vmatpush1.bf16.msra.mxu0 %v4202
  %4219 = vmatprep.subr.bf16.mxu0 0
  %4220 = vmatpush1.bf16.msra.mxu0 %v4201
  %4221 = vmatprep.subr.bf16.mxu0 0
  %4222 = vmatpush1.bf16.msra.mxu0 %v4200
  %4223 = vmatprep.subr.bf16.mxu0 0
  %4224 = vmatpush1.bf16.msra.mxu0 %v4199
  %4225 = vmatprep.subr.bf16.mxu0 0
  %4226 = vmatpush1.bf16.msra.mxu0 %v4198
  %4227 = vmatprep.subr.bf16.mxu0 0
  %4228 = vmatpush1.bf16.msra.mxu0 %v4197
  %4229 = vmatprep.subr.bf16.mxu0 0
  %4230 = vmatpush2.bf16.msra.mxu0 0
  %4231 = vmatprep.subr.bf16.mxu0 0
  %4232 = vmatpush2.bf16.msra.mxu0 0
  %4233 = vmatprep.subr.bf16.mxu0 0
  %4234 = vmatpush2.bf16.msra.mxu0 0
  %4235 = vmatprep.subr.bf16.mxu0 0
  %4236 = vmatpush2.bf16.msra.mxu0 0
  %4237 = vmatprep.subr.bf16.mxu0 0
  %4238 = vmatpush2.bf16.msra.mxu0 0
  %4239 = vmatprep.subr.bf16.mxu0 0
  %4240 = vmatpush2.bf16.msra.mxu0 0
  %4241 = vmatprep.subr.bf16.mxu0 0
  %4242 = vmatpush2.bf16.msra.mxu0 0
  %4243 = vmatprep.subr.bf16.mxu0 0
  %4244 = vmatpush2.bf16.msra.mxu0 0
  %4245 = vmatprep.mubr.bf16.mxu0 0
  %4246 = vmatmul.mubr.bf16.gmra.mxu0 %v4101
  %v4247 = vpop.f32.mrf.mxu0
  %v4248 = vadd.f32 0.0, %v4247
  %v4249 = vpop.f32.mrf.mxu0
  %v4250 = vpop.f32.mrf.mxu0
  %v4251 = vadd.f32 0.0, %v4250
  %v4252 = vpop.f32.mrf.mxu0
  %4253 = vmatprep.mubr.bf16.mxu0 0
  %4254 = vmatmul.mubr.bf16.gmra.mxu0 %v4102
  %v4255 = vpop.f32.mrf.mxu0
  %v4256 = vadd.f32 0.0, %v4255
  %v4257 = vpop.f32.mrf.mxu0
  %v4258 = vpop.f32.mrf.mxu0
  %v4259 = vadd.f32 0.0, %v4258
  %v4260 = vpop.f32.mrf.mxu0
  %4261 = vmatprep.mubr.bf16.mxu0 0
  %4262 = vmatmul.mubr.bf16.gmra.mxu0 %v4103
  %v4263 = vpop.f32.mrf.mxu0
  %v4264 = vadd.f32 0.0, %v4263
  %v4265 = vpop.f32.mrf.mxu0
  %v4266 = vpop.f32.mrf.mxu0
  %v4267 = vadd.f32 0.0, %v4266
  %v4268 = vpop.f32.mrf.mxu0
  %4269 = vmatprep.mubr.bf16.mxu0 0
  %4270 = vmatmul.mubr.bf16.gmra.mxu0 %v4104
  %v4271 = vpop.f32.mrf.mxu0
  %v4272 = vadd.f32 0.0, %v4271
  %v4273 = vpop.f32.mrf.mxu0
  %v4274 = vpop.f32.mrf.mxu0
  %v4275 = vadd.f32 0.0, %v4274
  %v4276 = vpop.f32.mrf.mxu0
  %4277 = vmatprep.mubr.bf16.mxu0 0
  %4278 = vmatmul.mubr.bf16.gmra.mxu0 %v4105
  %v4279 = vpop.f32.mrf.mxu0
  %v4280 = vadd.f32 0.0, %v4279
  %v4281 = vpop.f32.mrf.mxu0
  %v4282 = vpop.f32.mrf.mxu0
  %v4283 = vadd.f32 0.0, %v4282
  %v4284 = vpop.f32.mrf.mxu0
  %4285 = vmatprep.mubr.bf16.mxu0 0
  %4286 = vmatmul.mubr.bf16.gmra.mxu0 %v4106
  %v4287 = vpop.f32.mrf.mxu0
  %v4288 = vadd.f32 0.0, %v4287
  %v4289 = vpop.f32.mrf.mxu0
  %v4290 = vpop.f32.mrf.mxu0
  %v4291 = vadd.f32 0.0, %v4290
  %v4292 = vpop.f32.mrf.mxu0
  %4293 = vmatprep.mubr.bf16.mxu0 0
  %4294 = vmatmul.mubr.bf16.gmra.mxu0 %v4107
  %v4295 = vpop.f32.mrf.mxu0
  %v4296 = vadd.f32 0.0, %v4295
  %v4297 = vpop.f32.mrf.mxu0
  %v4298 = vpop.f32.mrf.mxu0
  %v4299 = vadd.f32 0.0, %v4298
  %v4300 = vpop.f32.mrf.mxu0
  %4301 = vmatprep.mubr.bf16.mxu0 0
  %4302 = vmatmul.mubr.bf16.gmra.mxu0 %v4108
  %v4303 = vpop.f32.mrf.mxu0
  %v4304 = vadd.f32 0.0, %v4303
  %v4305 = vpop.f32.mrf.mxu0
  %v4306 = vpop.f32.mrf.mxu0
  %v4307 = vadd.f32 0.0, %v4306
  %v4308 = vpop.f32.mrf.mxu0
  %4309 = vmatprep.mubr.bf16.mxu0 0
  %4310 = vmatmul.mubr.bf16.gmra.mxu0 %v4109
  %v4311 = vpop.f32.mrf.mxu0
  %v4312 = vadd.f32 0.0, %v4311
  %v4313 = vpop.f32.mrf.mxu0
  %v4314 = vpop.f32.mrf.mxu0
  %v4315 = vadd.f32 0.0, %v4314
  %v4316 = vpop.f32.mrf.mxu0
  %4317 = vmatprep.mubr.bf16.mxu0 0
  %4318 = vmatmul.mubr.bf16.gmra.mxu0 %v4110
  %v4319 = vpop.f32.mrf.mxu0
  %v4320 = vadd.f32 0.0, %v4319
  %v4321 = vpop.f32.mrf.mxu0
  %v4322 = vpop.f32.mrf.mxu0
  %v4323 = vadd.f32 0.0, %v4322
  %v4324 = vpop.f32.mrf.mxu0
  %4325 = vmatprep.mubr.bf16.mxu0 0
  %4326 = vmatmul.mubr.bf16.gmra.mxu0 %v4111
  %v4327 = vpop.f32.mrf.mxu0
  %v4328 = vadd.f32 0.0, %v4327
  %v4329 = vpop.f32.mrf.mxu0
  %v4330 = vpop.f32.mrf.mxu0
  %v4331 = vadd.f32 0.0, %v4330
  %v4332 = vpop.f32.mrf.mxu0
  %4333 = vmatprep.mubr.bf16.mxu0 0
  %4334 = vmatmul.mubr.bf16.gmra.mxu0 %v4112
  %v4335 = vpop.f32.mrf.mxu0
  %v4336 = vadd.f32 0.0, %v4335
  %v4337 = vpop.f32.mrf.mxu0
  %v4338 = vpop.f32.mrf.mxu0
  %v4339 = vadd.f32 0.0, %v4338
  %v4340 = vpop.f32.mrf.mxu0
  %4341 = vmatprep.mubr.bf16.mxu0 0
  %4342 = vmatmul.mubr.bf16.gmra.mxu0 %v4113
  %v4343 = vpop.f32.mrf.mxu0
  %v4344 = vadd.f32 0.0, %v4343
  %v4345 = vpop.f32.mrf.mxu0
  %v4346 = vpop.f32.mrf.mxu0
  %v4347 = vadd.f32 0.0, %v4346
  %v4348 = vpop.f32.mrf.mxu0
  %4349 = vmatprep.mubr.bf16.mxu0 0
  %4350 = vmatmul.mubr.bf16.gmra.mxu0 %v4114
  %v4351 = vpop.f32.mrf.mxu0
  %v4352 = vadd.f32 0.0, %v4351
  %v4353 = vpop.f32.mrf.mxu0
  %v4354 = vpop.f32.mrf.mxu0
  %v4355 = vadd.f32 0.0, %v4354
  %v4356 = vpop.f32.mrf.mxu0
  %4357 = vmatprep.mubr.bf16.mxu0 0
  %4358 = vmatmul.mubr.bf16.gmra.mxu0 %v4115
  %v4359 = vpop.f32.mrf.mxu0
  %v4360 = vadd.f32 0.0, %v4359
  %v4361 = vpop.f32.mrf.mxu0
  %v4362 = vpop.f32.mrf.mxu0
  %v4363 = vadd.f32 0.0, %v4362
  %v4364 = vpop.f32.mrf.mxu0
  %4365 = vmatprep.mubr.bf16.mxu0 0
  %4366 = vmatmul.mubr.bf16.gmra.mxu0 %v4116
  %v4367 = vpop.f32.mrf.mxu0
  %v4368 = vadd.f32 0.0, %v4367
  %v4369 = vpop.f32.mrf.mxu0
  %v4370 = vpop.f32.mrf.mxu0
  %v4371 = vadd.f32 0.0, %v4370
  %v4372 = vpop.f32.mrf.mxu0
  %4373 = vmatprep.mubr.bf16.mxu0 0
  %4374 = vmatmul.mubr.bf16.gmra.mxu0 %v4117
  %v4375 = vpop.f32.mrf.mxu0
  %v4376 = vadd.f32 0.0, %v4375
  %v4377 = vpop.f32.mrf.mxu0
  %v4378 = vpop.f32.mrf.mxu0
  %v4379 = vadd.f32 0.0, %v4378
  %v4380 = vpop.f32.mrf.mxu0
  %4381 = vmatprep.mubr.bf16.mxu0 0
  %4382 = vmatmul.mubr.bf16.gmra.mxu0 %v4118
  %v4383 = vpop.f32.mrf.mxu0
  %v4384 = vadd.f32 0.0, %v4383
  %v4385 = vpop.f32.mrf.mxu0
  %v4386 = vpop.f32.mrf.mxu0
  %v4387 = vadd.f32 0.0, %v4386
  %v4388 = vpop.f32.mrf.mxu0
  %4389 = vmatprep.mubr.bf16.mxu0 0
  %4390 = vmatmul.mubr.bf16.gmra.mxu0 %v4119
  %v4391 = vpop.f32.mrf.mxu0
  %v4392 = vadd.f32 0.0, %v4391
  %v4393 = vpop.f32.mrf.mxu0
  %v4394 = vpop.f32.mrf.mxu0
  %v4395 = vadd.f32 0.0, %v4394
  %v4396 = vpop.f32.mrf.mxu0
  %4397 = vmatprep.mubr.bf16.mxu0 0
  %4398 = vmatmul.mubr.bf16.gmra.mxu0 %v4120
  %v4399 = vpop.f32.mrf.mxu0
  %v4400 = vadd.f32 0.0, %v4399
  %v4401 = vpop.f32.mrf.mxu0
  %v4402 = vpop.f32.mrf.mxu0
  %v4403 = vadd.f32 0.0, %v4402
  %v4404 = vpop.f32.mrf.mxu0
  %4405 = vmatprep.mubr.bf16.mxu0 0
  %4406 = vmatmul.mubr.bf16.gmra.mxu0 %v4121
  %v4407 = vpop.f32.mrf.mxu0
  %v4408 = vadd.f32 0.0, %v4407
  %v4409 = vpop.f32.mrf.mxu0
  %v4410 = vpop.f32.mrf.mxu0
  %v4411 = vadd.f32 0.0, %v4410
  %v4412 = vpop.f32.mrf.mxu0
  %4413 = vmatprep.mubr.bf16.mxu0 0
  %4414 = vmatmul.mubr.bf16.gmra.mxu0 %v4122
  %v4415 = vpop.f32.mrf.mxu0
  %v4416 = vadd.f32 0.0, %v4415
  %v4417 = vpop.f32.mrf.mxu0
  %v4418 = vpop.f32.mrf.mxu0
  %v4419 = vadd.f32 0.0, %v4418
  %v4420 = vpop.f32.mrf.mxu0
  %4421 = vmatprep.mubr.bf16.mxu0 0
  %4422 = vmatmul.mubr.bf16.gmra.mxu0 %v4123
  %v4423 = vpop.f32.mrf.mxu0
  %v4424 = vadd.f32 0.0, %v4423
  %v4425 = vpop.f32.mrf.mxu0
  %v4426 = vpop.f32.mrf.mxu0
  %v4427 = vadd.f32 0.0, %v4426
  %v4428 = vpop.f32.mrf.mxu0
  %4429 = vmatprep.mubr.bf16.mxu0 0
  %4430 = vmatmul.mubr.bf16.gmra.mxu0 %v4124
  %v4431 = vpop.f32.mrf.mxu0
  %v4432 = vadd.f32 0.0, %v4431
  %v4433 = vpop.f32.mrf.mxu0
  %v4434 = vpop.f32.mrf.mxu0
  %v4435 = vadd.f32 0.0, %v4434
  %v4436 = vpop.f32.mrf.mxu0
  %4437 = vmatprep.mubr.bf16.mxu0 0
  %4438 = vmatmul.mubr.bf16.gmra.mxu0 %v4125
  %v4439 = vpop.f32.mrf.mxu0
  %v4440 = vadd.f32 0.0, %v4439
  %v4441 = vpop.f32.mrf.mxu0
  %v4442 = vpop.f32.mrf.mxu0
  %v4443 = vadd.f32 0.0, %v4442
  %v4444 = vpop.f32.mrf.mxu0
  %4445 = vmatprep.mubr.bf16.mxu0 0
  %4446 = vmatmul.mubr.bf16.gmra.mxu0 %v4126
  %v4447 = vpop.f32.mrf.mxu0
  %v4448 = vadd.f32 0.0, %v4447
  %v4449 = vpop.f32.mrf.mxu0
  %v4450 = vpop.f32.mrf.mxu0
  %v4451 = vadd.f32 0.0, %v4450
  %v4452 = vpop.f32.mrf.mxu0
  %4453 = vmatprep.mubr.bf16.mxu0 0
  %4454 = vmatmul.mubr.bf16.gmra.mxu0 %v4127
  %v4455 = vpop.f32.mrf.mxu0
  %v4456 = vadd.f32 0.0, %v4455
  %v4457 = vpop.f32.mrf.mxu0
  %v4458 = vpop.f32.mrf.mxu0
  %v4459 = vadd.f32 0.0, %v4458
  %v4460 = vpop.f32.mrf.mxu0
  %4461 = vmatprep.mubr.bf16.mxu0 0
  %4462 = vmatmul.mubr.bf16.gmra.mxu0 %v4128
  %v4463 = vpop.f32.mrf.mxu0
  %v4464 = vadd.f32 0.0, %v4463
  %v4465 = vpop.f32.mrf.mxu0
  %v4466 = vpop.f32.mrf.mxu0
  %v4467 = vadd.f32 0.0, %v4466
  %v4468 = vpop.f32.mrf.mxu0
  %4469 = vmatprep.mubr.bf16.mxu0 0
  %4470 = vmatmul.mubr.bf16.gmra.mxu0 %v4129
  %v4471 = vpop.f32.mrf.mxu0
  %v4472 = vadd.f32 0.0, %v4471
  %v4473 = vpop.f32.mrf.mxu0
  %v4474 = vpop.f32.mrf.mxu0
  %v4475 = vadd.f32 0.0, %v4474
  %v4476 = vpop.f32.mrf.mxu0
  %4477 = vmatprep.mubr.bf16.mxu0 0
  %4478 = vmatmul.mubr.bf16.gmra.mxu0 %v4130
  %v4479 = vpop.f32.mrf.mxu0
  %v4480 = vadd.f32 0.0, %v4479
  %v4481 = vpop.f32.mrf.mxu0
  %v4482 = vpop.f32.mrf.mxu0
  %v4483 = vadd.f32 0.0, %v4482
  %v4484 = vpop.f32.mrf.mxu0
  %4485 = vmatprep.mubr.bf16.mxu0 0
  %4486 = vmatmul.mubr.bf16.gmra.mxu0 %v4131
  %v4487 = vpop.f32.mrf.mxu0
  %v4488 = vadd.f32 0.0, %v4487
  %v4489 = vpop.f32.mrf.mxu0
  %v4490 = vpop.f32.mrf.mxu0
  %v4491 = vadd.f32 0.0, %v4490
  %v4492 = vpop.f32.mrf.mxu0
  %4493 = vmatprep.mubr.bf16.mxu0 0
  %4494 = vmatmul.mubr.bf16.gmra.mxu0 %v4132
  %v4495 = vpop.f32.mrf.mxu0
  %v4496 = vadd.f32 0.0, %v4495
  %v4497 = vpop.f32.mrf.mxu0
  %v4498 = vpop.f32.mrf.mxu0
  %v4499 = vadd.f32 0.0, %v4498
  %v4500 = vpop.f32.mrf.mxu0
  %4501 = vdwg.mxu0
  %v4502 = vadd.f32 %v3714, %v4248
  %v4503 = vadd.f32 %v3715, %v4251
  %v4504 = vadd.f32 %v3716, %v4256
  %v4505 = vadd.f32 %v3717, %v4259
  %v4506 = vadd.f32 %v3718, %v4264
  %v4507 = vadd.f32 %v3719, %v4267
  %v4508 = vadd.f32 %v3720, %v4272
  %v4509 = vadd.f32 %v3721, %v4275
  %v4510 = vadd.f32 %v3722, %v4280
  %v4511 = vadd.f32 %v3723, %v4283
  %v4512 = vadd.f32 %v3724, %v4288
  %v4513 = vadd.f32 %v3725, %v4291
  %v4514 = vadd.f32 %v3726, %v4296
  %v4515 = vadd.f32 %v3727, %v4299
  %v4516 = vadd.f32 %v3728, %v4304
  %v4517 = vadd.f32 %v3729, %v4307
  %v4518 = vadd.f32 %v3730, %v4312
  %v4519 = vadd.f32 %v3731, %v4315
  %v4520 = vadd.f32 %v3732, %v4320
  %v4521 = vadd.f32 %v3733, %v4323
  %v4522 = vadd.f32 %v3734, %v4328
  %v4523 = vadd.f32 %v3735, %v4331
  %v4524 = vadd.f32 %v3736, %v4336
  %v4525 = vadd.f32 %v3737, %v4339
  %v4526 = vadd.f32 %v3738, %v4344
  %v4527 = vadd.f32 %v3739, %v4347
  %v4528 = vadd.f32 %v3740, %v4352
  %v4529 = vadd.f32 %v3741, %v4355
  %v4530 = vadd.f32 %v3742, %v4360
  %v4531 = vadd.f32 %v3743, %v4363
  %v4532 = vadd.f32 %v3744, %v4368
  %v4533 = vadd.f32 %v3745, %v4371
  %v4534 = vadd.f32 %v3746, %v4376
  %v4535 = vadd.f32 %v3747, %v4379
  %v4536 = vadd.f32 %v3748, %v4384
  %v4537 = vadd.f32 %v3749, %v4387
  %v4538 = vadd.f32 %v3750, %v4392
  %v4539 = vadd.f32 %v3751, %v4395
  %v4540 = vadd.f32 %v3752, %v4400
  %v4541 = vadd.f32 %v3753, %v4403
  %v4542 = vadd.f32 %v3754, %v4408
  %v4543 = vadd.f32 %v3755, %v4411
  %v4544 = vadd.f32 %v3756, %v4416
  %v4545 = vadd.f32 %v3757, %v4419
  %v4546 = vadd.f32 %v3758, %v4424
  %v4547 = vadd.f32 %v3759, %v4427
  %v4548 = vadd.f32 %v3760, %v4432
  %v4549 = vadd.f32 %v3761, %v4435
  %v4550 = vadd.f32 %v3762, %v4440
  %v4551 = vadd.f32 %v3763, %v4443
  %v4552 = vadd.f32 %v3764, %v4448
  %v4553 = vadd.f32 %v3765, %v4451
  %v4554 = vadd.f32 %v3766, %v4456
  %v4555 = vadd.f32 %v3767, %v4459
  %v4556 = vadd.f32 %v3768, %v4464
  %v4557 = vadd.f32 %v3769, %v4467
  %v4558 = vadd.f32 %v3770, %v4472
  %v4559 = vadd.f32 %v3771, %v4475
  %v4560 = vadd.f32 %v3772, %v4480
  %v4561 = vadd.f32 %v3773, %v4483
  %v4562 = vadd.f32 %v3774, %v4488
  %v4563 = vadd.f32 %v3775, %v4491
  %v4564 = vadd.f32 %v3776, %v4496
  %v4565 = vadd.f32 %v3777, %v4499
  %v4568 = vrot.slane %v69, 5
  %v4569 = vrot.slane %v4568, 4
  %v4570 = vrot.slane %v70, 5
  %v4571 = vsel %vm3812, %v4569, %v4570
  %v4572 = vrot.slane %v4570, 4
  %v4573 = vrot.slane %v71, 5
  %v4574 = vsel %vm3812, %v4572, %v4573
  %v4575 = vrot.slane %v123, 5
  %v4576 = vrot.slane %v4575, 4
  %v4577 = vrot.slane %v124, 5
  %v4578 = vsel %vm3812, %v4576, %v4577
  %v4579 = vrot.slane %v4577, 4
  %v4580 = vrot.slane %v125, 5
  %v4581 = vsel %vm3812, %v4579, %v4580
  %v4582 = vunpack.c.l.b16 %v4571
  %v4583 = vunpack.c.l.b16 %v4574
  %v4584 = vunpack.c.l.b16 %v4578
  %v4585 = vunpack.c.l.b16 %v4581
  %v4586 = vpack.c.b16 %v4583, %v4582
  %v4587 = vpack.c.b16 %v4585, %v4584
  %v4606 = vunpack.c.l.b16 %v209
  %v4607 = vunpack.c.l.b16 %v210
  %v4608 = vunpack.c.l.b16 %v211
  %v4609 = vunpack.c.l.b16 %v212
  %v4610 = vunpack.c.l.b16 %v213
  %v4611 = vunpack.c.l.b16 %v214
  %v4612 = vunpack.c.l.b16 %v215
  %v4613 = vunpack.c.l.b16 %v216
  %v4614 = vunpack.c.l.b16 %v217
  %v4615 = vunpack.c.l.b16 %v218
  %v4616 = vunpack.c.l.b16 %v219
  %v4617 = vunpack.c.l.b16 %v220
  %v4618 = vunpack.c.l.b16 %v221
  %v4619 = vunpack.c.l.b16 %v222
  %v4620 = vunpack.c.l.b16 %v223
  %v4621 = vunpack.c.l.b16 %v224
  %v4622 = vpack.c.b16 %v4607, %v4606
  %v4623 = vpack.c.b16 %v4609, %v4608
  %v4624 = vpack.c.b16 %v4611, %v4610
  %v4625 = vpack.c.b16 %v4613, %v4612
  %v4626 = vpack.c.b16 %v4615, %v4614
  %v4627 = vpack.c.b16 %v4617, %v4616
  %v4628 = vpack.c.b16 %v4619, %v4618
  %v4629 = vpack.c.b16 %v4621, %v4620
  %4638 = vmatprep.subr.bf16.mxu0 0
  %4639 = vmatpush1.bf16.msra.mxu0 %v4629
  %4640 = vmatprep.subr.bf16.mxu0 0
  %4641 = vmatpush1.bf16.msra.mxu0 %v4628
  %4642 = vmatprep.subr.bf16.mxu0 0
  %4643 = vmatpush1.bf16.msra.mxu0 %v4627
  %4644 = vmatprep.subr.bf16.mxu0 0
  %4645 = vmatpush1.bf16.msra.mxu0 %v4626
  %4646 = vmatprep.subr.bf16.mxu0 0
  %4647 = vmatpush1.bf16.msra.mxu0 %v4625
  %4648 = vmatprep.subr.bf16.mxu0 0
  %4649 = vmatpush1.bf16.msra.mxu0 %v4624
  %4650 = vmatprep.subr.bf16.mxu0 0
  %4651 = vmatpush1.bf16.msra.mxu0 %v4623
  %4652 = vmatprep.subr.bf16.mxu0 0
  %4653 = vmatpush1.bf16.msra.mxu0 %v4622
  %4654 = vmatprep.subr.bf16.mxu0 0
  %4655 = vmatpush2.bf16.msra.mxu0 0
  %4656 = vmatprep.subr.bf16.mxu0 0
  %4657 = vmatpush2.bf16.msra.mxu0 0
  %4658 = vmatprep.subr.bf16.mxu0 0
  %4659 = vmatpush2.bf16.msra.mxu0 0
  %4660 = vmatprep.subr.bf16.mxu0 0
  %4661 = vmatpush2.bf16.msra.mxu0 0
  %4662 = vmatprep.subr.bf16.mxu0 0
  %4663 = vmatpush2.bf16.msra.mxu0 0
  %4664 = vmatprep.subr.bf16.mxu0 0
  %4665 = vmatpush2.bf16.msra.mxu0 0
  %4666 = vmatprep.subr.bf16.mxu0 0
  %4667 = vmatpush2.bf16.msra.mxu0 0
  %4668 = vmatprep.subr.bf16.mxu0 0
  %4669 = vmatpush2.bf16.msra.mxu0 0
  %4670 = vmatprep.mubr.bf16.mxu0 0
  %4671 = vmatmul.mubr.bf16.gmra.mxu0 %v4102
  %v4672 = vpop.f32.mrf.mxu0
  %v4673 = vadd.f32 0.0, %v4672
  %v4674 = vpop.f32.mrf.mxu0
  %v4675 = vpop.f32.mrf.mxu0
  %v4676 = vadd.f32 0.0, %v4675
  %v4677 = vpop.f32.mrf.mxu0
  %4678 = vmatprep.mubr.bf16.mxu0 0
  %4679 = vmatmul.mubr.bf16.gmra.mxu0 %v4103
  %v4680 = vpop.f32.mrf.mxu0
  %v4681 = vadd.f32 0.0, %v4680
  %v4682 = vpop.f32.mrf.mxu0
  %v4683 = vpop.f32.mrf.mxu0
  %v4684 = vadd.f32 0.0, %v4683
  %v4685 = vpop.f32.mrf.mxu0
  %4686 = vmatprep.mubr.bf16.mxu0 0
  %4687 = vmatmul.mubr.bf16.gmra.mxu0 %v4104
  %v4688 = vpop.f32.mrf.mxu0
  %v4689 = vadd.f32 0.0, %v4688
  %v4690 = vpop.f32.mrf.mxu0
  %v4691 = vpop.f32.mrf.mxu0
  %v4692 = vadd.f32 0.0, %v4691
  %v4693 = vpop.f32.mrf.mxu0
  %4694 = vmatprep.mubr.bf16.mxu0 0
  %4695 = vmatmul.mubr.bf16.gmra.mxu0 %v4105
  %v4696 = vpop.f32.mrf.mxu0
  %v4697 = vadd.f32 0.0, %v4696
  %v4698 = vpop.f32.mrf.mxu0
  %v4699 = vpop.f32.mrf.mxu0
  %v4700 = vadd.f32 0.0, %v4699
  %v4701 = vpop.f32.mrf.mxu0
  %4702 = vmatprep.mubr.bf16.mxu0 0
  %4703 = vmatmul.mubr.bf16.gmra.mxu0 %v4106
  %v4704 = vpop.f32.mrf.mxu0
  %v4705 = vadd.f32 0.0, %v4704
  %v4706 = vpop.f32.mrf.mxu0
  %v4707 = vpop.f32.mrf.mxu0
  %v4708 = vadd.f32 0.0, %v4707
  %v4709 = vpop.f32.mrf.mxu0
  %4710 = vmatprep.mubr.bf16.mxu0 0
  %4711 = vmatmul.mubr.bf16.gmra.mxu0 %v4107
  %v4712 = vpop.f32.mrf.mxu0
  %v4713 = vadd.f32 0.0, %v4712
  %v4714 = vpop.f32.mrf.mxu0
  %v4715 = vpop.f32.mrf.mxu0
  %v4716 = vadd.f32 0.0, %v4715
  %v4717 = vpop.f32.mrf.mxu0
  %4718 = vmatprep.mubr.bf16.mxu0 0
  %4719 = vmatmul.mubr.bf16.gmra.mxu0 %v4108
  %v4720 = vpop.f32.mrf.mxu0
  %v4721 = vadd.f32 0.0, %v4720
  %v4722 = vpop.f32.mrf.mxu0
  %v4723 = vpop.f32.mrf.mxu0
  %v4724 = vadd.f32 0.0, %v4723
  %v4725 = vpop.f32.mrf.mxu0
  %4726 = vmatprep.mubr.bf16.mxu0 0
  %4727 = vmatmul.mubr.bf16.gmra.mxu0 %v4109
  %v4728 = vpop.f32.mrf.mxu0
  %v4729 = vadd.f32 0.0, %v4728
  %v4730 = vpop.f32.mrf.mxu0
  %v4731 = vpop.f32.mrf.mxu0
  %v4732 = vadd.f32 0.0, %v4731
  %v4733 = vpop.f32.mrf.mxu0
  %4734 = vmatprep.mubr.bf16.mxu0 0
  %4735 = vmatmul.mubr.bf16.gmra.mxu0 %v4110
  %v4736 = vpop.f32.mrf.mxu0
  %v4737 = vadd.f32 0.0, %v4736
  %v4738 = vpop.f32.mrf.mxu0
  %v4739 = vpop.f32.mrf.mxu0
  %v4740 = vadd.f32 0.0, %v4739
  %v4741 = vpop.f32.mrf.mxu0
  %4742 = vmatprep.mubr.bf16.mxu0 0
  %4743 = vmatmul.mubr.bf16.gmra.mxu0 %v4111
  %v4744 = vpop.f32.mrf.mxu0
  %v4745 = vadd.f32 0.0, %v4744
  %v4746 = vpop.f32.mrf.mxu0
  %v4747 = vpop.f32.mrf.mxu0
  %v4748 = vadd.f32 0.0, %v4747
  %v4749 = vpop.f32.mrf.mxu0
  %4750 = vmatprep.mubr.bf16.mxu0 0
  %4751 = vmatmul.mubr.bf16.gmra.mxu0 %v4112
  %v4752 = vpop.f32.mrf.mxu0
  %v4753 = vadd.f32 0.0, %v4752
  %v4754 = vpop.f32.mrf.mxu0
  %v4755 = vpop.f32.mrf.mxu0
  %v4756 = vadd.f32 0.0, %v4755
  %v4757 = vpop.f32.mrf.mxu0
  %4758 = vmatprep.mubr.bf16.mxu0 0
  %4759 = vmatmul.mubr.bf16.gmra.mxu0 %v4113
  %v4760 = vpop.f32.mrf.mxu0
  %v4761 = vadd.f32 0.0, %v4760
  %v4762 = vpop.f32.mrf.mxu0
  %v4763 = vpop.f32.mrf.mxu0
  %v4764 = vadd.f32 0.0, %v4763
  %v4765 = vpop.f32.mrf.mxu0
  %4766 = vmatprep.mubr.bf16.mxu0 0
  %4767 = vmatmul.mubr.bf16.gmra.mxu0 %v4114
  %v4768 = vpop.f32.mrf.mxu0
  %v4769 = vadd.f32 0.0, %v4768
  %v4770 = vpop.f32.mrf.mxu0
  %v4771 = vpop.f32.mrf.mxu0
  %v4772 = vadd.f32 0.0, %v4771
  %v4773 = vpop.f32.mrf.mxu0
  %4774 = vmatprep.mubr.bf16.mxu0 0
  %4775 = vmatmul.mubr.bf16.gmra.mxu0 %v4115
  %v4776 = vpop.f32.mrf.mxu0
  %v4777 = vadd.f32 0.0, %v4776
  %v4778 = vpop.f32.mrf.mxu0
  %v4779 = vpop.f32.mrf.mxu0
  %v4780 = vadd.f32 0.0, %v4779
  %v4781 = vpop.f32.mrf.mxu0
  %4782 = vmatprep.mubr.bf16.mxu0 0
  %4783 = vmatmul.mubr.bf16.gmra.mxu0 %v4116
  %v4784 = vpop.f32.mrf.mxu0
  %v4785 = vadd.f32 0.0, %v4784
  %v4786 = vpop.f32.mrf.mxu0
  %v4787 = vpop.f32.mrf.mxu0
  %v4788 = vadd.f32 0.0, %v4787
  %v4789 = vpop.f32.mrf.mxu0
  %4790 = vmatprep.mubr.bf16.mxu0 0
  %4791 = vmatmul.mubr.bf16.gmra.mxu0 %v4586
  %v4792 = vpop.f32.mrf.mxu0
  %v4793 = vadd.f32 0.0, %v4792
  %v4794 = vpop.f32.mrf.mxu0
  %v4795 = vpop.f32.mrf.mxu0
  %v4796 = vadd.f32 0.0, %v4795
  %v4797 = vpop.f32.mrf.mxu0
  %4798 = vmatprep.mubr.bf16.mxu0 0
  %4799 = vmatmul.mubr.bf16.gmra.mxu0 %v4118
  %v4800 = vpop.f32.mrf.mxu0
  %v4801 = vadd.f32 0.0, %v4800
  %v4802 = vpop.f32.mrf.mxu0
  %v4803 = vpop.f32.mrf.mxu0
  %v4804 = vadd.f32 0.0, %v4803
  %v4805 = vpop.f32.mrf.mxu0
  %4806 = vmatprep.mubr.bf16.mxu0 0
  %4807 = vmatmul.mubr.bf16.gmra.mxu0 %v4119
  %v4808 = vpop.f32.mrf.mxu0
  %v4809 = vadd.f32 0.0, %v4808
  %v4810 = vpop.f32.mrf.mxu0
  %v4811 = vpop.f32.mrf.mxu0
  %v4812 = vadd.f32 0.0, %v4811
  %v4813 = vpop.f32.mrf.mxu0
  %4814 = vmatprep.mubr.bf16.mxu0 0
  %4815 = vmatmul.mubr.bf16.gmra.mxu0 %v4120
  %v4816 = vpop.f32.mrf.mxu0
  %v4817 = vadd.f32 0.0, %v4816
  %v4818 = vpop.f32.mrf.mxu0
  %v4819 = vpop.f32.mrf.mxu0
  %v4820 = vadd.f32 0.0, %v4819
  %v4821 = vpop.f32.mrf.mxu0
  %4822 = vmatprep.mubr.bf16.mxu0 0
  %4823 = vmatmul.mubr.bf16.gmra.mxu0 %v4121
  %v4824 = vpop.f32.mrf.mxu0
  %v4825 = vadd.f32 0.0, %v4824
  %v4826 = vpop.f32.mrf.mxu0
  %v4827 = vpop.f32.mrf.mxu0
  %v4828 = vadd.f32 0.0, %v4827
  %v4829 = vpop.f32.mrf.mxu0
  %4830 = vmatprep.mubr.bf16.mxu0 0
  %4831 = vmatmul.mubr.bf16.gmra.mxu0 %v4122
  %v4832 = vpop.f32.mrf.mxu0
  %v4833 = vadd.f32 0.0, %v4832
  %v4834 = vpop.f32.mrf.mxu0
  %v4835 = vpop.f32.mrf.mxu0
  %v4836 = vadd.f32 0.0, %v4835
  %v4837 = vpop.f32.mrf.mxu0
  %4838 = vmatprep.mubr.bf16.mxu0 0
  %4839 = vmatmul.mubr.bf16.gmra.mxu0 %v4123
  %v4840 = vpop.f32.mrf.mxu0
  %v4841 = vadd.f32 0.0, %v4840
  %v4842 = vpop.f32.mrf.mxu0
  %v4843 = vpop.f32.mrf.mxu0
  %v4844 = vadd.f32 0.0, %v4843
  %v4845 = vpop.f32.mrf.mxu0
  %4846 = vmatprep.mubr.bf16.mxu0 0
  %4847 = vmatmul.mubr.bf16.gmra.mxu0 %v4124
  %v4848 = vpop.f32.mrf.mxu0
  %v4849 = vadd.f32 0.0, %v4848
  %v4850 = vpop.f32.mrf.mxu0
  %v4851 = vpop.f32.mrf.mxu0
  %v4852 = vadd.f32 0.0, %v4851
  %v4853 = vpop.f32.mrf.mxu0
  %4854 = vmatprep.mubr.bf16.mxu0 0
  %4855 = vmatmul.mubr.bf16.gmra.mxu0 %v4125
  %v4856 = vpop.f32.mrf.mxu0
  %v4857 = vadd.f32 0.0, %v4856
  %v4858 = vpop.f32.mrf.mxu0
  %v4859 = vpop.f32.mrf.mxu0
  %v4860 = vadd.f32 0.0, %v4859
  %v4861 = vpop.f32.mrf.mxu0
  %4862 = vmatprep.mubr.bf16.mxu0 0
  %4863 = vmatmul.mubr.bf16.gmra.mxu0 %v4126
  %v4864 = vpop.f32.mrf.mxu0
  %v4865 = vadd.f32 0.0, %v4864
  %v4866 = vpop.f32.mrf.mxu0
  %v4867 = vpop.f32.mrf.mxu0
  %v4868 = vadd.f32 0.0, %v4867
  %v4869 = vpop.f32.mrf.mxu0
  %4870 = vmatprep.mubr.bf16.mxu0 0
  %4871 = vmatmul.mubr.bf16.gmra.mxu0 %v4127
  %v4872 = vpop.f32.mrf.mxu0
  %v4873 = vadd.f32 0.0, %v4872
  %v4874 = vpop.f32.mrf.mxu0
  %v4875 = vpop.f32.mrf.mxu0
  %v4876 = vadd.f32 0.0, %v4875
  %v4877 = vpop.f32.mrf.mxu0
  %4878 = vmatprep.mubr.bf16.mxu0 0
  %4879 = vmatmul.mubr.bf16.gmra.mxu0 %v4128
  %v4880 = vpop.f32.mrf.mxu0
  %v4881 = vadd.f32 0.0, %v4880
  %v4882 = vpop.f32.mrf.mxu0
  %v4883 = vpop.f32.mrf.mxu0
  %v4884 = vadd.f32 0.0, %v4883
  %v4885 = vpop.f32.mrf.mxu0
  %4886 = vmatprep.mubr.bf16.mxu0 0
  %4887 = vmatmul.mubr.bf16.gmra.mxu0 %v4129
  %v4888 = vpop.f32.mrf.mxu0
  %v4889 = vadd.f32 0.0, %v4888
  %v4890 = vpop.f32.mrf.mxu0
  %v4891 = vpop.f32.mrf.mxu0
  %v4892 = vadd.f32 0.0, %v4891
  %v4893 = vpop.f32.mrf.mxu0
  %4894 = vmatprep.mubr.bf16.mxu0 0
  %4895 = vmatmul.mubr.bf16.gmra.mxu0 %v4130
  %v4896 = vpop.f32.mrf.mxu0
  %v4897 = vadd.f32 0.0, %v4896
  %v4898 = vpop.f32.mrf.mxu0
  %v4899 = vpop.f32.mrf.mxu0
  %v4900 = vadd.f32 0.0, %v4899
  %v4901 = vpop.f32.mrf.mxu0
  %4902 = vmatprep.mubr.bf16.mxu0 0
  %4903 = vmatmul.mubr.bf16.gmra.mxu0 %v4131
  %v4904 = vpop.f32.mrf.mxu0
  %v4905 = vadd.f32 0.0, %v4904
  %v4906 = vpop.f32.mrf.mxu0
  %v4907 = vpop.f32.mrf.mxu0
  %v4908 = vadd.f32 0.0, %v4907
  %v4909 = vpop.f32.mrf.mxu0
  %4910 = vmatprep.mubr.bf16.mxu0 0
  %4911 = vmatmul.mubr.bf16.gmra.mxu0 %v4132
  %v4912 = vpop.f32.mrf.mxu0
  %v4913 = vadd.f32 0.0, %v4912
  %v4914 = vpop.f32.mrf.mxu0
  %v4915 = vpop.f32.mrf.mxu0
  %v4916 = vadd.f32 0.0, %v4915
  %v4917 = vpop.f32.mrf.mxu0
  %4918 = vmatprep.mubr.bf16.mxu0 0
  %4919 = vmatmul.mubr.bf16.gmra.mxu0 %v4587
  %v4920 = vpop.f32.mrf.mxu0
  %v4921 = vadd.f32 0.0, %v4920
  %v4922 = vpop.f32.mrf.mxu0
  %v4923 = vpop.f32.mrf.mxu0
  %v4924 = vadd.f32 0.0, %v4923
  %v4925 = vpop.f32.mrf.mxu0
  %4926 = vdwg.mxu0
  %v4927 = vadd.f32 %v4502, %v4673
  %v4928 = vadd.f32 %v4503, %v4676
  %v4929 = vadd.f32 %v4504, %v4681
  %v4930 = vadd.f32 %v4505, %v4684
  %v4931 = vadd.f32 %v4506, %v4689
  %v4932 = vadd.f32 %v4507, %v4692
  %v4933 = vadd.f32 %v4508, %v4697
  %v4934 = vadd.f32 %v4509, %v4700
  %v4935 = vadd.f32 %v4510, %v4705
  %v4936 = vadd.f32 %v4511, %v4708
  %v4937 = vadd.f32 %v4512, %v4713
  %v4938 = vadd.f32 %v4513, %v4716
  %v4939 = vadd.f32 %v4514, %v4721
  %v4940 = vadd.f32 %v4515, %v4724
  %v4941 = vadd.f32 %v4516, %v4729
  %v4942 = vadd.f32 %v4517, %v4732
  %v4943 = vadd.f32 %v4518, %v4737
  %v4944 = vadd.f32 %v4519, %v4740
  %v4945 = vadd.f32 %v4520, %v4745
  %v4946 = vadd.f32 %v4521, %v4748
  %v4947 = vadd.f32 %v4522, %v4753
  %v4948 = vadd.f32 %v4523, %v4756
  %v4949 = vadd.f32 %v4524, %v4761
  %v4950 = vadd.f32 %v4525, %v4764
  %v4951 = vadd.f32 %v4526, %v4769
  %v4952 = vadd.f32 %v4527, %v4772
  %v4953 = vadd.f32 %v4528, %v4777
  %v4954 = vadd.f32 %v4529, %v4780
  %v4955 = vadd.f32 %v4530, %v4785
  %v4956 = vadd.f32 %v4531, %v4788
  %v4957 = vadd.f32 %v4532, %v4793
  %v4958 = vadd.f32 %v4533, %v4796
  %v4959 = vadd.f32 %v4534, %v4801
  %v4960 = vadd.f32 %v4535, %v4804
  %v4961 = vadd.f32 %v4536, %v4809
  %v4962 = vadd.f32 %v4537, %v4812
  %v4963 = vadd.f32 %v4538, %v4817
  %v4964 = vadd.f32 %v4539, %v4820
  %v4965 = vadd.f32 %v4540, %v4825
  %v4966 = vadd.f32 %v4541, %v4828
  %v4967 = vadd.f32 %v4542, %v4833
  %v4968 = vadd.f32 %v4543, %v4836
  %v4969 = vadd.f32 %v4544, %v4841
  %v4970 = vadd.f32 %v4545, %v4844
  %v4971 = vadd.f32 %v4546, %v4849
  %v4972 = vadd.f32 %v4547, %v4852
  %v4973 = vadd.f32 %v4548, %v4857
  %v4974 = vadd.f32 %v4549, %v4860
  %v4975 = vadd.f32 %v4550, %v4865
  %v4976 = vadd.f32 %v4551, %v4868
  %v4977 = vadd.f32 %v4552, %v4873
  %v4978 = vadd.f32 %v4553, %v4876
  %v4979 = vadd.f32 %v4554, %v4881
  %v4980 = vadd.f32 %v4555, %v4884
  %v4981 = vadd.f32 %v4556, %v4889
  %v4982 = vadd.f32 %v4557, %v4892
  %v4983 = vadd.f32 %v4558, %v4897
  %v4984 = vadd.f32 %v4559, %v4900
  %v4985 = vadd.f32 %v4560, %v4905
  %v4986 = vadd.f32 %v4561, %v4908
  %v4987 = vadd.f32 %v4562, %v4913
  %v4988 = vadd.f32 %v4563, %v4916
  %v4989 = vadd.f32 %v4564, %v4921
  %v4990 = vadd.f32 %v4565, %v4924
  %v4993 = vrot.slane %v72, 5
  %v4994 = vrot.slane %v4993, 4
  %v4995 = vrot.slane %v73, 5
  %v4996 = vsel %vm3812, %v4994, %v4995
  %v4997 = vrot.slane %v4995, 4
  %v4998 = vrot.slane %v74, 5
  %v4999 = vsel %vm3812, %v4997, %v4998
  %v5000 = vrot.slane %v126, 5
  %v5001 = vrot.slane %v5000, 4
  %v5002 = vrot.slane %v127, 5
  %v5003 = vsel %vm3812, %v5001, %v5002
  %v5004 = vrot.slane %v5002, 4
  %v5005 = vrot.slane %v128, 5
  %v5006 = vsel %vm3812, %v5004, %v5005
  %v5007 = vunpack.c.l.b16 %v4996
  %v5008 = vunpack.c.l.b16 %v4999
  %v5009 = vunpack.c.l.b16 %v5003
  %v5010 = vunpack.c.l.b16 %v5006
  %v5011 = vpack.c.b16 %v5008, %v5007
  %v5012 = vpack.c.b16 %v5010, %v5009
  %v5031 = vunpack.c.l.b16 %v257
  %v5032 = vunpack.c.l.b16 %v258
  %v5033 = vunpack.c.l.b16 %v259
  %v5034 = vunpack.c.l.b16 %v260
  %v5035 = vunpack.c.l.b16 %v261
  %v5036 = vunpack.c.l.b16 %v262
  %v5037 = vunpack.c.l.b16 %v263
  %v5038 = vunpack.c.l.b16 %v264
  %v5039 = vunpack.c.l.b16 %v265
  %v5040 = vunpack.c.l.b16 %v266
  %v5041 = vunpack.c.l.b16 %v267
  %v5042 = vunpack.c.l.b16 %v268
  %v5043 = vunpack.c.l.b16 %v269
  %v5044 = vunpack.c.l.b16 %v270
  %v5045 = vunpack.c.l.b16 %v271
  %v5046 = vunpack.c.l.b16 %v272
  %v5047 = vpack.c.b16 %v5032, %v5031
  %v5048 = vpack.c.b16 %v5034, %v5033
  %v5049 = vpack.c.b16 %v5036, %v5035
  %v5050 = vpack.c.b16 %v5038, %v5037
  %v5051 = vpack.c.b16 %v5040, %v5039
  %v5052 = vpack.c.b16 %v5042, %v5041
  %v5053 = vpack.c.b16 %v5044, %v5043
  %v5054 = vpack.c.b16 %v5046, %v5045
  %5063 = vmatprep.subr.bf16.mxu0 0
  %5064 = vmatpush1.bf16.msra.mxu0 %v5054
  %5065 = vmatprep.subr.bf16.mxu0 0
  %5066 = vmatpush1.bf16.msra.mxu0 %v5053
  %5067 = vmatprep.subr.bf16.mxu0 0
  %5068 = vmatpush1.bf16.msra.mxu0 %v5052
  %5069 = vmatprep.subr.bf16.mxu0 0
  %5070 = vmatpush1.bf16.msra.mxu0 %v5051
  %5071 = vmatprep.subr.bf16.mxu0 0
  %5072 = vmatpush1.bf16.msra.mxu0 %v5050
  %5073 = vmatprep.subr.bf16.mxu0 0
  %5074 = vmatpush1.bf16.msra.mxu0 %v5049
  %5075 = vmatprep.subr.bf16.mxu0 0
  %5076 = vmatpush1.bf16.msra.mxu0 %v5048
  %5077 = vmatprep.subr.bf16.mxu0 0
  %5078 = vmatpush1.bf16.msra.mxu0 %v5047
  %5079 = vmatprep.subr.bf16.mxu0 0
  %5080 = vmatpush2.bf16.msra.mxu0 0
  %5081 = vmatprep.subr.bf16.mxu0 0
  %5082 = vmatpush2.bf16.msra.mxu0 0
  %5083 = vmatprep.subr.bf16.mxu0 0
  %5084 = vmatpush2.bf16.msra.mxu0 0
  %5085 = vmatprep.subr.bf16.mxu0 0
  %5086 = vmatpush2.bf16.msra.mxu0 0
  %5087 = vmatprep.subr.bf16.mxu0 0
  %5088 = vmatpush2.bf16.msra.mxu0 0
  %5089 = vmatprep.subr.bf16.mxu0 0
  %5090 = vmatpush2.bf16.msra.mxu0 0
  %5091 = vmatprep.subr.bf16.mxu0 0
  %5092 = vmatpush2.bf16.msra.mxu0 0
  %5093 = vmatprep.subr.bf16.mxu0 0
  %5094 = vmatpush2.bf16.msra.mxu0 0
  %5095 = vmatprep.mubr.bf16.mxu0 0
  %5096 = vmatmul.mubr.bf16.gmra.mxu0 %v4103
  %v5097 = vpop.f32.mrf.mxu0
  %v5098 = vadd.f32 0.0, %v5097
  %v5099 = vpop.f32.mrf.mxu0
  %v5100 = vpop.f32.mrf.mxu0
  %v5101 = vadd.f32 0.0, %v5100
  %v5102 = vpop.f32.mrf.mxu0
  %5103 = vmatprep.mubr.bf16.mxu0 0
  %5104 = vmatmul.mubr.bf16.gmra.mxu0 %v4104
  %v5105 = vpop.f32.mrf.mxu0
  %v5106 = vadd.f32 0.0, %v5105
  %v5107 = vpop.f32.mrf.mxu0
  %v5108 = vpop.f32.mrf.mxu0
  %v5109 = vadd.f32 0.0, %v5108
  %v5110 = vpop.f32.mrf.mxu0
  %5111 = vmatprep.mubr.bf16.mxu0 0
  %5112 = vmatmul.mubr.bf16.gmra.mxu0 %v4105
  %v5113 = vpop.f32.mrf.mxu0
  %v5114 = vadd.f32 0.0, %v5113
  %v5115 = vpop.f32.mrf.mxu0
  %v5116 = vpop.f32.mrf.mxu0
  %v5117 = vadd.f32 0.0, %v5116
  %v5118 = vpop.f32.mrf.mxu0
  %5119 = vmatprep.mubr.bf16.mxu0 0
  %5120 = vmatmul.mubr.bf16.gmra.mxu0 %v4106
  %v5121 = vpop.f32.mrf.mxu0
  %v5122 = vadd.f32 0.0, %v5121
  %v5123 = vpop.f32.mrf.mxu0
  %v5124 = vpop.f32.mrf.mxu0
  %v5125 = vadd.f32 0.0, %v5124
  %v5126 = vpop.f32.mrf.mxu0
  %5127 = vmatprep.mubr.bf16.mxu0 0
  %5128 = vmatmul.mubr.bf16.gmra.mxu0 %v4107
  %v5129 = vpop.f32.mrf.mxu0
  %v5130 = vadd.f32 0.0, %v5129
  %v5131 = vpop.f32.mrf.mxu0
  %v5132 = vpop.f32.mrf.mxu0
  %v5133 = vadd.f32 0.0, %v5132
  %v5134 = vpop.f32.mrf.mxu0
  %5135 = vmatprep.mubr.bf16.mxu0 0
  %5136 = vmatmul.mubr.bf16.gmra.mxu0 %v4108
  %v5137 = vpop.f32.mrf.mxu0
  %v5138 = vadd.f32 0.0, %v5137
  %v5139 = vpop.f32.mrf.mxu0
  %v5140 = vpop.f32.mrf.mxu0
  %v5141 = vadd.f32 0.0, %v5140
  %v5142 = vpop.f32.mrf.mxu0
  %5143 = vmatprep.mubr.bf16.mxu0 0
  %5144 = vmatmul.mubr.bf16.gmra.mxu0 %v4109
  %v5145 = vpop.f32.mrf.mxu0
  %v5146 = vadd.f32 0.0, %v5145
  %v5147 = vpop.f32.mrf.mxu0
  %v5148 = vpop.f32.mrf.mxu0
  %v5149 = vadd.f32 0.0, %v5148
  %v5150 = vpop.f32.mrf.mxu0
  %5151 = vmatprep.mubr.bf16.mxu0 0
  %5152 = vmatmul.mubr.bf16.gmra.mxu0 %v4110
  %v5153 = vpop.f32.mrf.mxu0
  %v5154 = vadd.f32 0.0, %v5153
  %v5155 = vpop.f32.mrf.mxu0
  %v5156 = vpop.f32.mrf.mxu0
  %v5157 = vadd.f32 0.0, %v5156
  %v5158 = vpop.f32.mrf.mxu0
  %5159 = vmatprep.mubr.bf16.mxu0 0
  %5160 = vmatmul.mubr.bf16.gmra.mxu0 %v4111
  %v5161 = vpop.f32.mrf.mxu0
  %v5162 = vadd.f32 0.0, %v5161
  %v5163 = vpop.f32.mrf.mxu0
  %v5164 = vpop.f32.mrf.mxu0
  %v5165 = vadd.f32 0.0, %v5164
  %v5166 = vpop.f32.mrf.mxu0
  %5167 = vmatprep.mubr.bf16.mxu0 0
  %5168 = vmatmul.mubr.bf16.gmra.mxu0 %v4112
  %v5169 = vpop.f32.mrf.mxu0
  %v5170 = vadd.f32 0.0, %v5169
  %v5171 = vpop.f32.mrf.mxu0
  %v5172 = vpop.f32.mrf.mxu0
  %v5173 = vadd.f32 0.0, %v5172
  %v5174 = vpop.f32.mrf.mxu0
  %5175 = vmatprep.mubr.bf16.mxu0 0
  %5176 = vmatmul.mubr.bf16.gmra.mxu0 %v4113
  %v5177 = vpop.f32.mrf.mxu0
  %v5178 = vadd.f32 0.0, %v5177
  %v5179 = vpop.f32.mrf.mxu0
  %v5180 = vpop.f32.mrf.mxu0
  %v5181 = vadd.f32 0.0, %v5180
  %v5182 = vpop.f32.mrf.mxu0
  %5183 = vmatprep.mubr.bf16.mxu0 0
  %5184 = vmatmul.mubr.bf16.gmra.mxu0 %v4114
  %v5185 = vpop.f32.mrf.mxu0
  %v5186 = vadd.f32 0.0, %v5185
  %v5187 = vpop.f32.mrf.mxu0
  %v5188 = vpop.f32.mrf.mxu0
  %v5189 = vadd.f32 0.0, %v5188
  %v5190 = vpop.f32.mrf.mxu0
  %5191 = vmatprep.mubr.bf16.mxu0 0
  %5192 = vmatmul.mubr.bf16.gmra.mxu0 %v4115
  %v5193 = vpop.f32.mrf.mxu0
  %v5194 = vadd.f32 0.0, %v5193
  %v5195 = vpop.f32.mrf.mxu0
  %v5196 = vpop.f32.mrf.mxu0
  %v5197 = vadd.f32 0.0, %v5196
  %v5198 = vpop.f32.mrf.mxu0
  %5199 = vmatprep.mubr.bf16.mxu0 0
  %5200 = vmatmul.mubr.bf16.gmra.mxu0 %v4116
  %v5201 = vpop.f32.mrf.mxu0
  %v5202 = vadd.f32 0.0, %v5201
  %v5203 = vpop.f32.mrf.mxu0
  %v5204 = vpop.f32.mrf.mxu0
  %v5205 = vadd.f32 0.0, %v5204
  %v5206 = vpop.f32.mrf.mxu0
  %5207 = vmatprep.mubr.bf16.mxu0 0
  %5208 = vmatmul.mubr.bf16.gmra.mxu0 %v4586
  %v5209 = vpop.f32.mrf.mxu0
  %v5210 = vadd.f32 0.0, %v5209
  %v5211 = vpop.f32.mrf.mxu0
  %v5212 = vpop.f32.mrf.mxu0
  %v5213 = vadd.f32 0.0, %v5212
  %v5214 = vpop.f32.mrf.mxu0
  %5215 = vmatprep.mubr.bf16.mxu0 0
  %5216 = vmatmul.mubr.bf16.gmra.mxu0 %v5011
  %v5217 = vpop.f32.mrf.mxu0
  %v5218 = vadd.f32 0.0, %v5217
  %v5219 = vpop.f32.mrf.mxu0
  %v5220 = vpop.f32.mrf.mxu0
  %v5221 = vadd.f32 0.0, %v5220
  %v5222 = vpop.f32.mrf.mxu0
  %5223 = vmatprep.mubr.bf16.mxu0 0
  %5224 = vmatmul.mubr.bf16.gmra.mxu0 %v4119
  %v5225 = vpop.f32.mrf.mxu0
  %v5226 = vadd.f32 0.0, %v5225
  %v5227 = vpop.f32.mrf.mxu0
  %v5228 = vpop.f32.mrf.mxu0
  %v5229 = vadd.f32 0.0, %v5228
  %v5230 = vpop.f32.mrf.mxu0
  %5231 = vmatprep.mubr.bf16.mxu0 0
  %5232 = vmatmul.mubr.bf16.gmra.mxu0 %v4120
  %v5233 = vpop.f32.mrf.mxu0
  %v5234 = vadd.f32 0.0, %v5233
  %v5235 = vpop.f32.mrf.mxu0
  %v5236 = vpop.f32.mrf.mxu0
  %v5237 = vadd.f32 0.0, %v5236
  %v5238 = vpop.f32.mrf.mxu0
  %5239 = vmatprep.mubr.bf16.mxu0 0
  %5240 = vmatmul.mubr.bf16.gmra.mxu0 %v4121
  %v5241 = vpop.f32.mrf.mxu0
  %v5242 = vadd.f32 0.0, %v5241
  %v5243 = vpop.f32.mrf.mxu0
  %v5244 = vpop.f32.mrf.mxu0
  %v5245 = vadd.f32 0.0, %v5244
  %v5246 = vpop.f32.mrf.mxu0
  %5247 = vmatprep.mubr.bf16.mxu0 0
  %5248 = vmatmul.mubr.bf16.gmra.mxu0 %v4122
  %v5249 = vpop.f32.mrf.mxu0
  %v5250 = vadd.f32 0.0, %v5249
  %v5251 = vpop.f32.mrf.mxu0
  %v5252 = vpop.f32.mrf.mxu0
  %v5253 = vadd.f32 0.0, %v5252
  %v5254 = vpop.f32.mrf.mxu0
  %5255 = vmatprep.mubr.bf16.mxu0 0
  %5256 = vmatmul.mubr.bf16.gmra.mxu0 %v4123
  %v5257 = vpop.f32.mrf.mxu0
  %v5258 = vadd.f32 0.0, %v5257
  %v5259 = vpop.f32.mrf.mxu0
  %v5260 = vpop.f32.mrf.mxu0
  %v5261 = vadd.f32 0.0, %v5260
  %v5262 = vpop.f32.mrf.mxu0
  %5263 = vmatprep.mubr.bf16.mxu0 0
  %5264 = vmatmul.mubr.bf16.gmra.mxu0 %v4124
  %v5265 = vpop.f32.mrf.mxu0
  %v5266 = vadd.f32 0.0, %v5265
  %v5267 = vpop.f32.mrf.mxu0
  %v5268 = vpop.f32.mrf.mxu0
  %v5269 = vadd.f32 0.0, %v5268
  %v5270 = vpop.f32.mrf.mxu0
  %5271 = vmatprep.mubr.bf16.mxu0 0
  %5272 = vmatmul.mubr.bf16.gmra.mxu0 %v4125
  %v5273 = vpop.f32.mrf.mxu0
  %v5274 = vadd.f32 0.0, %v5273
  %v5275 = vpop.f32.mrf.mxu0
  %v5276 = vpop.f32.mrf.mxu0
  %v5277 = vadd.f32 0.0, %v5276
  %v5278 = vpop.f32.mrf.mxu0
  %5279 = vmatprep.mubr.bf16.mxu0 0
  %5280 = vmatmul.mubr.bf16.gmra.mxu0 %v4126
  %v5281 = vpop.f32.mrf.mxu0
  %v5282 = vadd.f32 0.0, %v5281
  %v5283 = vpop.f32.mrf.mxu0
  %v5284 = vpop.f32.mrf.mxu0
  %v5285 = vadd.f32 0.0, %v5284
  %v5286 = vpop.f32.mrf.mxu0
  %5287 = vmatprep.mubr.bf16.mxu0 0
  %5288 = vmatmul.mubr.bf16.gmra.mxu0 %v4127
  %v5289 = vpop.f32.mrf.mxu0
  %v5290 = vadd.f32 0.0, %v5289
  %v5291 = vpop.f32.mrf.mxu0
  %v5292 = vpop.f32.mrf.mxu0
  %v5293 = vadd.f32 0.0, %v5292
  %v5294 = vpop.f32.mrf.mxu0
  %5295 = vmatprep.mubr.bf16.mxu0 0
  %5296 = vmatmul.mubr.bf16.gmra.mxu0 %v4128
  %v5297 = vpop.f32.mrf.mxu0
  %v5298 = vadd.f32 0.0, %v5297
  %v5299 = vpop.f32.mrf.mxu0
  %v5300 = vpop.f32.mrf.mxu0
  %v5301 = vadd.f32 0.0, %v5300
  %v5302 = vpop.f32.mrf.mxu0
  %5303 = vmatprep.mubr.bf16.mxu0 0
  %5304 = vmatmul.mubr.bf16.gmra.mxu0 %v4129
  %v5305 = vpop.f32.mrf.mxu0
  %v5306 = vadd.f32 0.0, %v5305
  %v5307 = vpop.f32.mrf.mxu0
  %v5308 = vpop.f32.mrf.mxu0
  %v5309 = vadd.f32 0.0, %v5308
  %v5310 = vpop.f32.mrf.mxu0
  %5311 = vmatprep.mubr.bf16.mxu0 0
  %5312 = vmatmul.mubr.bf16.gmra.mxu0 %v4130
  %v5313 = vpop.f32.mrf.mxu0
  %v5314 = vadd.f32 0.0, %v5313
  %v5315 = vpop.f32.mrf.mxu0
  %v5316 = vpop.f32.mrf.mxu0
  %v5317 = vadd.f32 0.0, %v5316
  %v5318 = vpop.f32.mrf.mxu0
  %5319 = vmatprep.mubr.bf16.mxu0 0
  %5320 = vmatmul.mubr.bf16.gmra.mxu0 %v4131
  %v5321 = vpop.f32.mrf.mxu0
  %v5322 = vadd.f32 0.0, %v5321
  %v5323 = vpop.f32.mrf.mxu0
  %v5324 = vpop.f32.mrf.mxu0
  %v5325 = vadd.f32 0.0, %v5324
  %v5326 = vpop.f32.mrf.mxu0
  %5327 = vmatprep.mubr.bf16.mxu0 0
  %5328 = vmatmul.mubr.bf16.gmra.mxu0 %v4132
  %v5329 = vpop.f32.mrf.mxu0
  %v5330 = vadd.f32 0.0, %v5329
  %v5331 = vpop.f32.mrf.mxu0
  %v5332 = vpop.f32.mrf.mxu0
  %v5333 = vadd.f32 0.0, %v5332
  %v5334 = vpop.f32.mrf.mxu0
  %5335 = vmatprep.mubr.bf16.mxu0 0
  %5336 = vmatmul.mubr.bf16.gmra.mxu0 %v4587
  %v5337 = vpop.f32.mrf.mxu0
  %v5338 = vadd.f32 0.0, %v5337
  %v5339 = vpop.f32.mrf.mxu0
  %v5340 = vpop.f32.mrf.mxu0
  %v5341 = vadd.f32 0.0, %v5340
  %v5342 = vpop.f32.mrf.mxu0
  %5343 = vmatprep.mubr.bf16.mxu0 0
  %5344 = vmatmul.mubr.bf16.gmra.mxu0 %v5012
  %v5345 = vpop.f32.mrf.mxu0
  %v5346 = vadd.f32 0.0, %v5345
  %v5347 = vpop.f32.mrf.mxu0
  %v5348 = vpop.f32.mrf.mxu0
  %v5349 = vadd.f32 0.0, %v5348
  %v5350 = vpop.f32.mrf.mxu0
  %5351 = vdwg.mxu0
  %v5352 = vadd.f32 %v4927, %v5098
  %v5353 = vadd.f32 %v4928, %v5101
  %v5354 = vadd.f32 %v4929, %v5106
  %v5355 = vadd.f32 %v4930, %v5109
  %v5356 = vadd.f32 %v4931, %v5114
  %v5357 = vadd.f32 %v4932, %v5117
  %v5358 = vadd.f32 %v4933, %v5122
  %v5359 = vadd.f32 %v4934, %v5125
  %v5360 = vadd.f32 %v4935, %v5130
  %v5361 = vadd.f32 %v4936, %v5133
  %v5362 = vadd.f32 %v4937, %v5138
  %v5363 = vadd.f32 %v4938, %v5141
  %v5364 = vadd.f32 %v4939, %v5146
  %v5365 = vadd.f32 %v4940, %v5149
  %v5366 = vadd.f32 %v4941, %v5154
  %v5367 = vadd.f32 %v4942, %v5157
  %v5368 = vadd.f32 %v4943, %v5162
  %v5369 = vadd.f32 %v4944, %v5165
  %v5370 = vadd.f32 %v4945, %v5170
  %v5371 = vadd.f32 %v4946, %v5173
  %v5372 = vadd.f32 %v4947, %v5178
  %v5373 = vadd.f32 %v4948, %v5181
  %v5374 = vadd.f32 %v4949, %v5186
  %v5375 = vadd.f32 %v4950, %v5189
  %v5376 = vadd.f32 %v4951, %v5194
  %v5377 = vadd.f32 %v4952, %v5197
  %v5378 = vadd.f32 %v4953, %v5202
  %v5379 = vadd.f32 %v4954, %v5205
  %v5380 = vadd.f32 %v4955, %v5210
  %v5381 = vadd.f32 %v4956, %v5213
  %v5382 = vadd.f32 %v4957, %v5218
  %v5383 = vadd.f32 %v4958, %v5221
  %v5384 = vadd.f32 %v4959, %v5226
  %v5385 = vadd.f32 %v4960, %v5229
  %v5386 = vadd.f32 %v4961, %v5234
  %v5387 = vadd.f32 %v4962, %v5237
  %v5388 = vadd.f32 %v4963, %v5242
  %v5389 = vadd.f32 %v4964, %v5245
  %v5390 = vadd.f32 %v4965, %v5250
  %v5391 = vadd.f32 %v4966, %v5253
  %v5392 = vadd.f32 %v4967, %v5258
  %v5393 = vadd.f32 %v4968, %v5261
  %v5394 = vadd.f32 %v4969, %v5266
  %v5395 = vadd.f32 %v4970, %v5269
  %v5396 = vadd.f32 %v4971, %v5274
  %v5397 = vadd.f32 %v4972, %v5277
  %v5398 = vadd.f32 %v4973, %v5282
  %v5399 = vadd.f32 %v4974, %v5285
  %v5400 = vadd.f32 %v4975, %v5290
  %v5401 = vadd.f32 %v4976, %v5293
  %v5402 = vadd.f32 %v4977, %v5298
  %v5403 = vadd.f32 %v4978, %v5301
  %v5404 = vadd.f32 %v4979, %v5306
  %v5405 = vadd.f32 %v4980, %v5309
  %v5406 = vadd.f32 %v4981, %v5314
  %v5407 = vadd.f32 %v4982, %v5317
  %v5408 = vadd.f32 %v4983, %v5322
  %v5409 = vadd.f32 %v4984, %v5325
  %v5410 = vadd.f32 %v4985, %v5330
  %v5411 = vadd.f32 %v4986, %v5333
  %v5412 = vadd.f32 %v4987, %v5338
  %v5413 = vadd.f32 %v4988, %v5341
  %v5414 = vadd.f32 %v4989, %v5346
  %v5415 = vadd.f32 %v4990, %v5349
  %v5416 = vld [vmem:[%s3] sm:$0x1]
  %v5417 = vld [vmem:[%s4] sm:$0x1]
  %v5418 = vadd.f32 %v5352, %v5353
  %v5419 = vadd.f32 %v5418, %v5354
  %v5420 = vadd.f32 %v5419, %v5355
  %v5421 = vadd.f32 %v5420, %v5356
  %v5422 = vadd.f32 %v5421, %v5357
  %v5423 = vadd.f32 %v5422, %v5358
  %v5424 = vadd.f32 %v5423, %v5359
  %v5425 = vadd.f32 %v5424, %v5360
  %v5426 = vadd.f32 %v5425, %v5361
  %v5427 = vadd.f32 %v5426, %v5362
  %v5428 = vadd.f32 %v5427, %v5363
  %v5429 = vadd.f32 %v5428, %v5364
  %v5430 = vadd.f32 %v5429, %v5365
  %v5431 = vadd.f32 %v5430, %v5366
  %v5432 = vadd.f32 %v5431, %v5367
  %v5433 = vadd.f32 %v5432, %v5368
  %v5434 = vadd.f32 %v5433, %v5369
  %v5435 = vadd.f32 %v5434, %v5370
  %v5436 = vadd.f32 %v5435, %v5371
  %v5437 = vadd.f32 %v5436, %v5372
  %v5438 = vadd.f32 %v5437, %v5373
  %v5439 = vadd.f32 %v5438, %v5374
  %v5440 = vadd.f32 %v5439, %v5375
  %v5441 = vadd.f32 %v5440, %v5376
  %v5442 = vadd.f32 %v5441, %v5377
  %v5443 = vadd.f32 %v5442, %v5378
  %v5444 = vadd.f32 %v5443, %v5379
  %v5445 = vadd.f32 %v5444, %v5380
  %v5446 = vadd.f32 %v5445, %v5381
  %v5447 = vadd.f32 %v5446, %v5382
  %v5448 = vadd.f32 %v5447, %v5383
  %v5449 = vadd.f32 %v5448, %v5384
  %v5450 = vadd.f32 %v5449, %v5385
  %v5451 = vadd.f32 %v5450, %v5386
  %v5452 = vadd.f32 %v5451, %v5387
  %v5453 = vadd.f32 %v5452, %v5388
  %v5454 = vadd.f32 %v5453, %v5389
  %v5455 = vadd.f32 %v5454, %v5390
  %v5456 = vadd.f32 %v5455, %v5391
  %v5457 = vadd.f32 %v5456, %v5392
  %v5458 = vadd.f32 %v5457, %v5393
  %v5459 = vadd.f32 %v5458, %v5394
  %v5460 = vadd.f32 %v5459, %v5395
  %v5461 = vadd.f32 %v5460, %v5396
  %v5462 = vadd.f32 %v5461, %v5397
  %v5463 = vadd.f32 %v5462, %v5398
  %v5464 = vadd.f32 %v5463, %v5399
  %v5465 = vadd.f32 %v5464, %v5400
  %v5466 = vadd.f32 %v5465, %v5401
  %v5467 = vadd.f32 %v5466, %v5402
  %v5468 = vadd.f32 %v5467, %v5403
  %v5469 = vadd.f32 %v5468, %v5404
  %v5470 = vadd.f32 %v5469, %v5405
  %v5471 = vadd.f32 %v5470, %v5406
  %v5472 = vadd.f32 %v5471, %v5407
  %v5473 = vadd.f32 %v5472, %v5408
  %v5474 = vadd.f32 %v5473, %v5409
  %v5475 = vadd.f32 %v5474, %v5410
  %v5476 = vadd.f32 %v5475, %v5411
  %v5477 = vadd.f32 %v5476, %v5412
  %v5478 = vadd.f32 %v5477, %v5413
  %v5479 = vadd.f32 %v5478, %v5414
  %v5480 = vadd.f32 %v5479, %v5415
  %v5481 = vrot.slane %v5480, 4
  %v5482 = vadd.f32 %v5480, %v5481
  %v5483 = vrot.slane %v5482, 2
  %v5484 = vadd.f32 %v5482, %v5483
  %v5485 = vrot.slane %v5484, 1
  %v5486 = vadd.f32 %v5484, %v5485
  %v5487 = vrcp.pop 512.0
  %v5488 = vmul.f32 %v5486, %v5487
  %v5489 = vsub.f32 %v5352, %v5488
  %v5490 = vsub.f32 %v5353, %v5488
  %v5491 = vsub.f32 %v5354, %v5488
  %v5492 = vsub.f32 %v5355, %v5488
  %v5493 = vsub.f32 %v5356, %v5488
  %v5494 = vsub.f32 %v5357, %v5488
  %v5495 = vsub.f32 %v5358, %v5488
  %v5496 = vsub.f32 %v5359, %v5488
  %v5497 = vsub.f32 %v5360, %v5488
  %v5498 = vsub.f32 %v5361, %v5488
  %v5499 = vsub.f32 %v5362, %v5488
  %v5500 = vsub.f32 %v5363, %v5488
  %v5501 = vsub.f32 %v5364, %v5488
  %v5502 = vsub.f32 %v5365, %v5488
  %v5503 = vsub.f32 %v5366, %v5488
  %v5504 = vsub.f32 %v5367, %v5488
  %v5505 = vsub.f32 %v5368, %v5488
  %v5506 = vsub.f32 %v5369, %v5488
  %v5507 = vsub.f32 %v5370, %v5488
  %v5508 = vsub.f32 %v5371, %v5488
  %v5509 = vsub.f32 %v5372, %v5488
  %v5510 = vsub.f32 %v5373, %v5488
  %v5511 = vsub.f32 %v5374, %v5488
  %v5512 = vsub.f32 %v5375, %v5488
  %v5513 = vsub.f32 %v5376, %v5488
  %v5514 = vsub.f32 %v5377, %v5488
  %v5515 = vsub.f32 %v5378, %v5488
  %v5516 = vsub.f32 %v5379, %v5488
  %v5517 = vsub.f32 %v5380, %v5488
  %v5518 = vsub.f32 %v5381, %v5488
  %v5519 = vsub.f32 %v5382, %v5488
  %v5520 = vsub.f32 %v5383, %v5488
  %v5521 = vsub.f32 %v5384, %v5488
  %v5522 = vsub.f32 %v5385, %v5488
  %v5523 = vsub.f32 %v5386, %v5488
  %v5524 = vsub.f32 %v5387, %v5488
  %v5525 = vsub.f32 %v5388, %v5488
  %v5526 = vsub.f32 %v5389, %v5488
  %v5527 = vsub.f32 %v5390, %v5488
  %v5528 = vsub.f32 %v5391, %v5488
  %v5529 = vsub.f32 %v5392, %v5488
  %v5530 = vsub.f32 %v5393, %v5488
  %v5531 = vsub.f32 %v5394, %v5488
  %v5532 = vsub.f32 %v5395, %v5488
  %v5533 = vsub.f32 %v5396, %v5488
  %v5534 = vsub.f32 %v5397, %v5488
  %v5535 = vsub.f32 %v5398, %v5488
  %v5536 = vsub.f32 %v5399, %v5488
  %v5537 = vsub.f32 %v5400, %v5488
  %v5538 = vsub.f32 %v5401, %v5488
  %v5539 = vsub.f32 %v5402, %v5488
  %v5540 = vsub.f32 %v5403, %v5488
  %v5541 = vsub.f32 %v5404, %v5488
  %v5542 = vsub.f32 %v5405, %v5488
  %v5543 = vsub.f32 %v5406, %v5488
  %v5544 = vsub.f32 %v5407, %v5488
  %v5545 = vsub.f32 %v5408, %v5488
  %v5546 = vsub.f32 %v5409, %v5488
  %v5547 = vsub.f32 %v5410, %v5488
  %v5548 = vsub.f32 %v5411, %v5488
  %v5549 = vsub.f32 %v5412, %v5488
  %v5550 = vsub.f32 %v5413, %v5488
  %v5551 = vsub.f32 %v5414, %v5488
  %v5552 = vsub.f32 %v5415, %v5488
  %v5553 = vmul.f32 %v5489, %v5489
  %v5554 = vmul.f32 %v5490, %v5490
  %v5555 = vmul.f32 %v5491, %v5491
  %v5556 = vmul.f32 %v5492, %v5492
  %v5557 = vmul.f32 %v5493, %v5493
  %v5558 = vmul.f32 %v5494, %v5494
  %v5559 = vmul.f32 %v5495, %v5495
  %v5560 = vmul.f32 %v5496, %v5496
  %v5561 = vmul.f32 %v5497, %v5497
  %v5562 = vmul.f32 %v5498, %v5498
  %v5563 = vmul.f32 %v5499, %v5499
  %v5564 = vmul.f32 %v5500, %v5500
  %v5565 = vmul.f32 %v5501, %v5501
  %v5566 = vmul.f32 %v5502, %v5502
  %v5567 = vmul.f32 %v5503, %v5503
  %v5568 = vmul.f32 %v5504, %v5504
  %v5569 = vmul.f32 %v5505, %v5505
  %v5570 = vmul.f32 %v5506, %v5506
  %v5571 = vmul.f32 %v5507, %v5507
  %v5572 = vmul.f32 %v5508, %v5508
  %v5573 = vmul.f32 %v5509, %v5509
  %v5574 = vmul.f32 %v5510, %v5510
  %v5575 = vmul.f32 %v5511, %v5511
  %v5576 = vmul.f32 %v5512, %v5512
  %v5577 = vmul.f32 %v5513, %v5513
  %v5578 = vmul.f32 %v5514, %v5514
  %v5579 = vmul.f32 %v5515, %v5515
  %v5580 = vmul.f32 %v5516, %v5516
  %v5581 = vmul.f32 %v5517, %v5517
  %v5582 = vmul.f32 %v5518, %v5518
  %v5583 = vmul.f32 %v5519, %v5519
  %v5584 = vmul.f32 %v5520, %v5520
  %v5585 = vmul.f32 %v5521, %v5521
  %v5586 = vmul.f32 %v5522, %v5522
  %v5587 = vmul.f32 %v5523, %v5523
  %v5588 = vmul.f32 %v5524, %v5524
  %v5589 = vmul.f32 %v5525, %v5525
  %v5590 = vmul.f32 %v5526, %v5526
  %v5591 = vmul.f32 %v5527, %v5527
  %v5592 = vmul.f32 %v5528, %v5528
  %v5593 = vmul.f32 %v5529, %v5529
  %v5594 = vmul.f32 %v5530, %v5530
  %v5595 = vmul.f32 %v5531, %v5531
  %v5596 = vmul.f32 %v5532, %v5532
  %v5597 = vmul.f32 %v5533, %v5533
  %v5598 = vmul.f32 %v5534, %v5534
  %v5599 = vmul.f32 %v5535, %v5535
  %v5600 = vmul.f32 %v5536, %v5536
  %v5601 = vmul.f32 %v5537, %v5537
  %v5602 = vmul.f32 %v5538, %v5538
  %v5603 = vmul.f32 %v5539, %v5539
  %v5604 = vmul.f32 %v5540, %v5540
  %v5605 = vmul.f32 %v5541, %v5541
  %v5606 = vmul.f32 %v5542, %v5542
  %v5607 = vmul.f32 %v5543, %v5543
  %v5608 = vmul.f32 %v5544, %v5544
  %v5609 = vmul.f32 %v5545, %v5545
  %v5610 = vmul.f32 %v5546, %v5546
  %v5611 = vmul.f32 %v5547, %v5547
  %v5612 = vmul.f32 %v5548, %v5548
  %v5613 = vmul.f32 %v5549, %v5549
  %v5614 = vmul.f32 %v5550, %v5550
  %v5615 = vmul.f32 %v5551, %v5551
  %v5616 = vmul.f32 %v5552, %v5552
  %v5617 = vadd.f32 %v5553, %v5554
  %v5618 = vadd.f32 %v5617, %v5555
  %v5619 = vadd.f32 %v5618, %v5556
  %v5620 = vadd.f32 %v5619, %v5557
  %v5621 = vadd.f32 %v5620, %v5558
  %v5622 = vadd.f32 %v5621, %v5559
  %v5623 = vadd.f32 %v5622, %v5560
  %v5624 = vadd.f32 %v5623, %v5561
  %v5625 = vadd.f32 %v5624, %v5562
  %v5626 = vadd.f32 %v5625, %v5563
  %v5627 = vadd.f32 %v5626, %v5564
  %v5628 = vadd.f32 %v5627, %v5565
  %v5629 = vadd.f32 %v5628, %v5566
  %v5630 = vadd.f32 %v5629, %v5567
  %v5631 = vadd.f32 %v5630, %v5568
  %v5632 = vadd.f32 %v5631, %v5569
  %v5633 = vadd.f32 %v5632, %v5570
  %v5634 = vadd.f32 %v5633, %v5571
  %v5635 = vadd.f32 %v5634, %v5572
  %v5636 = vadd.f32 %v5635, %v5573
  %v5637 = vadd.f32 %v5636, %v5574
  %v5638 = vadd.f32 %v5637, %v5575
  %v5639 = vadd.f32 %v5638, %v5576
  %v5640 = vadd.f32 %v5639, %v5577
  %v5641 = vadd.f32 %v5640, %v5578
  %v5642 = vadd.f32 %v5641, %v5579
  %v5643 = vadd.f32 %v5642, %v5580
  %v5644 = vadd.f32 %v5643, %v5581
  %v5645 = vadd.f32 %v5644, %v5582
  %v5646 = vadd.f32 %v5645, %v5583
  %v5647 = vadd.f32 %v5646, %v5584
  %v5648 = vadd.f32 %v5647, %v5585
  %v5649 = vadd.f32 %v5648, %v5586
  %v5650 = vadd.f32 %v5649, %v5587
  %v5651 = vadd.f32 %v5650, %v5588
  %v5652 = vadd.f32 %v5651, %v5589
  %v5653 = vadd.f32 %v5652, %v5590
  %v5654 = vadd.f32 %v5653, %v5591
  %v5655 = vadd.f32 %v5654, %v5592
  %v5656 = vadd.f32 %v5655, %v5593
  %v5657 = vadd.f32 %v5656, %v5594
  %v5658 = vadd.f32 %v5657, %v5595
  %v5659 = vadd.f32 %v5658, %v5596
  %v5660 = vadd.f32 %v5659, %v5597
  %v5661 = vadd.f32 %v5660, %v5598
  %v5662 = vadd.f32 %v5661, %v5599
  %v5663 = vadd.f32 %v5662, %v5600
  %v5664 = vadd.f32 %v5663, %v5601
  %v5665 = vadd.f32 %v5664, %v5602
  %v5666 = vadd.f32 %v5665, %v5603
  %v5667 = vadd.f32 %v5666, %v5604
  %v5668 = vadd.f32 %v5667, %v5605
  %v5669 = vadd.f32 %v5668, %v5606
  %v5670 = vadd.f32 %v5669, %v5607
  %v5671 = vadd.f32 %v5670, %v5608
  %v5672 = vadd.f32 %v5671, %v5609
  %v5673 = vadd.f32 %v5672, %v5610
  %v5674 = vadd.f32 %v5673, %v5611
  %v5675 = vadd.f32 %v5674, %v5612
  %v5676 = vadd.f32 %v5675, %v5613
  %v5677 = vadd.f32 %v5676, %v5614
  %v5678 = vadd.f32 %v5677, %v5615
  %v5679 = vadd.f32 %v5678, %v5616
  %v5680 = vrot.slane %v5679, 4
  %v5681 = vadd.f32 %v5679, %v5680
  %v5682 = vrot.slane %v5681, 2
  %v5683 = vadd.f32 %v5681, %v5682
  %v5684 = vrot.slane %v5683, 1
  %v5685 = vadd.f32 %v5683, %v5684
  %v5686 = vmul.f32 %v5685, %v5487
  %v5687 = vadd.f32 %v5686, 1e-05
  %v5688 = vrsqrt.pop %v5687
  %v5689 = vmul.f32 %v5416, %v5688
  %v5690 = vmul.f32 %v5488, %v5689
  %v5691 = vsub.f32 %v5417, %v5690
  %v5693 = vlaneseq
  %v5694 = vshrl.u32 %v5693, 7
  %v5695 = vsub.s32 0, %v5694
  %v5696 = vrot.slane %v5689, %v5695
  %v5698 = vmul.f32 %v5352, %v5696
  %v5699 = vmul.f32 %v5353, %v5696
  %v5700 = vmul.f32 %v5354, %v5696
  %v5701 = vmul.f32 %v5355, %v5696
  %v5702 = vmul.f32 %v5356, %v5696
  %v5703 = vmul.f32 %v5357, %v5696
  %v5704 = vmul.f32 %v5358, %v5696
  %v5705 = vmul.f32 %v5359, %v5696
  %v5706 = vmul.f32 %v5360, %v5696
  %v5707 = vmul.f32 %v5361, %v5696
  %v5708 = vmul.f32 %v5362, %v5696
  %v5709 = vmul.f32 %v5363, %v5696
  %v5710 = vmul.f32 %v5364, %v5696
  %v5711 = vmul.f32 %v5365, %v5696
  %v5712 = vmul.f32 %v5366, %v5696
  %v5713 = vmul.f32 %v5367, %v5696
  %v5714 = vmul.f32 %v5368, %v5696
  %v5715 = vmul.f32 %v5369, %v5696
  %v5716 = vmul.f32 %v5370, %v5696
  %v5717 = vmul.f32 %v5371, %v5696
  %v5718 = vmul.f32 %v5372, %v5696
  %v5719 = vmul.f32 %v5373, %v5696
  %v5720 = vmul.f32 %v5374, %v5696
  %v5721 = vmul.f32 %v5375, %v5696
  %v5722 = vmul.f32 %v5376, %v5696
  %v5723 = vmul.f32 %v5377, %v5696
  %v5724 = vmul.f32 %v5378, %v5696
  %v5725 = vmul.f32 %v5379, %v5696
  %v5726 = vmul.f32 %v5380, %v5696
  %v5727 = vmul.f32 %v5381, %v5696
  %v5728 = vmul.f32 %v5382, %v5696
  %v5729 = vmul.f32 %v5383, %v5696
  %v5730 = vmul.f32 %v5384, %v5696
  %v5731 = vmul.f32 %v5385, %v5696
  %v5732 = vmul.f32 %v5386, %v5696
  %v5733 = vmul.f32 %v5387, %v5696
  %v5734 = vmul.f32 %v5388, %v5696
  %v5735 = vmul.f32 %v5389, %v5696
  %v5736 = vmul.f32 %v5390, %v5696
  %v5737 = vmul.f32 %v5391, %v5696
  %v5738 = vmul.f32 %v5392, %v5696
  %v5739 = vmul.f32 %v5393, %v5696
  %v5740 = vmul.f32 %v5394, %v5696
  %v5741 = vmul.f32 %v5395, %v5696
  %v5742 = vmul.f32 %v5396, %v5696
  %v5743 = vmul.f32 %v5397, %v5696
  %v5744 = vmul.f32 %v5398, %v5696
  %v5745 = vmul.f32 %v5399, %v5696
  %v5746 = vmul.f32 %v5400, %v5696
  %v5747 = vmul.f32 %v5401, %v5696
  %v5748 = vmul.f32 %v5402, %v5696
  %v5749 = vmul.f32 %v5403, %v5696
  %v5750 = vmul.f32 %v5404, %v5696
  %v5751 = vmul.f32 %v5405, %v5696
  %v5752 = vmul.f32 %v5406, %v5696
  %v5753 = vmul.f32 %v5407, %v5696
  %v5754 = vmul.f32 %v5408, %v5696
  %v5755 = vmul.f32 %v5409, %v5696
  %v5756 = vmul.f32 %v5410, %v5696
  %v5757 = vmul.f32 %v5411, %v5696
  %v5758 = vmul.f32 %v5412, %v5696
  %v5759 = vmul.f32 %v5413, %v5696
  %v5760 = vmul.f32 %v5414, %v5696
  %v5761 = vmul.f32 %v5415, %v5696
  %v5763 = vlaneseq
  %v5764 = vshrl.u32 %v5763, 7
  %v5765 = vsub.s32 0, %v5764
  %v5766 = vrot.slane %v5691, %v5765
  %v5768 = vadd.f32 %v5698, %v5766
  %v5769 = vadd.f32 %v5699, %v5766
  %v5770 = vadd.f32 %v5700, %v5766
  %v5771 = vadd.f32 %v5701, %v5766
  %v5772 = vadd.f32 %v5702, %v5766
  %v5773 = vadd.f32 %v5703, %v5766
  %v5774 = vadd.f32 %v5704, %v5766
  %v5775 = vadd.f32 %v5705, %v5766
  %v5776 = vadd.f32 %v5706, %v5766
  %v5777 = vadd.f32 %v5707, %v5766
  %v5778 = vadd.f32 %v5708, %v5766
  %v5779 = vadd.f32 %v5709, %v5766
  %v5780 = vadd.f32 %v5710, %v5766
  %v5781 = vadd.f32 %v5711, %v5766
  %v5782 = vadd.f32 %v5712, %v5766
  %v5783 = vadd.f32 %v5713, %v5766
  %v5784 = vadd.f32 %v5714, %v5766
  %v5785 = vadd.f32 %v5715, %v5766
  %v5786 = vadd.f32 %v5716, %v5766
  %v5787 = vadd.f32 %v5717, %v5766
  %v5788 = vadd.f32 %v5718, %v5766
  %v5789 = vadd.f32 %v5719, %v5766
  %v5790 = vadd.f32 %v5720, %v5766
  %v5791 = vadd.f32 %v5721, %v5766
  %v5792 = vadd.f32 %v5722, %v5766
  %v5793 = vadd.f32 %v5723, %v5766
  %v5794 = vadd.f32 %v5724, %v5766
  %v5795 = vadd.f32 %v5725, %v5766
  %v5796 = vadd.f32 %v5726, %v5766
  %v5797 = vadd.f32 %v5727, %v5766
  %v5798 = vadd.f32 %v5728, %v5766
  %v5799 = vadd.f32 %v5729, %v5766
  %v5800 = vadd.f32 %v5730, %v5766
  %v5801 = vadd.f32 %v5731, %v5766
  %v5802 = vadd.f32 %v5732, %v5766
  %v5803 = vadd.f32 %v5733, %v5766
  %v5804 = vadd.f32 %v5734, %v5766
  %v5805 = vadd.f32 %v5735, %v5766
  %v5806 = vadd.f32 %v5736, %v5766
  %v5807 = vadd.f32 %v5737, %v5766
  %v5808 = vadd.f32 %v5738, %v5766
  %v5809 = vadd.f32 %v5739, %v5766
  %v5810 = vadd.f32 %v5740, %v5766
  %v5811 = vadd.f32 %v5741, %v5766
  %v5812 = vadd.f32 %v5742, %v5766
  %v5813 = vadd.f32 %v5743, %v5766
  %v5814 = vadd.f32 %v5744, %v5766
  %v5815 = vadd.f32 %v5745, %v5766
  %v5816 = vadd.f32 %v5746, %v5766
  %v5817 = vadd.f32 %v5747, %v5766
  %v5818 = vadd.f32 %v5748, %v5766
  %v5819 = vadd.f32 %v5749, %v5766
  %v5820 = vadd.f32 %v5750, %v5766
  %v5821 = vadd.f32 %v5751, %v5766
  %v5822 = vadd.f32 %v5752, %v5766
  %v5823 = vadd.f32 %v5753, %v5766
  %v5824 = vadd.f32 %v5754, %v5766
  %v5825 = vadd.f32 %v5755, %v5766
  %v5826 = vadd.f32 %v5756, %v5766
  %v5827 = vadd.f32 %v5757, %v5766
  %v5828 = vadd.f32 %v5758, %v5766
  %v5829 = vadd.f32 %v5759, %v5766
  %v5830 = vadd.f32 %v5760, %v5766
  %v5831 = vadd.f32 %v5761, %v5766
  %v5832 = vmul.f32 %v5768, 0.15
  %v5833 = vmul.f32 %v5769, 0.15
  %v5834 = vmul.f32 %v5770, 0.15
  %v5835 = vmul.f32 %v5771, 0.15
  %v5836 = vmul.f32 %v5772, 0.15
  %v5837 = vmul.f32 %v5773, 0.15
  %v5838 = vmul.f32 %v5774, 0.15
  %v5839 = vmul.f32 %v5775, 0.15
  %v5840 = vmul.f32 %v5776, 0.15
  %v5841 = vmul.f32 %v5777, 0.15
  %v5842 = vmul.f32 %v5778, 0.15
  %v5843 = vmul.f32 %v5779, 0.15
  %v5844 = vmul.f32 %v5780, 0.15
  %v5845 = vmul.f32 %v5781, 0.15
  %v5846 = vmul.f32 %v5782, 0.15
  %v5847 = vmul.f32 %v5783, 0.15
  %v5848 = vmul.f32 %v5784, 0.15
  %v5849 = vmul.f32 %v5785, 0.15
  %v5850 = vmul.f32 %v5786, 0.15
  %v5851 = vmul.f32 %v5787, 0.15
  %v5852 = vmul.f32 %v5788, 0.15
  %v5853 = vmul.f32 %v5789, 0.15
  %v5854 = vmul.f32 %v5790, 0.15
  %v5855 = vmul.f32 %v5791, 0.15
  %v5856 = vmul.f32 %v5792, 0.15
  %v5857 = vmul.f32 %v5793, 0.15
  %v5858 = vmul.f32 %v5794, 0.15
  %v5859 = vmul.f32 %v5795, 0.15
  %v5860 = vmul.f32 %v5796, 0.15
  %v5861 = vmul.f32 %v5797, 0.15
  %v5862 = vmul.f32 %v5798, 0.15
  %v5863 = vmul.f32 %v5799, 0.15
  %v5864 = vmul.f32 %v5800, 0.15
  %v5865 = vmul.f32 %v5801, 0.15
  %v5866 = vmul.f32 %v5802, 0.15
  %v5867 = vmul.f32 %v5803, 0.15
  %v5868 = vmul.f32 %v5804, 0.15
  %v5869 = vmul.f32 %v5805, 0.15
  %v5870 = vmul.f32 %v5806, 0.15
  %v5871 = vmul.f32 %v5807, 0.15
  %v5872 = vmul.f32 %v5808, 0.15
  %v5873 = vmul.f32 %v5809, 0.15
  %v5874 = vmul.f32 %v5810, 0.15
  %v5875 = vmul.f32 %v5811, 0.15
  %v5876 = vmul.f32 %v5812, 0.15
  %v5877 = vmul.f32 %v5813, 0.15
  %v5878 = vmul.f32 %v5814, 0.15
  %v5879 = vmul.f32 %v5815, 0.15
  %v5880 = vmul.f32 %v5816, 0.15
  %v5881 = vmul.f32 %v5817, 0.15
  %v5882 = vmul.f32 %v5818, 0.15
  %v5883 = vmul.f32 %v5819, 0.15
  %v5884 = vmul.f32 %v5820, 0.15
  %v5885 = vmul.f32 %v5821, 0.15
  %v5886 = vmul.f32 %v5822, 0.15
  %v5887 = vmul.f32 %v5823, 0.15
  %v5888 = vmul.f32 %v5824, 0.15
  %v5889 = vmul.f32 %v5825, 0.15
  %v5890 = vmul.f32 %v5826, 0.15
  %v5891 = vmul.f32 %v5827, 0.15
  %v5892 = vmul.f32 %v5828, 0.15
  %v5893 = vmul.f32 %v5829, 0.15
  %v5894 = vmul.f32 %v5830, 0.15
  %v5895 = vmul.f32 %v5831, 0.15
  %v5896 = vmax.f32 %v5768, %v5832
  %v5897 = vmax.f32 %v5769, %v5833
  %v5898 = vmax.f32 %v5770, %v5834
  %v5899 = vmax.f32 %v5771, %v5835
  %v5900 = vmax.f32 %v5772, %v5836
  %v5901 = vmax.f32 %v5773, %v5837
  %v5902 = vmax.f32 %v5774, %v5838
  %v5903 = vmax.f32 %v5775, %v5839
  %v5904 = vmax.f32 %v5776, %v5840
  %v5905 = vmax.f32 %v5777, %v5841
  %v5906 = vmax.f32 %v5778, %v5842
  %v5907 = vmax.f32 %v5779, %v5843
  %v5908 = vmax.f32 %v5780, %v5844
  %v5909 = vmax.f32 %v5781, %v5845
  %v5910 = vmax.f32 %v5782, %v5846
  %v5911 = vmax.f32 %v5783, %v5847
  %v5912 = vmax.f32 %v5784, %v5848
  %v5913 = vmax.f32 %v5785, %v5849
  %v5914 = vmax.f32 %v5786, %v5850
  %v5915 = vmax.f32 %v5787, %v5851
  %v5916 = vmax.f32 %v5788, %v5852
  %v5917 = vmax.f32 %v5789, %v5853
  %v5918 = vmax.f32 %v5790, %v5854
  %v5919 = vmax.f32 %v5791, %v5855
  %v5920 = vmax.f32 %v5792, %v5856
  %v5921 = vmax.f32 %v5793, %v5857
  %v5922 = vmax.f32 %v5794, %v5858
  %v5923 = vmax.f32 %v5795, %v5859
  %v5924 = vmax.f32 %v5796, %v5860
  %v5925 = vmax.f32 %v5797, %v5861
  %v5926 = vmax.f32 %v5798, %v5862
  %v5927 = vmax.f32 %v5799, %v5863
  %v5928 = vmax.f32 %v5800, %v5864
  %v5929 = vmax.f32 %v5801, %v5865
  %v5930 = vmax.f32 %v5802, %v5866
  %v5931 = vmax.f32 %v5803, %v5867
  %v5932 = vmax.f32 %v5804, %v5868
  %v5933 = vmax.f32 %v5805, %v5869
  %v5934 = vmax.f32 %v5806, %v5870
  %v5935 = vmax.f32 %v5807, %v5871
  %v5936 = vmax.f32 %v5808, %v5872
  %v5937 = vmax.f32 %v5809, %v5873
  %v5938 = vmax.f32 %v5810, %v5874
  %v5939 = vmax.f32 %v5811, %v5875
  %v5940 = vmax.f32 %v5812, %v5876
  %v5941 = vmax.f32 %v5813, %v5877
  %v5942 = vmax.f32 %v5814, %v5878
  %v5943 = vmax.f32 %v5815, %v5879
  %v5944 = vmax.f32 %v5816, %v5880
  %v5945 = vmax.f32 %v5817, %v5881
  %v5946 = vmax.f32 %v5818, %v5882
  %v5947 = vmax.f32 %v5819, %v5883
  %v5948 = vmax.f32 %v5820, %v5884
  %v5949 = vmax.f32 %v5821, %v5885
  %v5950 = vmax.f32 %v5822, %v5886
  %v5951 = vmax.f32 %v5823, %v5887
  %v5952 = vmax.f32 %v5824, %v5888
  %v5953 = vmax.f32 %v5825, %v5889
  %v5954 = vmax.f32 %v5826, %v5890
  %v5955 = vmax.f32 %v5827, %v5891
  %v5956 = vmax.f32 %v5828, %v5892
  %v5957 = vmax.f32 %v5829, %v5893
  %v5958 = vmax.f32 %v5830, %v5894
  %v5959 = vmax.f32 %v5831, %v5895
  %v5960 = vld [vmem:[%s1] sm:$0xf]
  %v5961 = vld [vmem:[%s1 + $0x4] sm:$0xf]
  %v5962 = vld [vmem:[%s1 + $0x8] sm:$0xf]
  %v5963 = vld [vmem:[%s1 + $0xc] sm:$0xf]
  %v5964 = vld [vmem:[%s1 + $0x10] sm:$0xf]
  %v5965 = vld [vmem:[%s1 + $0x14] sm:$0xf]
  %v5966 = vld [vmem:[%s1 + $0x18] sm:$0xf]
  %v5967 = vld [vmem:[%s1 + $0x1c] sm:$0xf]
  %v5968 = vld [vmem:[%s1 + $0x20] sm:$0xf]
  %v5969 = vld [vmem:[%s1 + $0x24] sm:$0xf]
  %v5970 = vld [vmem:[%s1 + $0x28] sm:$0xf]
  %v5971 = vld [vmem:[%s1 + $0x2c] sm:$0xf]
  %v5972 = vld [vmem:[%s1 + $0x30] sm:$0xf]
  %v5973 = vld [vmem:[%s1 + $0x34] sm:$0xf]
  %v5974 = vld [vmem:[%s1 + $0x38] sm:$0xf]
  %v5975 = vld [vmem:[%s1 + $0x3c] sm:$0xf]
  %v5976 = vld [vmem:[%s1 + $0x40] sm:$0xf]
  %v5977 = vld [vmem:[%s1 + $0x44] sm:$0xf]
  %v5978 = vld [vmem:[%s1 + $0x48] sm:$0xf]
  %v5979 = vld [vmem:[%s1 + $0x4c] sm:$0xf]
  %v5980 = vld [vmem:[%s1 + $0x50] sm:$0xf]
  %v5981 = vld [vmem:[%s1 + $0x54] sm:$0xf]
  %v5982 = vld [vmem:[%s1 + $0x58] sm:$0xf]
  %v5983 = vld [vmem:[%s1 + $0x5c] sm:$0xf]
  %v5984 = vld [vmem:[%s1 + $0x60] sm:$0xf]
  %v5985 = vld [vmem:[%s1 + $0x64] sm:$0xf]
  %v5986 = vld [vmem:[%s1 + $0x68] sm:$0xf]
  %v5987 = vld [vmem:[%s1 + $0x6c] sm:$0xf]
  %v5988 = vld [vmem:[%s1 + $0x70] sm:$0xf]
  %v5989 = vld [vmem:[%s1 + $0x74] sm:$0xf]
  %v5990 = vld [vmem:[%s1 + $0x78] sm:$0xf]
  %v5991 = vld [vmem:[%s1 + $0x7c] sm:$0xf]
  %v5992 = vld [vmem:[%s1 + $0x80] sm:$0xf]
  %v5993 = vld [vmem:[%s1 + $0x84] sm:$0xf]
  %v5994 = vld [vmem:[%s1 + $0x88] sm:$0xf]
  %v5995 = vld [vmem:[%s1 + $0x8c] sm:$0xf]
  %v5996 = vld [vmem:[%s1 + $0x90] sm:$0xf]
  %v5997 = vld [vmem:[%s1 + $0x94] sm:$0xf]
  %v5998 = vld [vmem:[%s1 + $0x98] sm:$0xf]
  %v5999 = vld [vmem:[%s1 + $0x9c] sm:$0xf]
  %v6000 = vld [vmem:[%s1 + $0xa0] sm:$0xf]
  %v6001 = vld [vmem:[%s1 + $0xa4] sm:$0xf]
  %v6002 = vld [vmem:[%s1 + $0xa8] sm:$0xf]
  %v6003 = vld [vmem:[%s1 + $0xac] sm:$0xf]
  %v6004 = vld [vmem:[%s1 + $0xb0] sm:$0xf]
  %v6005 = vld [vmem:[%s1 + $0xb4] sm:$0xf]
  %v6006 = vld [vmem:[%s1 + $0xb8] sm:$0xf]
  %v6007 = vld [vmem:[%s1 + $0xbc] sm:$0xf]
  %v6008 = vld [vmem:[%s1 + $0xc0] sm:$0xf]
  %v6009 = vld [vmem:[%s1 + $0xc4] sm:$0xf]
  %v6010 = vld [vmem:[%s1 + $0xc8] sm:$0xf]
  %v6011 = vld [vmem:[%s1 + $0xcc] sm:$0xf]
  %v6012 = vld [vmem:[%s1 + $0xd0] sm:$0xf]
  %v6013 = vld [vmem:[%s1 + $0xd4] sm:$0xf]
  %v6014 = vld [vmem:[%s1 + $0xd8] sm:$0xf]
  %v6015 = vld [vmem:[%s1 + $0xdc] sm:$0xf]
  %v6016 = vld [vmem:[%s1 + $0xe0] sm:$0xf]
  %v6017 = vld [vmem:[%s1 + $0xe4] sm:$0xf]
  %v6018 = vld [vmem:[%s1 + $0xe8] sm:$0xf]
  %v6019 = vld [vmem:[%s1 + $0xec] sm:$0xf]
  %v6020 = vld [vmem:[%s1 + $0xf0] sm:$0xf]
  %v6021 = vld [vmem:[%s1 + $0xf4] sm:$0xf]
  %v6022 = vld [vmem:[%s1 + $0xf8] sm:$0xf]
  %v6023 = vld [vmem:[%s1 + $0xfc] sm:$0xf]
  %v6024 = vunpack.c.l.bf16 %v5960
  %v6025 = vunpack.c.l.bf16 %v5961
  %v6026 = vunpack.c.l.bf16 %v5962
  %v6027 = vunpack.c.l.bf16 %v5963
  %v6028 = vunpack.c.l.bf16 %v5964
  %v6029 = vunpack.c.l.bf16 %v5965
  %v6030 = vunpack.c.l.bf16 %v5966
  %v6031 = vunpack.c.l.bf16 %v5967
  %v6032 = vunpack.c.l.bf16 %v5968
  %v6033 = vunpack.c.l.bf16 %v5969
  %v6034 = vunpack.c.l.bf16 %v5970
  %v6035 = vunpack.c.l.bf16 %v5971
  %v6036 = vunpack.c.l.bf16 %v5972
  %v6037 = vunpack.c.l.bf16 %v5973
  %v6038 = vunpack.c.l.bf16 %v5974
  %v6039 = vunpack.c.l.bf16 %v5975
  %v6040 = vunpack.c.l.bf16 %v5976
  %v6041 = vunpack.c.l.bf16 %v5977
  %v6042 = vunpack.c.l.bf16 %v5978
  %v6043 = vunpack.c.l.bf16 %v5979
  %v6044 = vunpack.c.l.bf16 %v5980
  %v6045 = vunpack.c.l.bf16 %v5981
  %v6046 = vunpack.c.l.bf16 %v5982
  %v6047 = vunpack.c.l.bf16 %v5983
  %v6048 = vunpack.c.l.bf16 %v5984
  %v6049 = vunpack.c.l.bf16 %v5985
  %v6050 = vunpack.c.l.bf16 %v5986
  %v6051 = vunpack.c.l.bf16 %v5987
  %v6052 = vunpack.c.l.bf16 %v5988
  %v6053 = vunpack.c.l.bf16 %v5989
  %v6054 = vunpack.c.l.bf16 %v5990
  %v6055 = vunpack.c.l.bf16 %v5991
  %v6056 = vunpack.c.l.bf16 %v5992
  %v6057 = vunpack.c.l.bf16 %v5993
  %v6058 = vunpack.c.l.bf16 %v5994
  %v6059 = vunpack.c.l.bf16 %v5995
  %v6060 = vunpack.c.l.bf16 %v5996
  %v6061 = vunpack.c.l.bf16 %v5997
  %v6062 = vunpack.c.l.bf16 %v5998
  %v6063 = vunpack.c.l.bf16 %v5999
  %v6064 = vunpack.c.l.bf16 %v6000
  %v6065 = vunpack.c.l.bf16 %v6001
  %v6066 = vunpack.c.l.bf16 %v6002
  %v6067 = vunpack.c.l.bf16 %v6003
  %v6068 = vunpack.c.l.bf16 %v6004
  %v6069 = vunpack.c.l.bf16 %v6005
  %v6070 = vunpack.c.l.bf16 %v6006
  %v6071 = vunpack.c.l.bf16 %v6007
  %v6072 = vunpack.c.l.bf16 %v6008
  %v6073 = vunpack.c.l.bf16 %v6009
  %v6074 = vunpack.c.l.bf16 %v6010
  %v6075 = vunpack.c.l.bf16 %v6011
  %v6076 = vunpack.c.l.bf16 %v6012
  %v6077 = vunpack.c.l.bf16 %v6013
  %v6078 = vunpack.c.l.bf16 %v6014
  %v6079 = vunpack.c.l.bf16 %v6015
  %v6080 = vunpack.c.l.bf16 %v6016
  %v6081 = vunpack.c.l.bf16 %v6017
  %v6082 = vunpack.c.l.bf16 %v6018
  %v6083 = vunpack.c.l.bf16 %v6019
  %v6084 = vunpack.c.l.bf16 %v6020
  %v6085 = vunpack.c.l.bf16 %v6021
  %v6086 = vunpack.c.l.bf16 %v6022
  %v6087 = vunpack.c.l.bf16 %v6023
  %v6088 = vadd.f32 %v5896, %v6024
  %v6089 = vadd.f32 %v5897, %v6025
  %v6090 = vadd.f32 %v5898, %v6026
  %v6091 = vadd.f32 %v5899, %v6027
  %v6092 = vadd.f32 %v5900, %v6028
  %v6093 = vadd.f32 %v5901, %v6029
  %v6094 = vadd.f32 %v5902, %v6030
  %v6095 = vadd.f32 %v5903, %v6031
  %v6096 = vadd.f32 %v5904, %v6032
  %v6097 = vadd.f32 %v5905, %v6033
  %v6098 = vadd.f32 %v5906, %v6034
  %v6099 = vadd.f32 %v5907, %v6035
  %v6100 = vadd.f32 %v5908, %v6036
  %v6101 = vadd.f32 %v5909, %v6037
  %v6102 = vadd.f32 %v5910, %v6038
  %v6103 = vadd.f32 %v5911, %v6039
  %v6104 = vadd.f32 %v5912, %v6040
  %v6105 = vadd.f32 %v5913, %v6041
  %v6106 = vadd.f32 %v5914, %v6042
  %v6107 = vadd.f32 %v5915, %v6043
  %v6108 = vadd.f32 %v5916, %v6044
  %v6109 = vadd.f32 %v5917, %v6045
  %v6110 = vadd.f32 %v5918, %v6046
  %v6111 = vadd.f32 %v5919, %v6047
  %v6112 = vadd.f32 %v5920, %v6048
  %v6113 = vadd.f32 %v5921, %v6049
  %v6114 = vadd.f32 %v5922, %v6050
  %v6115 = vadd.f32 %v5923, %v6051
  %v6116 = vadd.f32 %v5924, %v6052
  %v6117 = vadd.f32 %v5925, %v6053
  %v6118 = vadd.f32 %v5926, %v6054
  %v6119 = vadd.f32 %v5927, %v6055
  %v6120 = vadd.f32 %v5928, %v6056
  %v6121 = vadd.f32 %v5929, %v6057
  %v6122 = vadd.f32 %v5930, %v6058
  %v6123 = vadd.f32 %v5931, %v6059
  %v6124 = vadd.f32 %v5932, %v6060
  %v6125 = vadd.f32 %v5933, %v6061
  %v6126 = vadd.f32 %v5934, %v6062
  %v6127 = vadd.f32 %v5935, %v6063
  %v6128 = vadd.f32 %v5936, %v6064
  %v6129 = vadd.f32 %v5937, %v6065
  %v6130 = vadd.f32 %v5938, %v6066
  %v6131 = vadd.f32 %v5939, %v6067
  %v6132 = vadd.f32 %v5940, %v6068
  %v6133 = vadd.f32 %v5941, %v6069
  %v6134 = vadd.f32 %v5942, %v6070
  %v6135 = vadd.f32 %v5943, %v6071
  %v6136 = vadd.f32 %v5944, %v6072
  %v6137 = vadd.f32 %v5945, %v6073
  %v6138 = vadd.f32 %v5946, %v6074
  %v6139 = vadd.f32 %v5947, %v6075
  %v6140 = vadd.f32 %v5948, %v6076
  %v6141 = vadd.f32 %v5949, %v6077
  %v6142 = vadd.f32 %v5950, %v6078
  %v6143 = vadd.f32 %v5951, %v6079
  %v6144 = vadd.f32 %v5952, %v6080
  %v6145 = vadd.f32 %v5953, %v6081
  %v6146 = vadd.f32 %v5954, %v6082
  %v6147 = vadd.f32 %v5955, %v6083
  %v6148 = vadd.f32 %v5956, %v6084
  %v6149 = vadd.f32 %v5957, %v6085
  %v6150 = vadd.f32 %v5958, %v6086
  %v6151 = vadd.f32 %v5959, %v6087
  %6152 = vst [vmem:[%s5] sm:$0xff] %v6088
  %6153 = vst [vmem:[%s5 + $0x8] sm:$0xff] %v6089
  %6154 = vst [vmem:[%s5 + $0x10] sm:$0xff] %v6090
  %6155 = vst [vmem:[%s5 + $0x18] sm:$0xff] %v6091
  %6156 = vst [vmem:[%s5 + $0x20] sm:$0xff] %v6092
  %6157 = vst [vmem:[%s5 + $0x28] sm:$0xff] %v6093
  %6158 = vst [vmem:[%s5 + $0x30] sm:$0xff] %v6094
  %6159 = vst [vmem:[%s5 + $0x38] sm:$0xff] %v6095
  %6160 = vst [vmem:[%s5 + $0x40] sm:$0xff] %v6096
  %6161 = vst [vmem:[%s5 + $0x48] sm:$0xff] %v6097
  %6162 = vst [vmem:[%s5 + $0x50] sm:$0xff] %v6098
  %6163 = vst [vmem:[%s5 + $0x58] sm:$0xff] %v6099
  %6164 = vst [vmem:[%s5 + $0x60] sm:$0xff] %v6100
  %6165 = vst [vmem:[%s5 + $0x68] sm:$0xff] %v6101
  %6166 = vst [vmem:[%s5 + $0x70] sm:$0xff] %v6102
  %6167 = vst [vmem:[%s5 + $0x78] sm:$0xff] %v6103
  %6168 = vst [vmem:[%s5 + $0x80] sm:$0xff] %v6104
  %6169 = vst [vmem:[%s5 + $0x88] sm:$0xff] %v6105
  %6170 = vst [vmem:[%s5 + $0x90] sm:$0xff] %v6106
  %6171 = vst [vmem:[%s5 + $0x98] sm:$0xff] %v6107
  %6172 = vst [vmem:[%s5 + $0xa0] sm:$0xff] %v6108
  %6173 = vst [vmem:[%s5 + $0xa8] sm:$0xff] %v6109
  %6174 = vst [vmem:[%s5 + $0xb0] sm:$0xff] %v6110
  %6175 = vst [vmem:[%s5 + $0xb8] sm:$0xff] %v6111
  %6176 = vst [vmem:[%s5 + $0xc0] sm:$0xff] %v6112
  %6177 = vst [vmem:[%s5 + $0xc8] sm:$0xff] %v6113
  %6178 = vst [vmem:[%s5 + $0xd0] sm:$0xff] %v6114
  %6179 = vst [vmem:[%s5 + $0xd8] sm:$0xff] %v6115
  %6180 = vst [vmem:[%s5 + $0xe0] sm:$0xff] %v6116
  %6181 = vst [vmem:[%s5 + $0xe8] sm:$0xff] %v6117
  %6182 = vst [vmem:[%s5 + $0xf0] sm:$0xff] %v6118
  %6183 = vst [vmem:[%s5 + $0xf8] sm:$0xff] %v6119
  %6184 = vst [vmem:[%s5 + $0x100] sm:$0xff] %v6120
  %6185 = vst [vmem:[%s5 + $0x108] sm:$0xff] %v6121
  %6186 = vst [vmem:[%s5 + $0x110] sm:$0xff] %v6122
  %6187 = vst [vmem:[%s5 + $0x118] sm:$0xff] %v6123
  %6188 = vst [vmem:[%s5 + $0x120] sm:$0xff] %v6124
  %6189 = vst [vmem:[%s5 + $0x128] sm:$0xff] %v6125
  %6190 = vst [vmem:[%s5 + $0x130] sm:$0xff] %v6126
  %6191 = vst [vmem:[%s5 + $0x138] sm:$0xff] %v6127
  %6192 = vst [vmem:[%s5 + $0x140] sm:$0xff] %v6128
  %6193 = vst [vmem:[%s5 + $0x148] sm:$0xff] %v6129
  %6194 = vst [vmem:[%s5 + $0x150] sm:$0xff] %v6130
  %6195 = vst [vmem:[%s5 + $0x158] sm:$0xff] %v6131
  %6196 = vst [vmem:[%s5 + $0x160] sm:$0xff] %v6132
  %6197 = vst [vmem:[%s5 + $0x168] sm:$0xff] %v6133
  %6198 = vst [vmem:[%s5 + $0x170] sm:$0xff] %v6134
  %6199 = vst [vmem:[%s5 + $0x178] sm:$0xff] %v6135
  %6200 = vst [vmem:[%s5 + $0x180] sm:$0xff] %v6136
  %6201 = vst [vmem:[%s5 + $0x188] sm:$0xff] %v6137
  %6202 = vst [vmem:[%s5 + $0x190] sm:$0xff] %v6138
  %6203 = vst [vmem:[%s5 + $0x198] sm:$0xff] %v6139
  %6204 = vst [vmem:[%s5 + $0x1a0] sm:$0xff] %v6140
  %6205 = vst [vmem:[%s5 + $0x1a8] sm:$0xff] %v6141
  %6206 = vst [vmem:[%s5 + $0x1b0] sm:$0xff] %v6142
  %6207 = vst [vmem:[%s5 + $0x1b8] sm:$0xff] %v6143
  %6208 = vst [vmem:[%s5 + $0x1c0] sm:$0xff] %v6144
  %6209 = vst [vmem:[%s5 + $0x1c8] sm:$0xff] %v6145
  %6210 = vst [vmem:[%s5 + $0x1d0] sm:$0xff] %v6146
  %6211 = vst [vmem:[%s5 + $0x1d8] sm:$0xff] %v6147
  %6212 = vst [vmem:[%s5 + $0x1e0] sm:$0xff] %v6148
  %6213 = vst [vmem:[%s5 + $0x1e8] sm:$0xff] %v6149
  %6214 = vst [vmem:[%s5 + $0x1f0] sm:$0xff] %v6150
  %6215 = vst [vmem:[%s5 + $0x1f8] sm:$0xff] %v6151
  // Predicated region
  $region22: #{conv_residual_block.3} parent=0 // pred_check
    _
  $region23: #{conv_residual_block.3} parent=0 // pred_check_branch
    %6217 = sbr.rel (0) target = $region25
  $region24: #{conv_residual_block.3} parent=0 // pred_region
    _
  $region25: #{conv_residual_block.3} parent=0 // pred_fallthru
    _
  // Predicated region
  $region26: #{conv_residual_block.3} parent=0 // pred_check
    _
  $region27: #{conv_residual_block.3} parent=0 // pred_check_branch
    %6219 = sbr.rel (0) target = $region29
  $region28: #{conv_residual_block.3} parent=0 // pred_region
    _
  $region29: #{conv_residual_block.3} parent=0 // pred_fallthru
    _

</llo_original>
